<compile_context>
chip_gen: v7x
topology: tpu7x:2x2x1
jax: 0.10.0
libtpu: 0.0.40
codegen_flags: <defaults>
</compile_context>

<pallas_src>
import functools
import math

import numpy as np

import jax
import jax.numpy as jnp
from jax import lax
from jax.experimental import pallas as pl
from jax.experimental.pallas import tpu as pltpu


# ---------------------------------------------------------------------------
# Bilinear interpolation matrices (PyTorch nn.Upsample, align_corners=False).
# Built host-side with numpy and lru_cached: no per-call XLA work, and the
# kernel's weight-side inputs are identical across grid steps / calls.
# ---------------------------------------------------------------------------
@functools.lru_cache(maxsize=None)
def _interp_matrix(out_size, in_size):
    scale = in_size / out_size
    src = (np.arange(out_size, dtype=np.float64) + 0.5) * scale - 0.5
    src = np.maximum(src, 0.0)                       # PyTorch clamps negative coords
    i0 = np.minimum(np.floor(src).astype(np.int64), in_size - 1)
    i1 = np.minimum(i0 + 1, in_size - 1)
    w1 = (src - i0).astype(np.float32)
    w0 = (1.0 - w1).astype(np.float32)
    m = np.zeros((out_size, in_size), dtype=np.float32)
    rows = np.arange(out_size)
    np.add.at(m, (rows, i0), w0)
    np.add.at(m, (rows, i1), w1)
    return jnp.asarray(m)                            # (out, in); rows sum to 1


def _dot_precision(cdt):
    # exact mode uses the accurate f32 MXU path; bf16 mode uses native bf16
    return lax.Precision.HIGHEST if jnp.dtype(cdt) == jnp.dtype(jnp.float32) else None


# ---------------------------------------------------------------------------
# In-kernel helpers (all data stays in VMEM / vregs -- no HBM traffic)
# ---------------------------------------------------------------------------
def _zero_border(pad_ref):
    """Zero ONLY the 1-pixel border of the (C, H+2, W+2) padded scratch."""
    C, Hp, Wp = pad_ref.shape
    dt = pad_ref.dtype
    pad_ref[:, 0:1, :] = jnp.zeros((C, 1, Wp), dt)
    pad_ref[:, Hp - 1:Hp, :] = jnp.zeros((C, 1, Wp), dt)
    pad_ref[:, :, 0:1] = jnp.zeros((C, Hp, 1), dt)
    pad_ref[:, :, Wp - 1:Wp] = jnp.zeros((C, Hp, 1), dt)


def _conv3x3_acc(pad_ref, wtaps_ref, b_ref, cdt):
    """3x3 stride-1 conv on a zero-padded CHW image held in VMEM.

    9 accumulated tap matmuls (Cout, Cin) @ (Cin, H*W) -> (Cout, H*W) f32.
    No im2col buffer; bias folded in once at the end.
    """
    Cin, Hp, Wp = pad_ref.shape
    H, W = Hp - 2, Wp - 2
    Cout = wtaps_ref.shape[1]
    prec = _dot_precision(cdt)
    acc = jnp.zeros((Cout, H * W), jnp.float32)
    for ky in range(3):
        for kx in range(3):
            wk = wtaps_ref[ky * 3 + kx].astype(cdt)                      # (Cout, Cin)
            win = pad_ref[:, ky:ky + H, kx:kx + W].reshape(Cin, H * W)   # (Cin, H*W)
            acc = acc + jnp.dot(wk, win.astype(cdt),
                                precision=prec,
                                preferred_element_type=jnp.float32)
    return acc + b_ref[...]                                              # (+ (Cout, 1))


def _resize_w(x2d, wwT, cdt):
    """W-axis resize: (R, Win) @ (Win, Wout) -> (R, Wout) f32 (lane-dense GEMM)."""
    return jnp.dot(x2d.astype(cdt), wwT.astype(cdt),
                   precision=_dot_precision(cdt),
                   preferred_element_type=jnp.float32)


def _resize_h_batched(x3d, wh, cdt):
    """H-axis resize, channel-batched: (C, Hout, Hin) x (C, Hin, W) -> (C, Hout, W).

    wh is broadcast over the channel axis and the contraction runs on the
    middle (H) axis via dot_general batch dims -> no transposes materialize.
    """
    C = x3d.shape[0]
    wh_b = jnp.broadcast_to(wh.astype(cdt), (C,) + wh.shape)
    return lax.dot_general(wh_b, x3d.astype(cdt),
                           dimension_numbers=(((2,), (1,)), ((0,), (0,))),
                           precision=_dot_precision(cdt),
                           preferred_element_type=jnp.float32)


# ---------------------------------------------------------------------------
# Fused kernels (one batch element per grid step; everything stays in VMEM)
# ---------------------------------------------------------------------------
def _up_conv_kernel(x_ref, wwT_ref, wh_ref, wtaps_ref, b_ref, o_ref, pad_ref,
                    *, cdt):
    """ratio < 1 branch: bilinear upsample to `size`, then conv3x3(pad=1)."""
    Cin, Hin, Win = x_ref.shape[1], x_ref.shape[2], x_ref.shape[3]
    Hout, Wout = wh_ref.shape[0], wwT_ref.shape[1]
    x = x_ref[0]                                                   # (Cin, Hin, Win)
    # W-upsample: one GEMM over all channels/rows
    xw = _resize_w(x.reshape(Cin * Hin, Win), wwT_ref[...], cdt)   # (Cin*Hin, Wout)
    # H-upsample: channel-batched contraction on the H axis
    up = _resize_h_batched(xw.reshape(Cin, Hin, Wout),
                           wh_ref[...], cdt)                       # (Cin, Hout, Wout)
    pad_ref[:, 1:Hout + 1, 1:Wout + 1] = up.astype(pad_ref.dtype)
    _zero_border(pad_ref)
    y = _conv3x3_acc(pad_ref, wtaps_ref, b_ref, cdt)               # (Cout, Hout*Wout)
    o_ref[0] = y.astype(o_ref.dtype)                               # lane-dense store


def _conv_down_kernel(x_ref, wwT_ref, wh_ref, wtaps_ref, b_ref, o_ref, pad_ref,
                      *, cdt):
    """ratio >= 1 branch: conv3x3(pad=1), then bilinear resize to `size`."""
    Cin, H, W = x_ref.shape[1], x_ref.shape[2], x_ref.shape[3]
    Hout, Wout = wh_ref.shape[0], wwT_ref.shape[1]
    Cout = o_ref.shape[1]
    pad_ref[:, 1:H + 1, 1:W + 1] = x_ref[0].astype(pad_ref.dtype)
    _zero_border(pad_ref)
    y = _conv3x3_acc(pad_ref, wtaps_ref, b_ref, cdt)               # (Cout, H*W) f32
    # H-downsample first (channel-batched), then W-downsample (plain GEMM)
    yh = _resize_h_batched(y.reshape(Cout, H, W), wh_ref[...], cdt)        # (Cout, Hout, W)
    yw = _resize_w(yh.reshape(Cout * Hout, W), wwT_ref[...], cdt)          # (Cout*Hout, Wout)
    o_ref[0] = yw.reshape(Cout, Hout, Wout).reshape(Cout, Hout * Wout).astype(o_ref.dtype)


# ---------------------------------------------------------------------------
# Wrapper: one fused pallas_call per branch (no HBM intermediates)
# ---------------------------------------------------------------------------
_VMEM_LIMIT_CACHE = [None]


def _vmem_limit_bytes():
    """Per-generation scoped-VMEM limit with headroom (not the physical ceiling)."""
    if _VMEM_LIMIT_CACHE[0] is None:
        try:
            cap = int(pltpu.get_tpu_info().vmem_capacity_bytes)
        except Exception:
            cap = 64 << 20                      # conservative fallback (v7x per-core)
        # leave ~16 MiB for compiler temporaries / double-buffered IO blocks
        _VMEM_LIMIT_CACHE[0] = max(cap - (16 << 20), 32 << 20)
    return _VMEM_LIMIT_CACHE[0]


def _enconv_call(kernel, x, wwT, wh, wtaps, b2, size, pad_hw, cdt):
    N, Cin = x.shape[0], x.shape[1]
    Cout = wtaps.shape[1]
    Hout, Wout = size
    Hp, Wp = pad_hw

    def body(*refs):                       # bind the MXU operand dtype
        kernel(*refs, cdt=cdt)
    body.__name__ = kernel.__name__

    out_flat = pl.pallas_call(
        body,
        out_shape=jax.ShapeDtypeStruct((N, Cout, Hout * Wout), x.dtype),
        grid=(N,),
        in_specs=[
            pl.BlockSpec((1,) + tuple(x.shape[1:]), lambda n: (n, 0, 0, 0)),
            pl.BlockSpec(tuple(wwT.shape), lambda n: (0, 0)),
            pl.BlockSpec(tuple(wh.shape), lambda n: (0, 0)),
            pl.BlockSpec(tuple(wtaps.shape), lambda n: (0, 0, 0)),
            pl.BlockSpec(tuple(b2.shape), lambda n: (0, 0)),
        ],
        out_specs=pl.BlockSpec((1, Cout, Hout * Wout), lambda n: (n, 0, 0)),
        scratch_shapes=[
            pltpu.VMEM((Cin, Hp, Wp), jnp.float32),   # zero-padded CHW image
        ],
        compiler_params=pltpu.CompilerParams(
            dimension_semantics=("parallel",),
            vmem_limit_bytes=_vmem_limit_bytes()),
    )(x, wwT, wh, wtaps, b2)
    return out_flat.reshape(N, Cout, Hout, Wout)      # free, contiguous reshape


# ---------------------------------------------------------------------------
# Enconv module (2-D / bilinear case, padding=None branch of the PyTorch code)
# ---------------------------------------------------------------------------
class EnconvPallas:
    def __init__(self, in_channels, out_channels, size=(16, 16), key=None,
                 mxu_dtype=jnp.bfloat16):
        assert len(size) == 2, "only the 2-D (bilinear) case is implemented"
        # TODO(synk): 1-D (linear) / 3-D (trilinear) Upsample variants and the
        # external `padding` module branch are not implemented.
        self.in_channels = in_channels
        self.out_channels = out_channels
        self.size = tuple(int(s) for s in size)
        self.cdt = mxu_dtype                    # MXU operand dtype (f32 accumulate)
        kw, kb = jax.random.split(key, 2)
        fan_in = in_channels * 3 * 3
        bound = 1.0 / math.sqrt(fan_in)
        # deterministic synthetic init (matches Conv2d's uniform-bound style)
        self.weight = jax.random.uniform(
            kw, (out_channels, in_channels, 3, 3), jnp.float32, -bound, bound)
        self.bias = jax.random.uniform(
            kb, (out_channels,), jnp.float32, -bound, bound)
        # per-tap (Cout, Cin) weight slabs, tap index = ky*3 + kx  (weights only)
        self.wtaps = jnp.transpose(self.weight, (2, 3, 0, 1)).reshape(
            9, out_channels, in_channels)
        self.b2 = self.bias.reshape(out_channels, 1)

    def __call__(self, x):
        h, w = int(x.shape[-2]), int(x.shape[-1])
        Hout, Wout = self.size
        ratio = (h * w) / (Hout * Wout)
        wwT = _interp_matrix(Wout, w).T        # (Win, Wout)
        wh = _interp_matrix(Hout, h)           # (Hout, Hin)
        if ratio < 1.0:
            return _enconv_call(_up_conv_kernel, x, wwT, wh, self.wtaps, self.b2,
                                self.size, (Hout + 2, Wout + 2), self.cdt)
        return _enconv_call(_conv_down_kernel, x, wwT, wh, self.wtaps, self.b2,
                            self.size, (h + 2, w + 2), self.cdt)


# ---------------------------------------------------------------------------
# Pure-JAX reference (same math, XLA ops) for an in-script correctness check
# ---------------------------------------------------------------------------
def _ref_forward(x, w, b, size):
    def resize(z, hw):
        wh = _interp_matrix(hw[0], z.shape[2])
        ww = _interp_matrix(hw[1], z.shape[3])
        return jnp.einsum('oh,nchw,pw->ncop', wh, z, ww,
                          precision=lax.Precision.HIGHEST)

    def conv(z):
        y = lax.conv_general_dilated(
            z, w, window_strides=(1, 1), padding=((1, 1), (1, 1)),
            dimension_numbers=('NCHW', 'OIHW', 'NCHW'),
            precision=lax.Precision.HIGHEST)
        return y + b[None, :, None, None]

    ratio = (x.shape[-2] * x.shape[-1]) / (size[0] * size[1])
    if ratio < 1.0:
        return conv(resize(x, size))
    return resize(conv(x), size)


if __name__ == "__main__":
    key = jax.random.PRNGKey(0)
    kx1, kx2, kparams = jax.random.split(key, 3)

    N, Cin, Cout = 2, 4, 8
    size = (16, 16)

    x_up = jax.random.normal(kx1, (N, Cin, 8, 8), jnp.float32)    # ratio < 1 branch
    x_dn = jax.random.normal(kx2, (N, Cin, 32, 32), jnp.float32)  # ratio > 1 branch

    # 1) exact mode (f32 MXU operands): tight correctness check on both branches
    mod_f32 = EnconvPallas(Cin, Cout, size=size, key=kparams, mxu_dtype=jnp.float32)
    for x in (x_up, x_dn):
        y = jax.block_until_ready(mod_f32(x))
        assert y.shape == (N, Cout, size[0], size[1]), y.shape
        ref = _ref_forward(x, mod_f32.weight, mod_f32.bias, size)
        err = float(jnp.max(jnp.abs(y - ref)))
        assert err < 2e-3, ("f32 mode", err)

    # 2) default perf mode (bf16 MXU operands, f32 accumulation)
    mod_bf16 = EnconvPallas(Cin, Cout, size=size, key=kparams)
    for x in (x_up, x_dn):
        y = jax.block_until_ready(mod_bf16(x))
        assert y.shape == (N, Cout, size[0], size[1]), y.shape
        ref = _ref_forward(x, mod_bf16.weight, mod_bf16.bias, size)
        err = float(jnp.max(jnp.abs(y - ref)))
        assert err < 5e-2, ("bf16 mode", err)

    print("KERNEL_OK")
</pallas_src>

<mosaic_0001>
module attributes {stable_mosaic.version = 11 : i64} {
  func.func @_up_conv_kernel(%arg0: i32, %arg1: memref<1x4x8x8xf32, #tpu.memory_space<vmem>>, %arg2: memref<8x16xf32, #tpu.memory_space<vmem>>, %arg3: memref<16x8xf32, #tpu.memory_space<vmem>>, %arg4: memref<9x8x4xf32, #tpu.memory_space<vmem>>, %arg5: memref<8x1xf32, #tpu.memory_space<vmem>>, %arg6: memref<1x8x256xf32, #tpu.memory_space<vmem>>, %arg7: memref<4x18x18xf32, #tpu.memory_space<vmem>>) attributes {dimension_semantics = [#tpu.dimension_semantics<parallel>], iteration_bounds = array<i64: 2>, scalar_prefetch = 0 : i64, scratch_operands = 1 : i64, tpu.core_type = #tpu.core_type<tc>, window_params = [{transform_indices = @transform_0, window_bounds = array<i64: 1, 4, 8, 8>}, {pipeline_mode = #tpu.pipeline_mode<synchronous>, transform_indices = @transform_1, window_bounds = array<i64: 8, 16>}, {pipeline_mode = #tpu.pipeline_mode<synchronous>, transform_indices = @transform_2, window_bounds = array<i64: 16, 8>}, {pipeline_mode = #tpu.pipeline_mode<synchronous>, transform_indices = @transform_3, window_bounds = array<i64: 9, 8, 4>}, {pipeline_mode = #tpu.pipeline_mode<synchronous>, transform_indices = @transform_4, window_bounds = array<i64: 8, 1>}, {transform_indices = @transform_5, window_bounds = array<i64: 1, 8, 256>}]} {
    %c0 = arith.constant 0 : index
    %c0_0 = arith.constant 0 : index
    %c0_1 = arith.constant 0 : index
    %c0_2 = arith.constant 0 : index
    %0 = vector.load %arg1[%c0, %c0_0, %c0_1, %c0_2] : memref<1x4x8x8xf32, #tpu.memory_space<vmem>>, vector<1x4x8x8xf32>
    %1 = vector.shape_cast %0 : vector<1x4x8x8xf32> to vector<4x8x8xf32>
    %2 = vector.shape_cast %1 : vector<4x8x8xf32> to vector<32x8xf32>
    %c0_3 = arith.constant 0 : index
    %c0_4 = arith.constant 0 : index
    %3 = vector.load %arg2[%c0_3, %c0_4] : memref<8x16xf32, #tpu.memory_space<vmem>>, vector<8x16xf32>
    %cst = arith.constant dense<0.000000e+00> : vector<32x16xf32>
    %4 = tpu.matmul %2, %3, %cst {dimension_numbers = #tpu.dot_dimension_numbers<[1], [0], [0], [1], [0, 0, 1, 1], [], []>, precision = #tpu.contract_precision<fp32>} : vector<32x8xf32>, vector<8x16xf32>, vector<32x16xf32> -> vector<32x16xf32>
    %5 = vector.shape_cast %4 : vector<32x16xf32> to vector<4x8x16xf32>
    %c0_5 = arith.constant 0 : index
    %c0_6 = arith.constant 0 : index
    %6 = vector.load %arg3[%c0_5, %c0_6] : memref<16x8xf32, #tpu.memory_space<vmem>>, vector<16x8xf32>
    %7 = vector.shape_cast %6 : vector<16x8xf32> to vector<1x16x8xf32>
    %8 = vector.broadcast %7 : vector<1x16x8xf32> to vector<4x16x8xf32>
    %cst_7 = arith.constant dense<0.000000e+00> : vector<4x16x16xf32>
    %9 = tpu.matmul %8, %5, %cst_7 {dimension_numbers = #tpu.dot_dimension_numbers<[2], [1], [1], [2], [0, 0, 0, 1, 1, 2], [0], [0]>, precision = #tpu.contract_precision<fp32>} : vector<4x16x8xf32>, vector<4x8x16xf32>, vector<4x16x16xf32> -> vector<4x16x16xf32>
    %c0_8 = arith.constant 0 : index
    %c1 = arith.constant 1 : index
    %c1_9 = arith.constant 1 : index
    %10 = vector.load %arg7[%c0_8, %c1, %c1_9] : memref<4x18x18xf32, #tpu.memory_space<vmem>>, vector<4x16x16xf32>
    tpu.vector_store %arg7[%c0_8, %c1, %c1_9], %9 {strides = array<i32>} : memref<4x18x18xf32, #tpu.memory_space<vmem>>, vector<4x16x16xf32>,
    %cst_10 = arith.constant 0.000000e+00 : f32
    %11 = vector.broadcast %cst_10 : f32 to vector<4x1x18xf32>
    %c0_11 = arith.constant 0 : index
    %c0_12 = arith.constant 0 : index
    %c0_13 = arith.constant 0 : index
    %12 = vector.load %arg7[%c0_11, %c0_12, %c0_13] : memref<4x18x18xf32, #tpu.memory_space<vmem>>, vector<4x1x18xf32>
    tpu.vector_store %arg7[%c0_11, %c0_12, %c0_13], %11 {strides = array<i32>} : memref<4x18x18xf32, #tpu.memory_space<vmem>>, vector<4x1x18xf32>,
    %cst_14 = arith.constant 0.000000e+00 : f32
    %13 = vector.broadcast %cst_14 : f32 to vector<4x1x18xf32>
    %c0_15 = arith.constant 0 : index
    %c17 = arith.constant 17 : index
    %c0_16 = arith.constant 0 : index
    %14 = vector.load %arg7[%c0_15, %c17, %c0_16] : memref<4x18x18xf32, #tpu.memory_space<vmem>>, vector<4x1x18xf32>
    tpu.vector_store %arg7[%c0_15, %c17, %c0_16], %13 {strides = array<i32>} : memref<4x18x18xf32, #tpu.memory_space<vmem>>, vector<4x1x18xf32>,
    %cst_17 = arith.constant 0.000000e+00 : f32
    %15 = vector.broadcast %cst_17 : f32 to vector<4x18x1xf32>
    %c0_18 = arith.constant 0 : index
    %c0_19 = arith.constant 0 : index
    %c0_20 = arith.constant 0 : index
    %16 = vector.load %arg7[%c0_18, %c0_19, %c0_20] : memref<4x18x18xf32, #tpu.memory_space<vmem>>, vector<4x18x1xf32>
    tpu.vector_store %arg7[%c0_18, %c0_19, %c0_20], %15 {strides = array<i32>} : memref<4x18x18xf32, #tpu.memory_space<vmem>>, vector<4x18x1xf32>,
    %cst_21 = arith.constant 0.000000e+00 : f32
    %17 = vector.broadcast %cst_21 : f32 to vector<4x18x1xf32>
    %c0_22 = arith.constant 0 : index
    %c0_23 = arith.constant 0 : index
    %c17_24 = arith.constant 17 : index
    %18 = vector.load %arg7[%c0_22, %c0_23, %c17_24] : memref<4x18x18xf32, #tpu.memory_space<vmem>>, vector<4x18x1xf32>
    tpu.vector_store %arg7[%c0_22, %c0_23, %c17_24], %17 {strides = array<i32>} : memref<4x18x18xf32, #tpu.memory_space<vmem>>, vector<4x18x1xf32>,
    %cst_25 = arith.constant 0.000000e+00 : f32
    %19 = vector.broadcast %cst_25 : f32 to vector<8x256xf32>
    %c0_26 = arith.constant 0 : index
    %c0_27 = arith.constant 0 : index
    %c0_28 = arith.constant 0 : index
    %20 = vector.load %arg4[%c0_26, %c0_27, %c0_28] : memref<9x8x4xf32, #tpu.memory_space<vmem>>, vector<1x8x4xf32>
    %21 = vector.shape_cast %20 : vector<1x8x4xf32> to vector<8x4xf32>
    %c0_29 = arith.constant 0 : index
    %c0_30 = arith.constant 0 : index
    %c0_31 = arith.constant 0 : index
    %22 = vector.load %arg7[%c0_29, %c0_30, %c0_31] : memref<4x18x18xf32, #tpu.memory_space<vmem>>, vector<4x16x16xf32>
    %23 = vector.shape_cast %22 : vector<4x16x16xf32> to vector<4x256xf32>
    %cst_32 = arith.constant dense<0.000000e+00> : vector<8x256xf32>
    %24 = tpu.matmul %21, %23, %cst_32 {dimension_numbers = #tpu.dot_dimension_numbers<[1], [0], [0], [1], [0, 0, 1, 1], [], []>, precision = #tpu.contract_precision<fp32>} : vector<8x4xf32>, vector<4x256xf32>, vector<8x256xf32> -> vector<8x256xf32>
    %25 = arith.addf %19, %24 : vector<8x256xf32>
    %c1_33 = arith.constant 1 : index
    %c0_34 = arith.constant 0 : index
    %c0_35 = arith.constant 0 : index
    %26 = vector.load %arg4[%c1_33, %c0_34, %c0_35] : memref<9x8x4xf32, #tpu.memory_space<vmem>>, vector<1x8x4xf32>
    %27 = vector.shape_cast %26 : vector<1x8x4xf32> to vector<8x4xf32>
    %c0_36 = arith.constant 0 : index
    %c0_37 = arith.constant 0 : index
    %c1_38 = arith.constant 1 : index
    %28 = vector.load %arg7[%c0_36, %c0_37, %c1_38] : memref<4x18x18xf32, #tpu.memory_space<vmem>>, vector<4x16x16xf32>
    %29 = vector.shape_cast %28 : vector<4x16x16xf32> to vector<4x256xf32>
    %cst_39 = arith.constant dense<0.000000e+00> : vector<8x256xf32>
    %30 = tpu.matmul %27, %29, %cst_39 {dimension_numbers = #tpu.dot_dimension_numbers<[1], [0], [0], [1], [0, 0, 1, 1], [], []>, precision = #tpu.contract_precision<fp32>} : vector<8x4xf32>, vector<4x256xf32>, vector<8x256xf32> -> vector<8x256xf32>
    %31 = arith.addf %25, %30 : vector<8x256xf32>
    %c2 = arith.constant 2 : index
    %c0_40 = arith.constant 0 : index
    %c0_41 = arith.constant 0 : index
    %32 = vector.load %arg4[%c2, %c0_40, %c0_41] : memref<9x8x4xf32, #tpu.memory_space<vmem>>, vector<1x8x4xf32>
    %33 = vector.shape_cast %32 : vector<1x8x4xf32> to vector<8x4xf32>
    %c0_42 = arith.constant 0 : index
    %c0_43 = arith.constant 0 : index
    %c2_44 = arith.constant 2 : index
    %34 = vector.load %arg7[%c0_42, %c0_43, %c2_44] : memref<4x18x18xf32, #tpu.memory_space<vmem>>, vector<4x16x16xf32>
    %35 = vector.shape_cast %34 : vector<4x16x16xf32> to vector<4x256xf32>
    %cst_45 = arith.constant dense<0.000000e+00> : vector<8x256xf32>
    %36 = tpu.matmul %33, %35, %cst_45 {dimension_numbers = #tpu.dot_dimension_numbers<[1], [0], [0], [1], [0, 0, 1, 1], [], []>, precision = #tpu.contract_precision<fp32>} : vector<8x4xf32>, vector<4x256xf32>, vector<8x256xf32> -> vector<8x256xf32>
    %37 = arith.addf %31, %36 : vector<8x256xf32>
    %c3 = arith.constant 3 : index
    %c0_46 = arith.constant 0 : index
    %c0_47 = arith.constant 0 : index
    %38 = vector.load %arg4[%c3, %c0_46, %c0_47] : memref<9x8x4xf32, #tpu.memory_space<vmem>>, vector<1x8x4xf32>
    %39 = vector.shape_cast %38 : vector<1x8x4xf32> to vector<8x4xf32>
    %c0_48 = arith.constant 0 : index
    %c1_49 = arith.constant 1 : index
    %c0_50 = arith.constant 0 : index
    %40 = vector.load %arg7[%c0_48, %c1_49, %c0_50] : memref<4x18x18xf32, #tpu.memory_space<vmem>>, vector<4x16x16xf32>
    %41 = vector.shape_cast %40 : vector<4x16x16xf32> to vector<4x256xf32>
    %cst_51 = arith.constant dense<0.000000e+00> : vector<8x256xf32>
    %42 = tpu.matmul %39, %41, %cst_51 {dimension_numbers = #tpu.dot_dimension_numbers<[1], [0], [0], [1], [0, 0, 1, 1], [], []>, precision = #tpu.contract_precision<fp32>} : vector<8x4xf32>, vector<4x256xf32>, vector<8x256xf32> -> vector<8x256xf32>
    %43 = arith.addf %37, %42 : vector<8x256xf32>
    %c4 = arith.constant 4 : index
    %c0_52 = arith.constant 0 : index
    %c0_53 = arith.constant 0 : index
    %44 = vector.load %arg4[%c4, %c0_52, %c0_53] : memref<9x8x4xf32, #tpu.memory_space<vmem>>, vector<1x8x4xf32>
    %45 = vector.shape_cast %44 : vector<1x8x4xf32> to vector<8x4xf32>
    %c0_54 = arith.constant 0 : index
    %c1_55 = arith.constant 1 : index
    %c1_56 = arith.constant 1 : index
    %46 = vector.load %arg7[%c0_54, %c1_55, %c1_56] : memref<4x18x18xf32, #tpu.memory_space<vmem>>, vector<4x16x16xf32>
    %47 = vector.shape_cast %46 : vector<4x16x16xf32> to vector<4x256xf32>
    %cst_57 = arith.constant dense<0.000000e+00> : vector<8x256xf32>
    %48 = tpu.matmul %45, %47, %cst_57 {dimension_numbers = #tpu.dot_dimension_numbers<[1], [0], [0], [1], [0, 0, 1, 1], [], []>, precision = #tpu.contract_precision<fp32>} : vector<8x4xf32>, vector<4x256xf32>, vector<8x256xf32> -> vector<8x256xf32>
    %49 = arith.addf %43, %48 : vector<8x256xf32>
    %c5 = arith.constant 5 : index
    %c0_58 = arith.constant 0 : index
    %c0_59 = arith.constant 0 : index
    %50 = vector.load %arg4[%c5, %c0_58, %c0_59] : memref<9x8x4xf32, #tpu.memory_space<vmem>>, vector<1x8x4xf32>
    %51 = vector.shape_cast %50 : vector<1x8x4xf32> to vector<8x4xf32>
    %c0_60 = arith.constant 0 : index
    %c1_61 = arith.constant 1 : index
    %c2_62 = arith.constant 2 : index
    %52 = vector.load %arg7[%c0_60, %c1_61, %c2_62] : memref<4x18x18xf32, #tpu.memory_space<vmem>>, vector<4x16x16xf32>
    %53 = vector.shape_cast %52 : vector<4x16x16xf32> to vector<4x256xf32>
    %cst_63 = arith.constant dense<0.000000e+00> : vector<8x256xf32>
    %54 = tpu.matmul %51, %53, %cst_63 {dimension_numbers = #tpu.dot_dimension_numbers<[1], [0], [0], [1], [0, 0, 1, 1], [], []>, precision = #tpu.contract_precision<fp32>} : vector<8x4xf32>, vector<4x256xf32>, vector<8x256xf32> -> vector<8x256xf32>
    %55 = arith.addf %49, %54 : vector<8x256xf32>
    %c6 = arith.constant 6 : index
    %c0_64 = arith.constant 0 : index
    %c0_65 = arith.constant 0 : index
    %56 = vector.load %arg4[%c6, %c0_64, %c0_65] : memref<9x8x4xf32, #tpu.memory_space<vmem>>, vector<1x8x4xf32>
    %57 = vector.shape_cast %56 : vector<1x8x4xf32> to vector<8x4xf32>
    %c0_66 = arith.constant 0 : index
    %c2_67 = arith.constant 2 : index
    %c0_68 = arith.constant 0 : index
    %58 = vector.load %arg7[%c0_66, %c2_67, %c0_68] : memref<4x18x18xf32, #tpu.memory_space<vmem>>, vector<4x16x16xf32>
    %59 = vector.shape_cast %58 : vector<4x16x16xf32> to vector<4x256xf32>
    %cst_69 = arith.constant dense<0.000000e+00> : vector<8x256xf32>
    %60 = tpu.matmul %57, %59, %cst_69 {dimension_numbers = #tpu.dot_dimension_numbers<[1], [0], [0], [1], [0, 0, 1, 1], [], []>, precision = #tpu.contract_precision<fp32>} : vector<8x4xf32>, vector<4x256xf32>, vector<8x256xf32> -> vector<8x256xf32>
    %61 = arith.addf %55, %60 : vector<8x256xf32>
    %c7 = arith.constant 7 : index
    %c0_70 = arith.constant 0 : index
    %c0_71 = arith.constant 0 : index
    %62 = vector.load %arg4[%c7, %c0_70, %c0_71] : memref<9x8x4xf32, #tpu.memory_space<vmem>>, vector<1x8x4xf32>
    %63 = vector.shape_cast %62 : vector<1x8x4xf32> to vector<8x4xf32>
    %c0_72 = arith.constant 0 : index
    %c2_73 = arith.constant 2 : index
    %c1_74 = arith.constant 1 : index
    %64 = vector.load %arg7[%c0_72, %c2_73, %c1_74] : memref<4x18x18xf32, #tpu.memory_space<vmem>>, vector<4x16x16xf32>
    %65 = vector.shape_cast %64 : vector<4x16x16xf32> to vector<4x256xf32>
    %cst_75 = arith.constant dense<0.000000e+00> : vector<8x256xf32>
    %66 = tpu.matmul %63, %65, %cst_75 {dimension_numbers = #tpu.dot_dimension_numbers<[1], [0], [0], [1], [0, 0, 1, 1], [], []>, precision = #tpu.contract_precision<fp32>} : vector<8x4xf32>, vector<4x256xf32>, vector<8x256xf32> -> vector<8x256xf32>
    %67 = arith.addf %61, %66 : vector<8x256xf32>
    %c8 = arith.constant 8 : index
    %c0_76 = arith.constant 0 : index
    %c0_77 = arith.constant 0 : index
    %68 = vector.load %arg4[%c8, %c0_76, %c0_77] : memref<9x8x4xf32, #tpu.memory_space<vmem>>, vector<1x8x4xf32>
    %69 = vector.shape_cast %68 : vector<1x8x4xf32> to vector<8x4xf32>
    %c0_78 = arith.constant 0 : index
    %c2_79 = arith.constant 2 : index
    %c2_80 = arith.constant 2 : index
    %70 = vector.load %arg7[%c0_78, %c2_79, %c2_80] : memref<4x18x18xf32, #tpu.memory_space<vmem>>, vector<4x16x16xf32>
    %71 = vector.shape_cast %70 : vector<4x16x16xf32> to vector<4x256xf32>
    %cst_81 = arith.constant dense<0.000000e+00> : vector<8x256xf32>
    %72 = tpu.matmul %69, %71, %cst_81 {dimension_numbers = #tpu.dot_dimension_numbers<[1], [0], [0], [1], [0, 0, 1, 1], [], []>, precision = #tpu.contract_precision<fp32>} : vector<8x4xf32>, vector<4x256xf32>, vector<8x256xf32> -> vector<8x256xf32>
    %73 = arith.addf %67, %72 : vector<8x256xf32>
    %c0_82 = arith.constant 0 : index
    %c0_83 = arith.constant 0 : index
    %74 = vector.load %arg5[%c0_82, %c0_83] : memref<8x1xf32, #tpu.memory_space<vmem>>, vector<8x1xf32>
    %75 = vector.broadcast %74 : vector<8x1xf32> to vector<8x256xf32>
    %76 = arith.addf %73, %75 : vector<8x256xf32>
    %c0_84 = arith.constant 0 : index
    %c0_85 = arith.constant 0 : index
    %c0_86 = arith.constant 0 : index
    %77 = vector.load %arg6[%c0_84, %c0_85, %c0_86] : memref<1x8x256xf32, #tpu.memory_space<vmem>>, vector<1x8x256xf32>
    %78 = vector.shape_cast %77 : vector<1x8x256xf32> to vector<8x256xf32>
    %79 = vector.shape_cast %76 : vector<8x256xf32> to vector<1x8x256xf32>
    tpu.vector_store %arg6[%c0_84, %c0_85, %c0_86], %79 {strides = array<i32>} : memref<1x8x256xf32, #tpu.memory_space<vmem>>, vector<1x8x256xf32>,
    return
  }
  func.func @transform_0(%arg0: i32) -> (i32, i32, i32, i32) {
    %c0_i32 = arith.constant 0 : i32
    %c0_i32_0 = arith.constant 0 : i32
    %c0_i32_1 = arith.constant 0 : i32
    %c0_i32_2 = arith.constant 0 : i32
    return %arg0, %c0_i32, %c0_i32_0, %c0_i32_1 : i32, i32, i32, i32
  }
  func.func @transform_1(%arg0: i32) -> (i32, i32) {
    %c0_i32 = arith.constant 0 : i32
    %c0_i32_0 = arith.constant 0 : i32
    %c0_i32_1 = arith.constant 0 : i32
    return %c0_i32, %c0_i32_0 : i32, i32
  }
  func.func @transform_2(%arg0: i32) -> (i32, i32) {
    %c0_i32 = arith.constant 0 : i32
    %c0_i32_0 = arith.constant 0 : i32
    %c0_i32_1 = arith.constant 0 : i32
    return %c0_i32, %c0_i32_0 : i32, i32
  }
  func.func @transform_3(%arg0: i32) -> (i32, i32, i32) {
    %c0_i32 = arith.constant 0 : i32
    %c0_i32_0 = arith.constant 0 : i32
    %c0_i32_1 = arith.constant 0 : i32
    %c0_i32_2 = arith.constant 0 : i32
    return %c0_i32, %c0_i32_0, %c0_i32_1 : i32, i32, i32
  }
  func.func @transform_4(%arg0: i32) -> (i32, i32) {
    %c0_i32 = arith.constant 0 : i32
    %c0_i32_0 = arith.constant 0 : i32
    %c0_i32_1 = arith.constant 0 : i32
    return %c0_i32, %c0_i32_0 : i32, i32
  }
  func.func @transform_5(%arg0: i32) -> (i32, i32, i32) {
    %c0_i32 = arith.constant 0 : i32
    %c0_i32_0 = arith.constant 0 : i32
    %c0_i32_1 = arith.constant 0 : i32
    return %arg0, %c0_i32, %c0_i32_0 : i32, i32, i32
  }
}

</mosaic_0001>

<llo_original>
// kernel: tpu_custom_call.1
$region0: #{tpu_custom_call.1}
  #allocation0 [shape = 'u32[]', space=smem, size = 0x4, offset = 0x4, fixed_abs, tag = 'smem constant byte address 0x4 - core index']
  #allocation1 [shape = 'u32[144,128]{1,0:T(1,128)}', space=vmem, size = 0x12000, scoped, tag = 'internal scratch']
  #allocation2 [shape = 'f32[4,18,18]{2,1,0:T(8,128)}', space=vmem, size = 0xc000, scoped, tag = 'scratch operand']
  %s0 = inlined_call_operand.vmem [shape: f32[2,4,8,8], index: 0, kind: input, shape index: {}]
  %s1 = inlined_call_operand.vmem [shape: f32[8,16], index: 1, kind: input, shape index: {}]
  %s2 = inlined_call_operand.vmem [shape: f32[16,8], index: 2, kind: input, shape index: {}]
  %s3 = inlined_call_operand.vmem [shape: f32[9,8,4], index: 3, kind: input, shape index: {}]
  %s4 = inlined_call_operand.vmem [shape: f32[8,1], index: 4, kind: input, shape index: {}]
  %s5 = inlined_call_operand.hbm [shape: f32[2,8,256], index: 5, kind: output, shape index: {}]
  %s6 = sld [smem:[#allocation0]]
  $region53: #{tpu_custom_call.1} parent=0
    _
  %s8 = ssub.s32 1, %s6
  %s9 = scalar_select 0, %s8, %s6
  $region1: #{tpu_custom_call.1} parent=0
    #allocation3 [shape = 'u8[16384]{0}', space=vmem, size = 0x4000, scoped, tag = 'output window, operand 0']
    #allocation4 [shape = 's32[2]{0}', space=sflag, size = 0x8, scoped, tag = 'scoped memory for tpu_custom_call.1']
    %10 = vsyncpa [#allocation4], 0
    %s11 = scalar_lea.sflag [#allocation4], 1
    %12 = vsyncpa %s11, 0
    loop: start=0, step=1, limit=4
    $region2: #{tpu_custom_call.1} parent=1 // loop_pre_header
      _
    $region3: #{tpu_custom_call.1} parent=1 // loop_header
      %s14 = sphi 0, %s18
      %p15 = scmp.ge.s32.totalorder %s14, 4
      %s24 = sphi 0, %s26
      %s27 = sphi 0, %s24
      %s28 = sphi 0, %s27
      %s44 = sphi 0, %s28
      %s48 = sphi 0, %s48
      %s50 = sphi 0, %s48
      %s51 = sphi 0, %s50
      %s65 = sphi 0, %s51
      %s69 = sphi 0, %s69
      %s71 = sphi 0, %s69
      %s72 = sphi 0, %s71
      %s86 = sphi 0, %s72
      %s90 = sphi 0, %s90
      %s92 = sphi 0, %s90
      %s93 = sphi 0, %s92
      %s107 = sphi 0, %s93
      %s111 = sphi 0, %s111
      %s113 = sphi 0, %s111
      %s114 = sphi 0, %s113
      %s128 = sphi 0, %s114
      %s134 = sphi 0, %s136
      %s137 = sphi 0, %s134
      %s138 = sphi 0, %s137
      %s154 = sphi 0, %s138
    $region4: #{tpu_custom_call.1} parent=1 // loop_header_branch
      %17 = sbr.rel (%p15) target = $region8
    $region5: #{tpu_custom_call.1} parent=1 // loop_body
      %s19 = ssub.s32 %s14, 1
      %s20 = ssub.s32 %s14, 2
      %s21 = sadd.s32 %s14, 1
      %s22 = ssub.s32 %s14, %s21
      %p23 = scmp.eq.s32.totalorder %s22, 0
      %s25 = sadd.s32 %s24, 1
      %s26 = scalar_select %p23, %s24, %s25
      %p29 = pneg %p23
      %p30 = scmp.eq.s32.totalorder %s14, 1
      %p31 = por %p29, %p30
      %p32 = scmp.ne.s32.totalorder %s24, %s27
      %p33 = scmp.eq.s32.totalorder %s14, 0
      %p34 = por %p32, %p33
      %p35 = scmp.ne.s32.totalorder %s24, %s27
      %p36 = scmp.eq.s32.totalorder %s19, 1
      %p37 = por %p35, %p36
      %p38 = scmp.ne.s32.totalorder %s27, %s28
      %p39 = scmp.eq.s32.totalorder %s19, 0
      %p40 = por %p38, %p39
      %p41 = scmp.ne.s32.totalorder %s27, %s28
      %p42 = scmp.eq.s32.totalorder %s20, 1
      %p43 = por %p41, %p42
      %p45 = scmp.ne.s32.totalorder %s28, %s44
      %p46 = scmp.eq.s32.totalorder %s20, 0
      %p47 = por %p45, %p46
      %s49 = sadd.s32 %s48, 1
      %p52 = scmp.eq.s32.totalorder %s14, 1
      %p53 = scmp.ne.s32.totalorder %s48, %s50
      %p54 = scmp.eq.s32.totalorder %s14, 0
      %p55 = por %p53, %p54
      %p56 = scmp.ne.s32.totalorder %s48, %s50
      %p57 = scmp.eq.s32.totalorder %s19, 1
      %p58 = por %p56, %p57
      %p59 = scmp.ne.s32.totalorder %s50, %s51
      %p60 = scmp.eq.s32.totalorder %s19, 0
      %p61 = por %p59, %p60
      %p62 = scmp.ne.s32.totalorder %s50, %s51
      %p63 = scmp.eq.s32.totalorder %s20, 1
      %p64 = por %p62, %p63
      %p66 = scmp.ne.s32.totalorder %s51, %s65
      %p67 = scmp.eq.s32.totalorder %s20, 0
      %p68 = por %p66, %p67
      %s70 = sadd.s32 %s69, 1
      %p73 = scmp.eq.s32.totalorder %s14, 1
      %p74 = scmp.ne.s32.totalorder %s69, %s71
      %p75 = scmp.eq.s32.totalorder %s14, 0
      %p76 = por %p74, %p75
      %p77 = scmp.ne.s32.totalorder %s69, %s71
      %p78 = scmp.eq.s32.totalorder %s19, 1
      %p79 = por %p77, %p78
      %p80 = scmp.ne.s32.totalorder %s71, %s72
      %p81 = scmp.eq.s32.totalorder %s19, 0
      %p82 = por %p80, %p81
      %p83 = scmp.ne.s32.totalorder %s71, %s72
      %p84 = scmp.eq.s32.totalorder %s20, 1
      %p85 = por %p83, %p84
      %p87 = scmp.ne.s32.totalorder %s72, %s86
      %p88 = scmp.eq.s32.totalorder %s20, 0
      %p89 = por %p87, %p88
      %s91 = sadd.s32 %s90, 1
      %p94 = scmp.eq.s32.totalorder %s14, 1
      %p95 = scmp.ne.s32.totalorder %s90, %s92
      %p96 = scmp.eq.s32.totalorder %s14, 0
      %p97 = por %p95, %p96
      %p98 = scmp.ne.s32.totalorder %s90, %s92
      %p99 = scmp.eq.s32.totalorder %s19, 1
      %p100 = por %p98, %p99
      %p101 = scmp.ne.s32.totalorder %s92, %s93
      %p102 = scmp.eq.s32.totalorder %s19, 0
      %p103 = por %p101, %p102
      %p104 = scmp.ne.s32.totalorder %s92, %s93
      %p105 = scmp.eq.s32.totalorder %s20, 1
      %p106 = por %p104, %p105
      %p108 = scmp.ne.s32.totalorder %s93, %s107
      %p109 = scmp.eq.s32.totalorder %s20, 0
      %p110 = por %p108, %p109
      %s112 = sadd.s32 %s111, 1
      %p115 = scmp.eq.s32.totalorder %s14, 1
      %p116 = scmp.ne.s32.totalorder %s111, %s113
      %p117 = scmp.eq.s32.totalorder %s14, 0
      %p118 = por %p116, %p117
      %p119 = scmp.ne.s32.totalorder %s111, %s113
      %p120 = scmp.eq.s32.totalorder %s19, 1
      %p121 = por %p119, %p120
      %p122 = scmp.ne.s32.totalorder %s113, %s114
      %p123 = scmp.eq.s32.totalorder %s19, 0
      %p124 = por %p122, %p123
      %p125 = scmp.ne.s32.totalorder %s113, %s114
      %p126 = scmp.eq.s32.totalorder %s20, 1
      %p127 = por %p125, %p126
      %p129 = scmp.ne.s32.totalorder %s114, %s128
      %p130 = scmp.eq.s32.totalorder %s20, 0
      %p131 = por %p129, %p130
      %s132 = ssub.s32 %s14, %s21
      %p133 = scmp.eq.s32.totalorder %s132, 0
      %s135 = sadd.s32 %s134, 1
      %s136 = scalar_select %p133, %s134, %s135
      %p139 = pneg %p133
      %p140 = scmp.eq.s32.totalorder %s14, 1
      %p141 = por %p139, %p140
      %p142 = scmp.ne.s32.totalorder %s134, %s137
      %p143 = scmp.eq.s32.totalorder %s14, 0
      %p144 = por %p142, %p143
      %p145 = scmp.ne.s32.totalorder %s134, %s137
      %p146 = scmp.eq.s32.totalorder %s19, 1
      %p147 = por %p145, %p146
      %p148 = scmp.ne.s32.totalorder %s137, %s138
      %p149 = scmp.eq.s32.totalorder %s19, 0
      %p150 = por %p148, %p149
      %p151 = scmp.ne.s32.totalorder %s137, %s138
      %p152 = scmp.eq.s32.totalorder %s20, 1
      %p153 = por %p151, %p152
      %p155 = scmp.ne.s32.totalorder %s138, %s154
      %p156 = scmp.eq.s32.totalorder %s20, 0
      %p157 = por %p155, %p156
      %p158 = scmp.le.s32.totalorder 1, %s14
      %p159 = scmp.lt.s32.totalorder %s14, 3
      %p160 = pnand %p158, %p159
      %p161 = pneg %p160
      // Predicated region
      $region9: #{tpu_custom_call.1} parent=5 // pred_check
        _
      $region10: #{tpu_custom_call.1} parent=5 // pred_check_branch
        %163 = sbr.rel (%p160) target = $region12
      $region11: #{tpu_custom_call.1} parent=5 // pred_region
        %s164 = ssub.s32 %s14, 1
        // Predicated region
        $region13: #{tpu_custom_call.1} parent=11 // pred_check
          %p165 = pneg %p61
        $region14: #{tpu_custom_call.1} parent=11 // pred_check_branch
          %167 = sbr.rel (%p165) target = $region16
        $region15: #{tpu_custom_call.1} parent=11 // pred_region
          _
        $region16: #{tpu_custom_call.1} parent=11 // pred_fallthru
          _
        // Predicated region
        $region17: #{tpu_custom_call.1} parent=11 // pred_check
          %p168 = pneg %p82
        $region18: #{tpu_custom_call.1} parent=11 // pred_check_branch
          %170 = sbr.rel (%p168) target = $region20
        $region19: #{tpu_custom_call.1} parent=11 // pred_region
          _
        $region20: #{tpu_custom_call.1} parent=11 // pred_fallthru
          _
        // Predicated region
        $region21: #{tpu_custom_call.1} parent=11 // pred_check
          %p171 = pneg %p103
        $region22: #{tpu_custom_call.1} parent=11 // pred_check_branch
          %173 = sbr.rel (%p171) target = $region24
        $region23: #{tpu_custom_call.1} parent=11 // pred_region
          _
        $region24: #{tpu_custom_call.1} parent=11 // pred_fallthru
          _
        // Predicated region
        $region25: #{tpu_custom_call.1} parent=11 // pred_check
          %p174 = pneg %p124
        $region26: #{tpu_custom_call.1} parent=11 // pred_check_branch
          %176 = sbr.rel (%p174) target = $region28
        $region27: #{tpu_custom_call.1} parent=11 // pred_region
          _
        $region28: #{tpu_custom_call.1} parent=11 // pred_fallthru
          _
      $region12: #{tpu_custom_call.1} parent=5 // pred_fallthru
        _
      %p177 = scmp.lt.s32.totalorder %s14, 2
      // Predicated region
      $region29: #{tpu_custom_call.1} parent=5 // pred_check
        %p178 = pneg %p177
      $region30: #{tpu_custom_call.1} parent=5 // pred_check_branch
        %180 = sbr.rel (%p178) target = $region32
      $region31: #{tpu_custom_call.1} parent=5 // pred_region
        // Predicated region
        $region33: #{tpu_custom_call.1} parent=31 // pred_check
          %p181 = pneg %p34
        $region34: #{tpu_custom_call.1} parent=31 // pred_check_branch
          %183 = sbr.rel (%p181) target = $region36
        $region35: #{tpu_custom_call.1} parent=31 // pred_region
          %p184 = scmp.lt.s32.totalorder %s14, 1
          %s185 = scalar_select %p184, %s14, 1
          %s186 = smul.addr %s185, 4
          %s187 = smul.addr %s186, 8
          %s188 = scalar_lea.vmem %s0, %s187
        $region36: #{tpu_custom_call.1} parent=31 // pred_fallthru
          _
      $region32: #{tpu_custom_call.1} parent=5 // pred_fallthru
        _
      %p189 = scmp.le.s32.totalorder 1, %s14
      %p190 = scmp.lt.s32.totalorder %s14, 3
      %p191 = pnand %p189, %p190
      %p192 = pneg %p191
      // Predicated region
      $region37: #{tpu_custom_call.1} parent=5 // pred_check
        _
      $region38: #{tpu_custom_call.1} parent=5 // pred_check_branch
        %194 = sbr.rel (%p191) target = $region40
      $region39: #{tpu_custom_call.1} parent=5 // pred_region
        %s195 = ssub.s32 %s14, 1
        %p196 = scmp.lt.s32.totalorder %s19, 1
        %s197 = scalar_select %p196, %s19, 1
        %s198 = smul.addr %s197, 4
        %s199 = smul.addr %s198, 8
        %s200 = scalar_lea.vmem %s0, %s199
        %p201 = pneg %p40
        %p202 = pneg %p37
        %p203 = pneg %p61
        %p204 = pneg %p58
        %p205 = pneg %p82
        %p206 = pneg %p79
        %p207 = pneg %p103
        %p208 = pneg %p100
        %p209 = pneg %p124
        %p210 = pneg %p121
        %p211 = pneg %p150
        %p212 = pneg %p147
        %s213 = sand.u32 %s137, 1
        %s214 = scalar_lea.sflag [#allocation4], %s213
        %s215 = sand.u32 %s137, 1
        %s216 = smul.addr %s215, 16
        %s217 = scalar_lea.vmem [#allocation3], %s216
        %p218 = scmp.lt.s32.totalorder %s19, 1
        %s219 = scalar_select %p218, %s19, 1
        %s220 = smul.addr %s219, 4
        %s221 = smul.addr %s220, 8
        %s222 = scalar_lea.vmem %s0, %s221
        %v223 = vld [vmem:[%s222] sm:$0xff]
        %v224 = vld [vmem:[%s222 + $0x8] sm:$0xff]
        %v225 = vld [vmem:[%s222 + $0x10] sm:$0xff]
        %v226 = vld [vmem:[%s222 + $0x18] sm:$0xff]
        %v227 = vld [vmem:[%s1] sm:$0xff]
        %vm228 = vcmask 64512
        %v230 = vsel %vm228, %v223, 0
        %v233 = vsel %vm228, %v224, 0
        %v236 = vsel %vm228, %v225, 0
        %v239 = vsel %vm228, %v226, 0
        %241 = vmatprep.subr.mxu0 0.0
        %v242 = vand.u32 %v227, 4294901760
        %243 = vmatpush1.msra.mxu0 %v242
        %244 = vmatprep.subr.mxu0 0.0
        %245 = vmatpush1.msra.mxu0 0.0
        %246 = vmatprep.subr.mxu0 0.0
        %247 = vmatpush1.msra.mxu0 0.0
        %248 = vmatprep.subr.mxu0 0.0
        %249 = vmatpush1.msra.mxu0 0.0
        %250 = vmatprep.subr.mxu0 0.0
        %251 = vmatpush1.msra.mxu0 0.0
        %252 = vmatprep.subr.mxu0 0.0
        %253 = vmatpush1.msra.mxu0 0.0
        %254 = vmatprep.subr.mxu0 0.0
        %255 = vmatpush1.msra.mxu0 0.0
        %256 = vmatprep.subr.mxu0 0.0
        %257 = vmatpush1.msra.mxu0 0.0
        %258 = vmatprep.subr.mxu0 0.0
        %259 = vmatpush1.msra.mxu0 0.0
        %260 = vmatprep.subr.mxu0 0.0
        %261 = vmatpush1.msra.mxu0 0.0
        %262 = vmatprep.subr.mxu0 0.0
        %263 = vmatpush1.msra.mxu0 0.0
        %264 = vmatprep.subr.mxu0 0.0
        %265 = vmatpush1.msra.mxu0 0.0
        %266 = vmatprep.subr.mxu0 0.0
        %267 = vmatpush1.msra.mxu0 0.0
        %268 = vmatprep.subr.mxu0 0.0
        %269 = vmatpush1.msra.mxu0 0.0
        %270 = vmatprep.subr.mxu0 0.0
        %271 = vmatpush1.msra.mxu0 0.0
        %272 = vmatprep.subr.mxu0 0.0
        %273 = vmatpush1.msra.mxu0 0.0
        %274 = vmatprep.subr.mxu0 0.0
        %275 = vmatpush1.msra.mxu0 0.0
        %276 = vmatprep.subr.mxu0 0.0
        %277 = vmatpush1.msra.mxu0 0.0
        %278 = vmatprep.subr.mxu0 0.0
        %279 = vmatpush1.msra.mxu0 0.0
        %280 = vmatprep.subr.mxu0 0.0
        %281 = vmatpush1.msra.mxu0 0.0
        %282 = vmatprep.subr.mxu0 0.0
        %283 = vmatpush1.msra.mxu0 0.0
        %284 = vmatprep.subr.mxu0 0.0
        %285 = vmatpush1.msra.mxu0 0.0
        %286 = vmatprep.subr.mxu0 0.0
        %287 = vmatpush1.msra.mxu0 0.0
        %288 = vmatprep.subr.mxu0 0.0
        %289 = vmatpush1.msra.mxu0 0.0
        %290 = vmatprep.subr.mxu0 0.0
        %291 = vmatpush1.msra.mxu0 0.0
        %292 = vmatprep.subr.mxu0 0.0
        %293 = vmatpush1.msra.mxu0 0.0
        %294 = vmatprep.subr.mxu0 0.0
        %295 = vmatpush1.msra.mxu0 0.0
        %296 = vmatprep.subr.mxu0 0.0
        %297 = vmatpush1.msra.mxu0 0.0
        %298 = vmatprep.subr.mxu0 0.0
        %299 = vmatpush1.msra.mxu0 0.0
        %300 = vmatprep.subr.mxu0 0.0
        %301 = vmatpush1.msra.mxu0 0.0
        %302 = vmatprep.subr.mxu0 0.0
        %303 = vmatpush1.msra.mxu0 0.0
        %304 = vmatprep.subr.mxu0 0.0
        %305 = vmatpush1.msra.mxu0 0.0
        %306 = vmatprep.mubr.f32.mxu0 0.0
        %v307 = vand.u32 %v230, 4294901760
        %v308 = vsub.f32 %v230, %v307
        %v309 = vand.u32 %v308, 4294901760
        %v310 = vsub.f32 %v308, %v309
        %v311 = vand.u32 %v310, 4294901760
        %312 = vmatmul.mubr.f32.gmra.mrb[0].mxu0 %v311
        %v313 = vpop.f32.mrb[0].mxu0
        %v314 = vadd.f32 0.0, %v313
        %v315 = vpop.f32.mrb[0].mxu0
        %316 = vmatprep.mubr.f32.mxu0 0.0
        %v317 = vand.u32 %v233, 4294901760
        %v318 = vsub.f32 %v233, %v317
        %v319 = vand.u32 %v318, 4294901760
        %v320 = vsub.f32 %v318, %v319
        %v321 = vand.u32 %v320, 4294901760
        %322 = vmatmul.mubr.f32.gmra.mrb[0].mxu0 %v321
        %v323 = vpop.f32.mrb[0].mxu0
        %v324 = vadd.f32 0.0, %v323
        %v325 = vpop.f32.mrb[0].mxu0
        %326 = vmatprep.mubr.f32.mxu0 0.0
        %v327 = vand.u32 %v236, 4294901760
        %v328 = vsub.f32 %v236, %v327
        %v329 = vand.u32 %v328, 4294901760
        %v330 = vsub.f32 %v328, %v329
        %v331 = vand.u32 %v330, 4294901760
        %332 = vmatmul.mubr.f32.gmra.mrb[0].mxu0 %v331
        %v333 = vpop.f32.mrb[0].mxu0
        %v334 = vadd.f32 0.0, %v333
        %v335 = vpop.f32.mrb[0].mxu0
        %336 = vmatprep.mubr.f32.mxu0 0.0
        %v337 = vand.u32 %v239, 4294901760
        %v338 = vsub.f32 %v239, %v337
        %v339 = vand.u32 %v338, 4294901760
        %v340 = vsub.f32 %v338, %v339
        %v341 = vand.u32 %v340, 4294901760
        %342 = vmatmul.mubr.f32.gmra.mrb[0].mxu0 %v341
        %v343 = vpop.f32.mrb[0].mxu0
        %v344 = vadd.f32 0.0, %v343
        %v345 = vpop.f32.mrb[0].mxu0
        %346 = vdwg.mxu0
        %347 = vmatprep.subr.mxu0 0.0
        %v348 = vand.u32 %v227, 4294901760
        %v349 = vsub.f32 %v227, %v348
        %v350 = vand.u32 %v349, 4294901760
        %v351 = vsub.f32 %v349, %v350
        %v352 = vand.u32 %v351, 4294901760
        %353 = vmatpush1.msra.mxu0 %v352
        %354 = vmatprep.subr.mxu0 0.0
        %355 = vmatpush1.msra.mxu0 0.0
        %356 = vmatprep.subr.mxu0 0.0
        %357 = vmatpush1.msra.mxu0 0.0
        %358 = vmatprep.subr.mxu0 0.0
        %359 = vmatpush1.msra.mxu0 0.0
        %360 = vmatprep.subr.mxu0 0.0
        %361 = vmatpush1.msra.mxu0 0.0
        %362 = vmatprep.subr.mxu0 0.0
        %363 = vmatpush1.msra.mxu0 0.0
        %364 = vmatprep.subr.mxu0 0.0
        %365 = vmatpush1.msra.mxu0 0.0
        %366 = vmatprep.subr.mxu0 0.0
        %367 = vmatpush1.msra.mxu0 0.0
        %368 = vmatprep.subr.mxu0 0.0
        %369 = vmatpush1.msra.mxu0 0.0
        %370 = vmatprep.subr.mxu0 0.0
        %371 = vmatpush1.msra.mxu0 0.0
        %372 = vmatprep.subr.mxu0 0.0
        %373 = vmatpush1.msra.mxu0 0.0
        %374 = vmatprep.subr.mxu0 0.0
        %375 = vmatpush1.msra.mxu0 0.0
        %376 = vmatprep.subr.mxu0 0.0
        %377 = vmatpush1.msra.mxu0 0.0
        %378 = vmatprep.subr.mxu0 0.0
        %379 = vmatpush1.msra.mxu0 0.0
        %380 = vmatprep.subr.mxu0 0.0
        %381 = vmatpush1.msra.mxu0 0.0
        %382 = vmatprep.subr.mxu0 0.0
        %383 = vmatpush1.msra.mxu0 0.0
        %384 = vmatprep.subr.mxu0 0.0
        %385 = vmatpush1.msra.mxu0 0.0
        %386 = vmatprep.subr.mxu0 0.0
        %387 = vmatpush1.msra.mxu0 0.0
        %388 = vmatprep.subr.mxu0 0.0
        %389 = vmatpush1.msra.mxu0 0.0
        %390 = vmatprep.subr.mxu0 0.0
        %391 = vmatpush1.msra.mxu0 0.0
        %392 = vmatprep.subr.mxu0 0.0
        %393 = vmatpush1.msra.mxu0 0.0
        %394 = vmatprep.subr.mxu0 0.0
        %395 = vmatpush1.msra.mxu0 0.0
        %396 = vmatprep.subr.mxu0 0.0
        %397 = vmatpush1.msra.mxu0 0.0
        %398 = vmatprep.subr.mxu0 0.0
        %399 = vmatpush1.msra.mxu0 0.0
        %400 = vmatprep.subr.mxu0 0.0
        %401 = vmatpush1.msra.mxu0 0.0
        %402 = vmatprep.subr.mxu0 0.0
        %403 = vmatpush1.msra.mxu0 0.0
        %404 = vmatprep.subr.mxu0 0.0
        %405 = vmatpush1.msra.mxu0 0.0
        %406 = vmatprep.subr.mxu0 0.0
        %407 = vmatpush1.msra.mxu0 0.0
        %408 = vmatprep.subr.mxu0 0.0
        %409 = vmatpush1.msra.mxu0 0.0
        %410 = vmatprep.subr.mxu0 0.0
        %411 = vmatpush1.msra.mxu0 0.0
        %412 = vmatprep.subr.mxu0 0.0
        %413 = vmatpush1.msra.mxu0 0.0
        %414 = vmatprep.subr.mxu0 0.0
        %415 = vmatpush1.msra.mxu0 0.0
        %416 = vmatprep.mubr.f32.mxu0 0.0
        %v417 = vand.u32 %v230, 4294901760
        %418 = vmatmul.mubr.f32.gmra.mrb[0].mxu0 %v417
        %v419 = vpop.f32.mrb[0].mxu0
        %v420 = vadd.f32 %v314, %v419
        %v421 = vpop.f32.mrb[0].mxu0
        %422 = vmatprep.mubr.f32.mxu0 0.0
        %v423 = vand.u32 %v233, 4294901760
        %424 = vmatmul.mubr.f32.gmra.mrb[0].mxu0 %v423
        %v425 = vpop.f32.mrb[0].mxu0
        %v426 = vadd.f32 %v324, %v425
        %v427 = vpop.f32.mrb[0].mxu0
        %428 = vmatprep.mubr.f32.mxu0 0.0
        %v429 = vand.u32 %v236, 4294901760
        %430 = vmatmul.mubr.f32.gmra.mrb[0].mxu0 %v429
        %v431 = vpop.f32.mrb[0].mxu0
        %v432 = vadd.f32 %v334, %v431
        %v433 = vpop.f32.mrb[0].mxu0
        %434 = vmatprep.mubr.f32.mxu0 0.0
        %v435 = vand.u32 %v239, 4294901760
        %436 = vmatmul.mubr.f32.gmra.mrb[0].mxu0 %v435
        %v437 = vpop.f32.mrb[0].mxu0
        %v438 = vadd.f32 %v344, %v437
        %v439 = vpop.f32.mrb[0].mxu0
        %440 = vdwg.mxu0
        %441 = vmatprep.subr.mxu0 0.0
        %v442 = vand.u32 %v227, 4294901760
        %v443 = vsub.f32 %v227, %v442
        %444 = vmatpush1.msra.mxu0 %v443
        %445 = vmatprep.subr.mxu0 0.0
        %446 = vmatpush1.msra.mxu0 0.0
        %447 = vmatprep.subr.mxu0 0.0
        %448 = vmatpush1.msra.mxu0 0.0
        %449 = vmatprep.subr.mxu0 0.0
        %450 = vmatpush1.msra.mxu0 0.0
        %451 = vmatprep.subr.mxu0 0.0
        %452 = vmatpush1.msra.mxu0 0.0
        %453 = vmatprep.subr.mxu0 0.0
        %454 = vmatpush1.msra.mxu0 0.0
        %455 = vmatprep.subr.mxu0 0.0
        %456 = vmatpush1.msra.mxu0 0.0
        %457 = vmatprep.subr.mxu0 0.0
        %458 = vmatpush1.msra.mxu0 0.0
        %459 = vmatprep.subr.mxu0 0.0
        %460 = vmatpush1.msra.mxu0 0.0
        %461 = vmatprep.subr.mxu0 0.0
        %462 = vmatpush1.msra.mxu0 0.0
        %463 = vmatprep.subr.mxu0 0.0
        %464 = vmatpush1.msra.mxu0 0.0
        %465 = vmatprep.subr.mxu0 0.0
        %466 = vmatpush1.msra.mxu0 0.0
        %467 = vmatprep.subr.mxu0 0.0
        %468 = vmatpush1.msra.mxu0 0.0
        %469 = vmatprep.subr.mxu0 0.0
        %470 = vmatpush1.msra.mxu0 0.0
        %471 = vmatprep.subr.mxu0 0.0
        %472 = vmatpush1.msra.mxu0 0.0
        %473 = vmatprep.subr.mxu0 0.0
        %474 = vmatpush1.msra.mxu0 0.0
        %475 = vmatprep.subr.mxu0 0.0
        %476 = vmatpush1.msra.mxu0 0.0
        %477 = vmatprep.subr.mxu0 0.0
        %478 = vmatpush1.msra.mxu0 0.0
        %479 = vmatprep.subr.mxu0 0.0
        %480 = vmatpush1.msra.mxu0 0.0
        %481 = vmatprep.subr.mxu0 0.0
        %482 = vmatpush1.msra.mxu0 0.0
        %483 = vmatprep.subr.mxu0 0.0
        %484 = vmatpush1.msra.mxu0 0.0
        %485 = vmatprep.subr.mxu0 0.0
        %486 = vmatpush1.msra.mxu0 0.0
        %487 = vmatprep.subr.mxu0 0.0
        %488 = vmatpush1.msra.mxu0 0.0
        %489 = vmatprep.subr.mxu0 0.0
        %490 = vmatpush1.msra.mxu0 0.0
        %491 = vmatprep.subr.mxu0 0.0
        %492 = vmatpush1.msra.mxu0 0.0
        %493 = vmatprep.subr.mxu0 0.0
        %494 = vmatpush1.msra.mxu0 0.0
        %495 = vmatprep.subr.mxu0 0.0
        %496 = vmatpush1.msra.mxu0 0.0
        %497 = vmatprep.subr.mxu0 0.0
        %498 = vmatpush1.msra.mxu0 0.0
        %499 = vmatprep.subr.mxu0 0.0
        %500 = vmatpush1.msra.mxu0 0.0
        %501 = vmatprep.subr.mxu0 0.0
        %502 = vmatpush1.msra.mxu0 0.0
        %503 = vmatprep.subr.mxu0 0.0
        %504 = vmatpush1.msra.mxu0 0.0
        %505 = vmatprep.subr.mxu0 0.0
        %506 = vmatpush1.msra.mxu0 0.0
        %507 = vmatprep.mubr.f32.mxu0 0.0
        %v508 = vand.u32 %v230, 4294901760
        %v509 = vsub.f32 %v230, %v508
        %510 = vmatmul.mubr.f32.gmra.mrb[0].mxu0 %v509
        %v511 = vpop.f32.mrb[0].mxu0
        %v512 = vadd.f32 %v420, %v511
        %v513 = vpop.f32.mrb[0].mxu0
        %514 = vmatprep.mubr.f32.mxu0 0.0
        %v515 = vand.u32 %v233, 4294901760
        %v516 = vsub.f32 %v233, %v515
        %517 = vmatmul.mubr.f32.gmra.mrb[0].mxu0 %v516
        %v518 = vpop.f32.mrb[0].mxu0
        %v519 = vadd.f32 %v426, %v518
        %v520 = vpop.f32.mrb[0].mxu0
        %521 = vmatprep.mubr.f32.mxu0 0.0
        %v522 = vand.u32 %v236, 4294901760
        %v523 = vsub.f32 %v236, %v522
        %524 = vmatmul.mubr.f32.gmra.mrb[0].mxu0 %v523
        %v525 = vpop.f32.mrb[0].mxu0
        %v526 = vadd.f32 %v432, %v525
        %v527 = vpop.f32.mrb[0].mxu0
        %528 = vmatprep.mubr.f32.mxu0 0.0
        %v529 = vand.u32 %v239, 4294901760
        %v530 = vsub.f32 %v239, %v529
        %531 = vmatmul.mubr.f32.gmra.mrb[0].mxu0 %v530
        %v532 = vpop.f32.mrb[0].mxu0
        %v533 = vadd.f32 %v438, %v532
        %v534 = vpop.f32.mrb[0].mxu0
        %535 = vdwg.mxu0
        %536 = vmatprep.subr.mxu0 0.0
        %v537 = vand.u32 %v227, 4294901760
        %538 = vmatpush1.msra.mxu0 %v537
        %539 = vmatprep.subr.mxu0 0.0
        %540 = vmatpush1.msra.mxu0 0.0
        %541 = vmatprep.subr.mxu0 0.0
        %542 = vmatpush1.msra.mxu0 0.0
        %543 = vmatprep.subr.mxu0 0.0
        %544 = vmatpush1.msra.mxu0 0.0
        %545 = vmatprep.subr.mxu0 0.0
        %546 = vmatpush1.msra.mxu0 0.0
        %547 = vmatprep.subr.mxu0 0.0
        %548 = vmatpush1.msra.mxu0 0.0
        %549 = vmatprep.subr.mxu0 0.0
        %550 = vmatpush1.msra.mxu0 0.0
        %551 = vmatprep.subr.mxu0 0.0
        %552 = vmatpush1.msra.mxu0 0.0
        %553 = vmatprep.subr.mxu0 0.0
        %554 = vmatpush1.msra.mxu0 0.0
        %555 = vmatprep.subr.mxu0 0.0
        %556 = vmatpush1.msra.mxu0 0.0
        %557 = vmatprep.subr.mxu0 0.0
        %558 = vmatpush1.msra.mxu0 0.0
        %559 = vmatprep.subr.mxu0 0.0
        %560 = vmatpush1.msra.mxu0 0.0
        %561 = vmatprep.subr.mxu0 0.0
        %562 = vmatpush1.msra.mxu0 0.0
        %563 = vmatprep.subr.mxu0 0.0
        %564 = vmatpush1.msra.mxu0 0.0
        %565 = vmatprep.subr.mxu0 0.0
        %566 = vmatpush1.msra.mxu0 0.0
        %567 = vmatprep.subr.mxu0 0.0
        %568 = vmatpush1.msra.mxu0 0.0
        %569 = vmatprep.subr.mxu0 0.0
        %570 = vmatpush1.msra.mxu0 0.0
        %571 = vmatprep.subr.mxu0 0.0
        %572 = vmatpush1.msra.mxu0 0.0
        %573 = vmatprep.subr.mxu0 0.0
        %574 = vmatpush1.msra.mxu0 0.0
        %575 = vmatprep.subr.mxu0 0.0
        %576 = vmatpush1.msra.mxu0 0.0
        %577 = vmatprep.subr.mxu0 0.0
        %578 = vmatpush1.msra.mxu0 0.0
        %579 = vmatprep.subr.mxu0 0.0
        %580 = vmatpush1.msra.mxu0 0.0
        %581 = vmatprep.subr.mxu0 0.0
        %582 = vmatpush1.msra.mxu0 0.0
        %583 = vmatprep.subr.mxu0 0.0
        %584 = vmatpush1.msra.mxu0 0.0
        %585 = vmatprep.subr.mxu0 0.0
        %586 = vmatpush1.msra.mxu0 0.0
        %587 = vmatprep.subr.mxu0 0.0
        %588 = vmatpush1.msra.mxu0 0.0
        %589 = vmatprep.subr.mxu0 0.0
        %590 = vmatpush1.msra.mxu0 0.0
        %591 = vmatprep.subr.mxu0 0.0
        %592 = vmatpush1.msra.mxu0 0.0
        %593 = vmatprep.subr.mxu0 0.0
        %594 = vmatpush1.msra.mxu0 0.0
        %595 = vmatprep.subr.mxu0 0.0
        %596 = vmatpush1.msra.mxu0 0.0
        %597 = vmatprep.subr.mxu0 0.0
        %598 = vmatpush1.msra.mxu0 0.0
        %599 = vmatprep.subr.mxu0 0.0
        %600 = vmatpush1.msra.mxu0 0.0
        %601 = vmatprep.mubr.f32.mxu0 0.0
        %v602 = vand.u32 %v230, 4294901760
        %v603 = vsub.f32 %v230, %v602
        %v604 = vand.u32 %v603, 4294901760
        %605 = vmatmul.mubr.f32.gmra.mrb[0].mxu0 %v604
        %v606 = vpop.f32.mrb[0].mxu0
        %v607 = vadd.f32 %v512, %v606
        %v608 = vpop.f32.mrb[0].mxu0
        %609 = vmatprep.mubr.f32.mxu0 0.0
        %v610 = vand.u32 %v233, 4294901760
        %v611 = vsub.f32 %v233, %v610
        %v612 = vand.u32 %v611, 4294901760
        %613 = vmatmul.mubr.f32.gmra.mrb[0].mxu0 %v612
        %v614 = vpop.f32.mrb[0].mxu0
        %v615 = vadd.f32 %v519, %v614
        %v616 = vpop.f32.mrb[0].mxu0
        %617 = vmatprep.mubr.f32.mxu0 0.0
        %v618 = vand.u32 %v236, 4294901760
        %v619 = vsub.f32 %v236, %v618
        %v620 = vand.u32 %v619, 4294901760
        %621 = vmatmul.mubr.f32.gmra.mrb[0].mxu0 %v620
        %v622 = vpop.f32.mrb[0].mxu0
        %v623 = vadd.f32 %v526, %v622
        %v624 = vpop.f32.mrb[0].mxu0
        %625 = vmatprep.mubr.f32.mxu0 0.0
        %v626 = vand.u32 %v239, 4294901760
        %v627 = vsub.f32 %v239, %v626
        %v628 = vand.u32 %v627, 4294901760
        %629 = vmatmul.mubr.f32.gmra.mrb[0].mxu0 %v628
        %v630 = vpop.f32.mrb[0].mxu0
        %v631 = vadd.f32 %v533, %v630
        %v632 = vpop.f32.mrb[0].mxu0
        %633 = vdwg.mxu0
        %634 = vmatprep.subr.mxu0 0.0
        %v635 = vand.u32 %v227, 4294901760
        %v636 = vsub.f32 %v227, %v635
        %v637 = vand.u32 %v636, 4294901760
        %638 = vmatpush1.msra.mxu0 %v637
        %639 = vmatprep.subr.mxu0 0.0
        %640 = vmatpush1.msra.mxu0 0.0
        %641 = vmatprep.subr.mxu0 0.0
        %642 = vmatpush1.msra.mxu0 0.0
        %643 = vmatprep.subr.mxu0 0.0
        %644 = vmatpush1.msra.mxu0 0.0
        %645 = vmatprep.subr.mxu0 0.0
        %646 = vmatpush1.msra.mxu0 0.0
        %647 = vmatprep.subr.mxu0 0.0
        %648 = vmatpush1.msra.mxu0 0.0
        %649 = vmatprep.subr.mxu0 0.0
        %650 = vmatpush1.msra.mxu0 0.0
        %651 = vmatprep.subr.mxu0 0.0
        %652 = vmatpush1.msra.mxu0 0.0
        %653 = vmatprep.subr.mxu0 0.0
        %654 = vmatpush1.msra.mxu0 0.0
        %655 = vmatprep.subr.mxu0 0.0
        %656 = vmatpush1.msra.mxu0 0.0
        %657 = vmatprep.subr.mxu0 0.0
        %658 = vmatpush1.msra.mxu0 0.0
        %659 = vmatprep.subr.mxu0 0.0
        %660 = vmatpush1.msra.mxu0 0.0
        %661 = vmatprep.subr.mxu0 0.0
        %662 = vmatpush1.msra.mxu0 0.0
        %663 = vmatprep.subr.mxu0 0.0
        %664 = vmatpush1.msra.mxu0 0.0
        %665 = vmatprep.subr.mxu0 0.0
        %666 = vmatpush1.msra.mxu0 0.0
        %667 = vmatprep.subr.mxu0 0.0
        %668 = vmatpush1.msra.mxu0 0.0
        %669 = vmatprep.subr.mxu0 0.0
        %670 = vmatpush1.msra.mxu0 0.0
        %671 = vmatprep.subr.mxu0 0.0
        %672 = vmatpush1.msra.mxu0 0.0
        %673 = vmatprep.subr.mxu0 0.0
        %674 = vmatpush1.msra.mxu0 0.0
        %675 = vmatprep.subr.mxu0 0.0
        %676 = vmatpush1.msra.mxu0 0.0
        %677 = vmatprep.subr.mxu0 0.0
        %678 = vmatpush1.msra.mxu0 0.0
        %679 = vmatprep.subr.mxu0 0.0
        %680 = vmatpush1.msra.mxu0 0.0
        %681 = vmatprep.subr.mxu0 0.0
        %682 = vmatpush1.msra.mxu0 0.0
        %683 = vmatprep.subr.mxu0 0.0
        %684 = vmatpush1.msra.mxu0 0.0
        %685 = vmatprep.subr.mxu0 0.0
        %686 = vmatpush1.msra.mxu0 0.0
        %687 = vmatprep.subr.mxu0 0.0
        %688 = vmatpush1.msra.mxu0 0.0
        %689 = vmatprep.subr.mxu0 0.0
        %690 = vmatpush1.msra.mxu0 0.0
        %691 = vmatprep.subr.mxu0 0.0
        %692 = vmatpush1.msra.mxu0 0.0
        %693 = vmatprep.subr.mxu0 0.0
        %694 = vmatpush1.msra.mxu0 0.0
        %695 = vmatprep.subr.mxu0 0.0
        %696 = vmatpush1.msra.mxu0 0.0
        %697 = vmatprep.subr.mxu0 0.0
        %698 = vmatpush1.msra.mxu0 0.0
        %699 = vmatprep.subr.mxu0 0.0
        %700 = vmatpush1.msra.mxu0 0.0
        %701 = vmatprep.mubr.f32.mxu0 0.0
        %v702 = vand.u32 %v230, 4294901760
        %703 = vmatmul.mubr.f32.gmra.mrb[0].mxu0 %v702
        %v704 = vpop.f32.mrb[0].mxu0
        %v705 = vadd.f32 %v607, %v704
        %v706 = vpop.f32.mrb[0].mxu0
        %707 = vmatprep.mubr.f32.mxu0 0.0
        %v708 = vand.u32 %v233, 4294901760
        %709 = vmatmul.mubr.f32.gmra.mrb[0].mxu0 %v708
        %v710 = vpop.f32.mrb[0].mxu0
        %v711 = vadd.f32 %v615, %v710
        %v712 = vpop.f32.mrb[0].mxu0
        %713 = vmatprep.mubr.f32.mxu0 0.0
        %v714 = vand.u32 %v236, 4294901760
        %715 = vmatmul.mubr.f32.gmra.mrb[0].mxu0 %v714
        %v716 = vpop.f32.mrb[0].mxu0
        %v717 = vadd.f32 %v623, %v716
        %v718 = vpop.f32.mrb[0].mxu0
        %719 = vmatprep.mubr.f32.mxu0 0.0
        %v720 = vand.u32 %v239, 4294901760
        %721 = vmatmul.mubr.f32.gmra.mrb[0].mxu0 %v720
        %v722 = vpop.f32.mrb[0].mxu0
        %v723 = vadd.f32 %v631, %v722
        %v724 = vpop.f32.mrb[0].mxu0
        %725 = vdwg.mxu0
        %726 = vmatprep.subr.mxu0 0.0
        %v727 = vand.u32 %v227, 4294901760
        %728 = vmatpush1.msra.mxu0 %v727
        %729 = vmatprep.subr.mxu0 0.0
        %730 = vmatpush1.msra.mxu0 0.0
        %731 = vmatprep.subr.mxu0 0.0
        %732 = vmatpush1.msra.mxu0 0.0
        %733 = vmatprep.subr.mxu0 0.0
        %734 = vmatpush1.msra.mxu0 0.0
        %735 = vmatprep.subr.mxu0 0.0
        %736 = vmatpush1.msra.mxu0 0.0
        %737 = vmatprep.subr.mxu0 0.0
        %738 = vmatpush1.msra.mxu0 0.0
        %739 = vmatprep.subr.mxu0 0.0
        %740 = vmatpush1.msra.mxu0 0.0
        %741 = vmatprep.subr.mxu0 0.0
        %742 = vmatpush1.msra.mxu0 0.0
        %743 = vmatprep.subr.mxu0 0.0
        %744 = vmatpush1.msra.mxu0 0.0
        %745 = vmatprep.subr.mxu0 0.0
        %746 = vmatpush1.msra.mxu0 0.0
        %747 = vmatprep.subr.mxu0 0.0
        %748 = vmatpush1.msra.mxu0 0.0
        %749 = vmatprep.subr.mxu0 0.0
        %750 = vmatpush1.msra.mxu0 0.0
        %751 = vmatprep.subr.mxu0 0.0
        %752 = vmatpush1.msra.mxu0 0.0
        %753 = vmatprep.subr.mxu0 0.0
        %754 = vmatpush1.msra.mxu0 0.0
        %755 = vmatprep.subr.mxu0 0.0
        %756 = vmatpush1.msra.mxu0 0.0
        %757 = vmatprep.subr.mxu0 0.0
        %758 = vmatpush1.msra.mxu0 0.0
        %759 = vmatprep.subr.mxu0 0.0
        %760 = vmatpush1.msra.mxu0 0.0
        %761 = vmatprep.subr.mxu0 0.0
        %762 = vmatpush1.msra.mxu0 0.0
        %763 = vmatprep.subr.mxu0 0.0
        %764 = vmatpush1.msra.mxu0 0.0
        %765 = vmatprep.subr.mxu0 0.0
        %766 = vmatpush1.msra.mxu0 0.0
        %767 = vmatprep.subr.mxu0 0.0
        %768 = vmatpush1.msra.mxu0 0.0
        %769 = vmatprep.subr.mxu0 0.0
        %770 = vmatpush1.msra.mxu0 0.0
        %771 = vmatprep.subr.mxu0 0.0
        %772 = vmatpush1.msra.mxu0 0.0
        %773 = vmatprep.subr.mxu0 0.0
        %774 = vmatpush1.msra.mxu0 0.0
        %775 = vmatprep.subr.mxu0 0.0
        %776 = vmatpush1.msra.mxu0 0.0
        %777 = vmatprep.subr.mxu0 0.0
        %778 = vmatpush1.msra.mxu0 0.0
        %779 = vmatprep.subr.mxu0 0.0
        %780 = vmatpush1.msra.mxu0 0.0
        %781 = vmatprep.subr.mxu0 0.0
        %782 = vmatpush1.msra.mxu0 0.0
        %783 = vmatprep.subr.mxu0 0.0
        %784 = vmatpush1.msra.mxu0 0.0
        %785 = vmatprep.subr.mxu0 0.0
        %786 = vmatpush1.msra.mxu0 0.0
        %787 = vmatprep.subr.mxu0 0.0
        %788 = vmatpush1.msra.mxu0 0.0
        %789 = vmatprep.subr.mxu0 0.0
        %790 = vmatpush1.msra.mxu0 0.0
        %791 = vmatprep.mubr.f32.mxu0 0.0
        %v792 = vand.u32 %v230, 4294901760
        %793 = vmatmul.mubr.f32.gmra.mrb[0].mxu0 %v792
        %v794 = vpop.f32.mrb[0].mxu0
        %v795 = vadd.f32 %v705, %v794
        %v796 = vpop.f32.mrb[0].mxu0
        %797 = vmatprep.mubr.f32.mxu0 0.0
        %v798 = vand.u32 %v233, 4294901760
        %799 = vmatmul.mubr.f32.gmra.mrb[0].mxu0 %v798
        %v800 = vpop.f32.mrb[0].mxu0
        %v801 = vadd.f32 %v711, %v800
        %v802 = vpop.f32.mrb[0].mxu0
        %803 = vmatprep.mubr.f32.mxu0 0.0
        %v804 = vand.u32 %v236, 4294901760
        %805 = vmatmul.mubr.f32.gmra.mrb[0].mxu0 %v804
        %v806 = vpop.f32.mrb[0].mxu0
        %v807 = vadd.f32 %v717, %v806
        %v808 = vpop.f32.mrb[0].mxu0
        %809 = vmatprep.mubr.f32.mxu0 0.0
        %v810 = vand.u32 %v239, 4294901760
        %811 = vmatmul.mubr.f32.gmra.mrb[0].mxu0 %v810
        %v812 = vpop.f32.mrb[0].mxu0
        %v813 = vadd.f32 %v723, %v812
        %v814 = vpop.f32.mrb[0].mxu0
        %815 = vdwg.mxu0
        %v816 = vld [vmem:[%s2] sm:$0xff]
        %v817 = vld [vmem:[%s2 + $0x8] sm:$0xff]
        %v819 = vsel %vm228, %v816, 0
        %v822 = vsel %vm228, %v817, 0
        %824 = vmatprep.subr.mxu0 0.0
        %v825 = vand.u32 %v795, 4294901760
        %826 = vmatpush1.msra.mxu0 %v825
        %827 = vmatprep.subr.mxu0 0.0
        %828 = vmatpush1.msra.mxu0 0.0
        %829 = vmatprep.subr.mxu0 0.0
        %830 = vmatpush1.msra.mxu0 0.0
        %831 = vmatprep.subr.mxu0 0.0
        %832 = vmatpush1.msra.mxu0 0.0
        %833 = vmatprep.subr.mxu0 0.0
        %834 = vmatpush1.msra.mxu0 0.0
        %835 = vmatprep.subr.mxu0 0.0
        %836 = vmatpush1.msra.mxu0 0.0
        %837 = vmatprep.subr.mxu0 0.0
        %838 = vmatpush1.msra.mxu0 0.0
        %839 = vmatprep.subr.mxu0 0.0
        %840 = vmatpush1.msra.mxu0 0.0
        %841 = vmatprep.subr.mxu0 0.0
        %842 = vmatpush1.msra.mxu0 0.0
        %843 = vmatprep.subr.mxu0 0.0
        %844 = vmatpush1.msra.mxu0 0.0
        %845 = vmatprep.subr.mxu0 0.0
        %846 = vmatpush1.msra.mxu0 0.0
        %847 = vmatprep.subr.mxu0 0.0
        %848 = vmatpush1.msra.mxu0 0.0
        %849 = vmatprep.subr.mxu0 0.0
        %850 = vmatpush1.msra.mxu0 0.0
        %851 = vmatprep.subr.mxu0 0.0
        %852 = vmatpush1.msra.mxu0 0.0
        %853 = vmatprep.subr.mxu0 0.0
        %854 = vmatpush1.msra.mxu0 0.0
        %855 = vmatprep.subr.mxu0 0.0
        %856 = vmatpush1.msra.mxu0 0.0
        %857 = vmatprep.subr.mxu0 0.0
        %858 = vmatpush1.msra.mxu0 0.0
        %859 = vmatprep.subr.mxu0 0.0
        %860 = vmatpush1.msra.mxu0 0.0
        %861 = vmatprep.subr.mxu0 0.0
        %862 = vmatpush1.msra.mxu0 0.0
        %863 = vmatprep.subr.mxu0 0.0
        %864 = vmatpush1.msra.mxu0 0.0
        %865 = vmatprep.subr.mxu0 0.0
        %866 = vmatpush1.msra.mxu0 0.0
        %867 = vmatprep.subr.mxu0 0.0
        %868 = vmatpush1.msra.mxu0 0.0
        %869 = vmatprep.subr.mxu0 0.0
        %870 = vmatpush1.msra.mxu0 0.0
        %871 = vmatprep.subr.mxu0 0.0
        %872 = vmatpush1.msra.mxu0 0.0
        %873 = vmatprep.subr.mxu0 0.0
        %874 = vmatpush1.msra.mxu0 0.0
        %875 = vmatprep.subr.mxu0 0.0
        %876 = vmatpush1.msra.mxu0 0.0
        %877 = vmatprep.subr.mxu0 0.0
        %878 = vmatpush1.msra.mxu0 0.0
        %879 = vmatprep.subr.mxu0 0.0
        %880 = vmatpush1.msra.mxu0 0.0
        %881 = vmatprep.subr.mxu0 0.0
        %882 = vmatpush1.msra.mxu0 0.0
        %883 = vmatprep.subr.mxu0 0.0
        %884 = vmatpush1.msra.mxu0 0.0
        %885 = vmatprep.subr.mxu0 0.0
        %886 = vmatpush1.msra.mxu0 0.0
        %887 = vmatprep.subr.mxu0 0.0
        %888 = vmatpush1.msra.mxu0 0.0
        %889 = vmatprep.mubr.f32.mxu0 0.0
        %v890 = vand.u32 %v819, 4294901760
        %v891 = vsub.f32 %v819, %v890
        %v892 = vand.u32 %v891, 4294901760
        %v893 = vsub.f32 %v891, %v892
        %v894 = vand.u32 %v893, 4294901760
        %895 = vmatmul.mubr.f32.gmra.mrb[0].mxu0 %v894
        %v896 = vpop.f32.mrb[0].mxu0
        %v897 = vadd.f32 0.0, %v896
        %v898 = vpop.f32.mrb[0].mxu0
        %899 = vmatprep.mubr.f32.mxu0 0.0
        %v900 = vand.u32 %v822, 4294901760
        %v901 = vsub.f32 %v822, %v900
        %v902 = vand.u32 %v901, 4294901760
        %v903 = vsub.f32 %v901, %v902
        %v904 = vand.u32 %v903, 4294901760
        %905 = vmatmul.mubr.f32.gmra.mrb[0].mxu0 %v904
        %v906 = vpop.f32.mrb[0].mxu0
        %v907 = vadd.f32 0.0, %v906
        %v908 = vpop.f32.mrb[0].mxu0
        %909 = vdwg.mxu0
        %910 = vmatprep.subr.mxu0 0.0
        %v911 = vand.u32 %v795, 4294901760
        %v912 = vsub.f32 %v795, %v911
        %v913 = vand.u32 %v912, 4294901760
        %v914 = vsub.f32 %v912, %v913
        %v915 = vand.u32 %v914, 4294901760
        %916 = vmatpush1.msra.mxu0 %v915
        %917 = vmatprep.subr.mxu0 0.0
        %918 = vmatpush1.msra.mxu0 0.0
        %919 = vmatprep.subr.mxu0 0.0
        %920 = vmatpush1.msra.mxu0 0.0
        %921 = vmatprep.subr.mxu0 0.0
        %922 = vmatpush1.msra.mxu0 0.0
        %923 = vmatprep.subr.mxu0 0.0
        %924 = vmatpush1.msra.mxu0 0.0
        %925 = vmatprep.subr.mxu0 0.0
        %926 = vmatpush1.msra.mxu0 0.0
        %927 = vmatprep.subr.mxu0 0.0
        %928 = vmatpush1.msra.mxu0 0.0
        %929 = vmatprep.subr.mxu0 0.0
        %930 = vmatpush1.msra.mxu0 0.0
        %931 = vmatprep.subr.mxu0 0.0
        %932 = vmatpush1.msra.mxu0 0.0
        %933 = vmatprep.subr.mxu0 0.0
        %934 = vmatpush1.msra.mxu0 0.0
        %935 = vmatprep.subr.mxu0 0.0
        %936 = vmatpush1.msra.mxu0 0.0
        %937 = vmatprep.subr.mxu0 0.0
        %938 = vmatpush1.msra.mxu0 0.0
        %939 = vmatprep.subr.mxu0 0.0
        %940 = vmatpush1.msra.mxu0 0.0
        %941 = vmatprep.subr.mxu0 0.0
        %942 = vmatpush1.msra.mxu0 0.0
        %943 = vmatprep.subr.mxu0 0.0
        %944 = vmatpush1.msra.mxu0 0.0
        %945 = vmatprep.subr.mxu0 0.0
        %946 = vmatpush1.msra.mxu0 0.0
        %947 = vmatprep.subr.mxu0 0.0
        %948 = vmatpush1.msra.mxu0 0.0
        %949 = vmatprep.subr.mxu0 0.0
        %950 = vmatpush1.msra.mxu0 0.0
        %951 = vmatprep.subr.mxu0 0.0
        %952 = vmatpush1.msra.mxu0 0.0
        %953 = vmatprep.subr.mxu0 0.0
        %954 = vmatpush1.msra.mxu0 0.0
        %955 = vmatprep.subr.mxu0 0.0
        %956 = vmatpush1.msra.mxu0 0.0
        %957 = vmatprep.subr.mxu0 0.0
        %958 = vmatpush1.msra.mxu0 0.0
        %959 = vmatprep.subr.mxu0 0.0
        %960 = vmatpush1.msra.mxu0 0.0
        %961 = vmatprep.subr.mxu0 0.0
        %962 = vmatpush1.msra.mxu0 0.0
        %963 = vmatprep.subr.mxu0 0.0
        %964 = vmatpush1.msra.mxu0 0.0
        %965 = vmatprep.subr.mxu0 0.0
        %966 = vmatpush1.msra.mxu0 0.0
        %967 = vmatprep.subr.mxu0 0.0
        %968 = vmatpush1.msra.mxu0 0.0
        %969 = vmatprep.subr.mxu0 0.0
        %970 = vmatpush1.msra.mxu0 0.0
        %971 = vmatprep.subr.mxu0 0.0
        %972 = vmatpush1.msra.mxu0 0.0
        %973 = vmatprep.subr.mxu0 0.0
        %974 = vmatpush1.msra.mxu0 0.0
        %975 = vmatprep.subr.mxu0 0.0
        %976 = vmatpush1.msra.mxu0 0.0
        %977 = vmatprep.subr.mxu0 0.0
        %978 = vmatpush1.msra.mxu0 0.0
        %979 = vmatprep.mubr.f32.mxu0 0.0
        %v980 = vand.u32 %v819, 4294901760
        %981 = vmatmul.mubr.f32.gmra.mrb[0].mxu0 %v980
        %v982 = vpop.f32.mrb[0].mxu0
        %v983 = vadd.f32 %v897, %v982
        %v984 = vpop.f32.mrb[0].mxu0
        %985 = vmatprep.mubr.f32.mxu0 0.0
        %v986 = vand.u32 %v822, 4294901760
        %987 = vmatmul.mubr.f32.gmra.mrb[0].mxu0 %v986
        %v988 = vpop.f32.mrb[0].mxu0
        %v989 = vadd.f32 %v907, %v988
        %v990 = vpop.f32.mrb[0].mxu0
        %991 = vdwg.mxu0
        %992 = vmatprep.subr.mxu0 0.0
        %v993 = vand.u32 %v795, 4294901760
        %v994 = vsub.f32 %v795, %v993
        %995 = vmatpush1.msra.mxu0 %v994
        %996 = vmatprep.subr.mxu0 0.0
        %997 = vmatpush1.msra.mxu0 0.0
        %998 = vmatprep.subr.mxu0 0.0
        %999 = vmatpush1.msra.mxu0 0.0
        %1000 = vmatprep.subr.mxu0 0.0
        %1001 = vmatpush1.msra.mxu0 0.0
        %1002 = vmatprep.subr.mxu0 0.0
        %1003 = vmatpush1.msra.mxu0 0.0
        %1004 = vmatprep.subr.mxu0 0.0
        %1005 = vmatpush1.msra.mxu0 0.0
        %1006 = vmatprep.subr.mxu0 0.0
        %1007 = vmatpush1.msra.mxu0 0.0
        %1008 = vmatprep.subr.mxu0 0.0
        %1009 = vmatpush1.msra.mxu0 0.0
        %1010 = vmatprep.subr.mxu0 0.0
        %1011 = vmatpush1.msra.mxu0 0.0
        %1012 = vmatprep.subr.mxu0 0.0
        %1013 = vmatpush1.msra.mxu0 0.0
        %1014 = vmatprep.subr.mxu0 0.0
        %1015 = vmatpush1.msra.mxu0 0.0
        %1016 = vmatprep.subr.mxu0 0.0
        %1017 = vmatpush1.msra.mxu0 0.0
        %1018 = vmatprep.subr.mxu0 0.0
        %1019 = vmatpush1.msra.mxu0 0.0
        %1020 = vmatprep.subr.mxu0 0.0
        %1021 = vmatpush1.msra.mxu0 0.0
        %1022 = vmatprep.subr.mxu0 0.0
        %1023 = vmatpush1.msra.mxu0 0.0
        %1024 = vmatprep.subr.mxu0 0.0
        %1025 = vmatpush1.msra.mxu0 0.0
        %1026 = vmatprep.subr.mxu0 0.0
        %1027 = vmatpush1.msra.mxu0 0.0
        %1028 = vmatprep.subr.mxu0 0.0
        %1029 = vmatpush1.msra.mxu0 0.0
        %1030 = vmatprep.subr.mxu0 0.0
        %1031 = vmatpush1.msra.mxu0 0.0
        %1032 = vmatprep.subr.mxu0 0.0
        %1033 = vmatpush1.msra.mxu0 0.0
        %1034 = vmatprep.subr.mxu0 0.0
        %1035 = vmatpush1.msra.mxu0 0.0
        %1036 = vmatprep.subr.mxu0 0.0
        %1037 = vmatpush1.msra.mxu0 0.0
        %1038 = vmatprep.subr.mxu0 0.0
        %1039 = vmatpush1.msra.mxu0 0.0
        %1040 = vmatprep.subr.mxu0 0.0
        %1041 = vmatpush1.msra.mxu0 0.0
        %1042 = vmatprep.subr.mxu0 0.0
        %1043 = vmatpush1.msra.mxu0 0.0
        %1044 = vmatprep.subr.mxu0 0.0
        %1045 = vmatpush1.msra.mxu0 0.0
        %1046 = vmatprep.subr.mxu0 0.0
        %1047 = vmatpush1.msra.mxu0 0.0
        %1048 = vmatprep.subr.mxu0 0.0
        %1049 = vmatpush1.msra.mxu0 0.0
        %1050 = vmatprep.subr.mxu0 0.0
        %1051 = vmatpush1.msra.mxu0 0.0
        %1052 = vmatprep.subr.mxu0 0.0
        %1053 = vmatpush1.msra.mxu0 0.0
        %1054 = vmatprep.subr.mxu0 0.0
        %1055 = vmatpush1.msra.mxu0 0.0
        %1056 = vmatprep.subr.mxu0 0.0
        %1057 = vmatpush1.msra.mxu0 0.0
        %1058 = vmatprep.mubr.f32.mxu0 0.0
        %v1059 = vand.u32 %v819, 4294901760
        %v1060 = vsub.f32 %v819, %v1059
        %1061 = vmatmul.mubr.f32.gmra.mrb[0].mxu0 %v1060
        %v1062 = vpop.f32.mrb[0].mxu0
        %v1063 = vadd.f32 %v983, %v1062
        %v1064 = vpop.f32.mrb[0].mxu0
        %1065 = vmatprep.mubr.f32.mxu0 0.0
        %v1066 = vand.u32 %v822, 4294901760
        %v1067 = vsub.f32 %v822, %v1066
        %1068 = vmatmul.mubr.f32.gmra.mrb[0].mxu0 %v1067
        %v1069 = vpop.f32.mrb[0].mxu0
        %v1070 = vadd.f32 %v989, %v1069
        %v1071 = vpop.f32.mrb[0].mxu0
        %1072 = vdwg.mxu0
        %1073 = vmatprep.subr.mxu0 0.0
        %v1074 = vand.u32 %v795, 4294901760
        %1075 = vmatpush1.msra.mxu0 %v1074
        %1076 = vmatprep.subr.mxu0 0.0
        %1077 = vmatpush1.msra.mxu0 0.0
        %1078 = vmatprep.subr.mxu0 0.0
        %1079 = vmatpush1.msra.mxu0 0.0
        %1080 = vmatprep.subr.mxu0 0.0
        %1081 = vmatpush1.msra.mxu0 0.0
        %1082 = vmatprep.subr.mxu0 0.0
        %1083 = vmatpush1.msra.mxu0 0.0
        %1084 = vmatprep.subr.mxu0 0.0
        %1085 = vmatpush1.msra.mxu0 0.0
        %1086 = vmatprep.subr.mxu0 0.0
        %1087 = vmatpush1.msra.mxu0 0.0
        %1088 = vmatprep.subr.mxu0 0.0
        %1089 = vmatpush1.msra.mxu0 0.0
        %1090 = vmatprep.subr.mxu0 0.0
        %1091 = vmatpush1.msra.mxu0 0.0
        %1092 = vmatprep.subr.mxu0 0.0
        %1093 = vmatpush1.msra.mxu0 0.0
        %1094 = vmatprep.subr.mxu0 0.0
        %1095 = vmatpush1.msra.mxu0 0.0
        %1096 = vmatprep.subr.mxu0 0.0
        %1097 = vmatpush1.msra.mxu0 0.0
        %1098 = vmatprep.subr.mxu0 0.0
        %1099 = vmatpush1.msra.mxu0 0.0
        %1100 = vmatprep.subr.mxu0 0.0
        %1101 = vmatpush1.msra.mxu0 0.0
        %1102 = vmatprep.subr.mxu0 0.0
        %1103 = vmatpush1.msra.mxu0 0.0
        %1104 = vmatprep.subr.mxu0 0.0
        %1105 = vmatpush1.msra.mxu0 0.0
        %1106 = vmatprep.subr.mxu0 0.0
        %1107 = vmatpush1.msra.mxu0 0.0
        %1108 = vmatprep.subr.mxu0 0.0
        %1109 = vmatpush1.msra.mxu0 0.0
        %1110 = vmatprep.subr.mxu0 0.0
        %1111 = vmatpush1.msra.mxu0 0.0
        %1112 = vmatprep.subr.mxu0 0.0
        %1113 = vmatpush1.msra.mxu0 0.0
        %1114 = vmatprep.subr.mxu0 0.0
        %1115 = vmatpush1.msra.mxu0 0.0
        %1116 = vmatprep.subr.mxu0 0.0
        %1117 = vmatpush1.msra.mxu0 0.0
        %1118 = vmatprep.subr.mxu0 0.0
        %1119 = vmatpush1.msra.mxu0 0.0
        %1120 = vmatprep.subr.mxu0 0.0
        %1121 = vmatpush1.msra.mxu0 0.0
        %1122 = vmatprep.subr.mxu0 0.0
        %1123 = vmatpush1.msra.mxu0 0.0
        %1124 = vmatprep.subr.mxu0 0.0
        %1125 = vmatpush1.msra.mxu0 0.0
        %1126 = vmatprep.subr.mxu0 0.0
        %1127 = vmatpush1.msra.mxu0 0.0
        %1128 = vmatprep.subr.mxu0 0.0
        %1129 = vmatpush1.msra.mxu0 0.0
        %1130 = vmatprep.subr.mxu0 0.0
        %1131 = vmatpush1.msra.mxu0 0.0
        %1132 = vmatprep.subr.mxu0 0.0
        %1133 = vmatpush1.msra.mxu0 0.0
        %1134 = vmatprep.subr.mxu0 0.0
        %1135 = vmatpush1.msra.mxu0 0.0
        %1136 = vmatprep.subr.mxu0 0.0
        %1137 = vmatpush1.msra.mxu0 0.0
        %1138 = vmatprep.mubr.f32.mxu0 0.0
        %v1139 = vand.u32 %v819, 4294901760
        %v1140 = vsub.f32 %v819, %v1139
        %v1141 = vand.u32 %v1140, 4294901760
        %1142 = vmatmul.mubr.f32.gmra.mrb[0].mxu0 %v1141
        %v1143 = vpop.f32.mrb[0].mxu0
        %v1144 = vadd.f32 %v1063, %v1143
        %v1145 = vpop.f32.mrb[0].mxu0
        %1146 = vmatprep.mubr.f32.mxu0 0.0
        %v1147 = vand.u32 %v822, 4294901760
        %v1148 = vsub.f32 %v822, %v1147
        %v1149 = vand.u32 %v1148, 4294901760
        %1150 = vmatmul.mubr.f32.gmra.mrb[0].mxu0 %v1149
        %v1151 = vpop.f32.mrb[0].mxu0
        %v1152 = vadd.f32 %v1070, %v1151
        %v1153 = vpop.f32.mrb[0].mxu0
        %1154 = vdwg.mxu0
        %1155 = vmatprep.subr.mxu0 0.0
        %v1156 = vand.u32 %v795, 4294901760
        %v1157 = vsub.f32 %v795, %v1156
        %v1158 = vand.u32 %v1157, 4294901760
        %1159 = vmatpush1.msra.mxu0 %v1158
        %1160 = vmatprep.subr.mxu0 0.0
        %1161 = vmatpush1.msra.mxu0 0.0
        %1162 = vmatprep.subr.mxu0 0.0
        %1163 = vmatpush1.msra.mxu0 0.0
        %1164 = vmatprep.subr.mxu0 0.0
        %1165 = vmatpush1.msra.mxu0 0.0
        %1166 = vmatprep.subr.mxu0 0.0
        %1167 = vmatpush1.msra.mxu0 0.0
        %1168 = vmatprep.subr.mxu0 0.0
        %1169 = vmatpush1.msra.mxu0 0.0
        %1170 = vmatprep.subr.mxu0 0.0
        %1171 = vmatpush1.msra.mxu0 0.0
        %1172 = vmatprep.subr.mxu0 0.0
        %1173 = vmatpush1.msra.mxu0 0.0
        %1174 = vmatprep.subr.mxu0 0.0
        %1175 = vmatpush1.msra.mxu0 0.0
        %1176 = vmatprep.subr.mxu0 0.0
        %1177 = vmatpush1.msra.mxu0 0.0
        %1178 = vmatprep.subr.mxu0 0.0
        %1179 = vmatpush1.msra.mxu0 0.0
        %1180 = vmatprep.subr.mxu0 0.0
        %1181 = vmatpush1.msra.mxu0 0.0
        %1182 = vmatprep.subr.mxu0 0.0
        %1183 = vmatpush1.msra.mxu0 0.0
        %1184 = vmatprep.subr.mxu0 0.0
        %1185 = vmatpush1.msra.mxu0 0.0
        %1186 = vmatprep.subr.mxu0 0.0
        %1187 = vmatpush1.msra.mxu0 0.0
        %1188 = vmatprep.subr.mxu0 0.0
        %1189 = vmatpush1.msra.mxu0 0.0
        %1190 = vmatprep.subr.mxu0 0.0
        %1191 = vmatpush1.msra.mxu0 0.0
        %1192 = vmatprep.subr.mxu0 0.0
        %1193 = vmatpush1.msra.mxu0 0.0
        %1194 = vmatprep.subr.mxu0 0.0
        %1195 = vmatpush1.msra.mxu0 0.0
        %1196 = vmatprep.subr.mxu0 0.0
        %1197 = vmatpush1.msra.mxu0 0.0
        %1198 = vmatprep.subr.mxu0 0.0
        %1199 = vmatpush1.msra.mxu0 0.0
        %1200 = vmatprep.subr.mxu0 0.0
        %1201 = vmatpush1.msra.mxu0 0.0
        %1202 = vmatprep.subr.mxu0 0.0
        %1203 = vmatpush1.msra.mxu0 0.0
        %1204 = vmatprep.subr.mxu0 0.0
        %1205 = vmatpush1.msra.mxu0 0.0
        %1206 = vmatprep.subr.mxu0 0.0
        %1207 = vmatpush1.msra.mxu0 0.0
        %1208 = vmatprep.subr.mxu0 0.0
        %1209 = vmatpush1.msra.mxu0 0.0
        %1210 = vmatprep.subr.mxu0 0.0
        %1211 = vmatpush1.msra.mxu0 0.0
        %1212 = vmatprep.subr.mxu0 0.0
        %1213 = vmatpush1.msra.mxu0 0.0
        %1214 = vmatprep.subr.mxu0 0.0
        %1215 = vmatpush1.msra.mxu0 0.0
        %1216 = vmatprep.subr.mxu0 0.0
        %1217 = vmatpush1.msra.mxu0 0.0
        %1218 = vmatprep.subr.mxu0 0.0
        %1219 = vmatpush1.msra.mxu0 0.0
        %1220 = vmatprep.subr.mxu0 0.0
        %1221 = vmatpush1.msra.mxu0 0.0
        %1222 = vmatprep.mubr.f32.mxu0 0.0
        %v1223 = vand.u32 %v819, 4294901760
        %1224 = vmatmul.mubr.f32.gmra.mrb[0].mxu0 %v1223
        %v1225 = vpop.f32.mrb[0].mxu0
        %v1226 = vadd.f32 %v1144, %v1225
        %v1227 = vpop.f32.mrb[0].mxu0
        %1228 = vmatprep.mubr.f32.mxu0 0.0
        %v1229 = vand.u32 %v822, 4294901760
        %1230 = vmatmul.mubr.f32.gmra.mrb[0].mxu0 %v1229
        %v1231 = vpop.f32.mrb[0].mxu0
        %v1232 = vadd.f32 %v1152, %v1231
        %v1233 = vpop.f32.mrb[0].mxu0
        %1234 = vdwg.mxu0
        %1235 = vmatprep.subr.mxu0 0.0
        %v1236 = vand.u32 %v795, 4294901760
        %1237 = vmatpush1.msra.mxu0 %v1236
        %1238 = vmatprep.subr.mxu0 0.0
        %1239 = vmatpush1.msra.mxu0 0.0
        %1240 = vmatprep.subr.mxu0 0.0
        %1241 = vmatpush1.msra.mxu0 0.0
        %1242 = vmatprep.subr.mxu0 0.0
        %1243 = vmatpush1.msra.mxu0 0.0
        %1244 = vmatprep.subr.mxu0 0.0
        %1245 = vmatpush1.msra.mxu0 0.0
        %1246 = vmatprep.subr.mxu0 0.0
        %1247 = vmatpush1.msra.mxu0 0.0
        %1248 = vmatprep.subr.mxu0 0.0
        %1249 = vmatpush1.msra.mxu0 0.0
        %1250 = vmatprep.subr.mxu0 0.0
        %1251 = vmatpush1.msra.mxu0 0.0
        %1252 = vmatprep.subr.mxu0 0.0
        %1253 = vmatpush1.msra.mxu0 0.0
        %1254 = vmatprep.subr.mxu0 0.0
        %1255 = vmatpush1.msra.mxu0 0.0
        %1256 = vmatprep.subr.mxu0 0.0
        %1257 = vmatpush1.msra.mxu0 0.0
        %1258 = vmatprep.subr.mxu0 0.0
        %1259 = vmatpush1.msra.mxu0 0.0
        %1260 = vmatprep.subr.mxu0 0.0
        %1261 = vmatpush1.msra.mxu0 0.0
        %1262 = vmatprep.subr.mxu0 0.0
        %1263 = vmatpush1.msra.mxu0 0.0
        %1264 = vmatprep.subr.mxu0 0.0
        %1265 = vmatpush1.msra.mxu0 0.0
        %1266 = vmatprep.subr.mxu0 0.0
        %1267 = vmatpush1.msra.mxu0 0.0
        %1268 = vmatprep.subr.mxu0 0.0
        %1269 = vmatpush1.msra.mxu0 0.0
        %1270 = vmatprep.subr.mxu0 0.0
        %1271 = vmatpush1.msra.mxu0 0.0
        %1272 = vmatprep.subr.mxu0 0.0
        %1273 = vmatpush1.msra.mxu0 0.0
        %1274 = vmatprep.subr.mxu0 0.0
        %1275 = vmatpush1.msra.mxu0 0.0
        %1276 = vmatprep.subr.mxu0 0.0
        %1277 = vmatpush1.msra.mxu0 0.0
        %1278 = vmatprep.subr.mxu0 0.0
        %1279 = vmatpush1.msra.mxu0 0.0
        %1280 = vmatprep.subr.mxu0 0.0
        %1281 = vmatpush1.msra.mxu0 0.0
        %1282 = vmatprep.subr.mxu0 0.0
        %1283 = vmatpush1.msra.mxu0 0.0
        %1284 = vmatprep.subr.mxu0 0.0
        %1285 = vmatpush1.msra.mxu0 0.0
        %1286 = vmatprep.subr.mxu0 0.0
        %1287 = vmatpush1.msra.mxu0 0.0
        %1288 = vmatprep.subr.mxu0 0.0
        %1289 = vmatpush1.msra.mxu0 0.0
        %1290 = vmatprep.subr.mxu0 0.0
        %1291 = vmatpush1.msra.mxu0 0.0
        %1292 = vmatprep.subr.mxu0 0.0
        %1293 = vmatpush1.msra.mxu0 0.0
        %1294 = vmatprep.subr.mxu0 0.0
        %1295 = vmatpush1.msra.mxu0 0.0
        %1296 = vmatprep.subr.mxu0 0.0
        %1297 = vmatpush1.msra.mxu0 0.0
        %1298 = vmatprep.subr.mxu0 0.0
        %1299 = vmatpush1.msra.mxu0 0.0
        %1300 = vmatprep.mubr.f32.mxu0 0.0
        %v1301 = vand.u32 %v819, 4294901760
        %1302 = vmatmul.mubr.f32.gmra.mrb[0].mxu0 %v1301
        %v1303 = vpop.f32.mrb[0].mxu0
        %v1304 = vadd.f32 %v1226, %v1303
        %v1305 = vpop.f32.mrb[0].mxu0
        %1306 = vmatprep.mubr.f32.mxu0 0.0
        %v1307 = vand.u32 %v822, 4294901760
        %1308 = vmatmul.mubr.f32.gmra.mrb[0].mxu0 %v1307
        %v1309 = vpop.f32.mrb[0].mxu0
        %v1310 = vadd.f32 %v1232, %v1309
        %v1311 = vpop.f32.mrb[0].mxu0
        %1312 = vdwg.mxu0
        %1313 = vmatprep.subr.mxu0 0.0
        %v1314 = vand.u32 %v801, 4294901760
        %1315 = vmatpush1.msra.mxu0 %v1314
        %1316 = vmatprep.subr.mxu0 0.0
        %1317 = vmatpush1.msra.mxu0 0.0
        %1318 = vmatprep.subr.mxu0 0.0
        %1319 = vmatpush1.msra.mxu0 0.0
        %1320 = vmatprep.subr.mxu0 0.0
        %1321 = vmatpush1.msra.mxu0 0.0
        %1322 = vmatprep.subr.mxu0 0.0
        %1323 = vmatpush1.msra.mxu0 0.0
        %1324 = vmatprep.subr.mxu0 0.0
        %1325 = vmatpush1.msra.mxu0 0.0
        %1326 = vmatprep.subr.mxu0 0.0
        %1327 = vmatpush1.msra.mxu0 0.0
        %1328 = vmatprep.subr.mxu0 0.0
        %1329 = vmatpush1.msra.mxu0 0.0
        %1330 = vmatprep.subr.mxu0 0.0
        %1331 = vmatpush1.msra.mxu0 0.0
        %1332 = vmatprep.subr.mxu0 0.0
        %1333 = vmatpush1.msra.mxu0 0.0
        %1334 = vmatprep.subr.mxu0 0.0
        %1335 = vmatpush1.msra.mxu0 0.0
        %1336 = vmatprep.subr.mxu0 0.0
        %1337 = vmatpush1.msra.mxu0 0.0
        %1338 = vmatprep.subr.mxu0 0.0
        %1339 = vmatpush1.msra.mxu0 0.0
        %1340 = vmatprep.subr.mxu0 0.0
        %1341 = vmatpush1.msra.mxu0 0.0
        %1342 = vmatprep.subr.mxu0 0.0
        %1343 = vmatpush1.msra.mxu0 0.0
        %1344 = vmatprep.subr.mxu0 0.0
        %1345 = vmatpush1.msra.mxu0 0.0
        %1346 = vmatprep.subr.mxu0 0.0
        %1347 = vmatpush1.msra.mxu0 0.0
        %1348 = vmatprep.subr.mxu0 0.0
        %1349 = vmatpush1.msra.mxu0 0.0
        %1350 = vmatprep.subr.mxu0 0.0
        %1351 = vmatpush1.msra.mxu0 0.0
        %1352 = vmatprep.subr.mxu0 0.0
        %1353 = vmatpush1.msra.mxu0 0.0
        %1354 = vmatprep.subr.mxu0 0.0
        %1355 = vmatpush1.msra.mxu0 0.0
        %1356 = vmatprep.subr.mxu0 0.0
        %1357 = vmatpush1.msra.mxu0 0.0
        %1358 = vmatprep.subr.mxu0 0.0
        %1359 = vmatpush1.msra.mxu0 0.0
        %1360 = vmatprep.subr.mxu0 0.0
        %1361 = vmatpush1.msra.mxu0 0.0
        %1362 = vmatprep.subr.mxu0 0.0
        %1363 = vmatpush1.msra.mxu0 0.0
        %1364 = vmatprep.subr.mxu0 0.0
        %1365 = vmatpush1.msra.mxu0 0.0
        %1366 = vmatprep.subr.mxu0 0.0
        %1367 = vmatpush1.msra.mxu0 0.0
        %1368 = vmatprep.subr.mxu0 0.0
        %1369 = vmatpush1.msra.mxu0 0.0
        %1370 = vmatprep.subr.mxu0 0.0
        %1371 = vmatpush1.msra.mxu0 0.0
        %1372 = vmatprep.subr.mxu0 0.0
        %1373 = vmatpush1.msra.mxu0 0.0
        %1374 = vmatprep.subr.mxu0 0.0
        %1375 = vmatpush1.msra.mxu0 0.0
        %1376 = vmatprep.subr.mxu0 0.0
        %1377 = vmatpush1.msra.mxu0 0.0
        %1378 = vmatprep.mubr.f32.mxu0 0.0
        %v1379 = vand.u32 %v819, 4294901760
        %v1380 = vsub.f32 %v819, %v1379
        %v1381 = vand.u32 %v1380, 4294901760
        %v1382 = vsub.f32 %v1380, %v1381
        %v1383 = vand.u32 %v1382, 4294901760
        %1384 = vmatmul.mubr.f32.gmra.mrb[0].mxu0 %v1383
        %v1385 = vpop.f32.mrb[0].mxu0
        %v1386 = vadd.f32 0.0, %v1385
        %v1387 = vpop.f32.mrb[0].mxu0
        %1388 = vmatprep.mubr.f32.mxu0 0.0
        %v1389 = vand.u32 %v822, 4294901760
        %v1390 = vsub.f32 %v822, %v1389
        %v1391 = vand.u32 %v1390, 4294901760
        %v1392 = vsub.f32 %v1390, %v1391
        %v1393 = vand.u32 %v1392, 4294901760
        %1394 = vmatmul.mubr.f32.gmra.mrb[0].mxu0 %v1393
        %v1395 = vpop.f32.mrb[0].mxu0
        %v1396 = vadd.f32 0.0, %v1395
        %v1397 = vpop.f32.mrb[0].mxu0
        %1398 = vdwg.mxu0
        %1399 = vmatprep.subr.mxu0 0.0
        %v1400 = vand.u32 %v801, 4294901760
        %v1401 = vsub.f32 %v801, %v1400
        %v1402 = vand.u32 %v1401, 4294901760
        %v1403 = vsub.f32 %v1401, %v1402
        %v1404 = vand.u32 %v1403, 4294901760
        %1405 = vmatpush1.msra.mxu0 %v1404
        %1406 = vmatprep.subr.mxu0 0.0
        %1407 = vmatpush1.msra.mxu0 0.0
        %1408 = vmatprep.subr.mxu0 0.0
        %1409 = vmatpush1.msra.mxu0 0.0
        %1410 = vmatprep.subr.mxu0 0.0
        %1411 = vmatpush1.msra.mxu0 0.0
        %1412 = vmatprep.subr.mxu0 0.0
        %1413 = vmatpush1.msra.mxu0 0.0
        %1414 = vmatprep.subr.mxu0 0.0
        %1415 = vmatpush1.msra.mxu0 0.0
        %1416 = vmatprep.subr.mxu0 0.0
        %1417 = vmatpush1.msra.mxu0 0.0
        %1418 = vmatprep.subr.mxu0 0.0
        %1419 = vmatpush1.msra.mxu0 0.0
        %1420 = vmatprep.subr.mxu0 0.0
        %1421 = vmatpush1.msra.mxu0 0.0
        %1422 = vmatprep.subr.mxu0 0.0
        %1423 = vmatpush1.msra.mxu0 0.0
        %1424 = vmatprep.subr.mxu0 0.0
        %1425 = vmatpush1.msra.mxu0 0.0
        %1426 = vmatprep.subr.mxu0 0.0
        %1427 = vmatpush1.msra.mxu0 0.0
        %1428 = vmatprep.subr.mxu0 0.0
        %1429 = vmatpush1.msra.mxu0 0.0
        %1430 = vmatprep.subr.mxu0 0.0
        %1431 = vmatpush1.msra.mxu0 0.0
        %1432 = vmatprep.subr.mxu0 0.0
        %1433 = vmatpush1.msra.mxu0 0.0
        %1434 = vmatprep.subr.mxu0 0.0
        %1435 = vmatpush1.msra.mxu0 0.0
        %1436 = vmatprep.subr.mxu0 0.0
        %1437 = vmatpush1.msra.mxu0 0.0
        %1438 = vmatprep.subr.mxu0 0.0
        %1439 = vmatpush1.msra.mxu0 0.0
        %1440 = vmatprep.subr.mxu0 0.0
        %1441 = vmatpush1.msra.mxu0 0.0
        %1442 = vmatprep.subr.mxu0 0.0
        %1443 = vmatpush1.msra.mxu0 0.0
        %1444 = vmatprep.subr.mxu0 0.0
        %1445 = vmatpush1.msra.mxu0 0.0
        %1446 = vmatprep.subr.mxu0 0.0
        %1447 = vmatpush1.msra.mxu0 0.0
        %1448 = vmatprep.subr.mxu0 0.0
        %1449 = vmatpush1.msra.mxu0 0.0
        %1450 = vmatprep.subr.mxu0 0.0
        %1451 = vmatpush1.msra.mxu0 0.0
        %1452 = vmatprep.subr.mxu0 0.0
        %1453 = vmatpush1.msra.mxu0 0.0
        %1454 = vmatprep.subr.mxu0 0.0
        %1455 = vmatpush1.msra.mxu0 0.0
        %1456 = vmatprep.subr.mxu0 0.0
        %1457 = vmatpush1.msra.mxu0 0.0
        %1458 = vmatprep.subr.mxu0 0.0
        %1459 = vmatpush1.msra.mxu0 0.0
        %1460 = vmatprep.subr.mxu0 0.0
        %1461 = vmatpush1.msra.mxu0 0.0
        %1462 = vmatprep.subr.mxu0 0.0
        %1463 = vmatpush1.msra.mxu0 0.0
        %1464 = vmatprep.subr.mxu0 0.0
        %1465 = vmatpush1.msra.mxu0 0.0
        %1466 = vmatprep.subr.mxu0 0.0
        %1467 = vmatpush1.msra.mxu0 0.0
        %1468 = vmatprep.mubr.f32.mxu0 0.0
        %v1469 = vand.u32 %v819, 4294901760
        %1470 = vmatmul.mubr.f32.gmra.mrb[0].mxu0 %v1469
        %v1471 = vpop.f32.mrb[0].mxu0
        %v1472 = vadd.f32 %v1386, %v1471
        %v1473 = vpop.f32.mrb[0].mxu0
        %1474 = vmatprep.mubr.f32.mxu0 0.0
        %v1475 = vand.u32 %v822, 4294901760
        %1476 = vmatmul.mubr.f32.gmra.mrb[0].mxu0 %v1475
        %v1477 = vpop.f32.mrb[0].mxu0
        %v1478 = vadd.f32 %v1396, %v1477
        %v1479 = vpop.f32.mrb[0].mxu0
        %1480 = vdwg.mxu0
        %1481 = vmatprep.subr.mxu0 0.0
        %v1482 = vand.u32 %v801, 4294901760
        %v1483 = vsub.f32 %v801, %v1482
        %1484 = vmatpush1.msra.mxu0 %v1483
        %1485 = vmatprep.subr.mxu0 0.0
        %1486 = vmatpush1.msra.mxu0 0.0
        %1487 = vmatprep.subr.mxu0 0.0
        %1488 = vmatpush1.msra.mxu0 0.0
        %1489 = vmatprep.subr.mxu0 0.0
        %1490 = vmatpush1.msra.mxu0 0.0
        %1491 = vmatprep.subr.mxu0 0.0
        %1492 = vmatpush1.msra.mxu0 0.0
        %1493 = vmatprep.subr.mxu0 0.0
        %1494 = vmatpush1.msra.mxu0 0.0
        %1495 = vmatprep.subr.mxu0 0.0
        %1496 = vmatpush1.msra.mxu0 0.0
        %1497 = vmatprep.subr.mxu0 0.0
        %1498 = vmatpush1.msra.mxu0 0.0
        %1499 = vmatprep.subr.mxu0 0.0
        %1500 = vmatpush1.msra.mxu0 0.0
        %1501 = vmatprep.subr.mxu0 0.0
        %1502 = vmatpush1.msra.mxu0 0.0
        %1503 = vmatprep.subr.mxu0 0.0
        %1504 = vmatpush1.msra.mxu0 0.0
        %1505 = vmatprep.subr.mxu0 0.0
        %1506 = vmatpush1.msra.mxu0 0.0
        %1507 = vmatprep.subr.mxu0 0.0
        %1508 = vmatpush1.msra.mxu0 0.0
        %1509 = vmatprep.subr.mxu0 0.0
        %1510 = vmatpush1.msra.mxu0 0.0
        %1511 = vmatprep.subr.mxu0 0.0
        %1512 = vmatpush1.msra.mxu0 0.0
        %1513 = vmatprep.subr.mxu0 0.0
        %1514 = vmatpush1.msra.mxu0 0.0
        %1515 = vmatprep.subr.mxu0 0.0
        %1516 = vmatpush1.msra.mxu0 0.0
        %1517 = vmatprep.subr.mxu0 0.0
        %1518 = vmatpush1.msra.mxu0 0.0
        %1519 = vmatprep.subr.mxu0 0.0
        %1520 = vmatpush1.msra.mxu0 0.0
        %1521 = vmatprep.subr.mxu0 0.0
        %1522 = vmatpush1.msra.mxu0 0.0
        %1523 = vmatprep.subr.mxu0 0.0
        %1524 = vmatpush1.msra.mxu0 0.0
        %1525 = vmatprep.subr.mxu0 0.0
        %1526 = vmatpush1.msra.mxu0 0.0
        %1527 = vmatprep.subr.mxu0 0.0
        %1528 = vmatpush1.msra.mxu0 0.0
        %1529 = vmatprep.subr.mxu0 0.0
        %1530 = vmatpush1.msra.mxu0 0.0
        %1531 = vmatprep.subr.mxu0 0.0
        %1532 = vmatpush1.msra.mxu0 0.0
        %1533 = vmatprep.subr.mxu0 0.0
        %1534 = vmatpush1.msra.mxu0 0.0
        %1535 = vmatprep.subr.mxu0 0.0
        %1536 = vmatpush1.msra.mxu0 0.0
        %1537 = vmatprep.subr.mxu0 0.0
        %1538 = vmatpush1.msra.mxu0 0.0
        %1539 = vmatprep.subr.mxu0 0.0
        %1540 = vmatpush1.msra.mxu0 0.0
        %1541 = vmatprep.subr.mxu0 0.0
        %1542 = vmatpush1.msra.mxu0 0.0
        %1543 = vmatprep.subr.mxu0 0.0
        %1544 = vmatpush1.msra.mxu0 0.0
        %1545 = vmatprep.subr.mxu0 0.0
        %1546 = vmatpush1.msra.mxu0 0.0
        %1547 = vmatprep.mubr.f32.mxu0 0.0
        %v1548 = vand.u32 %v819, 4294901760
        %v1549 = vsub.f32 %v819, %v1548
        %1550 = vmatmul.mubr.f32.gmra.mrb[0].mxu0 %v1549
        %v1551 = vpop.f32.mrb[0].mxu0
        %v1552 = vadd.f32 %v1472, %v1551
        %v1553 = vpop.f32.mrb[0].mxu0
        %1554 = vmatprep.mubr.f32.mxu0 0.0
        %v1555 = vand.u32 %v822, 4294901760
        %v1556 = vsub.f32 %v822, %v1555
        %1557 = vmatmul.mubr.f32.gmra.mrb[0].mxu0 %v1556
        %v1558 = vpop.f32.mrb[0].mxu0
        %v1559 = vadd.f32 %v1478, %v1558
        %v1560 = vpop.f32.mrb[0].mxu0
        %1561 = vdwg.mxu0
        %1562 = vmatprep.subr.mxu0 0.0
        %v1563 = vand.u32 %v801, 4294901760
        %1564 = vmatpush1.msra.mxu0 %v1563
        %1565 = vmatprep.subr.mxu0 0.0
        %1566 = vmatpush1.msra.mxu0 0.0
        %1567 = vmatprep.subr.mxu0 0.0
        %1568 = vmatpush1.msra.mxu0 0.0
        %1569 = vmatprep.subr.mxu0 0.0
        %1570 = vmatpush1.msra.mxu0 0.0
        %1571 = vmatprep.subr.mxu0 0.0
        %1572 = vmatpush1.msra.mxu0 0.0
        %1573 = vmatprep.subr.mxu0 0.0
        %1574 = vmatpush1.msra.mxu0 0.0
        %1575 = vmatprep.subr.mxu0 0.0
        %1576 = vmatpush1.msra.mxu0 0.0
        %1577 = vmatprep.subr.mxu0 0.0
        %1578 = vmatpush1.msra.mxu0 0.0
        %1579 = vmatprep.subr.mxu0 0.0
        %1580 = vmatpush1.msra.mxu0 0.0
        %1581 = vmatprep.subr.mxu0 0.0
        %1582 = vmatpush1.msra.mxu0 0.0
        %1583 = vmatprep.subr.mxu0 0.0
        %1584 = vmatpush1.msra.mxu0 0.0
        %1585 = vmatprep.subr.mxu0 0.0
        %1586 = vmatpush1.msra.mxu0 0.0
        %1587 = vmatprep.subr.mxu0 0.0
        %1588 = vmatpush1.msra.mxu0 0.0
        %1589 = vmatprep.subr.mxu0 0.0
        %1590 = vmatpush1.msra.mxu0 0.0
        %1591 = vmatprep.subr.mxu0 0.0
        %1592 = vmatpush1.msra.mxu0 0.0
        %1593 = vmatprep.subr.mxu0 0.0
        %1594 = vmatpush1.msra.mxu0 0.0
        %1595 = vmatprep.subr.mxu0 0.0
        %1596 = vmatpush1.msra.mxu0 0.0
        %1597 = vmatprep.subr.mxu0 0.0
        %1598 = vmatpush1.msra.mxu0 0.0
        %1599 = vmatprep.subr.mxu0 0.0
        %1600 = vmatpush1.msra.mxu0 0.0
        %1601 = vmatprep.subr.mxu0 0.0
        %1602 = vmatpush1.msra.mxu0 0.0
        %1603 = vmatprep.subr.mxu0 0.0
        %1604 = vmatpush1.msra.mxu0 0.0
        %1605 = vmatprep.subr.mxu0 0.0
        %1606 = vmatpush1.msra.mxu0 0.0
        %1607 = vmatprep.subr.mxu0 0.0
        %1608 = vmatpush1.msra.mxu0 0.0
        %1609 = vmatprep.subr.mxu0 0.0
        %1610 = vmatpush1.msra.mxu0 0.0
        %1611 = vmatprep.subr.mxu0 0.0
        %1612 = vmatpush1.msra.mxu0 0.0
        %1613 = vmatprep.subr.mxu0 0.0
        %1614 = vmatpush1.msra.mxu0 0.0
        %1615 = vmatprep.subr.mxu0 0.0
        %1616 = vmatpush1.msra.mxu0 0.0
        %1617 = vmatprep.subr.mxu0 0.0
        %1618 = vmatpush1.msra.mxu0 0.0
        %1619 = vmatprep.subr.mxu0 0.0
        %1620 = vmatpush1.msra.mxu0 0.0
        %1621 = vmatprep.subr.mxu0 0.0
        %1622 = vmatpush1.msra.mxu0 0.0
        %1623 = vmatprep.subr.mxu0 0.0
        %1624 = vmatpush1.msra.mxu0 0.0
        %1625 = vmatprep.subr.mxu0 0.0
        %1626 = vmatpush1.msra.mxu0 0.0
        %1627 = vmatprep.mubr.f32.mxu0 0.0
        %v1628 = vand.u32 %v819, 4294901760
        %v1629 = vsub.f32 %v819, %v1628
        %v1630 = vand.u32 %v1629, 4294901760
        %1631 = vmatmul.mubr.f32.gmra.mrb[0].mxu0 %v1630
        %v1632 = vpop.f32.mrb[0].mxu0
        %v1633 = vadd.f32 %v1552, %v1632
        %v1634 = vpop.f32.mrb[0].mxu0
        %1635 = vmatprep.mubr.f32.mxu0 0.0
        %v1636 = vand.u32 %v822, 4294901760
        %v1637 = vsub.f32 %v822, %v1636
        %v1638 = vand.u32 %v1637, 4294901760
        %1639 = vmatmul.mubr.f32.gmra.mrb[0].mxu0 %v1638
        %v1640 = vpop.f32.mrb[0].mxu0
        %v1641 = vadd.f32 %v1559, %v1640
        %v1642 = vpop.f32.mrb[0].mxu0
        %1643 = vdwg.mxu0
        %1644 = vmatprep.subr.mxu0 0.0
        %v1645 = vand.u32 %v801, 4294901760
        %v1646 = vsub.f32 %v801, %v1645
        %v1647 = vand.u32 %v1646, 4294901760
        %1648 = vmatpush1.msra.mxu0 %v1647
        %1649 = vmatprep.subr.mxu0 0.0
        %1650 = vmatpush1.msra.mxu0 0.0
        %1651 = vmatprep.subr.mxu0 0.0
        %1652 = vmatpush1.msra.mxu0 0.0
        %1653 = vmatprep.subr.mxu0 0.0
        %1654 = vmatpush1.msra.mxu0 0.0
        %1655 = vmatprep.subr.mxu0 0.0
        %1656 = vmatpush1.msra.mxu0 0.0
        %1657 = vmatprep.subr.mxu0 0.0
        %1658 = vmatpush1.msra.mxu0 0.0
        %1659 = vmatprep.subr.mxu0 0.0
        %1660 = vmatpush1.msra.mxu0 0.0
        %1661 = vmatprep.subr.mxu0 0.0
        %1662 = vmatpush1.msra.mxu0 0.0
        %1663 = vmatprep.subr.mxu0 0.0
        %1664 = vmatpush1.msra.mxu0 0.0
        %1665 = vmatprep.subr.mxu0 0.0
        %1666 = vmatpush1.msra.mxu0 0.0
        %1667 = vmatprep.subr.mxu0 0.0
        %1668 = vmatpush1.msra.mxu0 0.0
        %1669 = vmatprep.subr.mxu0 0.0
        %1670 = vmatpush1.msra.mxu0 0.0
        %1671 = vmatprep.subr.mxu0 0.0
        %1672 = vmatpush1.msra.mxu0 0.0
        %1673 = vmatprep.subr.mxu0 0.0
        %1674 = vmatpush1.msra.mxu0 0.0
        %1675 = vmatprep.subr.mxu0 0.0
        %1676 = vmatpush1.msra.mxu0 0.0
        %1677 = vmatprep.subr.mxu0 0.0
        %1678 = vmatpush1.msra.mxu0 0.0
        %1679 = vmatprep.subr.mxu0 0.0
        %1680 = vmatpush1.msra.mxu0 0.0
        %1681 = vmatprep.subr.mxu0 0.0
        %1682 = vmatpush1.msra.mxu0 0.0
        %1683 = vmatprep.subr.mxu0 0.0
        %1684 = vmatpush1.msra.mxu0 0.0
        %1685 = vmatprep.subr.mxu0 0.0
        %1686 = vmatpush1.msra.mxu0 0.0
        %1687 = vmatprep.subr.mxu0 0.0
        %1688 = vmatpush1.msra.mxu0 0.0
        %1689 = vmatprep.subr.mxu0 0.0
        %1690 = vmatpush1.msra.mxu0 0.0
        %1691 = vmatprep.subr.mxu0 0.0
        %1692 = vmatpush1.msra.mxu0 0.0
        %1693 = vmatprep.subr.mxu0 0.0
        %1694 = vmatpush1.msra.mxu0 0.0
        %1695 = vmatprep.subr.mxu0 0.0
        %1696 = vmatpush1.msra.mxu0 0.0
        %1697 = vmatprep.subr.mxu0 0.0
        %1698 = vmatpush1.msra.mxu0 0.0
        %1699 = vmatprep.subr.mxu0 0.0
        %1700 = vmatpush1.msra.mxu0 0.0
        %1701 = vmatprep.subr.mxu0 0.0
        %1702 = vmatpush1.msra.mxu0 0.0
        %1703 = vmatprep.subr.mxu0 0.0
        %1704 = vmatpush1.msra.mxu0 0.0
        %1705 = vmatprep.subr.mxu0 0.0
        %1706 = vmatpush1.msra.mxu0 0.0
        %1707 = vmatprep.subr.mxu0 0.0
        %1708 = vmatpush1.msra.mxu0 0.0
        %1709 = vmatprep.subr.mxu0 0.0
        %1710 = vmatpush1.msra.mxu0 0.0
        %1711 = vmatprep.mubr.f32.mxu0 0.0
        %v1712 = vand.u32 %v819, 4294901760
        %1713 = vmatmul.mubr.f32.gmra.mrb[0].mxu0 %v1712
        %v1714 = vpop.f32.mrb[0].mxu0
        %v1715 = vadd.f32 %v1633, %v1714
        %v1716 = vpop.f32.mrb[0].mxu0
        %1717 = vmatprep.mubr.f32.mxu0 0.0
        %v1718 = vand.u32 %v822, 4294901760
        %1719 = vmatmul.mubr.f32.gmra.mrb[0].mxu0 %v1718
        %v1720 = vpop.f32.mrb[0].mxu0
        %v1721 = vadd.f32 %v1641, %v1720
        %v1722 = vpop.f32.mrb[0].mxu0
        %1723 = vdwg.mxu0
        %1724 = vmatprep.subr.mxu0 0.0
        %v1725 = vand.u32 %v801, 4294901760
        %1726 = vmatpush1.msra.mxu0 %v1725
        %1727 = vmatprep.subr.mxu0 0.0
        %1728 = vmatpush1.msra.mxu0 0.0
        %1729 = vmatprep.subr.mxu0 0.0
        %1730 = vmatpush1.msra.mxu0 0.0
        %1731 = vmatprep.subr.mxu0 0.0
        %1732 = vmatpush1.msra.mxu0 0.0
        %1733 = vmatprep.subr.mxu0 0.0
        %1734 = vmatpush1.msra.mxu0 0.0
        %1735 = vmatprep.subr.mxu0 0.0
        %1736 = vmatpush1.msra.mxu0 0.0
        %1737 = vmatprep.subr.mxu0 0.0
        %1738 = vmatpush1.msra.mxu0 0.0
        %1739 = vmatprep.subr.mxu0 0.0
        %1740 = vmatpush1.msra.mxu0 0.0
        %1741 = vmatprep.subr.mxu0 0.0
        %1742 = vmatpush1.msra.mxu0 0.0
        %1743 = vmatprep.subr.mxu0 0.0
        %1744 = vmatpush1.msra.mxu0 0.0
        %1745 = vmatprep.subr.mxu0 0.0
        %1746 = vmatpush1.msra.mxu0 0.0
        %1747 = vmatprep.subr.mxu0 0.0
        %1748 = vmatpush1.msra.mxu0 0.0
        %1749 = vmatprep.subr.mxu0 0.0
        %1750 = vmatpush1.msra.mxu0 0.0
        %1751 = vmatprep.subr.mxu0 0.0
        %1752 = vmatpush1.msra.mxu0 0.0
        %1753 = vmatprep.subr.mxu0 0.0
        %1754 = vmatpush1.msra.mxu0 0.0
        %1755 = vmatprep.subr.mxu0 0.0
        %1756 = vmatpush1.msra.mxu0 0.0
        %1757 = vmatprep.subr.mxu0 0.0
        %1758 = vmatpush1.msra.mxu0 0.0
        %1759 = vmatprep.subr.mxu0 0.0
        %1760 = vmatpush1.msra.mxu0 0.0
        %1761 = vmatprep.subr.mxu0 0.0
        %1762 = vmatpush1.msra.mxu0 0.0
        %1763 = vmatprep.subr.mxu0 0.0
        %1764 = vmatpush1.msra.mxu0 0.0
        %1765 = vmatprep.subr.mxu0 0.0
        %1766 = vmatpush1.msra.mxu0 0.0
        %1767 = vmatprep.subr.mxu0 0.0
        %1768 = vmatpush1.msra.mxu0 0.0
        %1769 = vmatprep.subr.mxu0 0.0
        %1770 = vmatpush1.msra.mxu0 0.0
        %1771 = vmatprep.subr.mxu0 0.0
        %1772 = vmatpush1.msra.mxu0 0.0
        %1773 = vmatprep.subr.mxu0 0.0
        %1774 = vmatpush1.msra.mxu0 0.0
        %1775 = vmatprep.subr.mxu0 0.0
        %1776 = vmatpush1.msra.mxu0 0.0
        %1777 = vmatprep.subr.mxu0 0.0
        %1778 = vmatpush1.msra.mxu0 0.0
        %1779 = vmatprep.subr.mxu0 0.0
        %1780 = vmatpush1.msra.mxu0 0.0
        %1781 = vmatprep.subr.mxu0 0.0
        %1782 = vmatpush1.msra.mxu0 0.0
        %1783 = vmatprep.subr.mxu0 0.0
        %1784 = vmatpush1.msra.mxu0 0.0
        %1785 = vmatprep.subr.mxu0 0.0
        %1786 = vmatpush1.msra.mxu0 0.0
        %1787 = vmatprep.subr.mxu0 0.0
        %1788 = vmatpush1.msra.mxu0 0.0
        %1789 = vmatprep.mubr.f32.mxu0 0.0
        %v1790 = vand.u32 %v819, 4294901760
        %1791 = vmatmul.mubr.f32.gmra.mrb[0].mxu0 %v1790
        %v1792 = vpop.f32.mrb[0].mxu0
        %v1793 = vadd.f32 %v1715, %v1792
        %v1794 = vpop.f32.mrb[0].mxu0
        %1795 = vmatprep.mubr.f32.mxu0 0.0
        %v1796 = vand.u32 %v822, 4294901760
        %1797 = vmatmul.mubr.f32.gmra.mrb[0].mxu0 %v1796
        %v1798 = vpop.f32.mrb[0].mxu0
        %v1799 = vadd.f32 %v1721, %v1798
        %v1800 = vpop.f32.mrb[0].mxu0
        %1801 = vdwg.mxu0
        %1802 = vmatprep.subr.mxu0 0.0
        %v1803 = vand.u32 %v807, 4294901760
        %1804 = vmatpush1.msra.mxu0 %v1803
        %1805 = vmatprep.subr.mxu0 0.0
        %1806 = vmatpush1.msra.mxu0 0.0
        %1807 = vmatprep.subr.mxu0 0.0
        %1808 = vmatpush1.msra.mxu0 0.0
        %1809 = vmatprep.subr.mxu0 0.0
        %1810 = vmatpush1.msra.mxu0 0.0
        %1811 = vmatprep.subr.mxu0 0.0
        %1812 = vmatpush1.msra.mxu0 0.0
        %1813 = vmatprep.subr.mxu0 0.0
        %1814 = vmatpush1.msra.mxu0 0.0
        %1815 = vmatprep.subr.mxu0 0.0
        %1816 = vmatpush1.msra.mxu0 0.0
        %1817 = vmatprep.subr.mxu0 0.0
        %1818 = vmatpush1.msra.mxu0 0.0
        %1819 = vmatprep.subr.mxu0 0.0
        %1820 = vmatpush1.msra.mxu0 0.0
        %1821 = vmatprep.subr.mxu0 0.0
        %1822 = vmatpush1.msra.mxu0 0.0
        %1823 = vmatprep.subr.mxu0 0.0
        %1824 = vmatpush1.msra.mxu0 0.0
        %1825 = vmatprep.subr.mxu0 0.0
        %1826 = vmatpush1.msra.mxu0 0.0
        %1827 = vmatprep.subr.mxu0 0.0
        %1828 = vmatpush1.msra.mxu0 0.0
        %1829 = vmatprep.subr.mxu0 0.0
        %1830 = vmatpush1.msra.mxu0 0.0
        %1831 = vmatprep.subr.mxu0 0.0
        %1832 = vmatpush1.msra.mxu0 0.0
        %1833 = vmatprep.subr.mxu0 0.0
        %1834 = vmatpush1.msra.mxu0 0.0
        %1835 = vmatprep.subr.mxu0 0.0
        %1836 = vmatpush1.msra.mxu0 0.0
        %1837 = vmatprep.subr.mxu0 0.0
        %1838 = vmatpush1.msra.mxu0 0.0
        %1839 = vmatprep.subr.mxu0 0.0
        %1840 = vmatpush1.msra.mxu0 0.0
        %1841 = vmatprep.subr.mxu0 0.0
        %1842 = vmatpush1.msra.mxu0 0.0
        %1843 = vmatprep.subr.mxu0 0.0
        %1844 = vmatpush1.msra.mxu0 0.0
        %1845 = vmatprep.subr.mxu0 0.0
        %1846 = vmatpush1.msra.mxu0 0.0
        %1847 = vmatprep.subr.mxu0 0.0
        %1848 = vmatpush1.msra.mxu0 0.0
        %1849 = vmatprep.subr.mxu0 0.0
        %1850 = vmatpush1.msra.mxu0 0.0
        %1851 = vmatprep.subr.mxu0 0.0
        %1852 = vmatpush1.msra.mxu0 0.0
        %1853 = vmatprep.subr.mxu0 0.0
        %1854 = vmatpush1.msra.mxu0 0.0
        %1855 = vmatprep.subr.mxu0 0.0
        %1856 = vmatpush1.msra.mxu0 0.0
        %1857 = vmatprep.subr.mxu0 0.0
        %1858 = vmatpush1.msra.mxu0 0.0
        %1859 = vmatprep.subr.mxu0 0.0
        %1860 = vmatpush1.msra.mxu0 0.0
        %1861 = vmatprep.subr.mxu0 0.0
        %1862 = vmatpush1.msra.mxu0 0.0
        %1863 = vmatprep.subr.mxu0 0.0
        %1864 = vmatpush1.msra.mxu0 0.0
        %1865 = vmatprep.subr.mxu0 0.0
        %1866 = vmatpush1.msra.mxu0 0.0
        %1867 = vmatprep.mubr.f32.mxu0 0.0
        %v1868 = vand.u32 %v819, 4294901760
        %v1869 = vsub.f32 %v819, %v1868
        %v1870 = vand.u32 %v1869, 4294901760
        %v1871 = vsub.f32 %v1869, %v1870
        %v1872 = vand.u32 %v1871, 4294901760
        %1873 = vmatmul.mubr.f32.gmra.mrb[0].mxu0 %v1872
        %v1874 = vpop.f32.mrb[0].mxu0
        %v1875 = vadd.f32 0.0, %v1874
        %v1876 = vpop.f32.mrb[0].mxu0
        %1877 = vmatprep.mubr.f32.mxu0 0.0
        %v1878 = vand.u32 %v822, 4294901760
        %v1879 = vsub.f32 %v822, %v1878
        %v1880 = vand.u32 %v1879, 4294901760
        %v1881 = vsub.f32 %v1879, %v1880
        %v1882 = vand.u32 %v1881, 4294901760
        %1883 = vmatmul.mubr.f32.gmra.mrb[0].mxu0 %v1882
        %v1884 = vpop.f32.mrb[0].mxu0
        %v1885 = vadd.f32 0.0, %v1884
        %v1886 = vpop.f32.mrb[0].mxu0
        %1887 = vdwg.mxu0
        %1888 = vmatprep.subr.mxu0 0.0
        %v1889 = vand.u32 %v807, 4294901760
        %v1890 = vsub.f32 %v807, %v1889
        %v1891 = vand.u32 %v1890, 4294901760
        %v1892 = vsub.f32 %v1890, %v1891
        %v1893 = vand.u32 %v1892, 4294901760
        %1894 = vmatpush1.msra.mxu0 %v1893
        %1895 = vmatprep.subr.mxu0 0.0
        %1896 = vmatpush1.msra.mxu0 0.0
        %1897 = vmatprep.subr.mxu0 0.0
        %1898 = vmatpush1.msra.mxu0 0.0
        %1899 = vmatprep.subr.mxu0 0.0
        %1900 = vmatpush1.msra.mxu0 0.0
        %1901 = vmatprep.subr.mxu0 0.0
        %1902 = vmatpush1.msra.mxu0 0.0
        %1903 = vmatprep.subr.mxu0 0.0
        %1904 = vmatpush1.msra.mxu0 0.0
        %1905 = vmatprep.subr.mxu0 0.0
        %1906 = vmatpush1.msra.mxu0 0.0
        %1907 = vmatprep.subr.mxu0 0.0
        %1908 = vmatpush1.msra.mxu0 0.0
        %1909 = vmatprep.subr.mxu0 0.0
        %1910 = vmatpush1.msra.mxu0 0.0
        %1911 = vmatprep.subr.mxu0 0.0
        %1912 = vmatpush1.msra.mxu0 0.0
        %1913 = vmatprep.subr.mxu0 0.0
        %1914 = vmatpush1.msra.mxu0 0.0
        %1915 = vmatprep.subr.mxu0 0.0
        %1916 = vmatpush1.msra.mxu0 0.0
        %1917 = vmatprep.subr.mxu0 0.0
        %1918 = vmatpush1.msra.mxu0 0.0
        %1919 = vmatprep.subr.mxu0 0.0
        %1920 = vmatpush1.msra.mxu0 0.0
        %1921 = vmatprep.subr.mxu0 0.0
        %1922 = vmatpush1.msra.mxu0 0.0
        %1923 = vmatprep.subr.mxu0 0.0
        %1924 = vmatpush1.msra.mxu0 0.0
        %1925 = vmatprep.subr.mxu0 0.0
        %1926 = vmatpush1.msra.mxu0 0.0
        %1927 = vmatprep.subr.mxu0 0.0
        %1928 = vmatpush1.msra.mxu0 0.0
        %1929 = vmatprep.subr.mxu0 0.0
        %1930 = vmatpush1.msra.mxu0 0.0
        %1931 = vmatprep.subr.mxu0 0.0
        %1932 = vmatpush1.msra.mxu0 0.0
        %1933 = vmatprep.subr.mxu0 0.0
        %1934 = vmatpush1.msra.mxu0 0.0
        %1935 = vmatprep.subr.mxu0 0.0
        %1936 = vmatpush1.msra.mxu0 0.0
        %1937 = vmatprep.subr.mxu0 0.0
        %1938 = vmatpush1.msra.mxu0 0.0
        %1939 = vmatprep.subr.mxu0 0.0
        %1940 = vmatpush1.msra.mxu0 0.0
        %1941 = vmatprep.subr.mxu0 0.0
        %1942 = vmatpush1.msra.mxu0 0.0
        %1943 = vmatprep.subr.mxu0 0.0
        %1944 = vmatpush1.msra.mxu0 0.0
        %1945 = vmatprep.subr.mxu0 0.0
        %1946 = vmatpush1.msra.mxu0 0.0
        %1947 = vmatprep.subr.mxu0 0.0
        %1948 = vmatpush1.msra.mxu0 0.0
        %1949 = vmatprep.subr.mxu0 0.0
        %1950 = vmatpush1.msra.mxu0 0.0
        %1951 = vmatprep.subr.mxu0 0.0
        %1952 = vmatpush1.msra.mxu0 0.0
        %1953 = vmatprep.subr.mxu0 0.0
        %1954 = vmatpush1.msra.mxu0 0.0
        %1955 = vmatprep.subr.mxu0 0.0
        %1956 = vmatpush1.msra.mxu0 0.0
        %1957 = vmatprep.mubr.f32.mxu0 0.0
        %v1958 = vand.u32 %v819, 4294901760
        %1959 = vmatmul.mubr.f32.gmra.mrb[0].mxu0 %v1958
        %v1960 = vpop.f32.mrb[0].mxu0
        %v1961 = vadd.f32 %v1875, %v1960
        %v1962 = vpop.f32.mrb[0].mxu0
        %1963 = vmatprep.mubr.f32.mxu0 0.0
        %v1964 = vand.u32 %v822, 4294901760
        %1965 = vmatmul.mubr.f32.gmra.mrb[0].mxu0 %v1964
        %v1966 = vpop.f32.mrb[0].mxu0
        %v1967 = vadd.f32 %v1885, %v1966
        %v1968 = vpop.f32.mrb[0].mxu0
        %1969 = vdwg.mxu0
        %1970 = vmatprep.subr.mxu0 0.0
        %v1971 = vand.u32 %v807, 4294901760
        %v1972 = vsub.f32 %v807, %v1971
        %1973 = vmatpush1.msra.mxu0 %v1972
        %1974 = vmatprep.subr.mxu0 0.0
        %1975 = vmatpush1.msra.mxu0 0.0
        %1976 = vmatprep.subr.mxu0 0.0
        %1977 = vmatpush1.msra.mxu0 0.0
        %1978 = vmatprep.subr.mxu0 0.0
        %1979 = vmatpush1.msra.mxu0 0.0
        %1980 = vmatprep.subr.mxu0 0.0
        %1981 = vmatpush1.msra.mxu0 0.0
        %1982 = vmatprep.subr.mxu0 0.0
        %1983 = vmatpush1.msra.mxu0 0.0
        %1984 = vmatprep.subr.mxu0 0.0
        %1985 = vmatpush1.msra.mxu0 0.0
        %1986 = vmatprep.subr.mxu0 0.0
        %1987 = vmatpush1.msra.mxu0 0.0
        %1988 = vmatprep.subr.mxu0 0.0
        %1989 = vmatpush1.msra.mxu0 0.0
        %1990 = vmatprep.subr.mxu0 0.0
        %1991 = vmatpush1.msra.mxu0 0.0
        %1992 = vmatprep.subr.mxu0 0.0
        %1993 = vmatpush1.msra.mxu0 0.0
        %1994 = vmatprep.subr.mxu0 0.0
        %1995 = vmatpush1.msra.mxu0 0.0
        %1996 = vmatprep.subr.mxu0 0.0
        %1997 = vmatpush1.msra.mxu0 0.0
        %1998 = vmatprep.subr.mxu0 0.0
        %1999 = vmatpush1.msra.mxu0 0.0
        %2000 = vmatprep.subr.mxu0 0.0
        %2001 = vmatpush1.msra.mxu0 0.0
        %2002 = vmatprep.subr.mxu0 0.0
        %2003 = vmatpush1.msra.mxu0 0.0
        %2004 = vmatprep.subr.mxu0 0.0
        %2005 = vmatpush1.msra.mxu0 0.0
        %2006 = vmatprep.subr.mxu0 0.0
        %2007 = vmatpush1.msra.mxu0 0.0
        %2008 = vmatprep.subr.mxu0 0.0
        %2009 = vmatpush1.msra.mxu0 0.0
        %2010 = vmatprep.subr.mxu0 0.0
        %2011 = vmatpush1.msra.mxu0 0.0
        %2012 = vmatprep.subr.mxu0 0.0
        %2013 = vmatpush1.msra.mxu0 0.0
        %2014 = vmatprep.subr.mxu0 0.0
        %2015 = vmatpush1.msra.mxu0 0.0
        %2016 = vmatprep.subr.mxu0 0.0
        %2017 = vmatpush1.msra.mxu0 0.0
        %2018 = vmatprep.subr.mxu0 0.0
        %2019 = vmatpush1.msra.mxu0 0.0
        %2020 = vmatprep.subr.mxu0 0.0
        %2021 = vmatpush1.msra.mxu0 0.0
        %2022 = vmatprep.subr.mxu0 0.0
        %2023 = vmatpush1.msra.mxu0 0.0
        %2024 = vmatprep.subr.mxu0 0.0
        %2025 = vmatpush1.msra.mxu0 0.0
        %2026 = vmatprep.subr.mxu0 0.0
        %2027 = vmatpush1.msra.mxu0 0.0
        %2028 = vmatprep.subr.mxu0 0.0
        %2029 = vmatpush1.msra.mxu0 0.0
        %2030 = vmatprep.subr.mxu0 0.0
        %2031 = vmatpush1.msra.mxu0 0.0
        %2032 = vmatprep.subr.mxu0 0.0
        %2033 = vmatpush1.msra.mxu0 0.0
        %2034 = vmatprep.subr.mxu0 0.0
        %2035 = vmatpush1.msra.mxu0 0.0
        %2036 = vmatprep.mubr.f32.mxu0 0.0
        %v2037 = vand.u32 %v819, 4294901760
        %v2038 = vsub.f32 %v819, %v2037
        %2039 = vmatmul.mubr.f32.gmra.mrb[0].mxu0 %v2038
        %v2040 = vpop.f32.mrb[0].mxu0
        %v2041 = vadd.f32 %v1961, %v2040
        %v2042 = vpop.f32.mrb[0].mxu0
        %2043 = vmatprep.mubr.f32.mxu0 0.0
        %v2044 = vand.u32 %v822, 4294901760
        %v2045 = vsub.f32 %v822, %v2044
        %2046 = vmatmul.mubr.f32.gmra.mrb[0].mxu0 %v2045
        %v2047 = vpop.f32.mrb[0].mxu0
        %v2048 = vadd.f32 %v1967, %v2047
        %v2049 = vpop.f32.mrb[0].mxu0
        %2050 = vdwg.mxu0
        %2051 = vmatprep.subr.mxu0 0.0
        %v2052 = vand.u32 %v807, 4294901760
        %2053 = vmatpush1.msra.mxu0 %v2052
        %2054 = vmatprep.subr.mxu0 0.0
        %2055 = vmatpush1.msra.mxu0 0.0
        %2056 = vmatprep.subr.mxu0 0.0
        %2057 = vmatpush1.msra.mxu0 0.0
        %2058 = vmatprep.subr.mxu0 0.0
        %2059 = vmatpush1.msra.mxu0 0.0
        %2060 = vmatprep.subr.mxu0 0.0
        %2061 = vmatpush1.msra.mxu0 0.0
        %2062 = vmatprep.subr.mxu0 0.0
        %2063 = vmatpush1.msra.mxu0 0.0
        %2064 = vmatprep.subr.mxu0 0.0
        %2065 = vmatpush1.msra.mxu0 0.0
        %2066 = vmatprep.subr.mxu0 0.0
        %2067 = vmatpush1.msra.mxu0 0.0
        %2068 = vmatprep.subr.mxu0 0.0
        %2069 = vmatpush1.msra.mxu0 0.0
        %2070 = vmatprep.subr.mxu0 0.0
        %2071 = vmatpush1.msra.mxu0 0.0
        %2072 = vmatprep.subr.mxu0 0.0
        %2073 = vmatpush1.msra.mxu0 0.0
        %2074 = vmatprep.subr.mxu0 0.0
        %2075 = vmatpush1.msra.mxu0 0.0
        %2076 = vmatprep.subr.mxu0 0.0
        %2077 = vmatpush1.msra.mxu0 0.0
        %2078 = vmatprep.subr.mxu0 0.0
        %2079 = vmatpush1.msra.mxu0 0.0
        %2080 = vmatprep.subr.mxu0 0.0
        %2081 = vmatpush1.msra.mxu0 0.0
        %2082 = vmatprep.subr.mxu0 0.0
        %2083 = vmatpush1.msra.mxu0 0.0
        %2084 = vmatprep.subr.mxu0 0.0
        %2085 = vmatpush1.msra.mxu0 0.0
        %2086 = vmatprep.subr.mxu0 0.0
        %2087 = vmatpush1.msra.mxu0 0.0
        %2088 = vmatprep.subr.mxu0 0.0
        %2089 = vmatpush1.msra.mxu0 0.0
        %2090 = vmatprep.subr.mxu0 0.0
        %2091 = vmatpush1.msra.mxu0 0.0
        %2092 = vmatprep.subr.mxu0 0.0
        %2093 = vmatpush1.msra.mxu0 0.0
        %2094 = vmatprep.subr.mxu0 0.0
        %2095 = vmatpush1.msra.mxu0 0.0
        %2096 = vmatprep.subr.mxu0 0.0
        %2097 = vmatpush1.msra.mxu0 0.0
        %2098 = vmatprep.subr.mxu0 0.0
        %2099 = vmatpush1.msra.mxu0 0.0
        %2100 = vmatprep.subr.mxu0 0.0
        %2101 = vmatpush1.msra.mxu0 0.0
        %2102 = vmatprep.subr.mxu0 0.0
        %2103 = vmatpush1.msra.mxu0 0.0
        %2104 = vmatprep.subr.mxu0 0.0
        %2105 = vmatpush1.msra.mxu0 0.0
        %2106 = vmatprep.subr.mxu0 0.0
        %2107 = vmatpush1.msra.mxu0 0.0
        %2108 = vmatprep.subr.mxu0 0.0
        %2109 = vmatpush1.msra.mxu0 0.0
        %2110 = vmatprep.subr.mxu0 0.0
        %2111 = vmatpush1.msra.mxu0 0.0
        %2112 = vmatprep.subr.mxu0 0.0
        %2113 = vmatpush1.msra.mxu0 0.0
        %2114 = vmatprep.subr.mxu0 0.0
        %2115 = vmatpush1.msra.mxu0 0.0
        %2116 = vmatprep.mubr.f32.mxu0 0.0
        %v2117 = vand.u32 %v819, 4294901760
        %v2118 = vsub.f32 %v819, %v2117
        %v2119 = vand.u32 %v2118, 4294901760
        %2120 = vmatmul.mubr.f32.gmra.mrb[0].mxu0 %v2119
        %v2121 = vpop.f32.mrb[0].mxu0
        %v2122 = vadd.f32 %v2041, %v2121
        %v2123 = vpop.f32.mrb[0].mxu0
        %2124 = vmatprep.mubr.f32.mxu0 0.0
        %v2125 = vand.u32 %v822, 4294901760
        %v2126 = vsub.f32 %v822, %v2125
        %v2127 = vand.u32 %v2126, 4294901760
        %2128 = vmatmul.mubr.f32.gmra.mrb[0].mxu0 %v2127
        %v2129 = vpop.f32.mrb[0].mxu0
        %v2130 = vadd.f32 %v2048, %v2129
        %v2131 = vpop.f32.mrb[0].mxu0
        %2132 = vdwg.mxu0
        %2133 = vmatprep.subr.mxu0 0.0
        %v2134 = vand.u32 %v807, 4294901760
        %v2135 = vsub.f32 %v807, %v2134
        %v2136 = vand.u32 %v2135, 4294901760
        %2137 = vmatpush1.msra.mxu0 %v2136
        %2138 = vmatprep.subr.mxu0 0.0
        %2139 = vmatpush1.msra.mxu0 0.0
        %2140 = vmatprep.subr.mxu0 0.0
        %2141 = vmatpush1.msra.mxu0 0.0
        %2142 = vmatprep.subr.mxu0 0.0
        %2143 = vmatpush1.msra.mxu0 0.0
        %2144 = vmatprep.subr.mxu0 0.0
        %2145 = vmatpush1.msra.mxu0 0.0
        %2146 = vmatprep.subr.mxu0 0.0
        %2147 = vmatpush1.msra.mxu0 0.0
        %2148 = vmatprep.subr.mxu0 0.0
        %2149 = vmatpush1.msra.mxu0 0.0
        %2150 = vmatprep.subr.mxu0 0.0
        %2151 = vmatpush1.msra.mxu0 0.0
        %2152 = vmatprep.subr.mxu0 0.0
        %2153 = vmatpush1.msra.mxu0 0.0
        %2154 = vmatprep.subr.mxu0 0.0
        %2155 = vmatpush1.msra.mxu0 0.0
        %2156 = vmatprep.subr.mxu0 0.0
        %2157 = vmatpush1.msra.mxu0 0.0
        %2158 = vmatprep.subr.mxu0 0.0
        %2159 = vmatpush1.msra.mxu0 0.0
        %2160 = vmatprep.subr.mxu0 0.0
        %2161 = vmatpush1.msra.mxu0 0.0
        %2162 = vmatprep.subr.mxu0 0.0
        %2163 = vmatpush1.msra.mxu0 0.0
        %2164 = vmatprep.subr.mxu0 0.0
        %2165 = vmatpush1.msra.mxu0 0.0
        %2166 = vmatprep.subr.mxu0 0.0
        %2167 = vmatpush1.msra.mxu0 0.0
        %2168 = vmatprep.subr.mxu0 0.0
        %2169 = vmatpush1.msra.mxu0 0.0
        %2170 = vmatprep.subr.mxu0 0.0
        %2171 = vmatpush1.msra.mxu0 0.0
        %2172 = vmatprep.subr.mxu0 0.0
        %2173 = vmatpush1.msra.mxu0 0.0
        %2174 = vmatprep.subr.mxu0 0.0
        %2175 = vmatpush1.msra.mxu0 0.0
        %2176 = vmatprep.subr.mxu0 0.0
        %2177 = vmatpush1.msra.mxu0 0.0
        %2178 = vmatprep.subr.mxu0 0.0
        %2179 = vmatpush1.msra.mxu0 0.0
        %2180 = vmatprep.subr.mxu0 0.0
        %2181 = vmatpush1.msra.mxu0 0.0
        %2182 = vmatprep.subr.mxu0 0.0
        %2183 = vmatpush1.msra.mxu0 0.0
        %2184 = vmatprep.subr.mxu0 0.0
        %2185 = vmatpush1.msra.mxu0 0.0
        %2186 = vmatprep.subr.mxu0 0.0
        %2187 = vmatpush1.msra.mxu0 0.0
        %2188 = vmatprep.subr.mxu0 0.0
        %2189 = vmatpush1.msra.mxu0 0.0
        %2190 = vmatprep.subr.mxu0 0.0
        %2191 = vmatpush1.msra.mxu0 0.0
        %2192 = vmatprep.subr.mxu0 0.0
        %2193 = vmatpush1.msra.mxu0 0.0
        %2194 = vmatprep.subr.mxu0 0.0
        %2195 = vmatpush1.msra.mxu0 0.0
        %2196 = vmatprep.subr.mxu0 0.0
        %2197 = vmatpush1.msra.mxu0 0.0
        %2198 = vmatprep.subr.mxu0 0.0
        %2199 = vmatpush1.msra.mxu0 0.0
        %2200 = vmatprep.mubr.f32.mxu0 0.0
        %v2201 = vand.u32 %v819, 4294901760
        %2202 = vmatmul.mubr.f32.gmra.mrb[0].mxu0 %v2201
        %v2203 = vpop.f32.mrb[0].mxu0
        %v2204 = vadd.f32 %v2122, %v2203
        %v2205 = vpop.f32.mrb[0].mxu0
        %2206 = vmatprep.mubr.f32.mxu0 0.0
        %v2207 = vand.u32 %v822, 4294901760
        %2208 = vmatmul.mubr.f32.gmra.mrb[0].mxu0 %v2207
        %v2209 = vpop.f32.mrb[0].mxu0
        %v2210 = vadd.f32 %v2130, %v2209
        %v2211 = vpop.f32.mrb[0].mxu0
        %2212 = vdwg.mxu0
        %2213 = vmatprep.subr.mxu0 0.0
        %v2214 = vand.u32 %v807, 4294901760
        %2215 = vmatpush1.msra.mxu0 %v2214
        %2216 = vmatprep.subr.mxu0 0.0
        %2217 = vmatpush1.msra.mxu0 0.0
        %2218 = vmatprep.subr.mxu0 0.0
        %2219 = vmatpush1.msra.mxu0 0.0
        %2220 = vmatprep.subr.mxu0 0.0
        %2221 = vmatpush1.msra.mxu0 0.0
        %2222 = vmatprep.subr.mxu0 0.0
        %2223 = vmatpush1.msra.mxu0 0.0
        %2224 = vmatprep.subr.mxu0 0.0
        %2225 = vmatpush1.msra.mxu0 0.0
        %2226 = vmatprep.subr.mxu0 0.0
        %2227 = vmatpush1.msra.mxu0 0.0
        %2228 = vmatprep.subr.mxu0 0.0
        %2229 = vmatpush1.msra.mxu0 0.0
        %2230 = vmatprep.subr.mxu0 0.0
        %2231 = vmatpush1.msra.mxu0 0.0
        %2232 = vmatprep.subr.mxu0 0.0
        %2233 = vmatpush1.msra.mxu0 0.0
        %2234 = vmatprep.subr.mxu0 0.0
        %2235 = vmatpush1.msra.mxu0 0.0
        %2236 = vmatprep.subr.mxu0 0.0
        %2237 = vmatpush1.msra.mxu0 0.0
        %2238 = vmatprep.subr.mxu0 0.0
        %2239 = vmatpush1.msra.mxu0 0.0
        %2240 = vmatprep.subr.mxu0 0.0
        %2241 = vmatpush1.msra.mxu0 0.0
        %2242 = vmatprep.subr.mxu0 0.0
        %2243 = vmatpush1.msra.mxu0 0.0
        %2244 = vmatprep.subr.mxu0 0.0
        %2245 = vmatpush1.msra.mxu0 0.0
        %2246 = vmatprep.subr.mxu0 0.0
        %2247 = vmatpush1.msra.mxu0 0.0
        %2248 = vmatprep.subr.mxu0 0.0
        %2249 = vmatpush1.msra.mxu0 0.0
        %2250 = vmatprep.subr.mxu0 0.0
        %2251 = vmatpush1.msra.mxu0 0.0
        %2252 = vmatprep.subr.mxu0 0.0
        %2253 = vmatpush1.msra.mxu0 0.0
        %2254 = vmatprep.subr.mxu0 0.0
        %2255 = vmatpush1.msra.mxu0 0.0
        %2256 = vmatprep.subr.mxu0 0.0
        %2257 = vmatpush1.msra.mxu0 0.0
        %2258 = vmatprep.subr.mxu0 0.0
        %2259 = vmatpush1.msra.mxu0 0.0
        %2260 = vmatprep.subr.mxu0 0.0
        %2261 = vmatpush1.msra.mxu0 0.0
        %2262 = vmatprep.subr.mxu0 0.0
        %2263 = vmatpush1.msra.mxu0 0.0
        %2264 = vmatprep.subr.mxu0 0.0
        %2265 = vmatpush1.msra.mxu0 0.0
        %2266 = vmatprep.subr.mxu0 0.0
        %2267 = vmatpush1.msra.mxu0 0.0
        %2268 = vmatprep.subr.mxu0 0.0
        %2269 = vmatpush1.msra.mxu0 0.0
        %2270 = vmatprep.subr.mxu0 0.0
        %2271 = vmatpush1.msra.mxu0 0.0
        %2272 = vmatprep.subr.mxu0 0.0
        %2273 = vmatpush1.msra.mxu0 0.0
        %2274 = vmatprep.subr.mxu0 0.0
        %2275 = vmatpush1.msra.mxu0 0.0
        %2276 = vmatprep.subr.mxu0 0.0
        %2277 = vmatpush1.msra.mxu0 0.0
        %2278 = vmatprep.mubr.f32.mxu0 0.0
        %v2279 = vand.u32 %v819, 4294901760
        %2280 = vmatmul.mubr.f32.gmra.mrb[0].mxu0 %v2279
        %v2281 = vpop.f32.mrb[0].mxu0
        %v2282 = vadd.f32 %v2204, %v2281
        %v2283 = vpop.f32.mrb[0].mxu0
        %2284 = vmatprep.mubr.f32.mxu0 0.0
        %v2285 = vand.u32 %v822, 4294901760
        %2286 = vmatmul.mubr.f32.gmra.mrb[0].mxu0 %v2285
        %v2287 = vpop.f32.mrb[0].mxu0
        %v2288 = vadd.f32 %v2210, %v2287
        %v2289 = vpop.f32.mrb[0].mxu0
        %2290 = vdwg.mxu0
        %2291 = vmatprep.subr.mxu0 0.0
        %v2292 = vand.u32 %v813, 4294901760
        %2293 = vmatpush1.msra.mxu0 %v2292
        %2294 = vmatprep.subr.mxu0 0.0
        %2295 = vmatpush1.msra.mxu0 0.0
        %2296 = vmatprep.subr.mxu0 0.0
        %2297 = vmatpush1.msra.mxu0 0.0
        %2298 = vmatprep.subr.mxu0 0.0
        %2299 = vmatpush1.msra.mxu0 0.0
        %2300 = vmatprep.subr.mxu0 0.0
        %2301 = vmatpush1.msra.mxu0 0.0
        %2302 = vmatprep.subr.mxu0 0.0
        %2303 = vmatpush1.msra.mxu0 0.0
        %2304 = vmatprep.subr.mxu0 0.0
        %2305 = vmatpush1.msra.mxu0 0.0
        %2306 = vmatprep.subr.mxu0 0.0
        %2307 = vmatpush1.msra.mxu0 0.0
        %2308 = vmatprep.subr.mxu0 0.0
        %2309 = vmatpush1.msra.mxu0 0.0
        %2310 = vmatprep.subr.mxu0 0.0
        %2311 = vmatpush1.msra.mxu0 0.0
        %2312 = vmatprep.subr.mxu0 0.0
        %2313 = vmatpush1.msra.mxu0 0.0
        %2314 = vmatprep.subr.mxu0 0.0
        %2315 = vmatpush1.msra.mxu0 0.0
        %2316 = vmatprep.subr.mxu0 0.0
        %2317 = vmatpush1.msra.mxu0 0.0
        %2318 = vmatprep.subr.mxu0 0.0
        %2319 = vmatpush1.msra.mxu0 0.0
        %2320 = vmatprep.subr.mxu0 0.0
        %2321 = vmatpush1.msra.mxu0 0.0
        %2322 = vmatprep.subr.mxu0 0.0
        %2323 = vmatpush1.msra.mxu0 0.0
        %2324 = vmatprep.subr.mxu0 0.0
        %2325 = vmatpush1.msra.mxu0 0.0
        %2326 = vmatprep.subr.mxu0 0.0
        %2327 = vmatpush1.msra.mxu0 0.0
        %2328 = vmatprep.subr.mxu0 0.0
        %2329 = vmatpush1.msra.mxu0 0.0
        %2330 = vmatprep.subr.mxu0 0.0
        %2331 = vmatpush1.msra.mxu0 0.0
        %2332 = vmatprep.subr.mxu0 0.0
        %2333 = vmatpush1.msra.mxu0 0.0
        %2334 = vmatprep.subr.mxu0 0.0
        %2335 = vmatpush1.msra.mxu0 0.0
        %2336 = vmatprep.subr.mxu0 0.0
        %2337 = vmatpush1.msra.mxu0 0.0
        %2338 = vmatprep.subr.mxu0 0.0
        %2339 = vmatpush1.msra.mxu0 0.0
        %2340 = vmatprep.subr.mxu0 0.0
        %2341 = vmatpush1.msra.mxu0 0.0
        %2342 = vmatprep.subr.mxu0 0.0
        %2343 = vmatpush1.msra.mxu0 0.0
        %2344 = vmatprep.subr.mxu0 0.0
        %2345 = vmatpush1.msra.mxu0 0.0
        %2346 = vmatprep.subr.mxu0 0.0
        %2347 = vmatpush1.msra.mxu0 0.0
        %2348 = vmatprep.subr.mxu0 0.0
        %2349 = vmatpush1.msra.mxu0 0.0
        %2350 = vmatprep.subr.mxu0 0.0
        %2351 = vmatpush1.msra.mxu0 0.0
        %2352 = vmatprep.subr.mxu0 0.0
        %2353 = vmatpush1.msra.mxu0 0.0
        %2354 = vmatprep.subr.mxu0 0.0
        %2355 = vmatpush1.msra.mxu0 0.0
        %2356 = vmatprep.mubr.f32.mxu0 0.0
        %v2357 = vand.u32 %v819, 4294901760
        %v2358 = vsub.f32 %v819, %v2357
        %v2359 = vand.u32 %v2358, 4294901760
        %v2360 = vsub.f32 %v2358, %v2359
        %v2361 = vand.u32 %v2360, 4294901760
        %2362 = vmatmul.mubr.f32.gmra.mrb[0].mxu0 %v2361
        %v2363 = vpop.f32.mrb[0].mxu0
        %v2364 = vadd.f32 0.0, %v2363
        %v2365 = vpop.f32.mrb[0].mxu0
        %2366 = vmatprep.mubr.f32.mxu0 0.0
        %v2367 = vand.u32 %v822, 4294901760
        %v2368 = vsub.f32 %v822, %v2367
        %v2369 = vand.u32 %v2368, 4294901760
        %v2370 = vsub.f32 %v2368, %v2369
        %v2371 = vand.u32 %v2370, 4294901760
        %2372 = vmatmul.mubr.f32.gmra.mrb[0].mxu0 %v2371
        %v2373 = vpop.f32.mrb[0].mxu0
        %v2374 = vadd.f32 0.0, %v2373
        %v2375 = vpop.f32.mrb[0].mxu0
        %2376 = vdwg.mxu0
        %2377 = vmatprep.subr.mxu0 0.0
        %v2378 = vand.u32 %v813, 4294901760
        %v2379 = vsub.f32 %v813, %v2378
        %v2380 = vand.u32 %v2379, 4294901760
        %v2381 = vsub.f32 %v2379, %v2380
        %v2382 = vand.u32 %v2381, 4294901760
        %2383 = vmatpush1.msra.mxu0 %v2382
        %2384 = vmatprep.subr.mxu0 0.0
        %2385 = vmatpush1.msra.mxu0 0.0
        %2386 = vmatprep.subr.mxu0 0.0
        %2387 = vmatpush1.msra.mxu0 0.0
        %2388 = vmatprep.subr.mxu0 0.0
        %2389 = vmatpush1.msra.mxu0 0.0
        %2390 = vmatprep.subr.mxu0 0.0
        %2391 = vmatpush1.msra.mxu0 0.0
        %2392 = vmatprep.subr.mxu0 0.0
        %2393 = vmatpush1.msra.mxu0 0.0
        %2394 = vmatprep.subr.mxu0 0.0
        %2395 = vmatpush1.msra.mxu0 0.0
        %2396 = vmatprep.subr.mxu0 0.0
        %2397 = vmatpush1.msra.mxu0 0.0
        %2398 = vmatprep.subr.mxu0 0.0
        %2399 = vmatpush1.msra.mxu0 0.0
        %2400 = vmatprep.subr.mxu0 0.0
        %2401 = vmatpush1.msra.mxu0 0.0
        %2402 = vmatprep.subr.mxu0 0.0
        %2403 = vmatpush1.msra.mxu0 0.0
        %2404 = vmatprep.subr.mxu0 0.0
        %2405 = vmatpush1.msra.mxu0 0.0
        %2406 = vmatprep.subr.mxu0 0.0
        %2407 = vmatpush1.msra.mxu0 0.0
        %2408 = vmatprep.subr.mxu0 0.0
        %2409 = vmatpush1.msra.mxu0 0.0
        %2410 = vmatprep.subr.mxu0 0.0
        %2411 = vmatpush1.msra.mxu0 0.0
        %2412 = vmatprep.subr.mxu0 0.0
        %2413 = vmatpush1.msra.mxu0 0.0
        %2414 = vmatprep.subr.mxu0 0.0
        %2415 = vmatpush1.msra.mxu0 0.0
        %2416 = vmatprep.subr.mxu0 0.0
        %2417 = vmatpush1.msra.mxu0 0.0
        %2418 = vmatprep.subr.mxu0 0.0
        %2419 = vmatpush1.msra.mxu0 0.0
        %2420 = vmatprep.subr.mxu0 0.0
        %2421 = vmatpush1.msra.mxu0 0.0
        %2422 = vmatprep.subr.mxu0 0.0
        %2423 = vmatpush1.msra.mxu0 0.0
        %2424 = vmatprep.subr.mxu0 0.0
        %2425 = vmatpush1.msra.mxu0 0.0
        %2426 = vmatprep.subr.mxu0 0.0
        %2427 = vmatpush1.msra.mxu0 0.0
        %2428 = vmatprep.subr.mxu0 0.0
        %2429 = vmatpush1.msra.mxu0 0.0
        %2430 = vmatprep.subr.mxu0 0.0
        %2431 = vmatpush1.msra.mxu0 0.0
        %2432 = vmatprep.subr.mxu0 0.0
        %2433 = vmatpush1.msra.mxu0 0.0
        %2434 = vmatprep.subr.mxu0 0.0
        %2435 = vmatpush1.msra.mxu0 0.0
        %2436 = vmatprep.subr.mxu0 0.0
        %2437 = vmatpush1.msra.mxu0 0.0
        %2438 = vmatprep.subr.mxu0 0.0
        %2439 = vmatpush1.msra.mxu0 0.0
        %2440 = vmatprep.subr.mxu0 0.0
        %2441 = vmatpush1.msra.mxu0 0.0
        %2442 = vmatprep.subr.mxu0 0.0
        %2443 = vmatpush1.msra.mxu0 0.0
        %2444 = vmatprep.subr.mxu0 0.0
        %2445 = vmatpush1.msra.mxu0 0.0
        %2446 = vmatprep.mubr.f32.mxu0 0.0
        %v2447 = vand.u32 %v819, 4294901760
        %2448 = vmatmul.mubr.f32.gmra.mrb[0].mxu0 %v2447
        %v2449 = vpop.f32.mrb[0].mxu0
        %v2450 = vadd.f32 %v2364, %v2449
        %v2451 = vpop.f32.mrb[0].mxu0
        %2452 = vmatprep.mubr.f32.mxu0 0.0
        %v2453 = vand.u32 %v822, 4294901760
        %2454 = vmatmul.mubr.f32.gmra.mrb[0].mxu0 %v2453
        %v2455 = vpop.f32.mrb[0].mxu0
        %v2456 = vadd.f32 %v2374, %v2455
        %v2457 = vpop.f32.mrb[0].mxu0
        %2458 = vdwg.mxu0
        %2459 = vmatprep.subr.mxu0 0.0
        %v2460 = vand.u32 %v813, 4294901760
        %v2461 = vsub.f32 %v813, %v2460
        %2462 = vmatpush1.msra.mxu0 %v2461
        %2463 = vmatprep.subr.mxu0 0.0
        %2464 = vmatpush1.msra.mxu0 0.0
        %2465 = vmatprep.subr.mxu0 0.0
        %2466 = vmatpush1.msra.mxu0 0.0
        %2467 = vmatprep.subr.mxu0 0.0
        %2468 = vmatpush1.msra.mxu0 0.0
        %2469 = vmatprep.subr.mxu0 0.0
        %2470 = vmatpush1.msra.mxu0 0.0
        %2471 = vmatprep.subr.mxu0 0.0
        %2472 = vmatpush1.msra.mxu0 0.0
        %2473 = vmatprep.subr.mxu0 0.0
        %2474 = vmatpush1.msra.mxu0 0.0
        %2475 = vmatprep.subr.mxu0 0.0
        %2476 = vmatpush1.msra.mxu0 0.0
        %2477 = vmatprep.subr.mxu0 0.0
        %2478 = vmatpush1.msra.mxu0 0.0
        %2479 = vmatprep.subr.mxu0 0.0
        %2480 = vmatpush1.msra.mxu0 0.0
        %2481 = vmatprep.subr.mxu0 0.0
        %2482 = vmatpush1.msra.mxu0 0.0
        %2483 = vmatprep.subr.mxu0 0.0
        %2484 = vmatpush1.msra.mxu0 0.0
        %2485 = vmatprep.subr.mxu0 0.0
        %2486 = vmatpush1.msra.mxu0 0.0
        %2487 = vmatprep.subr.mxu0 0.0
        %2488 = vmatpush1.msra.mxu0 0.0
        %2489 = vmatprep.subr.mxu0 0.0
        %2490 = vmatpush1.msra.mxu0 0.0
        %2491 = vmatprep.subr.mxu0 0.0
        %2492 = vmatpush1.msra.mxu0 0.0
        %2493 = vmatprep.subr.mxu0 0.0
        %2494 = vmatpush1.msra.mxu0 0.0
        %2495 = vmatprep.subr.mxu0 0.0
        %2496 = vmatpush1.msra.mxu0 0.0
        %2497 = vmatprep.subr.mxu0 0.0
        %2498 = vmatpush1.msra.mxu0 0.0
        %2499 = vmatprep.subr.mxu0 0.0
        %2500 = vmatpush1.msra.mxu0 0.0
        %2501 = vmatprep.subr.mxu0 0.0
        %2502 = vmatpush1.msra.mxu0 0.0
        %2503 = vmatprep.subr.mxu0 0.0
        %2504 = vmatpush1.msra.mxu0 0.0
        %2505 = vmatprep.subr.mxu0 0.0
        %2506 = vmatpush1.msra.mxu0 0.0
        %2507 = vmatprep.subr.mxu0 0.0
        %2508 = vmatpush1.msra.mxu0 0.0
        %2509 = vmatprep.subr.mxu0 0.0
        %2510 = vmatpush1.msra.mxu0 0.0
        %2511 = vmatprep.subr.mxu0 0.0
        %2512 = vmatpush1.msra.mxu0 0.0
        %2513 = vmatprep.subr.mxu0 0.0
        %2514 = vmatpush1.msra.mxu0 0.0
        %2515 = vmatprep.subr.mxu0 0.0
        %2516 = vmatpush1.msra.mxu0 0.0
        %2517 = vmatprep.subr.mxu0 0.0
        %2518 = vmatpush1.msra.mxu0 0.0
        %2519 = vmatprep.subr.mxu0 0.0
        %2520 = vmatpush1.msra.mxu0 0.0
        %2521 = vmatprep.subr.mxu0 0.0
        %2522 = vmatpush1.msra.mxu0 0.0
        %2523 = vmatprep.subr.mxu0 0.0
        %2524 = vmatpush1.msra.mxu0 0.0
        %2525 = vmatprep.mubr.f32.mxu0 0.0
        %v2526 = vand.u32 %v819, 4294901760
        %v2527 = vsub.f32 %v819, %v2526
        %2528 = vmatmul.mubr.f32.gmra.mrb[0].mxu0 %v2527
        %v2529 = vpop.f32.mrb[0].mxu0
        %v2530 = vadd.f32 %v2450, %v2529
        %v2531 = vpop.f32.mrb[0].mxu0
        %2532 = vmatprep.mubr.f32.mxu0 0.0
        %v2533 = vand.u32 %v822, 4294901760
        %v2534 = vsub.f32 %v822, %v2533
        %2535 = vmatmul.mubr.f32.gmra.mrb[0].mxu0 %v2534
        %v2536 = vpop.f32.mrb[0].mxu0
        %v2537 = vadd.f32 %v2456, %v2536
        %v2538 = vpop.f32.mrb[0].mxu0
        %2539 = vdwg.mxu0
        %2540 = vmatprep.subr.mxu0 0.0
        %v2541 = vand.u32 %v813, 4294901760
        %2542 = vmatpush1.msra.mxu0 %v2541
        %2543 = vmatprep.subr.mxu0 0.0
        %2544 = vmatpush1.msra.mxu0 0.0
        %2545 = vmatprep.subr.mxu0 0.0
        %2546 = vmatpush1.msra.mxu0 0.0
        %2547 = vmatprep.subr.mxu0 0.0
        %2548 = vmatpush1.msra.mxu0 0.0
        %2549 = vmatprep.subr.mxu0 0.0
        %2550 = vmatpush1.msra.mxu0 0.0
        %2551 = vmatprep.subr.mxu0 0.0
        %2552 = vmatpush1.msra.mxu0 0.0
        %2553 = vmatprep.subr.mxu0 0.0
        %2554 = vmatpush1.msra.mxu0 0.0
        %2555 = vmatprep.subr.mxu0 0.0
        %2556 = vmatpush1.msra.mxu0 0.0
        %2557 = vmatprep.subr.mxu0 0.0
        %2558 = vmatpush1.msra.mxu0 0.0
        %2559 = vmatprep.subr.mxu0 0.0
        %2560 = vmatpush1.msra.mxu0 0.0
        %2561 = vmatprep.subr.mxu0 0.0
        %2562 = vmatpush1.msra.mxu0 0.0
        %2563 = vmatprep.subr.mxu0 0.0
        %2564 = vmatpush1.msra.mxu0 0.0
        %2565 = vmatprep.subr.mxu0 0.0
        %2566 = vmatpush1.msra.mxu0 0.0
        %2567 = vmatprep.subr.mxu0 0.0
        %2568 = vmatpush1.msra.mxu0 0.0
        %2569 = vmatprep.subr.mxu0 0.0
        %2570 = vmatpush1.msra.mxu0 0.0
        %2571 = vmatprep.subr.mxu0 0.0
        %2572 = vmatpush1.msra.mxu0 0.0
        %2573 = vmatprep.subr.mxu0 0.0
        %2574 = vmatpush1.msra.mxu0 0.0
        %2575 = vmatprep.subr.mxu0 0.0
        %2576 = vmatpush1.msra.mxu0 0.0
        %2577 = vmatprep.subr.mxu0 0.0
        %2578 = vmatpush1.msra.mxu0 0.0
        %2579 = vmatprep.subr.mxu0 0.0
        %2580 = vmatpush1.msra.mxu0 0.0
        %2581 = vmatprep.subr.mxu0 0.0
        %2582 = vmatpush1.msra.mxu0 0.0
        %2583 = vmatprep.subr.mxu0 0.0
        %2584 = vmatpush1.msra.mxu0 0.0
        %2585 = vmatprep.subr.mxu0 0.0
        %2586 = vmatpush1.msra.mxu0 0.0
        %2587 = vmatprep.subr.mxu0 0.0
        %2588 = vmatpush1.msra.mxu0 0.0
        %2589 = vmatprep.subr.mxu0 0.0
        %2590 = vmatpush1.msra.mxu0 0.0
        %2591 = vmatprep.subr.mxu0 0.0
        %2592 = vmatpush1.msra.mxu0 0.0
        %2593 = vmatprep.subr.mxu0 0.0
        %2594 = vmatpush1.msra.mxu0 0.0
        %2595 = vmatprep.subr.mxu0 0.0
        %2596 = vmatpush1.msra.mxu0 0.0
        %2597 = vmatprep.subr.mxu0 0.0
        %2598 = vmatpush1.msra.mxu0 0.0
        %2599 = vmatprep.subr.mxu0 0.0
        %2600 = vmatpush1.msra.mxu0 0.0
        %2601 = vmatprep.subr.mxu0 0.0
        %2602 = vmatpush1.msra.mxu0 0.0
        %2603 = vmatprep.subr.mxu0 0.0
        %2604 = vmatpush1.msra.mxu0 0.0
        %2605 = vmatprep.mubr.f32.mxu0 0.0
        %v2606 = vand.u32 %v819, 4294901760
        %v2607 = vsub.f32 %v819, %v2606
        %v2608 = vand.u32 %v2607, 4294901760
        %2609 = vmatmul.mubr.f32.gmra.mrb[0].mxu0 %v2608
        %v2610 = vpop.f32.mrb[0].mxu0
        %v2611 = vadd.f32 %v2530, %v2610
        %v2612 = vpop.f32.mrb[0].mxu0
        %2613 = vmatprep.mubr.f32.mxu0 0.0
        %v2614 = vand.u32 %v822, 4294901760
        %v2615 = vsub.f32 %v822, %v2614
        %v2616 = vand.u32 %v2615, 4294901760
        %2617 = vmatmul.mubr.f32.gmra.mrb[0].mxu0 %v2616
        %v2618 = vpop.f32.mrb[0].mxu0
        %v2619 = vadd.f32 %v2537, %v2618
        %v2620 = vpop.f32.mrb[0].mxu0
        %2621 = vdwg.mxu0
        %2622 = vmatprep.subr.mxu0 0.0
        %v2623 = vand.u32 %v813, 4294901760
        %v2624 = vsub.f32 %v813, %v2623
        %v2625 = vand.u32 %v2624, 4294901760
        %2626 = vmatpush1.msra.mxu0 %v2625
        %2627 = vmatprep.subr.mxu0 0.0
        %2628 = vmatpush1.msra.mxu0 0.0
        %2629 = vmatprep.subr.mxu0 0.0
        %2630 = vmatpush1.msra.mxu0 0.0
        %2631 = vmatprep.subr.mxu0 0.0
        %2632 = vmatpush1.msra.mxu0 0.0
        %2633 = vmatprep.subr.mxu0 0.0
        %2634 = vmatpush1.msra.mxu0 0.0
        %2635 = vmatprep.subr.mxu0 0.0
        %2636 = vmatpush1.msra.mxu0 0.0
        %2637 = vmatprep.subr.mxu0 0.0
        %2638 = vmatpush1.msra.mxu0 0.0
        %2639 = vmatprep.subr.mxu0 0.0
        %2640 = vmatpush1.msra.mxu0 0.0
        %2641 = vmatprep.subr.mxu0 0.0
        %2642 = vmatpush1.msra.mxu0 0.0
        %2643 = vmatprep.subr.mxu0 0.0
        %2644 = vmatpush1.msra.mxu0 0.0
        %2645 = vmatprep.subr.mxu0 0.0
        %2646 = vmatpush1.msra.mxu0 0.0
        %2647 = vmatprep.subr.mxu0 0.0
        %2648 = vmatpush1.msra.mxu0 0.0
        %2649 = vmatprep.subr.mxu0 0.0
        %2650 = vmatpush1.msra.mxu0 0.0
        %2651 = vmatprep.subr.mxu0 0.0
        %2652 = vmatpush1.msra.mxu0 0.0
        %2653 = vmatprep.subr.mxu0 0.0
        %2654 = vmatpush1.msra.mxu0 0.0
        %2655 = vmatprep.subr.mxu0 0.0
        %2656 = vmatpush1.msra.mxu0 0.0
        %2657 = vmatprep.subr.mxu0 0.0
        %2658 = vmatpush1.msra.mxu0 0.0
        %2659 = vmatprep.subr.mxu0 0.0
        %2660 = vmatpush1.msra.mxu0 0.0
        %2661 = vmatprep.subr.mxu0 0.0
        %2662 = vmatpush1.msra.mxu0 0.0
        %2663 = vmatprep.subr.mxu0 0.0
        %2664 = vmatpush1.msra.mxu0 0.0
        %2665 = vmatprep.subr.mxu0 0.0
        %2666 = vmatpush1.msra.mxu0 0.0
        %2667 = vmatprep.subr.mxu0 0.0
        %2668 = vmatpush1.msra.mxu0 0.0
        %2669 = vmatprep.subr.mxu0 0.0
        %2670 = vmatpush1.msra.mxu0 0.0
        %2671 = vmatprep.subr.mxu0 0.0
        %2672 = vmatpush1.msra.mxu0 0.0
        %2673 = vmatprep.subr.mxu0 0.0
        %2674 = vmatpush1.msra.mxu0 0.0
        %2675 = vmatprep.subr.mxu0 0.0
        %2676 = vmatpush1.msra.mxu0 0.0
        %2677 = vmatprep.subr.mxu0 0.0
        %2678 = vmatpush1.msra.mxu0 0.0
        %2679 = vmatprep.subr.mxu0 0.0
        %2680 = vmatpush1.msra.mxu0 0.0
        %2681 = vmatprep.subr.mxu0 0.0
        %2682 = vmatpush1.msra.mxu0 0.0
        %2683 = vmatprep.subr.mxu0 0.0
        %2684 = vmatpush1.msra.mxu0 0.0
        %2685 = vmatprep.subr.mxu0 0.0
        %2686 = vmatpush1.msra.mxu0 0.0
        %2687 = vmatprep.subr.mxu0 0.0
        %2688 = vmatpush1.msra.mxu0 0.0
        %2689 = vmatprep.mubr.f32.mxu0 0.0
        %v2690 = vand.u32 %v819, 4294901760
        %2691 = vmatmul.mubr.f32.gmra.mrb[0].mxu0 %v2690
        %v2692 = vpop.f32.mrb[0].mxu0
        %v2693 = vadd.f32 %v2611, %v2692
        %v2694 = vpop.f32.mrb[0].mxu0
        %2695 = vmatprep.mubr.f32.mxu0 0.0
        %v2696 = vand.u32 %v822, 4294901760
        %2697 = vmatmul.mubr.f32.gmra.mrb[0].mxu0 %v2696
        %v2698 = vpop.f32.mrb[0].mxu0
        %v2699 = vadd.f32 %v2619, %v2698
        %v2700 = vpop.f32.mrb[0].mxu0
        %2701 = vdwg.mxu0
        %2702 = vmatprep.subr.mxu0 0.0
        %v2703 = vand.u32 %v813, 4294901760
        %2704 = vmatpush1.msra.mxu0 %v2703
        %2705 = vmatprep.subr.mxu0 0.0
        %2706 = vmatpush1.msra.mxu0 0.0
        %2707 = vmatprep.subr.mxu0 0.0
        %2708 = vmatpush1.msra.mxu0 0.0
        %2709 = vmatprep.subr.mxu0 0.0
        %2710 = vmatpush1.msra.mxu0 0.0
        %2711 = vmatprep.subr.mxu0 0.0
        %2712 = vmatpush1.msra.mxu0 0.0
        %2713 = vmatprep.subr.mxu0 0.0
        %2714 = vmatpush1.msra.mxu0 0.0
        %2715 = vmatprep.subr.mxu0 0.0
        %2716 = vmatpush1.msra.mxu0 0.0
        %2717 = vmatprep.subr.mxu0 0.0
        %2718 = vmatpush1.msra.mxu0 0.0
        %2719 = vmatprep.subr.mxu0 0.0
        %2720 = vmatpush1.msra.mxu0 0.0
        %2721 = vmatprep.subr.mxu0 0.0
        %2722 = vmatpush1.msra.mxu0 0.0
        %2723 = vmatprep.subr.mxu0 0.0
        %2724 = vmatpush1.msra.mxu0 0.0
        %2725 = vmatprep.subr.mxu0 0.0
        %2726 = vmatpush1.msra.mxu0 0.0
        %2727 = vmatprep.subr.mxu0 0.0
        %2728 = vmatpush1.msra.mxu0 0.0
        %2729 = vmatprep.subr.mxu0 0.0
        %2730 = vmatpush1.msra.mxu0 0.0
        %2731 = vmatprep.subr.mxu0 0.0
        %2732 = vmatpush1.msra.mxu0 0.0
        %2733 = vmatprep.subr.mxu0 0.0
        %2734 = vmatpush1.msra.mxu0 0.0
        %2735 = vmatprep.subr.mxu0 0.0
        %2736 = vmatpush1.msra.mxu0 0.0
        %2737 = vmatprep.subr.mxu0 0.0
        %2738 = vmatpush1.msra.mxu0 0.0
        %2739 = vmatprep.subr.mxu0 0.0
        %2740 = vmatpush1.msra.mxu0 0.0
        %2741 = vmatprep.subr.mxu0 0.0
        %2742 = vmatpush1.msra.mxu0 0.0
        %2743 = vmatprep.subr.mxu0 0.0
        %2744 = vmatpush1.msra.mxu0 0.0
        %2745 = vmatprep.subr.mxu0 0.0
        %2746 = vmatpush1.msra.mxu0 0.0
        %2747 = vmatprep.subr.mxu0 0.0
        %2748 = vmatpush1.msra.mxu0 0.0
        %2749 = vmatprep.subr.mxu0 0.0
        %2750 = vmatpush1.msra.mxu0 0.0
        %2751 = vmatprep.subr.mxu0 0.0
        %2752 = vmatpush1.msra.mxu0 0.0
        %2753 = vmatprep.subr.mxu0 0.0
        %2754 = vmatpush1.msra.mxu0 0.0
        %2755 = vmatprep.subr.mxu0 0.0
        %2756 = vmatpush1.msra.mxu0 0.0
        %2757 = vmatprep.subr.mxu0 0.0
        %2758 = vmatpush1.msra.mxu0 0.0
        %2759 = vmatprep.subr.mxu0 0.0
        %2760 = vmatpush1.msra.mxu0 0.0
        %2761 = vmatprep.subr.mxu0 0.0
        %2762 = vmatpush1.msra.mxu0 0.0
        %2763 = vmatprep.subr.mxu0 0.0
        %2764 = vmatpush1.msra.mxu0 0.0
        %2765 = vmatprep.subr.mxu0 0.0
        %2766 = vmatpush1.msra.mxu0 0.0
        %2767 = vmatprep.mubr.f32.mxu0 0.0
        %v2768 = vand.u32 %v819, 4294901760
        %2769 = vmatmul.mubr.f32.gmra.mrb[0].mxu0 %v2768
        %v2770 = vpop.f32.mrb[0].mxu0
        %v2771 = vadd.f32 %v2693, %v2770
        %v2772 = vpop.f32.mrb[0].mxu0
        %2773 = vmatprep.mubr.f32.mxu0 0.0
        %v2774 = vand.u32 %v822, 4294901760
        %2775 = vmatmul.mubr.f32.gmra.mrb[0].mxu0 %v2774
        %v2776 = vpop.f32.mrb[0].mxu0
        %v2777 = vadd.f32 %v2699, %v2776
        %v2778 = vpop.f32.mrb[0].mxu0
        %2779 = vdwg.mxu0
        %2788 = vrot.lane.b32.xlu0 %v1304, 1
        %v2789 = vpop.permute.xlu0 %2788
        %2790 = vrot.lane.b32.xlu0 %v1310, 1
        %v2791 = vpop.permute.xlu0 %2790
        %2792 = vrot.lane.b32.xlu0 %v1793, 1
        %v2793 = vpop.permute.xlu0 %2792
        %2794 = vrot.lane.b32.xlu0 %v1799, 1
        %v2795 = vpop.permute.xlu0 %2794
        %2796 = vrot.lane.b32.xlu0 %v2282, 1
        %v2797 = vpop.permute.xlu0 %2796
        %2798 = vrot.lane.b32.xlu0 %v2288, 1
        %v2799 = vpop.permute.xlu0 %2798
        %2800 = vrot.lane.b32.xlu0 %v2771, 1
        %v2801 = vpop.permute.xlu0 %2800
        %2802 = vrot.lane.b32.xlu0 %v2777, 1
        %v2803 = vpop.permute.xlu0 %2802
        %vm2812 = vcmask 138248
        %2813 = vst.msk [vmem:[#allocation2 + $0x1] sm:$0xff] %vm2812, %v2789
        %2814 = vst.msk [vmem:[#allocation2 + $0x9] sm:$0xff] %vm2812, %v2791
        %2815 = vst.msk [vmem:[#allocation2 + $0x19] sm:$0xff] %vm2812, %v2793
        %2816 = vst.msk [vmem:[#allocation2 + $0x21] sm:$0xff] %vm2812, %v2795
        %2817 = vst.msk [vmem:[#allocation2 + $0x31] sm:$0xff] %vm2812, %v2797
        %2818 = vst.msk [vmem:[#allocation2 + $0x39] sm:$0xff] %vm2812, %v2799
        %2819 = vst.msk [vmem:[#allocation2 + $0x49] sm:$0xff] %vm2812, %v2801
        %2820 = vst.msk [vmem:[#allocation2 + $0x51] sm:$0xff] %vm2812, %v2803
        %vm2821 = vcmask 139264
        %2822 = vst.msk [vmem:[#allocation2] sm:$0x1] %vm2821, 0.0
        %2823 = vst.msk [vmem:[#allocation2 + $0x18] sm:$0x1] %vm2821, 0.0
        %2824 = vst.msk [vmem:[#allocation2 + $0x30] sm:$0x1] %vm2821, 0.0
        %2825 = vst.msk [vmem:[#allocation2 + $0x48] sm:$0x1] %vm2821, 0.0
        %2826 = vst.msk [vmem:[#allocation2 + $0x11] sm:$0x1] %vm2821, 0.0
        %2827 = vst.msk [vmem:[#allocation2 + $0x29] sm:$0x1] %vm2821, 0.0
        %2828 = vst.msk [vmem:[#allocation2 + $0x41] sm:$0x1] %vm2821, 0.0
        %2829 = vst.msk [vmem:[#allocation2 + $0x59] sm:$0x1] %vm2821, 0.0
        %vm2830 = vcmask 7168
        %2831 = vst.msk [vmem:[#allocation2] sm:$0xff] %vm2830, 0.0
        %2832 = vst.msk [vmem:[#allocation2 + $0x8] sm:$0xff] %vm2830, 0.0
        %vm2833 = vcmask 1024
        %2834 = vst.msk [vmem:[#allocation2 + $0x10] sm:$0x3] %vm2833, 0.0
        %2835 = vst.msk [vmem:[#allocation2 + $0x18] sm:$0xff] %vm2830, 0.0
        %2836 = vst.msk [vmem:[#allocation2 + $0x20] sm:$0xff] %vm2830, 0.0
        %2837 = vst.msk [vmem:[#allocation2 + $0x28] sm:$0x3] %vm2833, 0.0
        %2838 = vst.msk [vmem:[#allocation2 + $0x30] sm:$0xff] %vm2830, 0.0
        %2839 = vst.msk [vmem:[#allocation2 + $0x38] sm:$0xff] %vm2830, 0.0
        %2840 = vst.msk [vmem:[#allocation2 + $0x40] sm:$0x3] %vm2833, 0.0
        %2841 = vst.msk [vmem:[#allocation2 + $0x48] sm:$0xff] %vm2830, 0.0
        %2842 = vst.msk [vmem:[#allocation2 + $0x50] sm:$0xff] %vm2830, 0.0
        %2843 = vst.msk [vmem:[#allocation2 + $0x58] sm:$0x3] %vm2833, 0.0
        %vm2844 = vcmask 146568
        %2845 = vst.msk [vmem:[#allocation2] sm:$0xff] %vm2844, 0.0
        %2846 = vst.msk [vmem:[#allocation2 + $0x8] sm:$0xff] %vm2844, 0.0
        %vm2847 = vcmask 140424
        %2848 = vst.msk [vmem:[#allocation2 + $0x10] sm:$0x3] %vm2847, 0.0
        %2849 = vst.msk [vmem:[#allocation2 + $0x18] sm:$0xff] %vm2844, 0.0
        %2850 = vst.msk [vmem:[#allocation2 + $0x20] sm:$0xff] %vm2844, 0.0
        %2851 = vst.msk [vmem:[#allocation2 + $0x28] sm:$0x3] %vm2847, 0.0
        %2852 = vst.msk [vmem:[#allocation2 + $0x30] sm:$0xff] %vm2844, 0.0
        %2853 = vst.msk [vmem:[#allocation2 + $0x38] sm:$0xff] %vm2844, 0.0
        %2854 = vst.msk [vmem:[#allocation2 + $0x40] sm:$0x3] %vm2847, 0.0
        %2855 = vst.msk [vmem:[#allocation2 + $0x48] sm:$0xff] %vm2844, 0.0
        %2856 = vst.msk [vmem:[#allocation2 + $0x50] sm:$0xff] %vm2844, 0.0
        %2857 = vst.msk [vmem:[#allocation2 + $0x58] sm:$0x3] %vm2847, 0.0
        %v2858 = vld [vmem:[%s3] sm:$0xff]
        %v2859 = vld [vmem:[#allocation2] sm:$0xff]
        %v2860 = vld [vmem:[#allocation2 + $0x8] sm:$0xff]
        %v2861 = vld [vmem:[#allocation2 + $0x18] sm:$0xff]
        %v2862 = vld [vmem:[#allocation2 + $0x20] sm:$0xff]
        %v2863 = vld [vmem:[#allocation2 + $0x30] sm:$0xff]
        %v2864 = vld [vmem:[#allocation2 + $0x38] sm:$0xff]
        %v2865 = vld [vmem:[#allocation2 + $0x48] sm:$0xff]
        %v2866 = vld [vmem:[#allocation2 + $0x50] sm:$0xff]
        %v2867 = vcombine.low %v2859, %v2863
        %v2868 = vcombine.high %v2859, %v2863
        %v2870 = vunpack.c.l.s4 1983009808
        %v2871 = vunpack.c.0.s8 %v2870
        %v2872 = vlaneseq
        %v2873 = vshrl.u32 %v2872, 7
        %v2874 = vsub.s32 %v2871, %v2873
        %v2875 = vrot.slane %v2867, %v2874
        %v2877 = vunpack.c.l.s4 1983009808
        %v2878 = vunpack.c.0.s8 %v2877
        %v2879 = vlaneseq
        %v2880 = vshrl.u32 %v2879, 7
        %v2881 = vsub.s32 %v2878, %v2880
        %v2882 = vrot.slane %v2868, %v2881
        %v2883 = vcombine.low %v2861, %v2865
        %v2884 = vcombine.high %v2861, %v2865
        %v2886 = vunpack.c.l.s4 1983009808
        %v2887 = vunpack.c.0.s8 %v2886
        %v2888 = vlaneseq
        %v2889 = vshrl.u32 %v2888, 7
        %v2890 = vsub.s32 %v2887, %v2889
        %v2891 = vrot.slane %v2883, %v2890
        %v2893 = vunpack.c.l.s4 1983009808
        %v2894 = vunpack.c.0.s8 %v2893
        %v2895 = vlaneseq
        %v2896 = vshrl.u32 %v2895, 7
        %v2897 = vsub.s32 %v2894, %v2896
        %v2898 = vrot.slane %v2884, %v2897
        %v2899 = vcombine.low %v2875, %v2891
        %v2900 = vcombine.high %v2875, %v2891
        %v2902 = vunpack.c.l.s4 1934713408
        %v2903 = vunpack.c.0.s8 %v2902
        %v2904 = vlaneseq
        %v2905 = vshrl.u32 %v2904, 7
        %v2906 = vsub.s32 %v2903, %v2905
        %v2907 = vrot.slane %v2899, %v2906
        %v2909 = vunpack.c.l.s4 1934713408
        %v2910 = vunpack.c.0.s8 %v2909
        %v2911 = vlaneseq
        %v2912 = vshrl.u32 %v2911, 7
        %v2913 = vsub.s32 %v2910, %v2912
        %v2914 = vrot.slane %v2900, %v2913
        %v2915 = vcombine.low %v2882, %v2898
        %v2916 = vcombine.high %v2882, %v2898
        %v2918 = vunpack.c.l.s4 1934713408
        %v2919 = vunpack.c.0.s8 %v2918
        %v2920 = vlaneseq
        %v2921 = vshrl.u32 %v2920, 7
        %v2922 = vsub.s32 %v2919, %v2921
        %v2923 = vrot.slane %v2915, %v2922
        %v2925 = vunpack.c.l.s4 1934713408
        %v2926 = vunpack.c.0.s8 %v2925
        %v2927 = vlaneseq
        %v2928 = vshrl.u32 %v2927, 7
        %v2929 = vsub.s32 %v2926, %v2928
        %v2930 = vrot.slane %v2916, %v2929
        %v2931 = vcombine.high %v2907, 0.0
        %v2932 = vcombine.high %v2914, 0.0
        %v2933 = vcombine.high %v2923, 0.0
        %v2934 = vcombine.high %v2930, 0.0
        %v2935 = vcombine.low %v2860, %v2864
        %v2936 = vcombine.high %v2860, %v2864
        %v2938 = vunpack.c.l.s4 1983009808
        %v2939 = vunpack.c.0.s8 %v2938
        %v2940 = vlaneseq
        %v2941 = vshrl.u32 %v2940, 7
        %v2942 = vsub.s32 %v2939, %v2941
        %v2943 = vrot.slane %v2935, %v2942
        %v2945 = vunpack.c.l.s4 1983009808
        %v2946 = vunpack.c.0.s8 %v2945
        %v2947 = vlaneseq
        %v2948 = vshrl.u32 %v2947, 7
        %v2949 = vsub.s32 %v2946, %v2948
        %v2950 = vrot.slane %v2936, %v2949
        %v2951 = vcombine.low %v2862, %v2866
        %v2952 = vcombine.high %v2862, %v2866
        %v2954 = vunpack.c.l.s4 1983009808
        %v2955 = vunpack.c.0.s8 %v2954
        %v2956 = vlaneseq
        %v2957 = vshrl.u32 %v2956, 7
        %v2958 = vsub.s32 %v2955, %v2957
        %v2959 = vrot.slane %v2951, %v2958
        %v2961 = vunpack.c.l.s4 1983009808
        %v2962 = vunpack.c.0.s8 %v2961
        %v2963 = vlaneseq
        %v2964 = vshrl.u32 %v2963, 7
        %v2965 = vsub.s32 %v2962, %v2964
        %v2966 = vrot.slane %v2952, %v2965
        %v2967 = vcombine.low %v2943, %v2959
        %v2968 = vcombine.high %v2943, %v2959
        %v2970 = vunpack.c.l.s4 1934713408
        %v2971 = vunpack.c.0.s8 %v2970
        %v2972 = vlaneseq
        %v2973 = vshrl.u32 %v2972, 7
        %v2974 = vsub.s32 %v2971, %v2973
        %v2975 = vrot.slane %v2967, %v2974
        %v2977 = vunpack.c.l.s4 1934713408
        %v2978 = vunpack.c.0.s8 %v2977
        %v2979 = vlaneseq
        %v2980 = vshrl.u32 %v2979, 7
        %v2981 = vsub.s32 %v2978, %v2980
        %v2982 = vrot.slane %v2968, %v2981
        %v2983 = vcombine.low %v2950, %v2966
        %v2984 = vcombine.high %v2950, %v2966
        %v2986 = vunpack.c.l.s4 1934713408
        %v2987 = vunpack.c.0.s8 %v2986
        %v2988 = vlaneseq
        %v2989 = vshrl.u32 %v2988, 7
        %v2990 = vsub.s32 %v2987, %v2989
        %v2991 = vrot.slane %v2983, %v2990
        %v2993 = vunpack.c.l.s4 1934713408
        %v2994 = vunpack.c.0.s8 %v2993
        %v2995 = vlaneseq
        %v2996 = vshrl.u32 %v2995, 7
        %v2997 = vsub.s32 %v2994, %v2996
        %v2998 = vrot.slane %v2984, %v2997
        %v2999 = vcombine.high %v2975, 0.0
        %v3000 = vcombine.high %v2982, 0.0
        %v3001 = vcombine.high %v2991, 0.0
        %v3002 = vcombine.high %v2998, 0.0
        %3004 = vrot.lane.b32.xlu0 %v2931, 16
        %v3005 = vpop.permute.xlu0 %3004
        %3008 = vrot.lane.b32.xlu0 %v2914, 32
        %v3009 = vpop.permute.xlu0 %3008
        %3012 = vrot.lane.b32.xlu0 %v2932, 48
        %v3013 = vpop.permute.xlu0 %3012
        %3016 = vrot.lane.b32.xlu0 %v2923, 64
        %v3017 = vpop.permute.xlu0 %3016
        %3020 = vrot.lane.b32.xlu0 %v2933, 80
        %v3021 = vpop.permute.xlu0 %3020
        %3024 = vrot.lane.b32.xlu0 %v2930, 96
        %v3025 = vpop.permute.xlu0 %3024
        %3028 = vrot.lane.b32.xlu0 %v2934, 112
        %v3029 = vpop.permute.xlu0 %3028
        %3032 = vrot.lane.b32.xlu0 %v2999, 16
        %v3033 = vpop.permute.xlu0 %3032
        %3036 = vrot.lane.b32.xlu0 %v2982, 32
        %v3037 = vpop.permute.xlu0 %3036
        %3040 = vrot.lane.b32.xlu0 %v3000, 48
        %v3041 = vpop.permute.xlu0 %3040
        %3044 = vrot.lane.b32.xlu0 %v2991, 64
        %v3045 = vpop.permute.xlu0 %3044
        %3048 = vrot.lane.b32.xlu0 %v3001, 80
        %v3049 = vpop.permute.xlu0 %3048
        %3052 = vrot.lane.b32.xlu0 %v2998, 96
        %v3053 = vpop.permute.xlu0 %3052
        %3056 = vrot.lane.b32.xlu0 %v3002, 112
        %v3057 = vpop.permute.xlu0 %3056
        %vm3059 = vcmask 130048
        %v3060 = vsel %vm3059, %v2907, %v3005
        %vm3061 = vcmask 261120
        %v3062 = vsel %vm3061, %v3060, %v3009
        %vm3063 = vcmask 392192
        %v3064 = vsel %vm3063, %v3062, %v3013
        %vm3065 = vcmask 523264
        %v3066 = vsel %vm3065, %v3064, %v3017
        %vm3067 = vcmask 654336
        %v3068 = vsel %vm3067, %v3066, %v3021
        %vm3069 = vcmask 785408
        %v3070 = vsel %vm3069, %v3068, %v3025
        %vm3071 = vcmask 916480
        %v3072 = vsel %vm3071, %v3070, %v3029
        %v3073 = vsel %vm3059, %v2975, %v3033
        %v3074 = vsel %vm3061, %v3073, %v3037
        %v3075 = vsel %vm3063, %v3074, %v3041
        %v3076 = vsel %vm3065, %v3075, %v3045
        %v3077 = vsel %vm3067, %v3076, %v3049
        %v3078 = vsel %vm3069, %v3077, %v3053
        %v3079 = vsel %vm3071, %v3078, %v3057
        %s3080 = scalar_lea.vmem %s3, 8
        %v3081 = vld [vmem:[%s3080] sm:$0xff]
        %3090 = vrot.lane.b32.xlu0 %v2859, 127
        %v3091 = vpop.permute.xlu0 %3090
        %3092 = vrot.lane.b32.xlu0 %v2860, 127
        %v3093 = vpop.permute.xlu0 %3092
        %3094 = vrot.lane.b32.xlu0 %v2861, 127
        %v3095 = vpop.permute.xlu0 %3094
        %3096 = vrot.lane.b32.xlu0 %v2862, 127
        %v3097 = vpop.permute.xlu0 %3096
        %3098 = vrot.lane.b32.xlu0 %v2863, 127
        %v3099 = vpop.permute.xlu0 %3098
        %3100 = vrot.lane.b32.xlu0 %v2864, 127
        %v3101 = vpop.permute.xlu0 %3100
        %3102 = vrot.lane.b32.xlu0 %v2865, 127
        %v3103 = vpop.permute.xlu0 %3102
        %3104 = vrot.lane.b32.xlu0 %v2866, 127
        %v3105 = vpop.permute.xlu0 %3104
        %v3114 = vcombine.low %v3091, %v3099
        %v3115 = vcombine.high %v3091, %v3099
        %v3117 = vunpack.c.l.s4 1983009808
        %v3118 = vunpack.c.0.s8 %v3117
        %v3119 = vlaneseq
        %v3120 = vshrl.u32 %v3119, 7
        %v3121 = vsub.s32 %v3118, %v3120
        %v3122 = vrot.slane %v3114, %v3121
        %v3124 = vunpack.c.l.s4 1983009808
        %v3125 = vunpack.c.0.s8 %v3124
        %v3126 = vlaneseq
        %v3127 = vshrl.u32 %v3126, 7
        %v3128 = vsub.s32 %v3125, %v3127
        %v3129 = vrot.slane %v3115, %v3128
        %v3130 = vcombine.low %v3095, %v3103
        %v3131 = vcombine.high %v3095, %v3103
        %v3133 = vunpack.c.l.s4 1983009808
        %v3134 = vunpack.c.0.s8 %v3133
        %v3135 = vlaneseq
        %v3136 = vshrl.u32 %v3135, 7
        %v3137 = vsub.s32 %v3134, %v3136
        %v3138 = vrot.slane %v3130, %v3137
        %v3140 = vunpack.c.l.s4 1983009808
        %v3141 = vunpack.c.0.s8 %v3140
        %v3142 = vlaneseq
        %v3143 = vshrl.u32 %v3142, 7
        %v3144 = vsub.s32 %v3141, %v3143
        %v3145 = vrot.slane %v3131, %v3144
        %v3146 = vcombine.low %v3122, %v3138
        %v3147 = vcombine.high %v3122, %v3138
        %v3149 = vunpack.c.l.s4 1934713408
        %v3150 = vunpack.c.0.s8 %v3149
        %v3151 = vlaneseq
        %v3152 = vshrl.u32 %v3151, 7
        %v3153 = vsub.s32 %v3150, %v3152
        %v3154 = vrot.slane %v3146, %v3153
        %v3156 = vunpack.c.l.s4 1934713408
        %v3157 = vunpack.c.0.s8 %v3156
        %v3158 = vlaneseq
        %v3159 = vshrl.u32 %v3158, 7
        %v3160 = vsub.s32 %v3157, %v3159
        %v3161 = vrot.slane %v3147, %v3160
        %v3162 = vcombine.low %v3129, %v3145
        %v3163 = vcombine.high %v3129, %v3145
        %v3165 = vunpack.c.l.s4 1934713408
        %v3166 = vunpack.c.0.s8 %v3165
        %v3167 = vlaneseq
        %v3168 = vshrl.u32 %v3167, 7
        %v3169 = vsub.s32 %v3166, %v3168
        %v3170 = vrot.slane %v3162, %v3169
        %v3172 = vunpack.c.l.s4 1934713408
        %v3173 = vunpack.c.0.s8 %v3172
        %v3174 = vlaneseq
        %v3175 = vshrl.u32 %v3174, 7
        %v3176 = vsub.s32 %v3173, %v3175
        %v3177 = vrot.slane %v3163, %v3176
        %v3178 = vcombine.high %v3154, 0.0
        %v3179 = vcombine.high %v3161, 0.0
        %v3180 = vcombine.high %v3170, 0.0
        %v3181 = vcombine.high %v3177, 0.0
        %v3182 = vcombine.low %v3093, %v3101
        %v3183 = vcombine.high %v3093, %v3101
        %v3185 = vunpack.c.l.s4 1983009808
        %v3186 = vunpack.c.0.s8 %v3185
        %v3187 = vlaneseq
        %v3188 = vshrl.u32 %v3187, 7
        %v3189 = vsub.s32 %v3186, %v3188
        %v3190 = vrot.slane %v3182, %v3189
        %v3192 = vunpack.c.l.s4 1983009808
        %v3193 = vunpack.c.0.s8 %v3192
        %v3194 = vlaneseq
        %v3195 = vshrl.u32 %v3194, 7
        %v3196 = vsub.s32 %v3193, %v3195
        %v3197 = vrot.slane %v3183, %v3196
        %v3198 = vcombine.low %v3097, %v3105
        %v3199 = vcombine.high %v3097, %v3105
        %v3201 = vunpack.c.l.s4 1983009808
        %v3202 = vunpack.c.0.s8 %v3201
        %v3203 = vlaneseq
        %v3204 = vshrl.u32 %v3203, 7
        %v3205 = vsub.s32 %v3202, %v3204
        %v3206 = vrot.slane %v3198, %v3205
        %v3208 = vunpack.c.l.s4 1983009808
        %v3209 = vunpack.c.0.s8 %v3208
        %v3210 = vlaneseq
        %v3211 = vshrl.u32 %v3210, 7
        %v3212 = vsub.s32 %v3209, %v3211
        %v3213 = vrot.slane %v3199, %v3212
        %v3214 = vcombine.low %v3190, %v3206
        %v3215 = vcombine.high %v3190, %v3206
        %v3217 = vunpack.c.l.s4 1934713408
        %v3218 = vunpack.c.0.s8 %v3217
        %v3219 = vlaneseq
        %v3220 = vshrl.u32 %v3219, 7
        %v3221 = vsub.s32 %v3218, %v3220
        %v3222 = vrot.slane %v3214, %v3221
        %v3224 = vunpack.c.l.s4 1934713408
        %v3225 = vunpack.c.0.s8 %v3224
        %v3226 = vlaneseq
        %v3227 = vshrl.u32 %v3226, 7
        %v3228 = vsub.s32 %v3225, %v3227
        %v3229 = vrot.slane %v3215, %v3228
        %v3230 = vcombine.low %v3197, %v3213
        %v3231 = vcombine.high %v3197, %v3213
        %v3233 = vunpack.c.l.s4 1934713408
        %v3234 = vunpack.c.0.s8 %v3233
        %v3235 = vlaneseq
        %v3236 = vshrl.u32 %v3235, 7
        %v3237 = vsub.s32 %v3234, %v3236
        %v3238 = vrot.slane %v3230, %v3237
        %v3240 = vunpack.c.l.s4 1934713408
        %v3241 = vunpack.c.0.s8 %v3240
        %v3242 = vlaneseq
        %v3243 = vshrl.u32 %v3242, 7
        %v3244 = vsub.s32 %v3241, %v3243
        %v3245 = vrot.slane %v3231, %v3244
        %v3246 = vcombine.high %v3222, 0.0
        %v3247 = vcombine.high %v3229, 0.0
        %v3248 = vcombine.high %v3238, 0.0
        %v3249 = vcombine.high %v3245, 0.0
        %3251 = vrot.lane.b32.xlu0 %v3178, 16
        %v3252 = vpop.permute.xlu0 %3251
        %3255 = vrot.lane.b32.xlu0 %v3161, 32
        %v3256 = vpop.permute.xlu0 %3255
        %3259 = vrot.lane.b32.xlu0 %v3179, 48
        %v3260 = vpop.permute.xlu0 %3259
        %3263 = vrot.lane.b32.xlu0 %v3170, 64
        %v3264 = vpop.permute.xlu0 %3263
        %3267 = vrot.lane.b32.xlu0 %v3180, 80
        %v3268 = vpop.permute.xlu0 %3267
        %3271 = vrot.lane.b32.xlu0 %v3177, 96
        %v3272 = vpop.permute.xlu0 %3271
        %3275 = vrot.lane.b32.xlu0 %v3181, 112
        %v3276 = vpop.permute.xlu0 %3275
        %3279 = vrot.lane.b32.xlu0 %v3246, 16
        %v3280 = vpop.permute.xlu0 %3279
        %3283 = vrot.lane.b32.xlu0 %v3229, 32
        %v3284 = vpop.permute.xlu0 %3283
        %3287 = vrot.lane.b32.xlu0 %v3247, 48
        %v3288 = vpop.permute.xlu0 %3287
        %3291 = vrot.lane.b32.xlu0 %v3238, 64
        %v3292 = vpop.permute.xlu0 %3291
        %3295 = vrot.lane.b32.xlu0 %v3248, 80
        %v3296 = vpop.permute.xlu0 %3295
        %3299 = vrot.lane.b32.xlu0 %v3245, 96
        %v3300 = vpop.permute.xlu0 %3299
        %3303 = vrot.lane.b32.xlu0 %v3249, 112
        %v3304 = vpop.permute.xlu0 %3303
        %v3306 = vsel %vm3059, %v3154, %v3252
        %v3307 = vsel %vm3061, %v3306, %v3256
        %v3308 = vsel %vm3063, %v3307, %v3260
        %v3309 = vsel %vm3065, %v3308, %v3264
        %v3310 = vsel %vm3067, %v3309, %v3268
        %v3311 = vsel %vm3069, %v3310, %v3272
        %v3312 = vsel %vm3071, %v3311, %v3276
        %v3313 = vsel %vm3059, %v3222, %v3280
        %v3314 = vsel %vm3061, %v3313, %v3284
        %v3315 = vsel %vm3063, %v3314, %v3288
        %v3316 = vsel %vm3065, %v3315, %v3292
        %v3317 = vsel %vm3067, %v3316, %v3296
        %v3318 = vsel %vm3069, %v3317, %v3300
        %v3319 = vsel %vm3071, %v3318, %v3304
        %vm3320 = vcmask 31744
        %v3322 = vsel %vm3320, %v3081, 0
        %vm3324 = vcmask 1043456
        %v3326 = vsel %vm3324, %v3312, 0
        %v3329 = vsel %vm3324, %v3319, 0
        %v3331 = vand.u32 %v3329, 4294901760
        %3332 = vmatprep.subr.mxu0 %v3331
        %v3333 = vand.u32 %v3326, 4294901760
        %3334 = vmatpush1.msra.mxu0 %v3333
        %3335 = vmatprep.subr.mxu0 0.0
        %3336 = vmatpush1.msra.mxu0 0.0
        %3337 = vmatprep.subr.mxu0 0.0
        %3338 = vmatpush1.msra.mxu0 0.0
        %3339 = vmatprep.subr.mxu0 0.0
        %3340 = vmatpush1.msra.mxu0 0.0
        %3341 = vmatprep.subr.mxu0 0.0
        %3342 = vmatpush1.msra.mxu0 0.0
        %3343 = vmatprep.subr.mxu0 0.0
        %3344 = vmatpush1.msra.mxu0 0.0
        %3345 = vmatprep.subr.mxu0 0.0
        %3346 = vmatpush1.msra.mxu0 0.0
        %3347 = vmatprep.subr.mxu0 0.0
        %3348 = vmatpush1.msra.mxu0 0.0
        %3349 = vmatprep.subr.mxu0 0.0
        %3350 = vmatpush1.msra.mxu0 0.0
        %3351 = vmatprep.subr.mxu0 0.0
        %3352 = vmatpush1.msra.mxu0 0.0
        %3353 = vmatprep.subr.mxu0 0.0
        %3354 = vmatpush1.msra.mxu0 0.0
        %3355 = vmatprep.subr.mxu0 0.0
        %3356 = vmatpush1.msra.mxu0 0.0
        %3357 = vmatprep.subr.mxu0 0.0
        %3358 = vmatpush1.msra.mxu0 0.0
        %3359 = vmatprep.subr.mxu0 0.0
        %3360 = vmatpush1.msra.mxu0 0.0
        %3361 = vmatprep.subr.mxu0 0.0
        %3362 = vmatpush1.msra.mxu0 0.0
        %3363 = vmatprep.subr.mxu0 0.0
        %3364 = vmatpush1.msra.mxu0 0.0
        %3365 = vmatprep.subr.mxu0 0.0
        %3366 = vmatpush1.msra.mxu0 0.0
        %3367 = vmatprep.subr.mxu0 0.0
        %3368 = vmatpush1.msra.mxu0 0.0
        %3369 = vmatprep.subr.mxu0 0.0
        %3370 = vmatpush1.msra.mxu0 0.0
        %3371 = vmatprep.subr.mxu0 0.0
        %3372 = vmatpush1.msra.mxu0 0.0
        %3373 = vmatprep.subr.mxu0 0.0
        %3374 = vmatpush1.msra.mxu0 0.0
        %3375 = vmatprep.subr.mxu0 0.0
        %3376 = vmatpush1.msra.mxu0 0.0
        %3377 = vmatprep.subr.mxu0 0.0
        %3378 = vmatpush1.msra.mxu0 0.0
        %3379 = vmatprep.subr.mxu0 0.0
        %3380 = vmatpush1.msra.mxu0 0.0
        %3381 = vmatprep.subr.mxu0 0.0
        %3382 = vmatpush1.msra.mxu0 0.0
        %3383 = vmatprep.subr.mxu0 0.0
        %3384 = vmatpush1.msra.mxu0 0.0
        %3385 = vmatprep.subr.mxu0 0.0
        %3386 = vmatpush1.msra.mxu0 0.0
        %3387 = vmatprep.subr.mxu0 0.0
        %3388 = vmatpush1.msra.mxu0 0.0
        %3389 = vmatprep.subr.mxu0 0.0
        %3390 = vmatpush1.msra.mxu0 0.0
        %3391 = vmatprep.subr.mxu0 0.0
        %3392 = vmatpush1.msra.mxu0 0.0
        %3393 = vmatprep.subr.mxu0 0.0
        %3394 = vmatpush1.msra.mxu0 0.0
        %3395 = vmatprep.subr.mxu0 0.0
        %3396 = vmatpush1.msra.mxu0 0.0
        %3397 = vmatprep.mubr.f32.mxu0 0.0
        %v3398 = vand.u32 %v3322, 4294901760
        %v3399 = vsub.f32 %v3322, %v3398
        %v3400 = vand.u32 %v3399, 4294901760
        %v3401 = vsub.f32 %v3399, %v3400
        %v3402 = vand.u32 %v3401, 4294901760
        %3403 = vmatmul.mubr.f32.gmra.mrb[0].mxu0 %v3402
        %v3404 = vpop.f32.mrb[0].mxu0
        %v3405 = vadd.f32 0.0, %v3404
        %v3406 = vpop.f32.mrb[0].mxu0
        %v3407 = vadd.f32 0.0, %v3406
        %3408 = vdwg.mxu0
        %v3409 = vand.u32 %v3329, 4294901760
        %v3410 = vsub.f32 %v3329, %v3409
        %v3411 = vand.u32 %v3410, 4294901760
        %v3412 = vsub.f32 %v3410, %v3411
        %v3413 = vand.u32 %v3412, 4294901760
        %3414 = vmatprep.subr.mxu0 %v3413
        %v3415 = vand.u32 %v3326, 4294901760
        %v3416 = vsub.f32 %v3326, %v3415
        %v3417 = vand.u32 %v3416, 4294901760
        %v3418 = vsub.f32 %v3416, %v3417
        %v3419 = vand.u32 %v3418, 4294901760
        %3420 = vmatpush1.msra.mxu0 %v3419
        %3421 = vmatprep.subr.mxu0 0.0
        %3422 = vmatpush1.msra.mxu0 0.0
        %3423 = vmatprep.subr.mxu0 0.0
        %3424 = vmatpush1.msra.mxu0 0.0
        %3425 = vmatprep.subr.mxu0 0.0
        %3426 = vmatpush1.msra.mxu0 0.0
        %3427 = vmatprep.subr.mxu0 0.0
        %3428 = vmatpush1.msra.mxu0 0.0
        %3429 = vmatprep.subr.mxu0 0.0
        %3430 = vmatpush1.msra.mxu0 0.0
        %3431 = vmatprep.subr.mxu0 0.0
        %3432 = vmatpush1.msra.mxu0 0.0
        %3433 = vmatprep.subr.mxu0 0.0
        %3434 = vmatpush1.msra.mxu0 0.0
        %3435 = vmatprep.subr.mxu0 0.0
        %3436 = vmatpush1.msra.mxu0 0.0
        %3437 = vmatprep.subr.mxu0 0.0
        %3438 = vmatpush1.msra.mxu0 0.0
        %3439 = vmatprep.subr.mxu0 0.0
        %3440 = vmatpush1.msra.mxu0 0.0
        %3441 = vmatprep.subr.mxu0 0.0
        %3442 = vmatpush1.msra.mxu0 0.0
        %3443 = vmatprep.subr.mxu0 0.0
        %3444 = vmatpush1.msra.mxu0 0.0
        %3445 = vmatprep.subr.mxu0 0.0
        %3446 = vmatpush1.msra.mxu0 0.0
        %3447 = vmatprep.subr.mxu0 0.0
        %3448 = vmatpush1.msra.mxu0 0.0
        %3449 = vmatprep.subr.mxu0 0.0
        %3450 = vmatpush1.msra.mxu0 0.0
        %3451 = vmatprep.subr.mxu0 0.0
        %3452 = vmatpush1.msra.mxu0 0.0
        %3453 = vmatprep.subr.mxu0 0.0
        %3454 = vmatpush1.msra.mxu0 0.0
        %3455 = vmatprep.subr.mxu0 0.0
        %3456 = vmatpush1.msra.mxu0 0.0
        %3457 = vmatprep.subr.mxu0 0.0
        %3458 = vmatpush1.msra.mxu0 0.0
        %3459 = vmatprep.subr.mxu0 0.0
        %3460 = vmatpush1.msra.mxu0 0.0
        %3461 = vmatprep.subr.mxu0 0.0
        %3462 = vmatpush1.msra.mxu0 0.0
        %3463 = vmatprep.subr.mxu0 0.0
        %3464 = vmatpush1.msra.mxu0 0.0
        %3465 = vmatprep.subr.mxu0 0.0
        %3466 = vmatpush1.msra.mxu0 0.0
        %3467 = vmatprep.subr.mxu0 0.0
        %3468 = vmatpush1.msra.mxu0 0.0
        %3469 = vmatprep.subr.mxu0 0.0
        %3470 = vmatpush1.msra.mxu0 0.0
        %3471 = vmatprep.subr.mxu0 0.0
        %3472 = vmatpush1.msra.mxu0 0.0
        %3473 = vmatprep.subr.mxu0 0.0
        %3474 = vmatpush1.msra.mxu0 0.0
        %3475 = vmatprep.subr.mxu0 0.0
        %3476 = vmatpush1.msra.mxu0 0.0
        %3477 = vmatprep.subr.mxu0 0.0
        %3478 = vmatpush1.msra.mxu0 0.0
        %3479 = vmatprep.subr.mxu0 0.0
        %3480 = vmatpush1.msra.mxu0 0.0
        %3481 = vmatprep.subr.mxu0 0.0
        %3482 = vmatpush1.msra.mxu0 0.0
        %3483 = vmatprep.mubr.f32.mxu0 0.0
        %v3484 = vand.u32 %v3322, 4294901760
        %3485 = vmatmul.mubr.f32.gmra.mrb[0].mxu0 %v3484
        %v3486 = vpop.f32.mrb[0].mxu0
        %v3487 = vadd.f32 %v3405, %v3486
        %v3488 = vpop.f32.mrb[0].mxu0
        %v3489 = vadd.f32 %v3407, %v3488
        %3490 = vdwg.mxu0
        %v3491 = vand.u32 %v3329, 4294901760
        %v3492 = vsub.f32 %v3329, %v3491
        %3493 = vmatprep.subr.mxu0 %v3492
        %v3494 = vand.u32 %v3326, 4294901760
        %v3495 = vsub.f32 %v3326, %v3494
        %3496 = vmatpush1.msra.mxu0 %v3495
        %3497 = vmatprep.subr.mxu0 0.0
        %3498 = vmatpush1.msra.mxu0 0.0
        %3499 = vmatprep.subr.mxu0 0.0
        %3500 = vmatpush1.msra.mxu0 0.0
        %3501 = vmatprep.subr.mxu0 0.0
        %3502 = vmatpush1.msra.mxu0 0.0
        %3503 = vmatprep.subr.mxu0 0.0
        %3504 = vmatpush1.msra.mxu0 0.0
        %3505 = vmatprep.subr.mxu0 0.0
        %3506 = vmatpush1.msra.mxu0 0.0
        %3507 = vmatprep.subr.mxu0 0.0
        %3508 = vmatpush1.msra.mxu0 0.0
        %3509 = vmatprep.subr.mxu0 0.0
        %3510 = vmatpush1.msra.mxu0 0.0
        %3511 = vmatprep.subr.mxu0 0.0
        %3512 = vmatpush1.msra.mxu0 0.0
        %3513 = vmatprep.subr.mxu0 0.0
        %3514 = vmatpush1.msra.mxu0 0.0
        %3515 = vmatprep.subr.mxu0 0.0
        %3516 = vmatpush1.msra.mxu0 0.0
        %3517 = vmatprep.subr.mxu0 0.0
        %3518 = vmatpush1.msra.mxu0 0.0
        %3519 = vmatprep.subr.mxu0 0.0
        %3520 = vmatpush1.msra.mxu0 0.0
        %3521 = vmatprep.subr.mxu0 0.0
        %3522 = vmatpush1.msra.mxu0 0.0
        %3523 = vmatprep.subr.mxu0 0.0
        %3524 = vmatpush1.msra.mxu0 0.0
        %3525 = vmatprep.subr.mxu0 0.0
        %3526 = vmatpush1.msra.mxu0 0.0
        %3527 = vmatprep.subr.mxu0 0.0
        %3528 = vmatpush1.msra.mxu0 0.0
        %3529 = vmatprep.subr.mxu0 0.0
        %3530 = vmatpush1.msra.mxu0 0.0
        %3531 = vmatprep.subr.mxu0 0.0
        %3532 = vmatpush1.msra.mxu0 0.0
        %3533 = vmatprep.subr.mxu0 0.0
        %3534 = vmatpush1.msra.mxu0 0.0
        %3535 = vmatprep.subr.mxu0 0.0
        %3536 = vmatpush1.msra.mxu0 0.0
        %3537 = vmatprep.subr.mxu0 0.0
        %3538 = vmatpush1.msra.mxu0 0.0
        %3539 = vmatprep.subr.mxu0 0.0
        %3540 = vmatpush1.msra.mxu0 0.0
        %3541 = vmatprep.subr.mxu0 0.0
        %3542 = vmatpush1.msra.mxu0 0.0
        %3543 = vmatprep.subr.mxu0 0.0
        %3544 = vmatpush1.msra.mxu0 0.0
        %3545 = vmatprep.subr.mxu0 0.0
        %3546 = vmatpush1.msra.mxu0 0.0
        %3547 = vmatprep.subr.mxu0 0.0
        %3548 = vmatpush1.msra.mxu0 0.0
        %3549 = vmatprep.subr.mxu0 0.0
        %3550 = vmatpush1.msra.mxu0 0.0
        %3551 = vmatprep.subr.mxu0 0.0
        %3552 = vmatpush1.msra.mxu0 0.0
        %3553 = vmatprep.subr.mxu0 0.0
        %3554 = vmatpush1.msra.mxu0 0.0
        %3555 = vmatprep.subr.mxu0 0.0
        %3556 = vmatpush1.msra.mxu0 0.0
        %3557 = vmatprep.subr.mxu0 0.0
        %3558 = vmatpush1.msra.mxu0 0.0
        %3559 = vmatprep.mubr.f32.mxu0 0.0
        %v3560 = vand.u32 %v3322, 4294901760
        %v3561 = vsub.f32 %v3322, %v3560
        %3562 = vmatmul.mubr.f32.gmra.mrb[0].mxu0 %v3561
        %v3563 = vpop.f32.mrb[0].mxu0
        %v3564 = vadd.f32 %v3487, %v3563
        %v3565 = vpop.f32.mrb[0].mxu0
        %v3566 = vadd.f32 %v3489, %v3565
        %3567 = vdwg.mxu0
        %v3568 = vand.u32 %v3329, 4294901760
        %3569 = vmatprep.subr.mxu0 %v3568
        %v3570 = vand.u32 %v3326, 4294901760
        %3571 = vmatpush1.msra.mxu0 %v3570
        %3572 = vmatprep.subr.mxu0 0.0
        %3573 = vmatpush1.msra.mxu0 0.0
        %3574 = vmatprep.subr.mxu0 0.0
        %3575 = vmatpush1.msra.mxu0 0.0
        %3576 = vmatprep.subr.mxu0 0.0
        %3577 = vmatpush1.msra.mxu0 0.0
        %3578 = vmatprep.subr.mxu0 0.0
        %3579 = vmatpush1.msra.mxu0 0.0
        %3580 = vmatprep.subr.mxu0 0.0
        %3581 = vmatpush1.msra.mxu0 0.0
        %3582 = vmatprep.subr.mxu0 0.0
        %3583 = vmatpush1.msra.mxu0 0.0
        %3584 = vmatprep.subr.mxu0 0.0
        %3585 = vmatpush1.msra.mxu0 0.0
        %3586 = vmatprep.subr.mxu0 0.0
        %3587 = vmatpush1.msra.mxu0 0.0
        %3588 = vmatprep.subr.mxu0 0.0
        %3589 = vmatpush1.msra.mxu0 0.0
        %3590 = vmatprep.subr.mxu0 0.0
        %3591 = vmatpush1.msra.mxu0 0.0
        %3592 = vmatprep.subr.mxu0 0.0
        %3593 = vmatpush1.msra.mxu0 0.0
        %3594 = vmatprep.subr.mxu0 0.0
        %3595 = vmatpush1.msra.mxu0 0.0
        %3596 = vmatprep.subr.mxu0 0.0
        %3597 = vmatpush1.msra.mxu0 0.0
        %3598 = vmatprep.subr.mxu0 0.0
        %3599 = vmatpush1.msra.mxu0 0.0
        %3600 = vmatprep.subr.mxu0 0.0
        %3601 = vmatpush1.msra.mxu0 0.0
        %3602 = vmatprep.subr.mxu0 0.0
        %3603 = vmatpush1.msra.mxu0 0.0
        %3604 = vmatprep.subr.mxu0 0.0
        %3605 = vmatpush1.msra.mxu0 0.0
        %3606 = vmatprep.subr.mxu0 0.0
        %3607 = vmatpush1.msra.mxu0 0.0
        %3608 = vmatprep.subr.mxu0 0.0
        %3609 = vmatpush1.msra.mxu0 0.0
        %3610 = vmatprep.subr.mxu0 0.0
        %3611 = vmatpush1.msra.mxu0 0.0
        %3612 = vmatprep.subr.mxu0 0.0
        %3613 = vmatpush1.msra.mxu0 0.0
        %3614 = vmatprep.subr.mxu0 0.0
        %3615 = vmatpush1.msra.mxu0 0.0
        %3616 = vmatprep.subr.mxu0 0.0
        %3617 = vmatpush1.msra.mxu0 0.0
        %3618 = vmatprep.subr.mxu0 0.0
        %3619 = vmatpush1.msra.mxu0 0.0
        %3620 = vmatprep.subr.mxu0 0.0
        %3621 = vmatpush1.msra.mxu0 0.0
        %3622 = vmatprep.subr.mxu0 0.0
        %3623 = vmatpush1.msra.mxu0 0.0
        %3624 = vmatprep.subr.mxu0 0.0
        %3625 = vmatpush1.msra.mxu0 0.0
        %3626 = vmatprep.subr.mxu0 0.0
        %3627 = vmatpush1.msra.mxu0 0.0
        %3628 = vmatprep.subr.mxu0 0.0
        %3629 = vmatpush1.msra.mxu0 0.0
        %3630 = vmatprep.subr.mxu0 0.0
        %3631 = vmatpush1.msra.mxu0 0.0
        %3632 = vmatprep.subr.mxu0 0.0
        %3633 = vmatpush1.msra.mxu0 0.0
        %3634 = vmatprep.mubr.f32.mxu0 0.0
        %v3635 = vand.u32 %v3322, 4294901760
        %v3636 = vsub.f32 %v3322, %v3635
        %v3637 = vand.u32 %v3636, 4294901760
        %3638 = vmatmul.mubr.f32.gmra.mrb[0].mxu0 %v3637
        %v3639 = vpop.f32.mrb[0].mxu0
        %v3640 = vadd.f32 %v3564, %v3639
        %v3641 = vpop.f32.mrb[0].mxu0
        %v3642 = vadd.f32 %v3566, %v3641
        %3643 = vdwg.mxu0
        %v3644 = vand.u32 %v3329, 4294901760
        %v3645 = vsub.f32 %v3329, %v3644
        %v3646 = vand.u32 %v3645, 4294901760
        %3647 = vmatprep.subr.mxu0 %v3646
        %v3648 = vand.u32 %v3326, 4294901760
        %v3649 = vsub.f32 %v3326, %v3648
        %v3650 = vand.u32 %v3649, 4294901760
        %3651 = vmatpush1.msra.mxu0 %v3650
        %3652 = vmatprep.subr.mxu0 0.0
        %3653 = vmatpush1.msra.mxu0 0.0
        %3654 = vmatprep.subr.mxu0 0.0
        %3655 = vmatpush1.msra.mxu0 0.0
        %3656 = vmatprep.subr.mxu0 0.0
        %3657 = vmatpush1.msra.mxu0 0.0
        %3658 = vmatprep.subr.mxu0 0.0
        %3659 = vmatpush1.msra.mxu0 0.0
        %3660 = vmatprep.subr.mxu0 0.0
        %3661 = vmatpush1.msra.mxu0 0.0
        %3662 = vmatprep.subr.mxu0 0.0
        %3663 = vmatpush1.msra.mxu0 0.0
        %3664 = vmatprep.subr.mxu0 0.0
        %3665 = vmatpush1.msra.mxu0 0.0
        %3666 = vmatprep.subr.mxu0 0.0
        %3667 = vmatpush1.msra.mxu0 0.0
        %3668 = vmatprep.subr.mxu0 0.0
        %3669 = vmatpush1.msra.mxu0 0.0
        %3670 = vmatprep.subr.mxu0 0.0
        %3671 = vmatpush1.msra.mxu0 0.0
        %3672 = vmatprep.subr.mxu0 0.0
        %3673 = vmatpush1.msra.mxu0 0.0
        %3674 = vmatprep.subr.mxu0 0.0
        %3675 = vmatpush1.msra.mxu0 0.0
        %3676 = vmatprep.subr.mxu0 0.0
        %3677 = vmatpush1.msra.mxu0 0.0
        %3678 = vmatprep.subr.mxu0 0.0
        %3679 = vmatpush1.msra.mxu0 0.0
        %3680 = vmatprep.subr.mxu0 0.0
        %3681 = vmatpush1.msra.mxu0 0.0
        %3682 = vmatprep.subr.mxu0 0.0
        %3683 = vmatpush1.msra.mxu0 0.0
        %3684 = vmatprep.subr.mxu0 0.0
        %3685 = vmatpush1.msra.mxu0 0.0
        %3686 = vmatprep.subr.mxu0 0.0
        %3687 = vmatpush1.msra.mxu0 0.0
        %3688 = vmatprep.subr.mxu0 0.0
        %3689 = vmatpush1.msra.mxu0 0.0
        %3690 = vmatprep.subr.mxu0 0.0
        %3691 = vmatpush1.msra.mxu0 0.0
        %3692 = vmatprep.subr.mxu0 0.0
        %3693 = vmatpush1.msra.mxu0 0.0
        %3694 = vmatprep.subr.mxu0 0.0
        %3695 = vmatpush1.msra.mxu0 0.0
        %3696 = vmatprep.subr.mxu0 0.0
        %3697 = vmatpush1.msra.mxu0 0.0
        %3698 = vmatprep.subr.mxu0 0.0
        %3699 = vmatpush1.msra.mxu0 0.0
        %3700 = vmatprep.subr.mxu0 0.0
        %3701 = vmatpush1.msra.mxu0 0.0
        %3702 = vmatprep.subr.mxu0 0.0
        %3703 = vmatpush1.msra.mxu0 0.0
        %3704 = vmatprep.subr.mxu0 0.0
        %3705 = vmatpush1.msra.mxu0 0.0
        %3706 = vmatprep.subr.mxu0 0.0
        %3707 = vmatpush1.msra.mxu0 0.0
        %3708 = vmatprep.subr.mxu0 0.0
        %3709 = vmatpush1.msra.mxu0 0.0
        %3710 = vmatprep.subr.mxu0 0.0
        %3711 = vmatpush1.msra.mxu0 0.0
        %3712 = vmatprep.subr.mxu0 0.0
        %3713 = vmatpush1.msra.mxu0 0.0
        %3714 = vmatprep.mubr.f32.mxu0 0.0
        %v3715 = vand.u32 %v3322, 4294901760
        %3716 = vmatmul.mubr.f32.gmra.mrb[0].mxu0 %v3715
        %v3717 = vpop.f32.mrb[0].mxu0
        %v3718 = vadd.f32 %v3640, %v3717
        %v3719 = vpop.f32.mrb[0].mxu0
        %v3720 = vadd.f32 %v3642, %v3719
        %3721 = vdwg.mxu0
        %v3722 = vand.u32 %v3329, 4294901760
        %3723 = vmatprep.subr.mxu0 %v3722
        %v3724 = vand.u32 %v3326, 4294901760
        %3725 = vmatpush1.msra.mxu0 %v3724
        %3726 = vmatprep.subr.mxu0 0.0
        %3727 = vmatpush1.msra.mxu0 0.0
        %3728 = vmatprep.subr.mxu0 0.0
        %3729 = vmatpush1.msra.mxu0 0.0
        %3730 = vmatprep.subr.mxu0 0.0
        %3731 = vmatpush1.msra.mxu0 0.0
        %3732 = vmatprep.subr.mxu0 0.0
        %3733 = vmatpush1.msra.mxu0 0.0
        %3734 = vmatprep.subr.mxu0 0.0
        %3735 = vmatpush1.msra.mxu0 0.0
        %3736 = vmatprep.subr.mxu0 0.0
        %3737 = vmatpush1.msra.mxu0 0.0
        %3738 = vmatprep.subr.mxu0 0.0
        %3739 = vmatpush1.msra.mxu0 0.0
        %3740 = vmatprep.subr.mxu0 0.0
        %3741 = vmatpush1.msra.mxu0 0.0
        %3742 = vmatprep.subr.mxu0 0.0
        %3743 = vmatpush1.msra.mxu0 0.0
        %3744 = vmatprep.subr.mxu0 0.0
        %3745 = vmatpush1.msra.mxu0 0.0
        %3746 = vmatprep.subr.mxu0 0.0
        %3747 = vmatpush1.msra.mxu0 0.0
        %3748 = vmatprep.subr.mxu0 0.0
        %3749 = vmatpush1.msra.mxu0 0.0
        %3750 = vmatprep.subr.mxu0 0.0
        %3751 = vmatpush1.msra.mxu0 0.0
        %3752 = vmatprep.subr.mxu0 0.0
        %3753 = vmatpush1.msra.mxu0 0.0
        %3754 = vmatprep.subr.mxu0 0.0
        %3755 = vmatpush1.msra.mxu0 0.0
        %3756 = vmatprep.subr.mxu0 0.0
        %3757 = vmatpush1.msra.mxu0 0.0
        %3758 = vmatprep.subr.mxu0 0.0
        %3759 = vmatpush1.msra.mxu0 0.0
        %3760 = vmatprep.subr.mxu0 0.0
        %3761 = vmatpush1.msra.mxu0 0.0
        %3762 = vmatprep.subr.mxu0 0.0
        %3763 = vmatpush1.msra.mxu0 0.0
        %3764 = vmatprep.subr.mxu0 0.0
        %3765 = vmatpush1.msra.mxu0 0.0
        %3766 = vmatprep.subr.mxu0 0.0
        %3767 = vmatpush1.msra.mxu0 0.0
        %3768 = vmatprep.subr.mxu0 0.0
        %3769 = vmatpush1.msra.mxu0 0.0
        %3770 = vmatprep.subr.mxu0 0.0
        %3771 = vmatpush1.msra.mxu0 0.0
        %3772 = vmatprep.subr.mxu0 0.0
        %3773 = vmatpush1.msra.mxu0 0.0
        %3774 = vmatprep.subr.mxu0 0.0
        %3775 = vmatpush1.msra.mxu0 0.0
        %3776 = vmatprep.subr.mxu0 0.0
        %3777 = vmatpush1.msra.mxu0 0.0
        %3778 = vmatprep.subr.mxu0 0.0
        %3779 = vmatpush1.msra.mxu0 0.0
        %3780 = vmatprep.subr.mxu0 0.0
        %3781 = vmatpush1.msra.mxu0 0.0
        %3782 = vmatprep.subr.mxu0 0.0
        %3783 = vmatpush1.msra.mxu0 0.0
        %3784 = vmatprep.subr.mxu0 0.0
        %3785 = vmatpush1.msra.mxu0 0.0
        %3786 = vmatprep.subr.mxu0 0.0
        %3787 = vmatpush1.msra.mxu0 0.0
        %3788 = vmatprep.mubr.f32.mxu0 0.0
        %v3789 = vand.u32 %v3322, 4294901760
        %3790 = vmatmul.mubr.f32.gmra.mrb[0].mxu0 %v3789
        %v3791 = vpop.f32.mrb[0].mxu0
        %v3792 = vadd.f32 %v3718, %v3791
        %v3793 = vpop.f32.mrb[0].mxu0
        %v3794 = vadd.f32 %v3720, %v3793
        %3795 = vdwg.mxu0
        %v3797 = vsel %vm3320, %v2858, 0
        %v3800 = vsel %vm3324, %v3072, 0
        %v3803 = vsel %vm3324, %v3079, 0
        %v3805 = vand.u32 %v3803, 4294901760
        %3806 = vmatprep.subr.mxu0 %v3805
        %v3807 = vand.u32 %v3800, 4294901760
        %3808 = vmatpush1.msra.mxu0 %v3807
        %3809 = vmatprep.subr.mxu0 0.0
        %3810 = vmatpush1.msra.mxu0 0.0
        %3811 = vmatprep.subr.mxu0 0.0
        %3812 = vmatpush1.msra.mxu0 0.0
        %3813 = vmatprep.subr.mxu0 0.0
        %3814 = vmatpush1.msra.mxu0 0.0
        %3815 = vmatprep.subr.mxu0 0.0
        %3816 = vmatpush1.msra.mxu0 0.0
        %3817 = vmatprep.subr.mxu0 0.0
        %3818 = vmatpush1.msra.mxu0 0.0
        %3819 = vmatprep.subr.mxu0 0.0
        %3820 = vmatpush1.msra.mxu0 0.0
        %3821 = vmatprep.subr.mxu0 0.0
        %3822 = vmatpush1.msra.mxu0 0.0
        %3823 = vmatprep.subr.mxu0 0.0
        %3824 = vmatpush1.msra.mxu0 0.0
        %3825 = vmatprep.subr.mxu0 0.0
        %3826 = vmatpush1.msra.mxu0 0.0
        %3827 = vmatprep.subr.mxu0 0.0
        %3828 = vmatpush1.msra.mxu0 0.0
        %3829 = vmatprep.subr.mxu0 0.0
        %3830 = vmatpush1.msra.mxu0 0.0
        %3831 = vmatprep.subr.mxu0 0.0
        %3832 = vmatpush1.msra.mxu0 0.0
        %3833 = vmatprep.subr.mxu0 0.0
        %3834 = vmatpush1.msra.mxu0 0.0
        %3835 = vmatprep.subr.mxu0 0.0
        %3836 = vmatpush1.msra.mxu0 0.0
        %3837 = vmatprep.subr.mxu0 0.0
        %3838 = vmatpush1.msra.mxu0 0.0
        %3839 = vmatprep.subr.mxu0 0.0
        %3840 = vmatpush1.msra.mxu0 0.0
        %3841 = vmatprep.subr.mxu0 0.0
        %3842 = vmatpush1.msra.mxu0 0.0
        %3843 = vmatprep.subr.mxu0 0.0
        %3844 = vmatpush1.msra.mxu0 0.0
        %3845 = vmatprep.subr.mxu0 0.0
        %3846 = vmatpush1.msra.mxu0 0.0
        %3847 = vmatprep.subr.mxu0 0.0
        %3848 = vmatpush1.msra.mxu0 0.0
        %3849 = vmatprep.subr.mxu0 0.0
        %3850 = vmatpush1.msra.mxu0 0.0
        %3851 = vmatprep.subr.mxu0 0.0
        %3852 = vmatpush1.msra.mxu0 0.0
        %3853 = vmatprep.subr.mxu0 0.0
        %3854 = vmatpush1.msra.mxu0 0.0
        %3855 = vmatprep.subr.mxu0 0.0
        %3856 = vmatpush1.msra.mxu0 0.0
        %3857 = vmatprep.subr.mxu0 0.0
        %3858 = vmatpush1.msra.mxu0 0.0
        %3859 = vmatprep.subr.mxu0 0.0
        %3860 = vmatpush1.msra.mxu0 0.0
        %3861 = vmatprep.subr.mxu0 0.0
        %3862 = vmatpush1.msra.mxu0 0.0
        %3863 = vmatprep.subr.mxu0 0.0
        %3864 = vmatpush1.msra.mxu0 0.0
        %3865 = vmatprep.subr.mxu0 0.0
        %3866 = vmatpush1.msra.mxu0 0.0
        %3867 = vmatprep.subr.mxu0 0.0
        %3868 = vmatpush1.msra.mxu0 0.0
        %3869 = vmatprep.subr.mxu0 0.0
        %3870 = vmatpush1.msra.mxu0 0.0
        %3871 = vmatprep.mubr.f32.mxu0 0.0
        %v3872 = vand.u32 %v3797, 4294901760
        %v3873 = vsub.f32 %v3797, %v3872
        %v3874 = vand.u32 %v3873, 4294901760
        %v3875 = vsub.f32 %v3873, %v3874
        %v3876 = vand.u32 %v3875, 4294901760
        %3877 = vmatmul.mubr.f32.gmra.mrb[0].mxu0 %v3876
        %v3878 = vpop.f32.mrb[0].mxu0
        %v3879 = vadd.f32 %v3792, %v3878
        %v3880 = vpop.f32.mrb[0].mxu0
        %v3881 = vadd.f32 %v3794, %v3880
        %3882 = vdwg.mxu0
        %v3883 = vand.u32 %v3803, 4294901760
        %v3884 = vsub.f32 %v3803, %v3883
        %v3885 = vand.u32 %v3884, 4294901760
        %v3886 = vsub.f32 %v3884, %v3885
        %v3887 = vand.u32 %v3886, 4294901760
        %3888 = vmatprep.subr.mxu0 %v3887
        %v3889 = vand.u32 %v3800, 4294901760
        %v3890 = vsub.f32 %v3800, %v3889
        %v3891 = vand.u32 %v3890, 4294901760
        %v3892 = vsub.f32 %v3890, %v3891
        %v3893 = vand.u32 %v3892, 4294901760
        %3894 = vmatpush1.msra.mxu0 %v3893
        %3895 = vmatprep.subr.mxu0 0.0
        %3896 = vmatpush1.msra.mxu0 0.0
        %3897 = vmatprep.subr.mxu0 0.0
        %3898 = vmatpush1.msra.mxu0 0.0
        %3899 = vmatprep.subr.mxu0 0.0
        %3900 = vmatpush1.msra.mxu0 0.0
        %3901 = vmatprep.subr.mxu0 0.0
        %3902 = vmatpush1.msra.mxu0 0.0
        %3903 = vmatprep.subr.mxu0 0.0
        %3904 = vmatpush1.msra.mxu0 0.0
        %3905 = vmatprep.subr.mxu0 0.0
        %3906 = vmatpush1.msra.mxu0 0.0
        %3907 = vmatprep.subr.mxu0 0.0
        %3908 = vmatpush1.msra.mxu0 0.0
        %3909 = vmatprep.subr.mxu0 0.0
        %3910 = vmatpush1.msra.mxu0 0.0
        %3911 = vmatprep.subr.mxu0 0.0
        %3912 = vmatpush1.msra.mxu0 0.0
        %3913 = vmatprep.subr.mxu0 0.0
        %3914 = vmatpush1.msra.mxu0 0.0
        %3915 = vmatprep.subr.mxu0 0.0
        %3916 = vmatpush1.msra.mxu0 0.0
        %3917 = vmatprep.subr.mxu0 0.0
        %3918 = vmatpush1.msra.mxu0 0.0
        %3919 = vmatprep.subr.mxu0 0.0
        %3920 = vmatpush1.msra.mxu0 0.0
        %3921 = vmatprep.subr.mxu0 0.0
        %3922 = vmatpush1.msra.mxu0 0.0
        %3923 = vmatprep.subr.mxu0 0.0
        %3924 = vmatpush1.msra.mxu0 0.0
        %3925 = vmatprep.subr.mxu0 0.0
        %3926 = vmatpush1.msra.mxu0 0.0
        %3927 = vmatprep.subr.mxu0 0.0
        %3928 = vmatpush1.msra.mxu0 0.0
        %3929 = vmatprep.subr.mxu0 0.0
        %3930 = vmatpush1.msra.mxu0 0.0
        %3931 = vmatprep.subr.mxu0 0.0
        %3932 = vmatpush1.msra.mxu0 0.0
        %3933 = vmatprep.subr.mxu0 0.0
        %3934 = vmatpush1.msra.mxu0 0.0
        %3935 = vmatprep.subr.mxu0 0.0
        %3936 = vmatpush1.msra.mxu0 0.0
        %3937 = vmatprep.subr.mxu0 0.0
        %3938 = vmatpush1.msra.mxu0 0.0
        %3939 = vmatprep.subr.mxu0 0.0
        %3940 = vmatpush1.msra.mxu0 0.0
        %3941 = vmatprep.subr.mxu0 0.0
        %3942 = vmatpush1.msra.mxu0 0.0
        %3943 = vmatprep.subr.mxu0 0.0
        %3944 = vmatpush1.msra.mxu0 0.0
        %3945 = vmatprep.subr.mxu0 0.0
        %3946 = vmatpush1.msra.mxu0 0.0
        %3947 = vmatprep.subr.mxu0 0.0
        %3948 = vmatpush1.msra.mxu0 0.0
        %3949 = vmatprep.subr.mxu0 0.0
        %3950 = vmatpush1.msra.mxu0 0.0
        %3951 = vmatprep.subr.mxu0 0.0
        %3952 = vmatpush1.msra.mxu0 0.0
        %3953 = vmatprep.subr.mxu0 0.0
        %3954 = vmatpush1.msra.mxu0 0.0
        %3955 = vmatprep.subr.mxu0 0.0
        %3956 = vmatpush1.msra.mxu0 0.0
        %3957 = vmatprep.mubr.f32.mxu0 0.0
        %v3958 = vand.u32 %v3797, 4294901760
        %3959 = vmatmul.mubr.f32.gmra.mrb[0].mxu0 %v3958
        %v3960 = vpop.f32.mrb[0].mxu0
        %v3961 = vadd.f32 %v3879, %v3960
        %v3962 = vpop.f32.mrb[0].mxu0
        %v3963 = vadd.f32 %v3881, %v3962
        %3964 = vdwg.mxu0
        %v3965 = vand.u32 %v3803, 4294901760
        %v3966 = vsub.f32 %v3803, %v3965
        %3967 = vmatprep.subr.mxu0 %v3966
        %v3968 = vand.u32 %v3800, 4294901760
        %v3969 = vsub.f32 %v3800, %v3968
        %3970 = vmatpush1.msra.mxu0 %v3969
        %3971 = vmatprep.subr.mxu0 0.0
        %3972 = vmatpush1.msra.mxu0 0.0
        %3973 = vmatprep.subr.mxu0 0.0
        %3974 = vmatpush1.msra.mxu0 0.0
        %3975 = vmatprep.subr.mxu0 0.0
        %3976 = vmatpush1.msra.mxu0 0.0
        %3977 = vmatprep.subr.mxu0 0.0
        %3978 = vmatpush1.msra.mxu0 0.0
        %3979 = vmatprep.subr.mxu0 0.0
        %3980 = vmatpush1.msra.mxu0 0.0
        %3981 = vmatprep.subr.mxu0 0.0
        %3982 = vmatpush1.msra.mxu0 0.0
        %3983 = vmatprep.subr.mxu0 0.0
        %3984 = vmatpush1.msra.mxu0 0.0
        %3985 = vmatprep.subr.mxu0 0.0
        %3986 = vmatpush1.msra.mxu0 0.0
        %3987 = vmatprep.subr.mxu0 0.0
        %3988 = vmatpush1.msra.mxu0 0.0
        %3989 = vmatprep.subr.mxu0 0.0
        %3990 = vmatpush1.msra.mxu0 0.0
        %3991 = vmatprep.subr.mxu0 0.0
        %3992 = vmatpush1.msra.mxu0 0.0
        %3993 = vmatprep.subr.mxu0 0.0
        %3994 = vmatpush1.msra.mxu0 0.0
        %3995 = vmatprep.subr.mxu0 0.0
        %3996 = vmatpush1.msra.mxu0 0.0
        %3997 = vmatprep.subr.mxu0 0.0
        %3998 = vmatpush1.msra.mxu0 0.0
        %3999 = vmatprep.subr.mxu0 0.0
        %4000 = vmatpush1.msra.mxu0 0.0
        %4001 = vmatprep.subr.mxu0 0.0
        %4002 = vmatpush1.msra.mxu0 0.0
        %4003 = vmatprep.subr.mxu0 0.0
        %4004 = vmatpush1.msra.mxu0 0.0
        %4005 = vmatprep.subr.mxu0 0.0
        %4006 = vmatpush1.msra.mxu0 0.0
        %4007 = vmatprep.subr.mxu0 0.0
        %4008 = vmatpush1.msra.mxu0 0.0
        %4009 = vmatprep.subr.mxu0 0.0
        %4010 = vmatpush1.msra.mxu0 0.0
        %4011 = vmatprep.subr.mxu0 0.0
        %4012 = vmatpush1.msra.mxu0 0.0
        %4013 = vmatprep.subr.mxu0 0.0
        %4014 = vmatpush1.msra.mxu0 0.0
        %4015 = vmatprep.subr.mxu0 0.0
        %4016 = vmatpush1.msra.mxu0 0.0
        %4017 = vmatprep.subr.mxu0 0.0
        %4018 = vmatpush1.msra.mxu0 0.0
        %4019 = vmatprep.subr.mxu0 0.0
        %4020 = vmatpush1.msra.mxu0 0.0
        %4021 = vmatprep.subr.mxu0 0.0
        %4022 = vmatpush1.msra.mxu0 0.0
        %4023 = vmatprep.subr.mxu0 0.0
        %4024 = vmatpush1.msra.mxu0 0.0
        %4025 = vmatprep.subr.mxu0 0.0
        %4026 = vmatpush1.msra.mxu0 0.0
        %4027 = vmatprep.subr.mxu0 0.0
        %4028 = vmatpush1.msra.mxu0 0.0
        %4029 = vmatprep.subr.mxu0 0.0
        %4030 = vmatpush1.msra.mxu0 0.0
        %4031 = vmatprep.subr.mxu0 0.0
        %4032 = vmatpush1.msra.mxu0 0.0
        %4033 = vmatprep.mubr.f32.mxu0 0.0
        %v4034 = vand.u32 %v3797, 4294901760
        %v4035 = vsub.f32 %v3797, %v4034
        %4036 = vmatmul.mubr.f32.gmra.mrb[0].mxu0 %v4035
        %v4037 = vpop.f32.mrb[0].mxu0
        %v4038 = vadd.f32 %v3961, %v4037
        %v4039 = vpop.f32.mrb[0].mxu0
        %v4040 = vadd.f32 %v3963, %v4039
        %4041 = vdwg.mxu0
        %v4042 = vand.u32 %v3803, 4294901760
        %4043 = vmatprep.subr.mxu0 %v4042
        %v4044 = vand.u32 %v3800, 4294901760
        %4045 = vmatpush1.msra.mxu0 %v4044
        %4046 = vmatprep.subr.mxu0 0.0
        %4047 = vmatpush1.msra.mxu0 0.0
        %4048 = vmatprep.subr.mxu0 0.0
        %4049 = vmatpush1.msra.mxu0 0.0
        %4050 = vmatprep.subr.mxu0 0.0
        %4051 = vmatpush1.msra.mxu0 0.0
        %4052 = vmatprep.subr.mxu0 0.0
        %4053 = vmatpush1.msra.mxu0 0.0
        %4054 = vmatprep.subr.mxu0 0.0
        %4055 = vmatpush1.msra.mxu0 0.0
        %4056 = vmatprep.subr.mxu0 0.0
        %4057 = vmatpush1.msra.mxu0 0.0
        %4058 = vmatprep.subr.mxu0 0.0
        %4059 = vmatpush1.msra.mxu0 0.0
        %4060 = vmatprep.subr.mxu0 0.0
        %4061 = vmatpush1.msra.mxu0 0.0
        %4062 = vmatprep.subr.mxu0 0.0
        %4063 = vmatpush1.msra.mxu0 0.0
        %4064 = vmatprep.subr.mxu0 0.0
        %4065 = vmatpush1.msra.mxu0 0.0
        %4066 = vmatprep.subr.mxu0 0.0
        %4067 = vmatpush1.msra.mxu0 0.0
        %4068 = vmatprep.subr.mxu0 0.0
        %4069 = vmatpush1.msra.mxu0 0.0
        %4070 = vmatprep.subr.mxu0 0.0
        %4071 = vmatpush1.msra.mxu0 0.0
        %4072 = vmatprep.subr.mxu0 0.0
        %4073 = vmatpush1.msra.mxu0 0.0
        %4074 = vmatprep.subr.mxu0 0.0
        %4075 = vmatpush1.msra.mxu0 0.0
        %4076 = vmatprep.subr.mxu0 0.0
        %4077 = vmatpush1.msra.mxu0 0.0
        %4078 = vmatprep.subr.mxu0 0.0
        %4079 = vmatpush1.msra.mxu0 0.0
        %4080 = vmatprep.subr.mxu0 0.0
        %4081 = vmatpush1.msra.mxu0 0.0
        %4082 = vmatprep.subr.mxu0 0.0
        %4083 = vmatpush1.msra.mxu0 0.0
        %4084 = vmatprep.subr.mxu0 0.0
        %4085 = vmatpush1.msra.mxu0 0.0
        %4086 = vmatprep.subr.mxu0 0.0
        %4087 = vmatpush1.msra.mxu0 0.0
        %4088 = vmatprep.subr.mxu0 0.0
        %4089 = vmatpush1.msra.mxu0 0.0
        %4090 = vmatprep.subr.mxu0 0.0
        %4091 = vmatpush1.msra.mxu0 0.0
        %4092 = vmatprep.subr.mxu0 0.0
        %4093 = vmatpush1.msra.mxu0 0.0
        %4094 = vmatprep.subr.mxu0 0.0
        %4095 = vmatpush1.msra.mxu0 0.0
        %4096 = vmatprep.subr.mxu0 0.0
        %4097 = vmatpush1.msra.mxu0 0.0
        %4098 = vmatprep.subr.mxu0 0.0
        %4099 = vmatpush1.msra.mxu0 0.0
        %4100 = vmatprep.subr.mxu0 0.0
        %4101 = vmatpush1.msra.mxu0 0.0
        %4102 = vmatprep.subr.mxu0 0.0
        %4103 = vmatpush1.msra.mxu0 0.0
        %4104 = vmatprep.subr.mxu0 0.0
        %4105 = vmatpush1.msra.mxu0 0.0
        %4106 = vmatprep.subr.mxu0 0.0
        %4107 = vmatpush1.msra.mxu0 0.0
        %4108 = vmatprep.mubr.f32.mxu0 0.0
        %v4109 = vand.u32 %v3797, 4294901760
        %v4110 = vsub.f32 %v3797, %v4109
        %v4111 = vand.u32 %v4110, 4294901760
        %4112 = vmatmul.mubr.f32.gmra.mrb[0].mxu0 %v4111
        %v4113 = vpop.f32.mrb[0].mxu0
        %v4114 = vadd.f32 %v4038, %v4113
        %v4115 = vpop.f32.mrb[0].mxu0
        %v4116 = vadd.f32 %v4040, %v4115
        %4117 = vdwg.mxu0
        %v4118 = vand.u32 %v3803, 4294901760
        %v4119 = vsub.f32 %v3803, %v4118
        %v4120 = vand.u32 %v4119, 4294901760
        %4121 = vmatprep.subr.mxu0 %v4120
        %v4122 = vand.u32 %v3800, 4294901760
        %v4123 = vsub.f32 %v3800, %v4122
        %v4124 = vand.u32 %v4123, 4294901760
        %4125 = vmatpush1.msra.mxu0 %v4124
        %4126 = vmatprep.subr.mxu0 0.0
        %4127 = vmatpush1.msra.mxu0 0.0
        %4128 = vmatprep.subr.mxu0 0.0
        %4129 = vmatpush1.msra.mxu0 0.0
        %4130 = vmatprep.subr.mxu0 0.0
        %4131 = vmatpush1.msra.mxu0 0.0
        %4132 = vmatprep.subr.mxu0 0.0
        %4133 = vmatpush1.msra.mxu0 0.0
        %4134 = vmatprep.subr.mxu0 0.0
        %4135 = vmatpush1.msra.mxu0 0.0
        %4136 = vmatprep.subr.mxu0 0.0
        %4137 = vmatpush1.msra.mxu0 0.0
        %4138 = vmatprep.subr.mxu0 0.0
        %4139 = vmatpush1.msra.mxu0 0.0
        %4140 = vmatprep.subr.mxu0 0.0
        %4141 = vmatpush1.msra.mxu0 0.0
        %4142 = vmatprep.subr.mxu0 0.0
        %4143 = vmatpush1.msra.mxu0 0.0
        %4144 = vmatprep.subr.mxu0 0.0
        %4145 = vmatpush1.msra.mxu0 0.0
        %4146 = vmatprep.subr.mxu0 0.0
        %4147 = vmatpush1.msra.mxu0 0.0
        %4148 = vmatprep.subr.mxu0 0.0
        %4149 = vmatpush1.msra.mxu0 0.0
        %4150 = vmatprep.subr.mxu0 0.0
        %4151 = vmatpush1.msra.mxu0 0.0
        %4152 = vmatprep.subr.mxu0 0.0
        %4153 = vmatpush1.msra.mxu0 0.0
        %4154 = vmatprep.subr.mxu0 0.0
        %4155 = vmatpush1.msra.mxu0 0.0
        %4156 = vmatprep.subr.mxu0 0.0
        %4157 = vmatpush1.msra.mxu0 0.0
        %4158 = vmatprep.subr.mxu0 0.0
        %4159 = vmatpush1.msra.mxu0 0.0
        %4160 = vmatprep.subr.mxu0 0.0
        %4161 = vmatpush1.msra.mxu0 0.0
        %4162 = vmatprep.subr.mxu0 0.0
        %4163 = vmatpush1.msra.mxu0 0.0
        %4164 = vmatprep.subr.mxu0 0.0
        %4165 = vmatpush1.msra.mxu0 0.0
        %4166 = vmatprep.subr.mxu0 0.0
        %4167 = vmatpush1.msra.mxu0 0.0
        %4168 = vmatprep.subr.mxu0 0.0
        %4169 = vmatpush1.msra.mxu0 0.0
        %4170 = vmatprep.subr.mxu0 0.0
        %4171 = vmatpush1.msra.mxu0 0.0
        %4172 = vmatprep.subr.mxu0 0.0
        %4173 = vmatpush1.msra.mxu0 0.0
        %4174 = vmatprep.subr.mxu0 0.0
        %4175 = vmatpush1.msra.mxu0 0.0
        %4176 = vmatprep.subr.mxu0 0.0
        %4177 = vmatpush1.msra.mxu0 0.0
        %4178 = vmatprep.subr.mxu0 0.0
        %4179 = vmatpush1.msra.mxu0 0.0
        %4180 = vmatprep.subr.mxu0 0.0
        %4181 = vmatpush1.msra.mxu0 0.0
        %4182 = vmatprep.subr.mxu0 0.0
        %4183 = vmatpush1.msra.mxu0 0.0
        %4184 = vmatprep.subr.mxu0 0.0
        %4185 = vmatpush1.msra.mxu0 0.0
        %4186 = vmatprep.subr.mxu0 0.0
        %4187 = vmatpush1.msra.mxu0 0.0
        %4188 = vmatprep.mubr.f32.mxu0 0.0
        %v4189 = vand.u32 %v3797, 4294901760
        %4190 = vmatmul.mubr.f32.gmra.mrb[0].mxu0 %v4189
        %v4191 = vpop.f32.mrb[0].mxu0
        %v4192 = vadd.f32 %v4114, %v4191
        %v4193 = vpop.f32.mrb[0].mxu0
        %v4194 = vadd.f32 %v4116, %v4193
        %4195 = vdwg.mxu0
        %v4196 = vand.u32 %v3803, 4294901760
        %4197 = vmatprep.subr.mxu0 %v4196
        %v4198 = vand.u32 %v3800, 4294901760
        %4199 = vmatpush1.msra.mxu0 %v4198
        %4200 = vmatprep.subr.mxu0 0.0
        %4201 = vmatpush1.msra.mxu0 0.0
        %4202 = vmatprep.subr.mxu0 0.0
        %4203 = vmatpush1.msra.mxu0 0.0
        %4204 = vmatprep.subr.mxu0 0.0
        %4205 = vmatpush1.msra.mxu0 0.0
        %4206 = vmatprep.subr.mxu0 0.0
        %4207 = vmatpush1.msra.mxu0 0.0
        %4208 = vmatprep.subr.mxu0 0.0
        %4209 = vmatpush1.msra.mxu0 0.0
        %4210 = vmatprep.subr.mxu0 0.0
        %4211 = vmatpush1.msra.mxu0 0.0
        %4212 = vmatprep.subr.mxu0 0.0
        %4213 = vmatpush1.msra.mxu0 0.0
        %4214 = vmatprep.subr.mxu0 0.0
        %4215 = vmatpush1.msra.mxu0 0.0
        %4216 = vmatprep.subr.mxu0 0.0
        %4217 = vmatpush1.msra.mxu0 0.0
        %4218 = vmatprep.subr.mxu0 0.0
        %4219 = vmatpush1.msra.mxu0 0.0
        %4220 = vmatprep.subr.mxu0 0.0
        %4221 = vmatpush1.msra.mxu0 0.0
        %4222 = vmatprep.subr.mxu0 0.0
        %4223 = vmatpush1.msra.mxu0 0.0
        %4224 = vmatprep.subr.mxu0 0.0
        %4225 = vmatpush1.msra.mxu0 0.0
        %4226 = vmatprep.subr.mxu0 0.0
        %4227 = vmatpush1.msra.mxu0 0.0
        %4228 = vmatprep.subr.mxu0 0.0
        %4229 = vmatpush1.msra.mxu0 0.0
        %4230 = vmatprep.subr.mxu0 0.0
        %4231 = vmatpush1.msra.mxu0 0.0
        %4232 = vmatprep.subr.mxu0 0.0
        %4233 = vmatpush1.msra.mxu0 0.0
        %4234 = vmatprep.subr.mxu0 0.0
        %4235 = vmatpush1.msra.mxu0 0.0
        %4236 = vmatprep.subr.mxu0 0.0
        %4237 = vmatpush1.msra.mxu0 0.0
        %4238 = vmatprep.subr.mxu0 0.0
        %4239 = vmatpush1.msra.mxu0 0.0
        %4240 = vmatprep.subr.mxu0 0.0
        %4241 = vmatpush1.msra.mxu0 0.0
        %4242 = vmatprep.subr.mxu0 0.0
        %4243 = vmatpush1.msra.mxu0 0.0
        %4244 = vmatprep.subr.mxu0 0.0
        %4245 = vmatpush1.msra.mxu0 0.0
        %4246 = vmatprep.subr.mxu0 0.0
        %4247 = vmatpush1.msra.mxu0 0.0
        %4248 = vmatprep.subr.mxu0 0.0
        %4249 = vmatpush1.msra.mxu0 0.0
        %4250 = vmatprep.subr.mxu0 0.0
        %4251 = vmatpush1.msra.mxu0 0.0
        %4252 = vmatprep.subr.mxu0 0.0
        %4253 = vmatpush1.msra.mxu0 0.0
        %4254 = vmatprep.subr.mxu0 0.0
        %4255 = vmatpush1.msra.mxu0 0.0
        %4256 = vmatprep.subr.mxu0 0.0
        %4257 = vmatpush1.msra.mxu0 0.0
        %4258 = vmatprep.subr.mxu0 0.0
        %4259 = vmatpush1.msra.mxu0 0.0
        %4260 = vmatprep.subr.mxu0 0.0
        %4261 = vmatpush1.msra.mxu0 0.0
        %4262 = vmatprep.mubr.f32.mxu0 0.0
        %v4263 = vand.u32 %v3797, 4294901760
        %4264 = vmatmul.mubr.f32.gmra.mrb[0].mxu0 %v4263
        %v4265 = vpop.f32.mrb[0].mxu0
        %v4266 = vadd.f32 %v4192, %v4265
        %v4267 = vpop.f32.mrb[0].mxu0
        %v4268 = vadd.f32 %v4194, %v4267
        %4269 = vdwg.mxu0
        %s4270 = scalar_lea.vmem %s3, 16
        %v4271 = vld [vmem:[%s4270] sm:$0xff]
        %v4272 = vld [vmem:[#allocation2] sm:$0xff]
        %v4273 = vld [vmem:[#allocation2 + $0x8] sm:$0xff]
        %v4274 = vld [vmem:[#allocation2 + $0x18] sm:$0xff]
        %v4275 = vld [vmem:[#allocation2 + $0x20] sm:$0xff]
        %v4276 = vld [vmem:[#allocation2 + $0x30] sm:$0xff]
        %v4277 = vld [vmem:[#allocation2 + $0x38] sm:$0xff]
        %v4278 = vld [vmem:[#allocation2 + $0x48] sm:$0xff]
        %v4279 = vld [vmem:[#allocation2 + $0x50] sm:$0xff]
        %4288 = vrot.lane.b32.xlu0 %v4272, 126
        %v4289 = vpop.permute.xlu0 %4288
        %4290 = vrot.lane.b32.xlu0 %v4273, 126
        %v4291 = vpop.permute.xlu0 %4290
        %4292 = vrot.lane.b32.xlu0 %v4274, 126
        %v4293 = vpop.permute.xlu0 %4292
        %4294 = vrot.lane.b32.xlu0 %v4275, 126
        %v4295 = vpop.permute.xlu0 %4294
        %4296 = vrot.lane.b32.xlu0 %v4276, 126
        %v4297 = vpop.permute.xlu0 %4296
        %4298 = vrot.lane.b32.xlu0 %v4277, 126
        %v4299 = vpop.permute.xlu0 %4298
        %4300 = vrot.lane.b32.xlu0 %v4278, 126
        %v4301 = vpop.permute.xlu0 %4300
        %4302 = vrot.lane.b32.xlu0 %v4279, 126
        %v4303 = vpop.permute.xlu0 %4302
        %v4312 = vcombine.low %v4289, %v4297
        %v4313 = vcombine.high %v4289, %v4297
        %v4315 = vunpack.c.l.s4 1983009808
        %v4316 = vunpack.c.0.s8 %v4315
        %v4317 = vlaneseq
        %v4318 = vshrl.u32 %v4317, 7
        %v4319 = vsub.s32 %v4316, %v4318
        %v4320 = vrot.slane %v4312, %v4319
        %v4322 = vunpack.c.l.s4 1983009808
        %v4323 = vunpack.c.0.s8 %v4322
        %v4324 = vlaneseq
        %v4325 = vshrl.u32 %v4324, 7
        %v4326 = vsub.s32 %v4323, %v4325
        %v4327 = vrot.slane %v4313, %v4326
        %v4328 = vcombine.low %v4293, %v4301
        %v4329 = vcombine.high %v4293, %v4301
        %v4331 = vunpack.c.l.s4 1983009808
        %v4332 = vunpack.c.0.s8 %v4331
        %v4333 = vlaneseq
        %v4334 = vshrl.u32 %v4333, 7
        %v4335 = vsub.s32 %v4332, %v4334
        %v4336 = vrot.slane %v4328, %v4335
        %v4338 = vunpack.c.l.s4 1983009808
        %v4339 = vunpack.c.0.s8 %v4338
        %v4340 = vlaneseq
        %v4341 = vshrl.u32 %v4340, 7
        %v4342 = vsub.s32 %v4339, %v4341
        %v4343 = vrot.slane %v4329, %v4342
        %v4344 = vcombine.low %v4320, %v4336
        %v4345 = vcombine.high %v4320, %v4336
        %v4347 = vunpack.c.l.s4 1934713408
        %v4348 = vunpack.c.0.s8 %v4347
        %v4349 = vlaneseq
        %v4350 = vshrl.u32 %v4349, 7
        %v4351 = vsub.s32 %v4348, %v4350
        %v4352 = vrot.slane %v4344, %v4351
        %v4354 = vunpack.c.l.s4 1934713408
        %v4355 = vunpack.c.0.s8 %v4354
        %v4356 = vlaneseq
        %v4357 = vshrl.u32 %v4356, 7
        %v4358 = vsub.s32 %v4355, %v4357
        %v4359 = vrot.slane %v4345, %v4358
        %v4360 = vcombine.low %v4327, %v4343
        %v4361 = vcombine.high %v4327, %v4343
        %v4363 = vunpack.c.l.s4 1934713408
        %v4364 = vunpack.c.0.s8 %v4363
        %v4365 = vlaneseq
        %v4366 = vshrl.u32 %v4365, 7
        %v4367 = vsub.s32 %v4364, %v4366
        %v4368 = vrot.slane %v4360, %v4367
        %v4370 = vunpack.c.l.s4 1934713408
        %v4371 = vunpack.c.0.s8 %v4370
        %v4372 = vlaneseq
        %v4373 = vshrl.u32 %v4372, 7
        %v4374 = vsub.s32 %v4371, %v4373
        %v4375 = vrot.slane %v4361, %v4374
        %v4376 = vcombine.high %v4352, 0.0
        %v4377 = vcombine.high %v4359, 0.0
        %v4378 = vcombine.high %v4368, 0.0
        %v4379 = vcombine.high %v4375, 0.0
        %v4380 = vcombine.low %v4291, %v4299
        %v4381 = vcombine.high %v4291, %v4299
        %v4383 = vunpack.c.l.s4 1983009808
        %v4384 = vunpack.c.0.s8 %v4383
        %v4385 = vlaneseq
        %v4386 = vshrl.u32 %v4385, 7
        %v4387 = vsub.s32 %v4384, %v4386
        %v4388 = vrot.slane %v4380, %v4387
        %v4390 = vunpack.c.l.s4 1983009808
        %v4391 = vunpack.c.0.s8 %v4390
        %v4392 = vlaneseq
        %v4393 = vshrl.u32 %v4392, 7
        %v4394 = vsub.s32 %v4391, %v4393
        %v4395 = vrot.slane %v4381, %v4394
        %v4396 = vcombine.low %v4295, %v4303
        %v4397 = vcombine.high %v4295, %v4303
        %v4399 = vunpack.c.l.s4 1983009808
        %v4400 = vunpack.c.0.s8 %v4399
        %v4401 = vlaneseq
        %v4402 = vshrl.u32 %v4401, 7
        %v4403 = vsub.s32 %v4400, %v4402
        %v4404 = vrot.slane %v4396, %v4403
        %v4406 = vunpack.c.l.s4 1983009808
        %v4407 = vunpack.c.0.s8 %v4406
        %v4408 = vlaneseq
        %v4409 = vshrl.u32 %v4408, 7
        %v4410 = vsub.s32 %v4407, %v4409
        %v4411 = vrot.slane %v4397, %v4410
        %v4412 = vcombine.low %v4388, %v4404
        %v4413 = vcombine.high %v4388, %v4404
        %v4415 = vunpack.c.l.s4 1934713408
        %v4416 = vunpack.c.0.s8 %v4415
        %v4417 = vlaneseq
        %v4418 = vshrl.u32 %v4417, 7
        %v4419 = vsub.s32 %v4416, %v4418
        %v4420 = vrot.slane %v4412, %v4419
        %v4422 = vunpack.c.l.s4 1934713408
        %v4423 = vunpack.c.0.s8 %v4422
        %v4424 = vlaneseq
        %v4425 = vshrl.u32 %v4424, 7
        %v4426 = vsub.s32 %v4423, %v4425
        %v4427 = vrot.slane %v4413, %v4426
        %v4428 = vcombine.low %v4395, %v4411
        %v4429 = vcombine.high %v4395, %v4411
        %v4431 = vunpack.c.l.s4 1934713408
        %v4432 = vunpack.c.0.s8 %v4431
        %v4433 = vlaneseq
        %v4434 = vshrl.u32 %v4433, 7
        %v4435 = vsub.s32 %v4432, %v4434
        %v4436 = vrot.slane %v4428, %v4435
        %v4438 = vunpack.c.l.s4 1934713408
        %v4439 = vunpack.c.0.s8 %v4438
        %v4440 = vlaneseq
        %v4441 = vshrl.u32 %v4440, 7
        %v4442 = vsub.s32 %v4439, %v4441
        %v4443 = vrot.slane %v4429, %v4442
        %v4444 = vcombine.high %v4420, 0.0
        %v4445 = vcombine.high %v4427, 0.0
        %v4446 = vcombine.high %v4436, 0.0
        %v4447 = vcombine.high %v4443, 0.0
        %4449 = vrot.lane.b32.xlu0 %v4376, 16
        %v4450 = vpop.permute.xlu0 %4449
        %4453 = vrot.lane.b32.xlu0 %v4359, 32
        %v4454 = vpop.permute.xlu0 %4453
        %4457 = vrot.lane.b32.xlu0 %v4377, 48
        %v4458 = vpop.permute.xlu0 %4457
        %4461 = vrot.lane.b32.xlu0 %v4368, 64
        %v4462 = vpop.permute.xlu0 %4461
        %4465 = vrot.lane.b32.xlu0 %v4378, 80
        %v4466 = vpop.permute.xlu0 %4465
        %4469 = vrot.lane.b32.xlu0 %v4375, 96
        %v4470 = vpop.permute.xlu0 %4469
        %4473 = vrot.lane.b32.xlu0 %v4379, 112
        %v4474 = vpop.permute.xlu0 %4473
        %4477 = vrot.lane.b32.xlu0 %v4444, 16
        %v4478 = vpop.permute.xlu0 %4477
        %4481 = vrot.lane.b32.xlu0 %v4427, 32
        %v4482 = vpop.permute.xlu0 %4481
        %4485 = vrot.lane.b32.xlu0 %v4445, 48
        %v4486 = vpop.permute.xlu0 %4485
        %4489 = vrot.lane.b32.xlu0 %v4436, 64
        %v4490 = vpop.permute.xlu0 %4489
        %4493 = vrot.lane.b32.xlu0 %v4446, 80
        %v4494 = vpop.permute.xlu0 %4493
        %4497 = vrot.lane.b32.xlu0 %v4443, 96
        %v4498 = vpop.permute.xlu0 %4497
        %4501 = vrot.lane.b32.xlu0 %v4447, 112
        %v4502 = vpop.permute.xlu0 %4501
        %v4504 = vsel %vm3059, %v4352, %v4450
        %v4505 = vsel %vm3061, %v4504, %v4454
        %v4506 = vsel %vm3063, %v4505, %v4458
        %v4507 = vsel %vm3065, %v4506, %v4462
        %v4508 = vsel %vm3067, %v4507, %v4466
        %v4509 = vsel %vm3069, %v4508, %v4470
        %v4510 = vsel %vm3071, %v4509, %v4474
        %v4511 = vsel %vm3059, %v4420, %v4478
        %v4512 = vsel %vm3061, %v4511, %v4482
        %v4513 = vsel %vm3063, %v4512, %v4486
        %v4514 = vsel %vm3065, %v4513, %v4490
        %v4515 = vsel %vm3067, %v4514, %v4494
        %v4516 = vsel %vm3069, %v4515, %v4498
        %v4517 = vsel %vm3071, %v4516, %v4502
        %v4519 = vsel %vm3320, %v4271, 0
        %v4522 = vsel %vm3324, %v4510, 0
        %v4525 = vsel %vm3324, %v4517, 0
        %v4527 = vand.u32 %v4525, 4294901760
        %4528 = vmatprep.subr.mxu0 %v4527
        %v4529 = vand.u32 %v4522, 4294901760
        %4530 = vmatpush1.msra.mxu0 %v4529
        %4531 = vmatprep.subr.mxu0 0.0
        %4532 = vmatpush1.msra.mxu0 0.0
        %4533 = vmatprep.subr.mxu0 0.0
        %4534 = vmatpush1.msra.mxu0 0.0
        %4535 = vmatprep.subr.mxu0 0.0
        %4536 = vmatpush1.msra.mxu0 0.0
        %4537 = vmatprep.subr.mxu0 0.0
        %4538 = vmatpush1.msra.mxu0 0.0
        %4539 = vmatprep.subr.mxu0 0.0
        %4540 = vmatpush1.msra.mxu0 0.0
        %4541 = vmatprep.subr.mxu0 0.0
        %4542 = vmatpush1.msra.mxu0 0.0
        %4543 = vmatprep.subr.mxu0 0.0
        %4544 = vmatpush1.msra.mxu0 0.0
        %4545 = vmatprep.subr.mxu0 0.0
        %4546 = vmatpush1.msra.mxu0 0.0
        %4547 = vmatprep.subr.mxu0 0.0
        %4548 = vmatpush1.msra.mxu0 0.0
        %4549 = vmatprep.subr.mxu0 0.0
        %4550 = vmatpush1.msra.mxu0 0.0
        %4551 = vmatprep.subr.mxu0 0.0
        %4552 = vmatpush1.msra.mxu0 0.0
        %4553 = vmatprep.subr.mxu0 0.0
        %4554 = vmatpush1.msra.mxu0 0.0
        %4555 = vmatprep.subr.mxu0 0.0
        %4556 = vmatpush1.msra.mxu0 0.0
        %4557 = vmatprep.subr.mxu0 0.0
        %4558 = vmatpush1.msra.mxu0 0.0
        %4559 = vmatprep.subr.mxu0 0.0
        %4560 = vmatpush1.msra.mxu0 0.0
        %4561 = vmatprep.subr.mxu0 0.0
        %4562 = vmatpush1.msra.mxu0 0.0
        %4563 = vmatprep.subr.mxu0 0.0
        %4564 = vmatpush1.msra.mxu0 0.0
        %4565 = vmatprep.subr.mxu0 0.0
        %4566 = vmatpush1.msra.mxu0 0.0
        %4567 = vmatprep.subr.mxu0 0.0
        %4568 = vmatpush1.msra.mxu0 0.0
        %4569 = vmatprep.subr.mxu0 0.0
        %4570 = vmatpush1.msra.mxu0 0.0
        %4571 = vmatprep.subr.mxu0 0.0
        %4572 = vmatpush1.msra.mxu0 0.0
        %4573 = vmatprep.subr.mxu0 0.0
        %4574 = vmatpush1.msra.mxu0 0.0
        %4575 = vmatprep.subr.mxu0 0.0
        %4576 = vmatpush1.msra.mxu0 0.0
        %4577 = vmatprep.subr.mxu0 0.0
        %4578 = vmatpush1.msra.mxu0 0.0
        %4579 = vmatprep.subr.mxu0 0.0
        %4580 = vmatpush1.msra.mxu0 0.0
        %4581 = vmatprep.subr.mxu0 0.0
        %4582 = vmatpush1.msra.mxu0 0.0
        %4583 = vmatprep.subr.mxu0 0.0
        %4584 = vmatpush1.msra.mxu0 0.0
        %4585 = vmatprep.subr.mxu0 0.0
        %4586 = vmatpush1.msra.mxu0 0.0
        %4587 = vmatprep.subr.mxu0 0.0
        %4588 = vmatpush1.msra.mxu0 0.0
        %4589 = vmatprep.subr.mxu0 0.0
        %4590 = vmatpush1.msra.mxu0 0.0
        %4591 = vmatprep.subr.mxu0 0.0
        %4592 = vmatpush1.msra.mxu0 0.0
        %4593 = vmatprep.mubr.f32.mxu0 0.0
        %v4594 = vand.u32 %v4519, 4294901760
        %v4595 = vsub.f32 %v4519, %v4594
        %v4596 = vand.u32 %v4595, 4294901760
        %v4597 = vsub.f32 %v4595, %v4596
        %v4598 = vand.u32 %v4597, 4294901760
        %4599 = vmatmul.mubr.f32.gmra.mrb[0].mxu0 %v4598
        %v4600 = vpop.f32.mrb[0].mxu0
        %v4601 = vadd.f32 0.0, %v4600
        %v4602 = vpop.f32.mrb[0].mxu0
        %v4603 = vadd.f32 0.0, %v4602
        %4604 = vdwg.mxu0
        %v4605 = vand.u32 %v4525, 4294901760
        %v4606 = vsub.f32 %v4525, %v4605
        %v4607 = vand.u32 %v4606, 4294901760
        %v4608 = vsub.f32 %v4606, %v4607
        %v4609 = vand.u32 %v4608, 4294901760
        %4610 = vmatprep.subr.mxu0 %v4609
        %v4611 = vand.u32 %v4522, 4294901760
        %v4612 = vsub.f32 %v4522, %v4611
        %v4613 = vand.u32 %v4612, 4294901760
        %v4614 = vsub.f32 %v4612, %v4613
        %v4615 = vand.u32 %v4614, 4294901760
        %4616 = vmatpush1.msra.mxu0 %v4615
        %4617 = vmatprep.subr.mxu0 0.0
        %4618 = vmatpush1.msra.mxu0 0.0
        %4619 = vmatprep.subr.mxu0 0.0
        %4620 = vmatpush1.msra.mxu0 0.0
        %4621 = vmatprep.subr.mxu0 0.0
        %4622 = vmatpush1.msra.mxu0 0.0
        %4623 = vmatprep.subr.mxu0 0.0
        %4624 = vmatpush1.msra.mxu0 0.0
        %4625 = vmatprep.subr.mxu0 0.0
        %4626 = vmatpush1.msra.mxu0 0.0
        %4627 = vmatprep.subr.mxu0 0.0
        %4628 = vmatpush1.msra.mxu0 0.0
        %4629 = vmatprep.subr.mxu0 0.0
        %4630 = vmatpush1.msra.mxu0 0.0
        %4631 = vmatprep.subr.mxu0 0.0
        %4632 = vmatpush1.msra.mxu0 0.0
        %4633 = vmatprep.subr.mxu0 0.0
        %4634 = vmatpush1.msra.mxu0 0.0
        %4635 = vmatprep.subr.mxu0 0.0
        %4636 = vmatpush1.msra.mxu0 0.0
        %4637 = vmatprep.subr.mxu0 0.0
        %4638 = vmatpush1.msra.mxu0 0.0
        %4639 = vmatprep.subr.mxu0 0.0
        %4640 = vmatpush1.msra.mxu0 0.0
        %4641 = vmatprep.subr.mxu0 0.0
        %4642 = vmatpush1.msra.mxu0 0.0
        %4643 = vmatprep.subr.mxu0 0.0
        %4644 = vmatpush1.msra.mxu0 0.0
        %4645 = vmatprep.subr.mxu0 0.0
        %4646 = vmatpush1.msra.mxu0 0.0
        %4647 = vmatprep.subr.mxu0 0.0
        %4648 = vmatpush1.msra.mxu0 0.0
        %4649 = vmatprep.subr.mxu0 0.0
        %4650 = vmatpush1.msra.mxu0 0.0
        %4651 = vmatprep.subr.mxu0 0.0
        %4652 = vmatpush1.msra.mxu0 0.0
        %4653 = vmatprep.subr.mxu0 0.0
        %4654 = vmatpush1.msra.mxu0 0.0
        %4655 = vmatprep.subr.mxu0 0.0
        %4656 = vmatpush1.msra.mxu0 0.0
        %4657 = vmatprep.subr.mxu0 0.0
        %4658 = vmatpush1.msra.mxu0 0.0
        %4659 = vmatprep.subr.mxu0 0.0
        %4660 = vmatpush1.msra.mxu0 0.0
        %4661 = vmatprep.subr.mxu0 0.0
        %4662 = vmatpush1.msra.mxu0 0.0
        %4663 = vmatprep.subr.mxu0 0.0
        %4664 = vmatpush1.msra.mxu0 0.0
        %4665 = vmatprep.subr.mxu0 0.0
        %4666 = vmatpush1.msra.mxu0 0.0
        %4667 = vmatprep.subr.mxu0 0.0
        %4668 = vmatpush1.msra.mxu0 0.0
        %4669 = vmatprep.subr.mxu0 0.0
        %4670 = vmatpush1.msra.mxu0 0.0
        %4671 = vmatprep.subr.mxu0 0.0
        %4672 = vmatpush1.msra.mxu0 0.0
        %4673 = vmatprep.subr.mxu0 0.0
        %4674 = vmatpush1.msra.mxu0 0.0
        %4675 = vmatprep.subr.mxu0 0.0
        %4676 = vmatpush1.msra.mxu0 0.0
        %4677 = vmatprep.subr.mxu0 0.0
        %4678 = vmatpush1.msra.mxu0 0.0
        %4679 = vmatprep.mubr.f32.mxu0 0.0
        %v4680 = vand.u32 %v4519, 4294901760
        %4681 = vmatmul.mubr.f32.gmra.mrb[0].mxu0 %v4680
        %v4682 = vpop.f32.mrb[0].mxu0
        %v4683 = vadd.f32 %v4601, %v4682
        %v4684 = vpop.f32.mrb[0].mxu0
        %v4685 = vadd.f32 %v4603, %v4684
        %4686 = vdwg.mxu0
        %v4687 = vand.u32 %v4525, 4294901760
        %v4688 = vsub.f32 %v4525, %v4687
        %4689 = vmatprep.subr.mxu0 %v4688
        %v4690 = vand.u32 %v4522, 4294901760
        %v4691 = vsub.f32 %v4522, %v4690
        %4692 = vmatpush1.msra.mxu0 %v4691
        %4693 = vmatprep.subr.mxu0 0.0
        %4694 = vmatpush1.msra.mxu0 0.0
        %4695 = vmatprep.subr.mxu0 0.0
        %4696 = vmatpush1.msra.mxu0 0.0
        %4697 = vmatprep.subr.mxu0 0.0
        %4698 = vmatpush1.msra.mxu0 0.0
        %4699 = vmatprep.subr.mxu0 0.0
        %4700 = vmatpush1.msra.mxu0 0.0
        %4701 = vmatprep.subr.mxu0 0.0
        %4702 = vmatpush1.msra.mxu0 0.0
        %4703 = vmatprep.subr.mxu0 0.0
        %4704 = vmatpush1.msra.mxu0 0.0
        %4705 = vmatprep.subr.mxu0 0.0
        %4706 = vmatpush1.msra.mxu0 0.0
        %4707 = vmatprep.subr.mxu0 0.0
        %4708 = vmatpush1.msra.mxu0 0.0
        %4709 = vmatprep.subr.mxu0 0.0
        %4710 = vmatpush1.msra.mxu0 0.0
        %4711 = vmatprep.subr.mxu0 0.0
        %4712 = vmatpush1.msra.mxu0 0.0
        %4713 = vmatprep.subr.mxu0 0.0
        %4714 = vmatpush1.msra.mxu0 0.0
        %4715 = vmatprep.subr.mxu0 0.0
        %4716 = vmatpush1.msra.mxu0 0.0
        %4717 = vmatprep.subr.mxu0 0.0
        %4718 = vmatpush1.msra.mxu0 0.0
        %4719 = vmatprep.subr.mxu0 0.0
        %4720 = vmatpush1.msra.mxu0 0.0
        %4721 = vmatprep.subr.mxu0 0.0
        %4722 = vmatpush1.msra.mxu0 0.0
        %4723 = vmatprep.subr.mxu0 0.0
        %4724 = vmatpush1.msra.mxu0 0.0
        %4725 = vmatprep.subr.mxu0 0.0
        %4726 = vmatpush1.msra.mxu0 0.0
        %4727 = vmatprep.subr.mxu0 0.0
        %4728 = vmatpush1.msra.mxu0 0.0
        %4729 = vmatprep.subr.mxu0 0.0
        %4730 = vmatpush1.msra.mxu0 0.0
        %4731 = vmatprep.subr.mxu0 0.0
        %4732 = vmatpush1.msra.mxu0 0.0
        %4733 = vmatprep.subr.mxu0 0.0
        %4734 = vmatpush1.msra.mxu0 0.0
        %4735 = vmatprep.subr.mxu0 0.0
        %4736 = vmatpush1.msra.mxu0 0.0
        %4737 = vmatprep.subr.mxu0 0.0
        %4738 = vmatpush1.msra.mxu0 0.0
        %4739 = vmatprep.subr.mxu0 0.0
        %4740 = vmatpush1.msra.mxu0 0.0
        %4741 = vmatprep.subr.mxu0 0.0
        %4742 = vmatpush1.msra.mxu0 0.0
        %4743 = vmatprep.subr.mxu0 0.0
        %4744 = vmatpush1.msra.mxu0 0.0
        %4745 = vmatprep.subr.mxu0 0.0
        %4746 = vmatpush1.msra.mxu0 0.0
        %4747 = vmatprep.subr.mxu0 0.0
        %4748 = vmatpush1.msra.mxu0 0.0
        %4749 = vmatprep.subr.mxu0 0.0
        %4750 = vmatpush1.msra.mxu0 0.0
        %4751 = vmatprep.subr.mxu0 0.0
        %4752 = vmatpush1.msra.mxu0 0.0
        %4753 = vmatprep.subr.mxu0 0.0
        %4754 = vmatpush1.msra.mxu0 0.0
        %4755 = vmatprep.mubr.f32.mxu0 0.0
        %v4756 = vand.u32 %v4519, 4294901760
        %v4757 = vsub.f32 %v4519, %v4756
        %4758 = vmatmul.mubr.f32.gmra.mrb[0].mxu0 %v4757
        %v4759 = vpop.f32.mrb[0].mxu0
        %v4760 = vadd.f32 %v4683, %v4759
        %v4761 = vpop.f32.mrb[0].mxu0
        %v4762 = vadd.f32 %v4685, %v4761
        %4763 = vdwg.mxu0
        %v4764 = vand.u32 %v4525, 4294901760
        %4765 = vmatprep.subr.mxu0 %v4764
        %v4766 = vand.u32 %v4522, 4294901760
        %4767 = vmatpush1.msra.mxu0 %v4766
        %4768 = vmatprep.subr.mxu0 0.0
        %4769 = vmatpush1.msra.mxu0 0.0
        %4770 = vmatprep.subr.mxu0 0.0
        %4771 = vmatpush1.msra.mxu0 0.0
        %4772 = vmatprep.subr.mxu0 0.0
        %4773 = vmatpush1.msra.mxu0 0.0
        %4774 = vmatprep.subr.mxu0 0.0
        %4775 = vmatpush1.msra.mxu0 0.0
        %4776 = vmatprep.subr.mxu0 0.0
        %4777 = vmatpush1.msra.mxu0 0.0
        %4778 = vmatprep.subr.mxu0 0.0
        %4779 = vmatpush1.msra.mxu0 0.0
        %4780 = vmatprep.subr.mxu0 0.0
        %4781 = vmatpush1.msra.mxu0 0.0
        %4782 = vmatprep.subr.mxu0 0.0
        %4783 = vmatpush1.msra.mxu0 0.0
        %4784 = vmatprep.subr.mxu0 0.0
        %4785 = vmatpush1.msra.mxu0 0.0
        %4786 = vmatprep.subr.mxu0 0.0
        %4787 = vmatpush1.msra.mxu0 0.0
        %4788 = vmatprep.subr.mxu0 0.0
        %4789 = vmatpush1.msra.mxu0 0.0
        %4790 = vmatprep.subr.mxu0 0.0
        %4791 = vmatpush1.msra.mxu0 0.0
        %4792 = vmatprep.subr.mxu0 0.0
        %4793 = vmatpush1.msra.mxu0 0.0
        %4794 = vmatprep.subr.mxu0 0.0
        %4795 = vmatpush1.msra.mxu0 0.0
        %4796 = vmatprep.subr.mxu0 0.0
        %4797 = vmatpush1.msra.mxu0 0.0
        %4798 = vmatprep.subr.mxu0 0.0
        %4799 = vmatpush1.msra.mxu0 0.0
        %4800 = vmatprep.subr.mxu0 0.0
        %4801 = vmatpush1.msra.mxu0 0.0
        %4802 = vmatprep.subr.mxu0 0.0
        %4803 = vmatpush1.msra.mxu0 0.0
        %4804 = vmatprep.subr.mxu0 0.0
        %4805 = vmatpush1.msra.mxu0 0.0
        %4806 = vmatprep.subr.mxu0 0.0
        %4807 = vmatpush1.msra.mxu0 0.0
        %4808 = vmatprep.subr.mxu0 0.0
        %4809 = vmatpush1.msra.mxu0 0.0
        %4810 = vmatprep.subr.mxu0 0.0
        %4811 = vmatpush1.msra.mxu0 0.0
        %4812 = vmatprep.subr.mxu0 0.0
        %4813 = vmatpush1.msra.mxu0 0.0
        %4814 = vmatprep.subr.mxu0 0.0
        %4815 = vmatpush1.msra.mxu0 0.0
        %4816 = vmatprep.subr.mxu0 0.0
        %4817 = vmatpush1.msra.mxu0 0.0
        %4818 = vmatprep.subr.mxu0 0.0
        %4819 = vmatpush1.msra.mxu0 0.0
        %4820 = vmatprep.subr.mxu0 0.0
        %4821 = vmatpush1.msra.mxu0 0.0
        %4822 = vmatprep.subr.mxu0 0.0
        %4823 = vmatpush1.msra.mxu0 0.0
        %4824 = vmatprep.subr.mxu0 0.0
        %4825 = vmatpush1.msra.mxu0 0.0
        %4826 = vmatprep.subr.mxu0 0.0
        %4827 = vmatpush1.msra.mxu0 0.0
        %4828 = vmatprep.subr.mxu0 0.0
        %4829 = vmatpush1.msra.mxu0 0.0
        %4830 = vmatprep.mubr.f32.mxu0 0.0
        %v4831 = vand.u32 %v4519, 4294901760
        %v4832 = vsub.f32 %v4519, %v4831
        %v4833 = vand.u32 %v4832, 4294901760
        %4834 = vmatmul.mubr.f32.gmra.mrb[0].mxu0 %v4833
        %v4835 = vpop.f32.mrb[0].mxu0
        %v4836 = vadd.f32 %v4760, %v4835
        %v4837 = vpop.f32.mrb[0].mxu0
        %v4838 = vadd.f32 %v4762, %v4837
        %4839 = vdwg.mxu0
        %v4840 = vand.u32 %v4525, 4294901760
        %v4841 = vsub.f32 %v4525, %v4840
        %v4842 = vand.u32 %v4841, 4294901760
        %4843 = vmatprep.subr.mxu0 %v4842
        %v4844 = vand.u32 %v4522, 4294901760
        %v4845 = vsub.f32 %v4522, %v4844
        %v4846 = vand.u32 %v4845, 4294901760
        %4847 = vmatpush1.msra.mxu0 %v4846
        %4848 = vmatprep.subr.mxu0 0.0
        %4849 = vmatpush1.msra.mxu0 0.0
        %4850 = vmatprep.subr.mxu0 0.0
        %4851 = vmatpush1.msra.mxu0 0.0
        %4852 = vmatprep.subr.mxu0 0.0
        %4853 = vmatpush1.msra.mxu0 0.0
        %4854 = vmatprep.subr.mxu0 0.0
        %4855 = vmatpush1.msra.mxu0 0.0
        %4856 = vmatprep.subr.mxu0 0.0
        %4857 = vmatpush1.msra.mxu0 0.0
        %4858 = vmatprep.subr.mxu0 0.0
        %4859 = vmatpush1.msra.mxu0 0.0
        %4860 = vmatprep.subr.mxu0 0.0
        %4861 = vmatpush1.msra.mxu0 0.0
        %4862 = vmatprep.subr.mxu0 0.0
        %4863 = vmatpush1.msra.mxu0 0.0
        %4864 = vmatprep.subr.mxu0 0.0
        %4865 = vmatpush1.msra.mxu0 0.0
        %4866 = vmatprep.subr.mxu0 0.0
        %4867 = vmatpush1.msra.mxu0 0.0
        %4868 = vmatprep.subr.mxu0 0.0
        %4869 = vmatpush1.msra.mxu0 0.0
        %4870 = vmatprep.subr.mxu0 0.0
        %4871 = vmatpush1.msra.mxu0 0.0
        %4872 = vmatprep.subr.mxu0 0.0
        %4873 = vmatpush1.msra.mxu0 0.0
        %4874 = vmatprep.subr.mxu0 0.0
        %4875 = vmatpush1.msra.mxu0 0.0
        %4876 = vmatprep.subr.mxu0 0.0
        %4877 = vmatpush1.msra.mxu0 0.0
        %4878 = vmatprep.subr.mxu0 0.0
        %4879 = vmatpush1.msra.mxu0 0.0
        %4880 = vmatprep.subr.mxu0 0.0
        %4881 = vmatpush1.msra.mxu0 0.0
        %4882 = vmatprep.subr.mxu0 0.0
        %4883 = vmatpush1.msra.mxu0 0.0
        %4884 = vmatprep.subr.mxu0 0.0
        %4885 = vmatpush1.msra.mxu0 0.0
        %4886 = vmatprep.subr.mxu0 0.0
        %4887 = vmatpush1.msra.mxu0 0.0
        %4888 = vmatprep.subr.mxu0 0.0
        %4889 = vmatpush1.msra.mxu0 0.0
        %4890 = vmatprep.subr.mxu0 0.0
        %4891 = vmatpush1.msra.mxu0 0.0
        %4892 = vmatprep.subr.mxu0 0.0
        %4893 = vmatpush1.msra.mxu0 0.0
        %4894 = vmatprep.subr.mxu0 0.0
        %4895 = vmatpush1.msra.mxu0 0.0
        %4896 = vmatprep.subr.mxu0 0.0
        %4897 = vmatpush1.msra.mxu0 0.0
        %4898 = vmatprep.subr.mxu0 0.0
        %4899 = vmatpush1.msra.mxu0 0.0
        %4900 = vmatprep.subr.mxu0 0.0
        %4901 = vmatpush1.msra.mxu0 0.0
        %4902 = vmatprep.subr.mxu0 0.0
        %4903 = vmatpush1.msra.mxu0 0.0
        %4904 = vmatprep.subr.mxu0 0.0
        %4905 = vmatpush1.msra.mxu0 0.0
        %4906 = vmatprep.subr.mxu0 0.0
        %4907 = vmatpush1.msra.mxu0 0.0
        %4908 = vmatprep.subr.mxu0 0.0
        %4909 = vmatpush1.msra.mxu0 0.0
        %4910 = vmatprep.mubr.f32.mxu0 0.0
        %v4911 = vand.u32 %v4519, 4294901760
        %4912 = vmatmul.mubr.f32.gmra.mrb[0].mxu0 %v4911
        %v4913 = vpop.f32.mrb[0].mxu0
        %v4914 = vadd.f32 %v4836, %v4913
        %v4915 = vpop.f32.mrb[0].mxu0
        %v4916 = vadd.f32 %v4838, %v4915
        %4917 = vdwg.mxu0
        %v4918 = vand.u32 %v4525, 4294901760
        %4919 = vmatprep.subr.mxu0 %v4918
        %v4920 = vand.u32 %v4522, 4294901760
        %4921 = vmatpush1.msra.mxu0 %v4920
        %4922 = vmatprep.subr.mxu0 0.0
        %4923 = vmatpush1.msra.mxu0 0.0
        %4924 = vmatprep.subr.mxu0 0.0
        %4925 = vmatpush1.msra.mxu0 0.0
        %4926 = vmatprep.subr.mxu0 0.0
        %4927 = vmatpush1.msra.mxu0 0.0
        %4928 = vmatprep.subr.mxu0 0.0
        %4929 = vmatpush1.msra.mxu0 0.0
        %4930 = vmatprep.subr.mxu0 0.0
        %4931 = vmatpush1.msra.mxu0 0.0
        %4932 = vmatprep.subr.mxu0 0.0
        %4933 = vmatpush1.msra.mxu0 0.0
        %4934 = vmatprep.subr.mxu0 0.0
        %4935 = vmatpush1.msra.mxu0 0.0
        %4936 = vmatprep.subr.mxu0 0.0
        %4937 = vmatpush1.msra.mxu0 0.0
        %4938 = vmatprep.subr.mxu0 0.0
        %4939 = vmatpush1.msra.mxu0 0.0
        %4940 = vmatprep.subr.mxu0 0.0
        %4941 = vmatpush1.msra.mxu0 0.0
        %4942 = vmatprep.subr.mxu0 0.0
        %4943 = vmatpush1.msra.mxu0 0.0
        %4944 = vmatprep.subr.mxu0 0.0
        %4945 = vmatpush1.msra.mxu0 0.0
        %4946 = vmatprep.subr.mxu0 0.0
        %4947 = vmatpush1.msra.mxu0 0.0
        %4948 = vmatprep.subr.mxu0 0.0
        %4949 = vmatpush1.msra.mxu0 0.0
        %4950 = vmatprep.subr.mxu0 0.0
        %4951 = vmatpush1.msra.mxu0 0.0
        %4952 = vmatprep.subr.mxu0 0.0
        %4953 = vmatpush1.msra.mxu0 0.0
        %4954 = vmatprep.subr.mxu0 0.0
        %4955 = vmatpush1.msra.mxu0 0.0
        %4956 = vmatprep.subr.mxu0 0.0
        %4957 = vmatpush1.msra.mxu0 0.0
        %4958 = vmatprep.subr.mxu0 0.0
        %4959 = vmatpush1.msra.mxu0 0.0
        %4960 = vmatprep.subr.mxu0 0.0
        %4961 = vmatpush1.msra.mxu0 0.0
        %4962 = vmatprep.subr.mxu0 0.0
        %4963 = vmatpush1.msra.mxu0 0.0
        %4964 = vmatprep.subr.mxu0 0.0
        %4965 = vmatpush1.msra.mxu0 0.0
        %4966 = vmatprep.subr.mxu0 0.0
        %4967 = vmatpush1.msra.mxu0 0.0
        %4968 = vmatprep.subr.mxu0 0.0
        %4969 = vmatpush1.msra.mxu0 0.0
        %4970 = vmatprep.subr.mxu0 0.0
        %4971 = vmatpush1.msra.mxu0 0.0
        %4972 = vmatprep.subr.mxu0 0.0
        %4973 = vmatpush1.msra.mxu0 0.0
        %4974 = vmatprep.subr.mxu0 0.0
        %4975 = vmatpush1.msra.mxu0 0.0
        %4976 = vmatprep.subr.mxu0 0.0
        %4977 = vmatpush1.msra.mxu0 0.0
        %4978 = vmatprep.subr.mxu0 0.0
        %4979 = vmatpush1.msra.mxu0 0.0
        %4980 = vmatprep.subr.mxu0 0.0
        %4981 = vmatpush1.msra.mxu0 0.0
        %4982 = vmatprep.subr.mxu0 0.0
        %4983 = vmatpush1.msra.mxu0 0.0
        %4984 = vmatprep.mubr.f32.mxu0 0.0
        %v4985 = vand.u32 %v4519, 4294901760
        %4986 = vmatmul.mubr.f32.gmra.mrb[0].mxu0 %v4985
        %v4987 = vpop.f32.mrb[0].mxu0
        %v4988 = vadd.f32 %v4914, %v4987
        %v4989 = vpop.f32.mrb[0].mxu0
        %v4990 = vadd.f32 %v4916, %v4989
        %4991 = vdwg.mxu0
        %v4992 = vadd.f32 %v4266, %v4988
        %v4993 = vadd.f32 %v4268, %v4990
        %s4994 = scalar_lea.vmem %s3, 24
        %v4995 = vld [vmem:[%s4994] sm:$0xff]
        %v4996 = vld [vmem:[#allocation2 + $0x1] sm:$0xff]
        %v4997 = vld [vmem:[#allocation2 + $0x9] sm:$0xff]
        %v4998 = vld [vmem:[#allocation2 + $0x19] sm:$0xff]
        %v4999 = vld [vmem:[#allocation2 + $0x21] sm:$0xff]
        %v5000 = vld [vmem:[#allocation2 + $0x31] sm:$0xff]
        %v5001 = vld [vmem:[#allocation2 + $0x39] sm:$0xff]
        %v5002 = vld [vmem:[#allocation2 + $0x49] sm:$0xff]
        %v5003 = vld [vmem:[#allocation2 + $0x51] sm:$0xff]
        %v5004 = vcombine.low %v4996, %v5000
        %v5005 = vcombine.high %v4996, %v5000
        %v5007 = vunpack.c.l.s4 1983009808
        %v5008 = vunpack.c.0.s8 %v5007
        %v5009 = vlaneseq
        %v5010 = vshrl.u32 %v5009, 7
        %v5011 = vsub.s32 %v5008, %v5010
        %v5012 = vrot.slane %v5004, %v5011
        %v5014 = vunpack.c.l.s4 1983009808
        %v5015 = vunpack.c.0.s8 %v5014
        %v5016 = vlaneseq
        %v5017 = vshrl.u32 %v5016, 7
        %v5018 = vsub.s32 %v5015, %v5017
        %v5019 = vrot.slane %v5005, %v5018
        %v5020 = vcombine.low %v4998, %v5002
        %v5021 = vcombine.high %v4998, %v5002
        %v5023 = vunpack.c.l.s4 1983009808
        %v5024 = vunpack.c.0.s8 %v5023
        %v5025 = vlaneseq
        %v5026 = vshrl.u32 %v5025, 7
        %v5027 = vsub.s32 %v5024, %v5026
        %v5028 = vrot.slane %v5020, %v5027
        %v5030 = vunpack.c.l.s4 1983009808
        %v5031 = vunpack.c.0.s8 %v5030
        %v5032 = vlaneseq
        %v5033 = vshrl.u32 %v5032, 7
        %v5034 = vsub.s32 %v5031, %v5033
        %v5035 = vrot.slane %v5021, %v5034
        %v5036 = vcombine.low %v5012, %v5028
        %v5037 = vcombine.high %v5012, %v5028
        %v5039 = vunpack.c.l.s4 1934713408
        %v5040 = vunpack.c.0.s8 %v5039
        %v5041 = vlaneseq
        %v5042 = vshrl.u32 %v5041, 7
        %v5043 = vsub.s32 %v5040, %v5042
        %v5044 = vrot.slane %v5036, %v5043
        %v5046 = vunpack.c.l.s4 1934713408
        %v5047 = vunpack.c.0.s8 %v5046
        %v5048 = vlaneseq
        %v5049 = vshrl.u32 %v5048, 7
        %v5050 = vsub.s32 %v5047, %v5049
        %v5051 = vrot.slane %v5037, %v5050
        %v5052 = vcombine.low %v5019, %v5035
        %v5053 = vcombine.high %v5019, %v5035
        %v5055 = vunpack.c.l.s4 1934713408
        %v5056 = vunpack.c.0.s8 %v5055
        %v5057 = vlaneseq
        %v5058 = vshrl.u32 %v5057, 7
        %v5059 = vsub.s32 %v5056, %v5058
        %v5060 = vrot.slane %v5052, %v5059
        %v5062 = vunpack.c.l.s4 1934713408
        %v5063 = vunpack.c.0.s8 %v5062
        %v5064 = vlaneseq
        %v5065 = vshrl.u32 %v5064, 7
        %v5066 = vsub.s32 %v5063, %v5065
        %v5067 = vrot.slane %v5053, %v5066
        %v5068 = vcombine.high %v5044, 0.0
        %v5069 = vcombine.high %v5051, 0.0
        %v5070 = vcombine.high %v5060, 0.0
        %v5071 = vcombine.high %v5067, 0.0
        %v5072 = vcombine.low %v4997, %v5001
        %v5073 = vcombine.high %v4997, %v5001
        %v5075 = vunpack.c.l.s4 1983009808
        %v5076 = vunpack.c.0.s8 %v5075
        %v5077 = vlaneseq
        %v5078 = vshrl.u32 %v5077, 7
        %v5079 = vsub.s32 %v5076, %v5078
        %v5080 = vrot.slane %v5072, %v5079
        %v5082 = vunpack.c.l.s4 1983009808
        %v5083 = vunpack.c.0.s8 %v5082
        %v5084 = vlaneseq
        %v5085 = vshrl.u32 %v5084, 7
        %v5086 = vsub.s32 %v5083, %v5085
        %v5087 = vrot.slane %v5073, %v5086
        %v5088 = vcombine.low %v4999, %v5003
        %v5089 = vcombine.high %v4999, %v5003
        %v5091 = vunpack.c.l.s4 1983009808
        %v5092 = vunpack.c.0.s8 %v5091
        %v5093 = vlaneseq
        %v5094 = vshrl.u32 %v5093, 7
        %v5095 = vsub.s32 %v5092, %v5094
        %v5096 = vrot.slane %v5088, %v5095
        %v5098 = vunpack.c.l.s4 1983009808
        %v5099 = vunpack.c.0.s8 %v5098
        %v5100 = vlaneseq
        %v5101 = vshrl.u32 %v5100, 7
        %v5102 = vsub.s32 %v5099, %v5101
        %v5103 = vrot.slane %v5089, %v5102
        %v5104 = vcombine.low %v5080, %v5096
        %v5105 = vcombine.high %v5080, %v5096
        %v5107 = vunpack.c.l.s4 1934713408
        %v5108 = vunpack.c.0.s8 %v5107
        %v5109 = vlaneseq
        %v5110 = vshrl.u32 %v5109, 7
        %v5111 = vsub.s32 %v5108, %v5110
        %v5112 = vrot.slane %v5104, %v5111
        %v5114 = vunpack.c.l.s4 1934713408
        %v5115 = vunpack.c.0.s8 %v5114
        %v5116 = vlaneseq
        %v5117 = vshrl.u32 %v5116, 7
        %v5118 = vsub.s32 %v5115, %v5117
        %v5119 = vrot.slane %v5105, %v5118
        %v5120 = vcombine.low %v5087, %v5103
        %v5121 = vcombine.high %v5087, %v5103
        %v5123 = vunpack.c.l.s4 1934713408
        %v5124 = vunpack.c.0.s8 %v5123
        %v5125 = vlaneseq
        %v5126 = vshrl.u32 %v5125, 7
        %v5127 = vsub.s32 %v5124, %v5126
        %v5128 = vrot.slane %v5120, %v5127
        %v5130 = vunpack.c.l.s4 1934713408
        %v5131 = vunpack.c.0.s8 %v5130
        %v5132 = vlaneseq
        %v5133 = vshrl.u32 %v5132, 7
        %v5134 = vsub.s32 %v5131, %v5133
        %v5135 = vrot.slane %v5121, %v5134
        %v5136 = vcombine.high %v5112, 0.0
        %v5137 = vcombine.high %v5119, 0.0
        %v5138 = vcombine.high %v5128, 0.0
        %v5139 = vcombine.high %v5135, 0.0
        %5141 = vrot.lane.b32.xlu0 %v5068, 16
        %v5142 = vpop.permute.xlu0 %5141
        %5145 = vrot.lane.b32.xlu0 %v5051, 32
        %v5146 = vpop.permute.xlu0 %5145
        %5149 = vrot.lane.b32.xlu0 %v5069, 48
        %v5150 = vpop.permute.xlu0 %5149
        %5153 = vrot.lane.b32.xlu0 %v5060, 64
        %v5154 = vpop.permute.xlu0 %5153
        %5157 = vrot.lane.b32.xlu0 %v5070, 80
        %v5158 = vpop.permute.xlu0 %5157
        %5161 = vrot.lane.b32.xlu0 %v5067, 96
        %v5162 = vpop.permute.xlu0 %5161
        %5165 = vrot.lane.b32.xlu0 %v5071, 112
        %v5166 = vpop.permute.xlu0 %5165
        %5169 = vrot.lane.b32.xlu0 %v5136, 16
        %v5170 = vpop.permute.xlu0 %5169
        %5173 = vrot.lane.b32.xlu0 %v5119, 32
        %v5174 = vpop.permute.xlu0 %5173
        %5177 = vrot.lane.b32.xlu0 %v5137, 48
        %v5178 = vpop.permute.xlu0 %5177
        %5181 = vrot.lane.b32.xlu0 %v5128, 64
        %v5182 = vpop.permute.xlu0 %5181
        %5185 = vrot.lane.b32.xlu0 %v5138, 80
        %v5186 = vpop.permute.xlu0 %5185
        %5189 = vrot.lane.b32.xlu0 %v5135, 96
        %v5190 = vpop.permute.xlu0 %5189
        %5193 = vrot.lane.b32.xlu0 %v5139, 112
        %v5194 = vpop.permute.xlu0 %5193
        %v5196 = vsel %vm3059, %v5044, %v5142
        %v5197 = vsel %vm3061, %v5196, %v5146
        %v5198 = vsel %vm3063, %v5197, %v5150
        %v5199 = vsel %vm3065, %v5198, %v5154
        %v5200 = vsel %vm3067, %v5199, %v5158
        %v5201 = vsel %vm3069, %v5200, %v5162
        %v5202 = vsel %vm3071, %v5201, %v5166
        %v5203 = vsel %vm3059, %v5112, %v5170
        %v5204 = vsel %vm3061, %v5203, %v5174
        %v5205 = vsel %vm3063, %v5204, %v5178
        %v5206 = vsel %vm3065, %v5205, %v5182
        %v5207 = vsel %vm3067, %v5206, %v5186
        %v5208 = vsel %vm3069, %v5207, %v5190
        %v5209 = vsel %vm3071, %v5208, %v5194
        %v5211 = vsel %vm3320, %v4995, 0
        %v5214 = vsel %vm3324, %v5202, 0
        %v5217 = vsel %vm3324, %v5209, 0
        %v5219 = vand.u32 %v5217, 4294901760
        %5220 = vmatprep.subr.mxu0 %v5219
        %v5221 = vand.u32 %v5214, 4294901760
        %5222 = vmatpush1.msra.mxu0 %v5221
        %5223 = vmatprep.subr.mxu0 0.0
        %5224 = vmatpush1.msra.mxu0 0.0
        %5225 = vmatprep.subr.mxu0 0.0
        %5226 = vmatpush1.msra.mxu0 0.0
        %5227 = vmatprep.subr.mxu0 0.0
        %5228 = vmatpush1.msra.mxu0 0.0
        %5229 = vmatprep.subr.mxu0 0.0
        %5230 = vmatpush1.msra.mxu0 0.0
        %5231 = vmatprep.subr.mxu0 0.0
        %5232 = vmatpush1.msra.mxu0 0.0
        %5233 = vmatprep.subr.mxu0 0.0
        %5234 = vmatpush1.msra.mxu0 0.0
        %5235 = vmatprep.subr.mxu0 0.0
        %5236 = vmatpush1.msra.mxu0 0.0
        %5237 = vmatprep.subr.mxu0 0.0
        %5238 = vmatpush1.msra.mxu0 0.0
        %5239 = vmatprep.subr.mxu0 0.0
        %5240 = vmatpush1.msra.mxu0 0.0
        %5241 = vmatprep.subr.mxu0 0.0
        %5242 = vmatpush1.msra.mxu0 0.0
        %5243 = vmatprep.subr.mxu0 0.0
        %5244 = vmatpush1.msra.mxu0 0.0
        %5245 = vmatprep.subr.mxu0 0.0
        %5246 = vmatpush1.msra.mxu0 0.0
        %5247 = vmatprep.subr.mxu0 0.0
        %5248 = vmatpush1.msra.mxu0 0.0
        %5249 = vmatprep.subr.mxu0 0.0
        %5250 = vmatpush1.msra.mxu0 0.0
        %5251 = vmatprep.subr.mxu0 0.0
        %5252 = vmatpush1.msra.mxu0 0.0
        %5253 = vmatprep.subr.mxu0 0.0
        %5254 = vmatpush1.msra.mxu0 0.0
        %5255 = vmatprep.subr.mxu0 0.0
        %5256 = vmatpush1.msra.mxu0 0.0
        %5257 = vmatprep.subr.mxu0 0.0
        %5258 = vmatpush1.msra.mxu0 0.0
        %5259 = vmatprep.subr.mxu0 0.0
        %5260 = vmatpush1.msra.mxu0 0.0
        %5261 = vmatprep.subr.mxu0 0.0
        %5262 = vmatpush1.msra.mxu0 0.0
        %5263 = vmatprep.subr.mxu0 0.0
        %5264 = vmatpush1.msra.mxu0 0.0
        %5265 = vmatprep.subr.mxu0 0.0
        %5266 = vmatpush1.msra.mxu0 0.0
        %5267 = vmatprep.subr.mxu0 0.0
        %5268 = vmatpush1.msra.mxu0 0.0
        %5269 = vmatprep.subr.mxu0 0.0
        %5270 = vmatpush1.msra.mxu0 0.0
        %5271 = vmatprep.subr.mxu0 0.0
        %5272 = vmatpush1.msra.mxu0 0.0
        %5273 = vmatprep.subr.mxu0 0.0
        %5274 = vmatpush1.msra.mxu0 0.0
        %5275 = vmatprep.subr.mxu0 0.0
        %5276 = vmatpush1.msra.mxu0 0.0
        %5277 = vmatprep.subr.mxu0 0.0
        %5278 = vmatpush1.msra.mxu0 0.0
        %5279 = vmatprep.subr.mxu0 0.0
        %5280 = vmatpush1.msra.mxu0 0.0
        %5281 = vmatprep.subr.mxu0 0.0
        %5282 = vmatpush1.msra.mxu0 0.0
        %5283 = vmatprep.subr.mxu0 0.0
        %5284 = vmatpush1.msra.mxu0 0.0
        %5285 = vmatprep.mubr.f32.mxu0 0.0
        %v5286 = vand.u32 %v5211, 4294901760
        %v5287 = vsub.f32 %v5211, %v5286
        %v5288 = vand.u32 %v5287, 4294901760
        %v5289 = vsub.f32 %v5287, %v5288
        %v5290 = vand.u32 %v5289, 4294901760
        %5291 = vmatmul.mubr.f32.gmra.mrb[0].mxu0 %v5290
        %v5292 = vpop.f32.mrb[0].mxu0
        %v5293 = vadd.f32 0.0, %v5292
        %v5294 = vpop.f32.mrb[0].mxu0
        %v5295 = vadd.f32 0.0, %v5294
        %5296 = vdwg.mxu0
        %v5297 = vand.u32 %v5217, 4294901760
        %v5298 = vsub.f32 %v5217, %v5297
        %v5299 = vand.u32 %v5298, 4294901760
        %v5300 = vsub.f32 %v5298, %v5299
        %v5301 = vand.u32 %v5300, 4294901760
        %5302 = vmatprep.subr.mxu0 %v5301
        %v5303 = vand.u32 %v5214, 4294901760
        %v5304 = vsub.f32 %v5214, %v5303
        %v5305 = vand.u32 %v5304, 4294901760
        %v5306 = vsub.f32 %v5304, %v5305
        %v5307 = vand.u32 %v5306, 4294901760
        %5308 = vmatpush1.msra.mxu0 %v5307
        %5309 = vmatprep.subr.mxu0 0.0
        %5310 = vmatpush1.msra.mxu0 0.0
        %5311 = vmatprep.subr.mxu0 0.0
        %5312 = vmatpush1.msra.mxu0 0.0
        %5313 = vmatprep.subr.mxu0 0.0
        %5314 = vmatpush1.msra.mxu0 0.0
        %5315 = vmatprep.subr.mxu0 0.0
        %5316 = vmatpush1.msra.mxu0 0.0
        %5317 = vmatprep.subr.mxu0 0.0
        %5318 = vmatpush1.msra.mxu0 0.0
        %5319 = vmatprep.subr.mxu0 0.0
        %5320 = vmatpush1.msra.mxu0 0.0
        %5321 = vmatprep.subr.mxu0 0.0
        %5322 = vmatpush1.msra.mxu0 0.0
        %5323 = vmatprep.subr.mxu0 0.0
        %5324 = vmatpush1.msra.mxu0 0.0
        %5325 = vmatprep.subr.mxu0 0.0
        %5326 = vmatpush1.msra.mxu0 0.0
        %5327 = vmatprep.subr.mxu0 0.0
        %5328 = vmatpush1.msra.mxu0 0.0
        %5329 = vmatprep.subr.mxu0 0.0
        %5330 = vmatpush1.msra.mxu0 0.0
        %5331 = vmatprep.subr.mxu0 0.0
        %5332 = vmatpush1.msra.mxu0 0.0
        %5333 = vmatprep.subr.mxu0 0.0
        %5334 = vmatpush1.msra.mxu0 0.0
        %5335 = vmatprep.subr.mxu0 0.0
        %5336 = vmatpush1.msra.mxu0 0.0
        %5337 = vmatprep.subr.mxu0 0.0
        %5338 = vmatpush1.msra.mxu0 0.0
        %5339 = vmatprep.subr.mxu0 0.0
        %5340 = vmatpush1.msra.mxu0 0.0
        %5341 = vmatprep.subr.mxu0 0.0
        %5342 = vmatpush1.msra.mxu0 0.0
        %5343 = vmatprep.subr.mxu0 0.0
        %5344 = vmatpush1.msra.mxu0 0.0
        %5345 = vmatprep.subr.mxu0 0.0
        %5346 = vmatpush1.msra.mxu0 0.0
        %5347 = vmatprep.subr.mxu0 0.0
        %5348 = vmatpush1.msra.mxu0 0.0
        %5349 = vmatprep.subr.mxu0 0.0
        %5350 = vmatpush1.msra.mxu0 0.0
        %5351 = vmatprep.subr.mxu0 0.0
        %5352 = vmatpush1.msra.mxu0 0.0
        %5353 = vmatprep.subr.mxu0 0.0
        %5354 = vmatpush1.msra.mxu0 0.0
        %5355 = vmatprep.subr.mxu0 0.0
        %5356 = vmatpush1.msra.mxu0 0.0
        %5357 = vmatprep.subr.mxu0 0.0
        %5358 = vmatpush1.msra.mxu0 0.0
        %5359 = vmatprep.subr.mxu0 0.0
        %5360 = vmatpush1.msra.mxu0 0.0
        %5361 = vmatprep.subr.mxu0 0.0
        %5362 = vmatpush1.msra.mxu0 0.0
        %5363 = vmatprep.subr.mxu0 0.0
        %5364 = vmatpush1.msra.mxu0 0.0
        %5365 = vmatprep.subr.mxu0 0.0
        %5366 = vmatpush1.msra.mxu0 0.0
        %5367 = vmatprep.subr.mxu0 0.0
        %5368 = vmatpush1.msra.mxu0 0.0
        %5369 = vmatprep.subr.mxu0 0.0
        %5370 = vmatpush1.msra.mxu0 0.0
        %5371 = vmatprep.mubr.f32.mxu0 0.0
        %v5372 = vand.u32 %v5211, 4294901760
        %5373 = vmatmul.mubr.f32.gmra.mrb[0].mxu0 %v5372
        %v5374 = vpop.f32.mrb[0].mxu0
        %v5375 = vadd.f32 %v5293, %v5374
        %v5376 = vpop.f32.mrb[0].mxu0
        %v5377 = vadd.f32 %v5295, %v5376
        %5378 = vdwg.mxu0
        %v5379 = vand.u32 %v5217, 4294901760
        %v5380 = vsub.f32 %v5217, %v5379
        %5381 = vmatprep.subr.mxu0 %v5380
        %v5382 = vand.u32 %v5214, 4294901760
        %v5383 = vsub.f32 %v5214, %v5382
        %5384 = vmatpush1.msra.mxu0 %v5383
        %5385 = vmatprep.subr.mxu0 0.0
        %5386 = vmatpush1.msra.mxu0 0.0
        %5387 = vmatprep.subr.mxu0 0.0
        %5388 = vmatpush1.msra.mxu0 0.0
        %5389 = vmatprep.subr.mxu0 0.0
        %5390 = vmatpush1.msra.mxu0 0.0
        %5391 = vmatprep.subr.mxu0 0.0
        %5392 = vmatpush1.msra.mxu0 0.0
        %5393 = vmatprep.subr.mxu0 0.0
        %5394 = vmatpush1.msra.mxu0 0.0
        %5395 = vmatprep.subr.mxu0 0.0
        %5396 = vmatpush1.msra.mxu0 0.0
        %5397 = vmatprep.subr.mxu0 0.0
        %5398 = vmatpush1.msra.mxu0 0.0
        %5399 = vmatprep.subr.mxu0 0.0
        %5400 = vmatpush1.msra.mxu0 0.0
        %5401 = vmatprep.subr.mxu0 0.0
        %5402 = vmatpush1.msra.mxu0 0.0
        %5403 = vmatprep.subr.mxu0 0.0
        %5404 = vmatpush1.msra.mxu0 0.0
        %5405 = vmatprep.subr.mxu0 0.0
        %5406 = vmatpush1.msra.mxu0 0.0
        %5407 = vmatprep.subr.mxu0 0.0
        %5408 = vmatpush1.msra.mxu0 0.0
        %5409 = vmatprep.subr.mxu0 0.0
        %5410 = vmatpush1.msra.mxu0 0.0
        %5411 = vmatprep.subr.mxu0 0.0
        %5412 = vmatpush1.msra.mxu0 0.0
        %5413 = vmatprep.subr.mxu0 0.0
        %5414 = vmatpush1.msra.mxu0 0.0
        %5415 = vmatprep.subr.mxu0 0.0
        %5416 = vmatpush1.msra.mxu0 0.0
        %5417 = vmatprep.subr.mxu0 0.0
        %5418 = vmatpush1.msra.mxu0 0.0
        %5419 = vmatprep.subr.mxu0 0.0
        %5420 = vmatpush1.msra.mxu0 0.0
        %5421 = vmatprep.subr.mxu0 0.0
        %5422 = vmatpush1.msra.mxu0 0.0
        %5423 = vmatprep.subr.mxu0 0.0
        %5424 = vmatpush1.msra.mxu0 0.0
        %5425 = vmatprep.subr.mxu0 0.0
        %5426 = vmatpush1.msra.mxu0 0.0
        %5427 = vmatprep.subr.mxu0 0.0
        %5428 = vmatpush1.msra.mxu0 0.0
        %5429 = vmatprep.subr.mxu0 0.0
        %5430 = vmatpush1.msra.mxu0 0.0
        %5431 = vmatprep.subr.mxu0 0.0
        %5432 = vmatpush1.msra.mxu0 0.0
        %5433 = vmatprep.subr.mxu0 0.0
        %5434 = vmatpush1.msra.mxu0 0.0
        %5435 = vmatprep.subr.mxu0 0.0
        %5436 = vmatpush1.msra.mxu0 0.0
        %5437 = vmatprep.subr.mxu0 0.0
        %5438 = vmatpush1.msra.mxu0 0.0
        %5439 = vmatprep.subr.mxu0 0.0
        %5440 = vmatpush1.msra.mxu0 0.0
        %5441 = vmatprep.subr.mxu0 0.0
        %5442 = vmatpush1.msra.mxu0 0.0
        %5443 = vmatprep.subr.mxu0 0.0
        %5444 = vmatpush1.msra.mxu0 0.0
        %5445 = vmatprep.subr.mxu0 0.0
        %5446 = vmatpush1.msra.mxu0 0.0
        %5447 = vmatprep.mubr.f32.mxu0 0.0
        %v5448 = vand.u32 %v5211, 4294901760
        %v5449 = vsub.f32 %v5211, %v5448
        %5450 = vmatmul.mubr.f32.gmra.mrb[0].mxu0 %v5449
        %v5451 = vpop.f32.mrb[0].mxu0
        %v5452 = vadd.f32 %v5375, %v5451
        %v5453 = vpop.f32.mrb[0].mxu0
        %v5454 = vadd.f32 %v5377, %v5453
        %5455 = vdwg.mxu0
        %v5456 = vand.u32 %v5217, 4294901760
        %5457 = vmatprep.subr.mxu0 %v5456
        %v5458 = vand.u32 %v5214, 4294901760
        %5459 = vmatpush1.msra.mxu0 %v5458
        %5460 = vmatprep.subr.mxu0 0.0
        %5461 = vmatpush1.msra.mxu0 0.0
        %5462 = vmatprep.subr.mxu0 0.0
        %5463 = vmatpush1.msra.mxu0 0.0
        %5464 = vmatprep.subr.mxu0 0.0
        %5465 = vmatpush1.msra.mxu0 0.0
        %5466 = vmatprep.subr.mxu0 0.0
        %5467 = vmatpush1.msra.mxu0 0.0
        %5468 = vmatprep.subr.mxu0 0.0
        %5469 = vmatpush1.msra.mxu0 0.0
        %5470 = vmatprep.subr.mxu0 0.0
        %5471 = vmatpush1.msra.mxu0 0.0
        %5472 = vmatprep.subr.mxu0 0.0
        %5473 = vmatpush1.msra.mxu0 0.0
        %5474 = vmatprep.subr.mxu0 0.0
        %5475 = vmatpush1.msra.mxu0 0.0
        %5476 = vmatprep.subr.mxu0 0.0
        %5477 = vmatpush1.msra.mxu0 0.0
        %5478 = vmatprep.subr.mxu0 0.0
        %5479 = vmatpush1.msra.mxu0 0.0
        %5480 = vmatprep.subr.mxu0 0.0
        %5481 = vmatpush1.msra.mxu0 0.0
        %5482 = vmatprep.subr.mxu0 0.0
        %5483 = vmatpush1.msra.mxu0 0.0
        %5484 = vmatprep.subr.mxu0 0.0
        %5485 = vmatpush1.msra.mxu0 0.0
        %5486 = vmatprep.subr.mxu0 0.0
        %5487 = vmatpush1.msra.mxu0 0.0
        %5488 = vmatprep.subr.mxu0 0.0
        %5489 = vmatpush1.msra.mxu0 0.0
        %5490 = vmatprep.subr.mxu0 0.0
        %5491 = vmatpush1.msra.mxu0 0.0
        %5492 = vmatprep.subr.mxu0 0.0
        %5493 = vmatpush1.msra.mxu0 0.0
        %5494 = vmatprep.subr.mxu0 0.0
        %5495 = vmatpush1.msra.mxu0 0.0
        %5496 = vmatprep.subr.mxu0 0.0
        %5497 = vmatpush1.msra.mxu0 0.0
        %5498 = vmatprep.subr.mxu0 0.0
        %5499 = vmatpush1.msra.mxu0 0.0
        %5500 = vmatprep.subr.mxu0 0.0
        %5501 = vmatpush1.msra.mxu0 0.0
        %5502 = vmatprep.subr.mxu0 0.0
        %5503 = vmatpush1.msra.mxu0 0.0
        %5504 = vmatprep.subr.mxu0 0.0
        %5505 = vmatpush1.msra.mxu0 0.0
        %5506 = vmatprep.subr.mxu0 0.0
        %5507 = vmatpush1.msra.mxu0 0.0
        %5508 = vmatprep.subr.mxu0 0.0
        %5509 = vmatpush1.msra.mxu0 0.0
        %5510 = vmatprep.subr.mxu0 0.0
        %5511 = vmatpush1.msra.mxu0 0.0
        %5512 = vmatprep.subr.mxu0 0.0
        %5513 = vmatpush1.msra.mxu0 0.0
        %5514 = vmatprep.subr.mxu0 0.0
        %5515 = vmatpush1.msra.mxu0 0.0
        %5516 = vmatprep.subr.mxu0 0.0
        %5517 = vmatpush1.msra.mxu0 0.0
        %5518 = vmatprep.subr.mxu0 0.0
        %5519 = vmatpush1.msra.mxu0 0.0
        %5520 = vmatprep.subr.mxu0 0.0
        %5521 = vmatpush1.msra.mxu0 0.0
        %5522 = vmatprep.mubr.f32.mxu0 0.0
        %v5523 = vand.u32 %v5211, 4294901760
        %v5524 = vsub.f32 %v5211, %v5523
        %v5525 = vand.u32 %v5524, 4294901760
        %5526 = vmatmul.mubr.f32.gmra.mrb[0].mxu0 %v5525
        %v5527 = vpop.f32.mrb[0].mxu0
        %v5528 = vadd.f32 %v5452, %v5527
        %v5529 = vpop.f32.mrb[0].mxu0
        %v5530 = vadd.f32 %v5454, %v5529
        %5531 = vdwg.mxu0
        %v5532 = vand.u32 %v5217, 4294901760
        %v5533 = vsub.f32 %v5217, %v5532
        %v5534 = vand.u32 %v5533, 4294901760
        %5535 = vmatprep.subr.mxu0 %v5534
        %v5536 = vand.u32 %v5214, 4294901760
        %v5537 = vsub.f32 %v5214, %v5536
        %v5538 = vand.u32 %v5537, 4294901760
        %5539 = vmatpush1.msra.mxu0 %v5538
        %5540 = vmatprep.subr.mxu0 0.0
        %5541 = vmatpush1.msra.mxu0 0.0
        %5542 = vmatprep.subr.mxu0 0.0
        %5543 = vmatpush1.msra.mxu0 0.0
        %5544 = vmatprep.subr.mxu0 0.0
        %5545 = vmatpush1.msra.mxu0 0.0
        %5546 = vmatprep.subr.mxu0 0.0
        %5547 = vmatpush1.msra.mxu0 0.0
        %5548 = vmatprep.subr.mxu0 0.0
        %5549 = vmatpush1.msra.mxu0 0.0
        %5550 = vmatprep.subr.mxu0 0.0
        %5551 = vmatpush1.msra.mxu0 0.0
        %5552 = vmatprep.subr.mxu0 0.0
        %5553 = vmatpush1.msra.mxu0 0.0
        %5554 = vmatprep.subr.mxu0 0.0
        %5555 = vmatpush1.msra.mxu0 0.0
        %5556 = vmatprep.subr.mxu0 0.0
        %5557 = vmatpush1.msra.mxu0 0.0
        %5558 = vmatprep.subr.mxu0 0.0
        %5559 = vmatpush1.msra.mxu0 0.0
        %5560 = vmatprep.subr.mxu0 0.0
        %5561 = vmatpush1.msra.mxu0 0.0
        %5562 = vmatprep.subr.mxu0 0.0
        %5563 = vmatpush1.msra.mxu0 0.0
        %5564 = vmatprep.subr.mxu0 0.0
        %5565 = vmatpush1.msra.mxu0 0.0
        %5566 = vmatprep.subr.mxu0 0.0
        %5567 = vmatpush1.msra.mxu0 0.0
        %5568 = vmatprep.subr.mxu0 0.0
        %5569 = vmatpush1.msra.mxu0 0.0
        %5570 = vmatprep.subr.mxu0 0.0
        %5571 = vmatpush1.msra.mxu0 0.0
        %5572 = vmatprep.subr.mxu0 0.0
        %5573 = vmatpush1.msra.mxu0 0.0
        %5574 = vmatprep.subr.mxu0 0.0
        %5575 = vmatpush1.msra.mxu0 0.0
        %5576 = vmatprep.subr.mxu0 0.0
        %5577 = vmatpush1.msra.mxu0 0.0
        %5578 = vmatprep.subr.mxu0 0.0
        %5579 = vmatpush1.msra.mxu0 0.0
        %5580 = vmatprep.subr.mxu0 0.0
        %5581 = vmatpush1.msra.mxu0 0.0
        %5582 = vmatprep.subr.mxu0 0.0
        %5583 = vmatpush1.msra.mxu0 0.0
        %5584 = vmatprep.subr.mxu0 0.0
        %5585 = vmatpush1.msra.mxu0 0.0
        %5586 = vmatprep.subr.mxu0 0.0
        %5587 = vmatpush1.msra.mxu0 0.0
        %5588 = vmatprep.subr.mxu0 0.0
        %5589 = vmatpush1.msra.mxu0 0.0
        %5590 = vmatprep.subr.mxu0 0.0
        %5591 = vmatpush1.msra.mxu0 0.0
        %5592 = vmatprep.subr.mxu0 0.0
        %5593 = vmatpush1.msra.mxu0 0.0
        %5594 = vmatprep.subr.mxu0 0.0
        %5595 = vmatpush1.msra.mxu0 0.0
        %5596 = vmatprep.subr.mxu0 0.0
        %5597 = vmatpush1.msra.mxu0 0.0
        %5598 = vmatprep.subr.mxu0 0.0
        %5599 = vmatpush1.msra.mxu0 0.0
        %5600 = vmatprep.subr.mxu0 0.0
        %5601 = vmatpush1.msra.mxu0 0.0
        %5602 = vmatprep.mubr.f32.mxu0 0.0
        %v5603 = vand.u32 %v5211, 4294901760
        %5604 = vmatmul.mubr.f32.gmra.mrb[0].mxu0 %v5603
        %v5605 = vpop.f32.mrb[0].mxu0
        %v5606 = vadd.f32 %v5528, %v5605
        %v5607 = vpop.f32.mrb[0].mxu0
        %v5608 = vadd.f32 %v5530, %v5607
        %5609 = vdwg.mxu0
        %v5610 = vand.u32 %v5217, 4294901760
        %5611 = vmatprep.subr.mxu0 %v5610
        %v5612 = vand.u32 %v5214, 4294901760
        %5613 = vmatpush1.msra.mxu0 %v5612
        %5614 = vmatprep.subr.mxu0 0.0
        %5615 = vmatpush1.msra.mxu0 0.0
        %5616 = vmatprep.subr.mxu0 0.0
        %5617 = vmatpush1.msra.mxu0 0.0
        %5618 = vmatprep.subr.mxu0 0.0
        %5619 = vmatpush1.msra.mxu0 0.0
        %5620 = vmatprep.subr.mxu0 0.0
        %5621 = vmatpush1.msra.mxu0 0.0
        %5622 = vmatprep.subr.mxu0 0.0
        %5623 = vmatpush1.msra.mxu0 0.0
        %5624 = vmatprep.subr.mxu0 0.0
        %5625 = vmatpush1.msra.mxu0 0.0
        %5626 = vmatprep.subr.mxu0 0.0
        %5627 = vmatpush1.msra.mxu0 0.0
        %5628 = vmatprep.subr.mxu0 0.0
        %5629 = vmatpush1.msra.mxu0 0.0
        %5630 = vmatprep.subr.mxu0 0.0
        %5631 = vmatpush1.msra.mxu0 0.0
        %5632 = vmatprep.subr.mxu0 0.0
        %5633 = vmatpush1.msra.mxu0 0.0
        %5634 = vmatprep.subr.mxu0 0.0
        %5635 = vmatpush1.msra.mxu0 0.0
        %5636 = vmatprep.subr.mxu0 0.0
        %5637 = vmatpush1.msra.mxu0 0.0
        %5638 = vmatprep.subr.mxu0 0.0
        %5639 = vmatpush1.msra.mxu0 0.0
        %5640 = vmatprep.subr.mxu0 0.0
        %5641 = vmatpush1.msra.mxu0 0.0
        %5642 = vmatprep.subr.mxu0 0.0
        %5643 = vmatpush1.msra.mxu0 0.0
        %5644 = vmatprep.subr.mxu0 0.0
        %5645 = vmatpush1.msra.mxu0 0.0
        %5646 = vmatprep.subr.mxu0 0.0
        %5647 = vmatpush1.msra.mxu0 0.0
        %5648 = vmatprep.subr.mxu0 0.0
        %5649 = vmatpush1.msra.mxu0 0.0
        %5650 = vmatprep.subr.mxu0 0.0
        %5651 = vmatpush1.msra.mxu0 0.0
        %5652 = vmatprep.subr.mxu0 0.0
        %5653 = vmatpush1.msra.mxu0 0.0
        %5654 = vmatprep.subr.mxu0 0.0
        %5655 = vmatpush1.msra.mxu0 0.0
        %5656 = vmatprep.subr.mxu0 0.0
        %5657 = vmatpush1.msra.mxu0 0.0
        %5658 = vmatprep.subr.mxu0 0.0
        %5659 = vmatpush1.msra.mxu0 0.0
        %5660 = vmatprep.subr.mxu0 0.0
        %5661 = vmatpush1.msra.mxu0 0.0
        %5662 = vmatprep.subr.mxu0 0.0
        %5663 = vmatpush1.msra.mxu0 0.0
        %5664 = vmatprep.subr.mxu0 0.0
        %5665 = vmatpush1.msra.mxu0 0.0
        %5666 = vmatprep.subr.mxu0 0.0
        %5667 = vmatpush1.msra.mxu0 0.0
        %5668 = vmatprep.subr.mxu0 0.0
        %5669 = vmatpush1.msra.mxu0 0.0
        %5670 = vmatprep.subr.mxu0 0.0
        %5671 = vmatpush1.msra.mxu0 0.0
        %5672 = vmatprep.subr.mxu0 0.0
        %5673 = vmatpush1.msra.mxu0 0.0
        %5674 = vmatprep.subr.mxu0 0.0
        %5675 = vmatpush1.msra.mxu0 0.0
        %5676 = vmatprep.mubr.f32.mxu0 0.0
        %v5677 = vand.u32 %v5211, 4294901760
        %5678 = vmatmul.mubr.f32.gmra.mrb[0].mxu0 %v5677
        %v5679 = vpop.f32.mrb[0].mxu0
        %v5680 = vadd.f32 %v5606, %v5679
        %v5681 = vpop.f32.mrb[0].mxu0
        %v5682 = vadd.f32 %v5608, %v5681
        %5683 = vdwg.mxu0
        %v5684 = vadd.f32 %v4992, %v5680
        %v5685 = vadd.f32 %v4993, %v5682
        %s5686 = scalar_lea.vmem %s3, 32
        %v5687 = vld [vmem:[%s5686] sm:$0xff]
        %v5688 = vld [vmem:[#allocation2 + $0x1] sm:$0xff]
        %v5689 = vld [vmem:[#allocation2 + $0x9] sm:$0xff]
        %v5690 = vld [vmem:[#allocation2 + $0x19] sm:$0xff]
        %v5691 = vld [vmem:[#allocation2 + $0x21] sm:$0xff]
        %v5692 = vld [vmem:[#allocation2 + $0x31] sm:$0xff]
        %v5693 = vld [vmem:[#allocation2 + $0x39] sm:$0xff]
        %v5694 = vld [vmem:[#allocation2 + $0x49] sm:$0xff]
        %v5695 = vld [vmem:[#allocation2 + $0x51] sm:$0xff]
        %5704 = vrot.lane.b32.xlu0 %v5688, 127
        %v5705 = vpop.permute.xlu0 %5704
        %5706 = vrot.lane.b32.xlu0 %v5689, 127
        %v5707 = vpop.permute.xlu0 %5706
        %5708 = vrot.lane.b32.xlu0 %v5690, 127
        %v5709 = vpop.permute.xlu0 %5708
        %5710 = vrot.lane.b32.xlu0 %v5691, 127
        %v5711 = vpop.permute.xlu0 %5710
        %5712 = vrot.lane.b32.xlu0 %v5692, 127
        %v5713 = vpop.permute.xlu0 %5712
        %5714 = vrot.lane.b32.xlu0 %v5693, 127
        %v5715 = vpop.permute.xlu0 %5714
        %5716 = vrot.lane.b32.xlu0 %v5694, 127
        %v5717 = vpop.permute.xlu0 %5716
        %5718 = vrot.lane.b32.xlu0 %v5695, 127
        %v5719 = vpop.permute.xlu0 %5718
        %v5728 = vcombine.low %v5705, %v5713
        %v5729 = vcombine.high %v5705, %v5713
        %v5731 = vunpack.c.l.s4 1983009808
        %v5732 = vunpack.c.0.s8 %v5731
        %v5733 = vlaneseq
        %v5734 = vshrl.u32 %v5733, 7
        %v5735 = vsub.s32 %v5732, %v5734
        %v5736 = vrot.slane %v5728, %v5735
        %v5738 = vunpack.c.l.s4 1983009808
        %v5739 = vunpack.c.0.s8 %v5738
        %v5740 = vlaneseq
        %v5741 = vshrl.u32 %v5740, 7
        %v5742 = vsub.s32 %v5739, %v5741
        %v5743 = vrot.slane %v5729, %v5742
        %v5744 = vcombine.low %v5709, %v5717
        %v5745 = vcombine.high %v5709, %v5717
        %v5747 = vunpack.c.l.s4 1983009808
        %v5748 = vunpack.c.0.s8 %v5747
        %v5749 = vlaneseq
        %v5750 = vshrl.u32 %v5749, 7
        %v5751 = vsub.s32 %v5748, %v5750
        %v5752 = vrot.slane %v5744, %v5751
        %v5754 = vunpack.c.l.s4 1983009808
        %v5755 = vunpack.c.0.s8 %v5754
        %v5756 = vlaneseq
        %v5757 = vshrl.u32 %v5756, 7
        %v5758 = vsub.s32 %v5755, %v5757
        %v5759 = vrot.slane %v5745, %v5758
        %v5760 = vcombine.low %v5736, %v5752
        %v5761 = vcombine.high %v5736, %v5752
        %v5763 = vunpack.c.l.s4 1934713408
        %v5764 = vunpack.c.0.s8 %v5763
        %v5765 = vlaneseq
        %v5766 = vshrl.u32 %v5765, 7
        %v5767 = vsub.s32 %v5764, %v5766
        %v5768 = vrot.slane %v5760, %v5767
        %v5770 = vunpack.c.l.s4 1934713408
        %v5771 = vunpack.c.0.s8 %v5770
        %v5772 = vlaneseq
        %v5773 = vshrl.u32 %v5772, 7
        %v5774 = vsub.s32 %v5771, %v5773
        %v5775 = vrot.slane %v5761, %v5774
        %v5776 = vcombine.low %v5743, %v5759
        %v5777 = vcombine.high %v5743, %v5759
        %v5779 = vunpack.c.l.s4 1934713408
        %v5780 = vunpack.c.0.s8 %v5779
        %v5781 = vlaneseq
        %v5782 = vshrl.u32 %v5781, 7
        %v5783 = vsub.s32 %v5780, %v5782
        %v5784 = vrot.slane %v5776, %v5783
        %v5786 = vunpack.c.l.s4 1934713408
        %v5787 = vunpack.c.0.s8 %v5786
        %v5788 = vlaneseq
        %v5789 = vshrl.u32 %v5788, 7
        %v5790 = vsub.s32 %v5787, %v5789
        %v5791 = vrot.slane %v5777, %v5790
        %v5792 = vcombine.high %v5768, 0.0
        %v5793 = vcombine.high %v5775, 0.0
        %v5794 = vcombine.high %v5784, 0.0
        %v5795 = vcombine.high %v5791, 0.0
        %v5796 = vcombine.low %v5707, %v5715
        %v5797 = vcombine.high %v5707, %v5715
        %v5799 = vunpack.c.l.s4 1983009808
        %v5800 = vunpack.c.0.s8 %v5799
        %v5801 = vlaneseq
        %v5802 = vshrl.u32 %v5801, 7
        %v5803 = vsub.s32 %v5800, %v5802
        %v5804 = vrot.slane %v5796, %v5803
        %v5806 = vunpack.c.l.s4 1983009808
        %v5807 = vunpack.c.0.s8 %v5806
        %v5808 = vlaneseq
        %v5809 = vshrl.u32 %v5808, 7
        %v5810 = vsub.s32 %v5807, %v5809
        %v5811 = vrot.slane %v5797, %v5810
        %v5812 = vcombine.low %v5711, %v5719
        %v5813 = vcombine.high %v5711, %v5719
        %v5815 = vunpack.c.l.s4 1983009808
        %v5816 = vunpack.c.0.s8 %v5815
        %v5817 = vlaneseq
        %v5818 = vshrl.u32 %v5817, 7
        %v5819 = vsub.s32 %v5816, %v5818
        %v5820 = vrot.slane %v5812, %v5819
        %v5822 = vunpack.c.l.s4 1983009808
        %v5823 = vunpack.c.0.s8 %v5822
        %v5824 = vlaneseq
        %v5825 = vshrl.u32 %v5824, 7
        %v5826 = vsub.s32 %v5823, %v5825
        %v5827 = vrot.slane %v5813, %v5826
        %v5828 = vcombine.low %v5804, %v5820
        %v5829 = vcombine.high %v5804, %v5820
        %v5831 = vunpack.c.l.s4 1934713408
        %v5832 = vunpack.c.0.s8 %v5831
        %v5833 = vlaneseq
        %v5834 = vshrl.u32 %v5833, 7
        %v5835 = vsub.s32 %v5832, %v5834
        %v5836 = vrot.slane %v5828, %v5835
        %v5838 = vunpack.c.l.s4 1934713408
        %v5839 = vunpack.c.0.s8 %v5838
        %v5840 = vlaneseq
        %v5841 = vshrl.u32 %v5840, 7
        %v5842 = vsub.s32 %v5839, %v5841
        %v5843 = vrot.slane %v5829, %v5842
        %v5844 = vcombine.low %v5811, %v5827
        %v5845 = vcombine.high %v5811, %v5827
        %v5847 = vunpack.c.l.s4 1934713408
        %v5848 = vunpack.c.0.s8 %v5847
        %v5849 = vlaneseq
        %v5850 = vshrl.u32 %v5849, 7
        %v5851 = vsub.s32 %v5848, %v5850
        %v5852 = vrot.slane %v5844, %v5851
        %v5854 = vunpack.c.l.s4 1934713408
        %v5855 = vunpack.c.0.s8 %v5854
        %v5856 = vlaneseq
        %v5857 = vshrl.u32 %v5856, 7
        %v5858 = vsub.s32 %v5855, %v5857
        %v5859 = vrot.slane %v5845, %v5858
        %v5860 = vcombine.high %v5836, 0.0
        %v5861 = vcombine.high %v5843, 0.0
        %v5862 = vcombine.high %v5852, 0.0
        %v5863 = vcombine.high %v5859, 0.0
        %5865 = vrot.lane.b32.xlu0 %v5792, 16
        %v5866 = vpop.permute.xlu0 %5865
        %5869 = vrot.lane.b32.xlu0 %v5775, 32
        %v5870 = vpop.permute.xlu0 %5869
        %5873 = vrot.lane.b32.xlu0 %v5793, 48
        %v5874 = vpop.permute.xlu0 %5873
        %5877 = vrot.lane.b32.xlu0 %v5784, 64
        %v5878 = vpop.permute.xlu0 %5877
        %5881 = vrot.lane.b32.xlu0 %v5794, 80
        %v5882 = vpop.permute.xlu0 %5881
        %5885 = vrot.lane.b32.xlu0 %v5791, 96
        %v5886 = vpop.permute.xlu0 %5885
        %5889 = vrot.lane.b32.xlu0 %v5795, 112
        %v5890 = vpop.permute.xlu0 %5889
        %5893 = vrot.lane.b32.xlu0 %v5860, 16
        %v5894 = vpop.permute.xlu0 %5893
        %5897 = vrot.lane.b32.xlu0 %v5843, 32
        %v5898 = vpop.permute.xlu0 %5897
        %5901 = vrot.lane.b32.xlu0 %v5861, 48
        %v5902 = vpop.permute.xlu0 %5901
        %5905 = vrot.lane.b32.xlu0 %v5852, 64
        %v5906 = vpop.permute.xlu0 %5905
        %5909 = vrot.lane.b32.xlu0 %v5862, 80
        %v5910 = vpop.permute.xlu0 %5909
        %5913 = vrot.lane.b32.xlu0 %v5859, 96
        %v5914 = vpop.permute.xlu0 %5913
        %5917 = vrot.lane.b32.xlu0 %v5863, 112
        %v5918 = vpop.permute.xlu0 %5917
        %v5920 = vsel %vm3059, %v5768, %v5866
        %v5921 = vsel %vm3061, %v5920, %v5870
        %v5922 = vsel %vm3063, %v5921, %v5874
        %v5923 = vsel %vm3065, %v5922, %v5878
        %v5924 = vsel %vm3067, %v5923, %v5882
        %v5925 = vsel %vm3069, %v5924, %v5886
        %v5926 = vsel %vm3071, %v5925, %v5890
        %v5927 = vsel %vm3059, %v5836, %v5894
        %v5928 = vsel %vm3061, %v5927, %v5898
        %v5929 = vsel %vm3063, %v5928, %v5902
        %v5930 = vsel %vm3065, %v5929, %v5906
        %v5931 = vsel %vm3067, %v5930, %v5910
        %v5932 = vsel %vm3069, %v5931, %v5914
        %v5933 = vsel %vm3071, %v5932, %v5918
        %v5935 = vsel %vm3320, %v5687, 0
        %v5938 = vsel %vm3324, %v5926, 0
        %v5941 = vsel %vm3324, %v5933, 0
        %v5943 = vand.u32 %v5941, 4294901760
        %5944 = vmatprep.subr.mxu0 %v5943
        %v5945 = vand.u32 %v5938, 4294901760
        %5946 = vmatpush1.msra.mxu0 %v5945
        %5947 = vmatprep.subr.mxu0 0.0
        %5948 = vmatpush1.msra.mxu0 0.0
        %5949 = vmatprep.subr.mxu0 0.0
        %5950 = vmatpush1.msra.mxu0 0.0
        %5951 = vmatprep.subr.mxu0 0.0
        %5952 = vmatpush1.msra.mxu0 0.0
        %5953 = vmatprep.subr.mxu0 0.0
        %5954 = vmatpush1.msra.mxu0 0.0
        %5955 = vmatprep.subr.mxu0 0.0
        %5956 = vmatpush1.msra.mxu0 0.0
        %5957 = vmatprep.subr.mxu0 0.0
        %5958 = vmatpush1.msra.mxu0 0.0
        %5959 = vmatprep.subr.mxu0 0.0
        %5960 = vmatpush1.msra.mxu0 0.0
        %5961 = vmatprep.subr.mxu0 0.0
        %5962 = vmatpush1.msra.mxu0 0.0
        %5963 = vmatprep.subr.mxu0 0.0
        %5964 = vmatpush1.msra.mxu0 0.0
        %5965 = vmatprep.subr.mxu0 0.0
        %5966 = vmatpush1.msra.mxu0 0.0
        %5967 = vmatprep.subr.mxu0 0.0
        %5968 = vmatpush1.msra.mxu0 0.0
        %5969 = vmatprep.subr.mxu0 0.0
        %5970 = vmatpush1.msra.mxu0 0.0
        %5971 = vmatprep.subr.mxu0 0.0
        %5972 = vmatpush1.msra.mxu0 0.0
        %5973 = vmatprep.subr.mxu0 0.0
        %5974 = vmatpush1.msra.mxu0 0.0
        %5975 = vmatprep.subr.mxu0 0.0
        %5976 = vmatpush1.msra.mxu0 0.0
        %5977 = vmatprep.subr.mxu0 0.0
        %5978 = vmatpush1.msra.mxu0 0.0
        %5979 = vmatprep.subr.mxu0 0.0
        %5980 = vmatpush1.msra.mxu0 0.0
        %5981 = vmatprep.subr.mxu0 0.0
        %5982 = vmatpush1.msra.mxu0 0.0
        %5983 = vmatprep.subr.mxu0 0.0
        %5984 = vmatpush1.msra.mxu0 0.0
        %5985 = vmatprep.subr.mxu0 0.0
        %5986 = vmatpush1.msra.mxu0 0.0
        %5987 = vmatprep.subr.mxu0 0.0
        %5988 = vmatpush1.msra.mxu0 0.0
        %5989 = vmatprep.subr.mxu0 0.0
        %5990 = vmatpush1.msra.mxu0 0.0
        %5991 = vmatprep.subr.mxu0 0.0
        %5992 = vmatpush1.msra.mxu0 0.0
        %5993 = vmatprep.subr.mxu0 0.0
        %5994 = vmatpush1.msra.mxu0 0.0
        %5995 = vmatprep.subr.mxu0 0.0
        %5996 = vmatpush1.msra.mxu0 0.0
        %5997 = vmatprep.subr.mxu0 0.0
        %5998 = vmatpush1.msra.mxu0 0.0
        %5999 = vmatprep.subr.mxu0 0.0
        %6000 = vmatpush1.msra.mxu0 0.0
        %6001 = vmatprep.subr.mxu0 0.0
        %6002 = vmatpush1.msra.mxu0 0.0
        %6003 = vmatprep.subr.mxu0 0.0
        %6004 = vmatpush1.msra.mxu0 0.0
        %6005 = vmatprep.subr.mxu0 0.0
        %6006 = vmatpush1.msra.mxu0 0.0
        %6007 = vmatprep.subr.mxu0 0.0
        %6008 = vmatpush1.msra.mxu0 0.0
        %6009 = vmatprep.mubr.f32.mxu0 0.0
        %v6010 = vand.u32 %v5935, 4294901760
        %v6011 = vsub.f32 %v5935, %v6010
        %v6012 = vand.u32 %v6011, 4294901760
        %v6013 = vsub.f32 %v6011, %v6012
        %v6014 = vand.u32 %v6013, 4294901760
        %6015 = vmatmul.mubr.f32.gmra.mrb[0].mxu0 %v6014
        %v6016 = vpop.f32.mrb[0].mxu0
        %v6017 = vadd.f32 0.0, %v6016
        %v6018 = vpop.f32.mrb[0].mxu0
        %v6019 = vadd.f32 0.0, %v6018
        %6020 = vdwg.mxu0
        %v6021 = vand.u32 %v5941, 4294901760
        %v6022 = vsub.f32 %v5941, %v6021
        %v6023 = vand.u32 %v6022, 4294901760
        %v6024 = vsub.f32 %v6022, %v6023
        %v6025 = vand.u32 %v6024, 4294901760
        %6026 = vmatprep.subr.mxu0 %v6025
        %v6027 = vand.u32 %v5938, 4294901760
        %v6028 = vsub.f32 %v5938, %v6027
        %v6029 = vand.u32 %v6028, 4294901760
        %v6030 = vsub.f32 %v6028, %v6029
        %v6031 = vand.u32 %v6030, 4294901760
        %6032 = vmatpush1.msra.mxu0 %v6031
        %6033 = vmatprep.subr.mxu0 0.0
        %6034 = vmatpush1.msra.mxu0 0.0
        %6035 = vmatprep.subr.mxu0 0.0
        %6036 = vmatpush1.msra.mxu0 0.0
        %6037 = vmatprep.subr.mxu0 0.0
        %6038 = vmatpush1.msra.mxu0 0.0
        %6039 = vmatprep.subr.mxu0 0.0
        %6040 = vmatpush1.msra.mxu0 0.0
        %6041 = vmatprep.subr.mxu0 0.0
        %6042 = vmatpush1.msra.mxu0 0.0
        %6043 = vmatprep.subr.mxu0 0.0
        %6044 = vmatpush1.msra.mxu0 0.0
        %6045 = vmatprep.subr.mxu0 0.0
        %6046 = vmatpush1.msra.mxu0 0.0
        %6047 = vmatprep.subr.mxu0 0.0
        %6048 = vmatpush1.msra.mxu0 0.0
        %6049 = vmatprep.subr.mxu0 0.0
        %6050 = vmatpush1.msra.mxu0 0.0
        %6051 = vmatprep.subr.mxu0 0.0
        %6052 = vmatpush1.msra.mxu0 0.0
        %6053 = vmatprep.subr.mxu0 0.0
        %6054 = vmatpush1.msra.mxu0 0.0
        %6055 = vmatprep.subr.mxu0 0.0
        %6056 = vmatpush1.msra.mxu0 0.0
        %6057 = vmatprep.subr.mxu0 0.0
        %6058 = vmatpush1.msra.mxu0 0.0
        %6059 = vmatprep.subr.mxu0 0.0
        %6060 = vmatpush1.msra.mxu0 0.0
        %6061 = vmatprep.subr.mxu0 0.0
        %6062 = vmatpush1.msra.mxu0 0.0
        %6063 = vmatprep.subr.mxu0 0.0
        %6064 = vmatpush1.msra.mxu0 0.0
        %6065 = vmatprep.subr.mxu0 0.0
        %6066 = vmatpush1.msra.mxu0 0.0
        %6067 = vmatprep.subr.mxu0 0.0
        %6068 = vmatpush1.msra.mxu0 0.0
        %6069 = vmatprep.subr.mxu0 0.0
        %6070 = vmatpush1.msra.mxu0 0.0
        %6071 = vmatprep.subr.mxu0 0.0
        %6072 = vmatpush1.msra.mxu0 0.0
        %6073 = vmatprep.subr.mxu0 0.0
        %6074 = vmatpush1.msra.mxu0 0.0
        %6075 = vmatprep.subr.mxu0 0.0
        %6076 = vmatpush1.msra.mxu0 0.0
        %6077 = vmatprep.subr.mxu0 0.0
        %6078 = vmatpush1.msra.mxu0 0.0
        %6079 = vmatprep.subr.mxu0 0.0
        %6080 = vmatpush1.msra.mxu0 0.0
        %6081 = vmatprep.subr.mxu0 0.0
        %6082 = vmatpush1.msra.mxu0 0.0
        %6083 = vmatprep.subr.mxu0 0.0
        %6084 = vmatpush1.msra.mxu0 0.0
        %6085 = vmatprep.subr.mxu0 0.0
        %6086 = vmatpush1.msra.mxu0 0.0
        %6087 = vmatprep.subr.mxu0 0.0
        %6088 = vmatpush1.msra.mxu0 0.0
        %6089 = vmatprep.subr.mxu0 0.0
        %6090 = vmatpush1.msra.mxu0 0.0
        %6091 = vmatprep.subr.mxu0 0.0
        %6092 = vmatpush1.msra.mxu0 0.0
        %6093 = vmatprep.subr.mxu0 0.0
        %6094 = vmatpush1.msra.mxu0 0.0
        %6095 = vmatprep.mubr.f32.mxu0 0.0
        %v6096 = vand.u32 %v5935, 4294901760
        %6097 = vmatmul.mubr.f32.gmra.mrb[0].mxu0 %v6096
        %v6098 = vpop.f32.mrb[0].mxu0
        %v6099 = vadd.f32 %v6017, %v6098
        %v6100 = vpop.f32.mrb[0].mxu0
        %v6101 = vadd.f32 %v6019, %v6100
        %6102 = vdwg.mxu0
        %v6103 = vand.u32 %v5941, 4294901760
        %v6104 = vsub.f32 %v5941, %v6103
        %6105 = vmatprep.subr.mxu0 %v6104
        %v6106 = vand.u32 %v5938, 4294901760
        %v6107 = vsub.f32 %v5938, %v6106
        %6108 = vmatpush1.msra.mxu0 %v6107
        %6109 = vmatprep.subr.mxu0 0.0
        %6110 = vmatpush1.msra.mxu0 0.0
        %6111 = vmatprep.subr.mxu0 0.0
        %6112 = vmatpush1.msra.mxu0 0.0
        %6113 = vmatprep.subr.mxu0 0.0
        %6114 = vmatpush1.msra.mxu0 0.0
        %6115 = vmatprep.subr.mxu0 0.0
        %6116 = vmatpush1.msra.mxu0 0.0
        %6117 = vmatprep.subr.mxu0 0.0
        %6118 = vmatpush1.msra.mxu0 0.0
        %6119 = vmatprep.subr.mxu0 0.0
        %6120 = vmatpush1.msra.mxu0 0.0
        %6121 = vmatprep.subr.mxu0 0.0
        %6122 = vmatpush1.msra.mxu0 0.0
        %6123 = vmatprep.subr.mxu0 0.0
        %6124 = vmatpush1.msra.mxu0 0.0
        %6125 = vmatprep.subr.mxu0 0.0
        %6126 = vmatpush1.msra.mxu0 0.0
        %6127 = vmatprep.subr.mxu0 0.0
        %6128 = vmatpush1.msra.mxu0 0.0
        %6129 = vmatprep.subr.mxu0 0.0
        %6130 = vmatpush1.msra.mxu0 0.0
        %6131 = vmatprep.subr.mxu0 0.0
        %6132 = vmatpush1.msra.mxu0 0.0
        %6133 = vmatprep.subr.mxu0 0.0
        %6134 = vmatpush1.msra.mxu0 0.0
        %6135 = vmatprep.subr.mxu0 0.0
        %6136 = vmatpush1.msra.mxu0 0.0
        %6137 = vmatprep.subr.mxu0 0.0
        %6138 = vmatpush1.msra.mxu0 0.0
        %6139 = vmatprep.subr.mxu0 0.0
        %6140 = vmatpush1.msra.mxu0 0.0
        %6141 = vmatprep.subr.mxu0 0.0
        %6142 = vmatpush1.msra.mxu0 0.0
        %6143 = vmatprep.subr.mxu0 0.0
        %6144 = vmatpush1.msra.mxu0 0.0
        %6145 = vmatprep.subr.mxu0 0.0
        %6146 = vmatpush1.msra.mxu0 0.0
        %6147 = vmatprep.subr.mxu0 0.0
        %6148 = vmatpush1.msra.mxu0 0.0
        %6149 = vmatprep.subr.mxu0 0.0
        %6150 = vmatpush1.msra.mxu0 0.0
        %6151 = vmatprep.subr.mxu0 0.0
        %6152 = vmatpush1.msra.mxu0 0.0
        %6153 = vmatprep.subr.mxu0 0.0
        %6154 = vmatpush1.msra.mxu0 0.0
        %6155 = vmatprep.subr.mxu0 0.0
        %6156 = vmatpush1.msra.mxu0 0.0
        %6157 = vmatprep.subr.mxu0 0.0
        %6158 = vmatpush1.msra.mxu0 0.0
        %6159 = vmatprep.subr.mxu0 0.0
        %6160 = vmatpush1.msra.mxu0 0.0
        %6161 = vmatprep.subr.mxu0 0.0
        %6162 = vmatpush1.msra.mxu0 0.0
        %6163 = vmatprep.subr.mxu0 0.0
        %6164 = vmatpush1.msra.mxu0 0.0
        %6165 = vmatprep.subr.mxu0 0.0
        %6166 = vmatpush1.msra.mxu0 0.0
        %6167 = vmatprep.subr.mxu0 0.0
        %6168 = vmatpush1.msra.mxu0 0.0
        %6169 = vmatprep.subr.mxu0 0.0
        %6170 = vmatpush1.msra.mxu0 0.0
        %6171 = vmatprep.mubr.f32.mxu0 0.0
        %v6172 = vand.u32 %v5935, 4294901760
        %v6173 = vsub.f32 %v5935, %v6172
        %6174 = vmatmul.mubr.f32.gmra.mrb[0].mxu0 %v6173
        %v6175 = vpop.f32.mrb[0].mxu0
        %v6176 = vadd.f32 %v6099, %v6175
        %v6177 = vpop.f32.mrb[0].mxu0
        %v6178 = vadd.f32 %v6101, %v6177
        %6179 = vdwg.mxu0
        %v6180 = vand.u32 %v5941, 4294901760
        %6181 = vmatprep.subr.mxu0 %v6180
        %v6182 = vand.u32 %v5938, 4294901760
        %6183 = vmatpush1.msra.mxu0 %v6182
        %6184 = vmatprep.subr.mxu0 0.0
        %6185 = vmatpush1.msra.mxu0 0.0
        %6186 = vmatprep.subr.mxu0 0.0
        %6187 = vmatpush1.msra.mxu0 0.0
        %6188 = vmatprep.subr.mxu0 0.0
        %6189 = vmatpush1.msra.mxu0 0.0
        %6190 = vmatprep.subr.mxu0 0.0
        %6191 = vmatpush1.msra.mxu0 0.0
        %6192 = vmatprep.subr.mxu0 0.0
        %6193 = vmatpush1.msra.mxu0 0.0
        %6194 = vmatprep.subr.mxu0 0.0
        %6195 = vmatpush1.msra.mxu0 0.0
        %6196 = vmatprep.subr.mxu0 0.0
        %6197 = vmatpush1.msra.mxu0 0.0
        %6198 = vmatprep.subr.mxu0 0.0
        %6199 = vmatpush1.msra.mxu0 0.0
        %6200 = vmatprep.subr.mxu0 0.0
        %6201 = vmatpush1.msra.mxu0 0.0
        %6202 = vmatprep.subr.mxu0 0.0
        %6203 = vmatpush1.msra.mxu0 0.0
        %6204 = vmatprep.subr.mxu0 0.0
        %6205 = vmatpush1.msra.mxu0 0.0
        %6206 = vmatprep.subr.mxu0 0.0
        %6207 = vmatpush1.msra.mxu0 0.0
        %6208 = vmatprep.subr.mxu0 0.0
        %6209 = vmatpush1.msra.mxu0 0.0
        %6210 = vmatprep.subr.mxu0 0.0
        %6211 = vmatpush1.msra.mxu0 0.0
        %6212 = vmatprep.subr.mxu0 0.0
        %6213 = vmatpush1.msra.mxu0 0.0
        %6214 = vmatprep.subr.mxu0 0.0
        %6215 = vmatpush1.msra.mxu0 0.0
        %6216 = vmatprep.subr.mxu0 0.0
        %6217 = vmatpush1.msra.mxu0 0.0
        %6218 = vmatprep.subr.mxu0 0.0
        %6219 = vmatpush1.msra.mxu0 0.0
        %6220 = vmatprep.subr.mxu0 0.0
        %6221 = vmatpush1.msra.mxu0 0.0
        %6222 = vmatprep.subr.mxu0 0.0
        %6223 = vmatpush1.msra.mxu0 0.0
        %6224 = vmatprep.subr.mxu0 0.0
        %6225 = vmatpush1.msra.mxu0 0.0
        %6226 = vmatprep.subr.mxu0 0.0
        %6227 = vmatpush1.msra.mxu0 0.0
        %6228 = vmatprep.subr.mxu0 0.0
        %6229 = vmatpush1.msra.mxu0 0.0
        %6230 = vmatprep.subr.mxu0 0.0
        %6231 = vmatpush1.msra.mxu0 0.0
        %6232 = vmatprep.subr.mxu0 0.0
        %6233 = vmatpush1.msra.mxu0 0.0
        %6234 = vmatprep.subr.mxu0 0.0
        %6235 = vmatpush1.msra.mxu0 0.0
        %6236 = vmatprep.subr.mxu0 0.0
        %6237 = vmatpush1.msra.mxu0 0.0
        %6238 = vmatprep.subr.mxu0 0.0
        %6239 = vmatpush1.msra.mxu0 0.0
        %6240 = vmatprep.subr.mxu0 0.0
        %6241 = vmatpush1.msra.mxu0 0.0
        %6242 = vmatprep.subr.mxu0 0.0
        %6243 = vmatpush1.msra.mxu0 0.0
        %6244 = vmatprep.subr.mxu0 0.0
        %6245 = vmatpush1.msra.mxu0 0.0
        %6246 = vmatprep.mubr.f32.mxu0 0.0
        %v6247 = vand.u32 %v5935, 4294901760
        %v6248 = vsub.f32 %v5935, %v6247
        %v6249 = vand.u32 %v6248, 4294901760
        %6250 = vmatmul.mubr.f32.gmra.mrb[0].mxu0 %v6249
        %v6251 = vpop.f32.mrb[0].mxu0
        %v6252 = vadd.f32 %v6176, %v6251
        %v6253 = vpop.f32.mrb[0].mxu0
        %v6254 = vadd.f32 %v6178, %v6253
        %6255 = vdwg.mxu0
        %v6256 = vand.u32 %v5941, 4294901760
        %v6257 = vsub.f32 %v5941, %v6256
        %v6258 = vand.u32 %v6257, 4294901760
        %6259 = vmatprep.subr.mxu0 %v6258
        %v6260 = vand.u32 %v5938, 4294901760
        %v6261 = vsub.f32 %v5938, %v6260
        %v6262 = vand.u32 %v6261, 4294901760
        %6263 = vmatpush1.msra.mxu0 %v6262
        %6264 = vmatprep.subr.mxu0 0.0
        %6265 = vmatpush1.msra.mxu0 0.0
        %6266 = vmatprep.subr.mxu0 0.0
        %6267 = vmatpush1.msra.mxu0 0.0
        %6268 = vmatprep.subr.mxu0 0.0
        %6269 = vmatpush1.msra.mxu0 0.0
        %6270 = vmatprep.subr.mxu0 0.0
        %6271 = vmatpush1.msra.mxu0 0.0
        %6272 = vmatprep.subr.mxu0 0.0
        %6273 = vmatpush1.msra.mxu0 0.0
        %6274 = vmatprep.subr.mxu0 0.0
        %6275 = vmatpush1.msra.mxu0 0.0
        %6276 = vmatprep.subr.mxu0 0.0
        %6277 = vmatpush1.msra.mxu0 0.0
        %6278 = vmatprep.subr.mxu0 0.0
        %6279 = vmatpush1.msra.mxu0 0.0
        %6280 = vmatprep.subr.mxu0 0.0
        %6281 = vmatpush1.msra.mxu0 0.0
        %6282 = vmatprep.subr.mxu0 0.0
        %6283 = vmatpush1.msra.mxu0 0.0
        %6284 = vmatprep.subr.mxu0 0.0
        %6285 = vmatpush1.msra.mxu0 0.0
        %6286 = vmatprep.subr.mxu0 0.0
        %6287 = vmatpush1.msra.mxu0 0.0
        %6288 = vmatprep.subr.mxu0 0.0
        %6289 = vmatpush1.msra.mxu0 0.0
        %6290 = vmatprep.subr.mxu0 0.0
        %6291 = vmatpush1.msra.mxu0 0.0
        %6292 = vmatprep.subr.mxu0 0.0
        %6293 = vmatpush1.msra.mxu0 0.0
        %6294 = vmatprep.subr.mxu0 0.0
        %6295 = vmatpush1.msra.mxu0 0.0
        %6296 = vmatprep.subr.mxu0 0.0
        %6297 = vmatpush1.msra.mxu0 0.0
        %6298 = vmatprep.subr.mxu0 0.0
        %6299 = vmatpush1.msra.mxu0 0.0
        %6300 = vmatprep.subr.mxu0 0.0
        %6301 = vmatpush1.msra.mxu0 0.0
        %6302 = vmatprep.subr.mxu0 0.0
        %6303 = vmatpush1.msra.mxu0 0.0
        %6304 = vmatprep.subr.mxu0 0.0
        %6305 = vmatpush1.msra.mxu0 0.0
        %6306 = vmatprep.subr.mxu0 0.0
        %6307 = vmatpush1.msra.mxu0 0.0
        %6308 = vmatprep.subr.mxu0 0.0
        %6309 = vmatpush1.msra.mxu0 0.0
        %6310 = vmatprep.subr.mxu0 0.0
        %6311 = vmatpush1.msra.mxu0 0.0
        %6312 = vmatprep.subr.mxu0 0.0
        %6313 = vmatpush1.msra.mxu0 0.0
        %6314 = vmatprep.subr.mxu0 0.0
        %6315 = vmatpush1.msra.mxu0 0.0
        %6316 = vmatprep.subr.mxu0 0.0
        %6317 = vmatpush1.msra.mxu0 0.0
        %6318 = vmatprep.subr.mxu0 0.0
        %6319 = vmatpush1.msra.mxu0 0.0
        %6320 = vmatprep.subr.mxu0 0.0
        %6321 = vmatpush1.msra.mxu0 0.0
        %6322 = vmatprep.subr.mxu0 0.0
        %6323 = vmatpush1.msra.mxu0 0.0
        %6324 = vmatprep.subr.mxu0 0.0
        %6325 = vmatpush1.msra.mxu0 0.0
        %6326 = vmatprep.mubr.f32.mxu0 0.0
        %v6327 = vand.u32 %v5935, 4294901760
        %6328 = vmatmul.mubr.f32.gmra.mrb[0].mxu0 %v6327
        %v6329 = vpop.f32.mrb[0].mxu0
        %v6330 = vadd.f32 %v6252, %v6329
        %v6331 = vpop.f32.mrb[0].mxu0
        %v6332 = vadd.f32 %v6254, %v6331
        %6333 = vdwg.mxu0
        %v6334 = vand.u32 %v5941, 4294901760
        %6335 = vmatprep.subr.mxu0 %v6334
        %v6336 = vand.u32 %v5938, 4294901760
        %6337 = vmatpush1.msra.mxu0 %v6336
        %6338 = vmatprep.subr.mxu0 0.0
        %6339 = vmatpush1.msra.mxu0 0.0
        %6340 = vmatprep.subr.mxu0 0.0
        %6341 = vmatpush1.msra.mxu0 0.0
        %6342 = vmatprep.subr.mxu0 0.0
        %6343 = vmatpush1.msra.mxu0 0.0
        %6344 = vmatprep.subr.mxu0 0.0
        %6345 = vmatpush1.msra.mxu0 0.0
        %6346 = vmatprep.subr.mxu0 0.0
        %6347 = vmatpush1.msra.mxu0 0.0
        %6348 = vmatprep.subr.mxu0 0.0
        %6349 = vmatpush1.msra.mxu0 0.0
        %6350 = vmatprep.subr.mxu0 0.0
        %6351 = vmatpush1.msra.mxu0 0.0
        %6352 = vmatprep.subr.mxu0 0.0
        %6353 = vmatpush1.msra.mxu0 0.0
        %6354 = vmatprep.subr.mxu0 0.0
        %6355 = vmatpush1.msra.mxu0 0.0
        %6356 = vmatprep.subr.mxu0 0.0
        %6357 = vmatpush1.msra.mxu0 0.0
        %6358 = vmatprep.subr.mxu0 0.0
        %6359 = vmatpush1.msra.mxu0 0.0
        %6360 = vmatprep.subr.mxu0 0.0
        %6361 = vmatpush1.msra.mxu0 0.0
        %6362 = vmatprep.subr.mxu0 0.0
        %6363 = vmatpush1.msra.mxu0 0.0
        %6364 = vmatprep.subr.mxu0 0.0
        %6365 = vmatpush1.msra.mxu0 0.0
        %6366 = vmatprep.subr.mxu0 0.0
        %6367 = vmatpush1.msra.mxu0 0.0
        %6368 = vmatprep.subr.mxu0 0.0
        %6369 = vmatpush1.msra.mxu0 0.0
        %6370 = vmatprep.subr.mxu0 0.0
        %6371 = vmatpush1.msra.mxu0 0.0
        %6372 = vmatprep.subr.mxu0 0.0
        %6373 = vmatpush1.msra.mxu0 0.0
        %6374 = vmatprep.subr.mxu0 0.0
        %6375 = vmatpush1.msra.mxu0 0.0
        %6376 = vmatprep.subr.mxu0 0.0
        %6377 = vmatpush1.msra.mxu0 0.0
        %6378 = vmatprep.subr.mxu0 0.0
        %6379 = vmatpush1.msra.mxu0 0.0
        %6380 = vmatprep.subr.mxu0 0.0
        %6381 = vmatpush1.msra.mxu0 0.0
        %6382 = vmatprep.subr.mxu0 0.0
        %6383 = vmatpush1.msra.mxu0 0.0
        %6384 = vmatprep.subr.mxu0 0.0
        %6385 = vmatpush1.msra.mxu0 0.0
        %6386 = vmatprep.subr.mxu0 0.0
        %6387 = vmatpush1.msra.mxu0 0.0
        %6388 = vmatprep.subr.mxu0 0.0
        %6389 = vmatpush1.msra.mxu0 0.0
        %6390 = vmatprep.subr.mxu0 0.0
        %6391 = vmatpush1.msra.mxu0 0.0
        %6392 = vmatprep.subr.mxu0 0.0
        %6393 = vmatpush1.msra.mxu0 0.0
        %6394 = vmatprep.subr.mxu0 0.0
        %6395 = vmatpush1.msra.mxu0 0.0
        %6396 = vmatprep.subr.mxu0 0.0
        %6397 = vmatpush1.msra.mxu0 0.0
        %6398 = vmatprep.subr.mxu0 0.0
        %6399 = vmatpush1.msra.mxu0 0.0
        %6400 = vmatprep.mubr.f32.mxu0 0.0
        %v6401 = vand.u32 %v5935, 4294901760
        %6402 = vmatmul.mubr.f32.gmra.mrb[0].mxu0 %v6401
        %v6403 = vpop.f32.mrb[0].mxu0
        %v6404 = vadd.f32 %v6330, %v6403
        %v6405 = vpop.f32.mrb[0].mxu0
        %v6406 = vadd.f32 %v6332, %v6405
        %6407 = vdwg.mxu0
        %v6408 = vadd.f32 %v5684, %v6404
        %v6409 = vadd.f32 %v5685, %v6406
        %s6410 = scalar_lea.vmem %s3, 40
        %v6411 = vld [vmem:[%s6410] sm:$0xff]
        %v6412 = vld [vmem:[#allocation2 + $0x1] sm:$0xff]
        %v6413 = vld [vmem:[#allocation2 + $0x9] sm:$0xff]
        %v6414 = vld [vmem:[#allocation2 + $0x19] sm:$0xff]
        %v6415 = vld [vmem:[#allocation2 + $0x21] sm:$0xff]
        %v6416 = vld [vmem:[#allocation2 + $0x31] sm:$0xff]
        %v6417 = vld [vmem:[#allocation2 + $0x39] sm:$0xff]
        %v6418 = vld [vmem:[#allocation2 + $0x49] sm:$0xff]
        %v6419 = vld [vmem:[#allocation2 + $0x51] sm:$0xff]
        %6428 = vrot.lane.b32.xlu0 %v6412, 126
        %v6429 = vpop.permute.xlu0 %6428
        %6430 = vrot.lane.b32.xlu0 %v6413, 126
        %v6431 = vpop.permute.xlu0 %6430
        %6432 = vrot.lane.b32.xlu0 %v6414, 126
        %v6433 = vpop.permute.xlu0 %6432
        %6434 = vrot.lane.b32.xlu0 %v6415, 126
        %v6435 = vpop.permute.xlu0 %6434
        %6436 = vrot.lane.b32.xlu0 %v6416, 126
        %v6437 = vpop.permute.xlu0 %6436
        %6438 = vrot.lane.b32.xlu0 %v6417, 126
        %v6439 = vpop.permute.xlu0 %6438
        %6440 = vrot.lane.b32.xlu0 %v6418, 126
        %v6441 = vpop.permute.xlu0 %6440
        %6442 = vrot.lane.b32.xlu0 %v6419, 126
        %v6443 = vpop.permute.xlu0 %6442
        %v6452 = vcombine.low %v6429, %v6437
        %v6453 = vcombine.high %v6429, %v6437
        %v6455 = vunpack.c.l.s4 1983009808
        %v6456 = vunpack.c.0.s8 %v6455
        %v6457 = vlaneseq
        %v6458 = vshrl.u32 %v6457, 7
        %v6459 = vsub.s32 %v6456, %v6458
        %v6460 = vrot.slane %v6452, %v6459
        %v6462 = vunpack.c.l.s4 1983009808
        %v6463 = vunpack.c.0.s8 %v6462
        %v6464 = vlaneseq
        %v6465 = vshrl.u32 %v6464, 7
        %v6466 = vsub.s32 %v6463, %v6465
        %v6467 = vrot.slane %v6453, %v6466
        %v6468 = vcombine.low %v6433, %v6441
        %v6469 = vcombine.high %v6433, %v6441
        %v6471 = vunpack.c.l.s4 1983009808
        %v6472 = vunpack.c.0.s8 %v6471
        %v6473 = vlaneseq
        %v6474 = vshrl.u32 %v6473, 7
        %v6475 = vsub.s32 %v6472, %v6474
        %v6476 = vrot.slane %v6468, %v6475
        %v6478 = vunpack.c.l.s4 1983009808
        %v6479 = vunpack.c.0.s8 %v6478
        %v6480 = vlaneseq
        %v6481 = vshrl.u32 %v6480, 7
        %v6482 = vsub.s32 %v6479, %v6481
        %v6483 = vrot.slane %v6469, %v6482
        %v6484 = vcombine.low %v6460, %v6476
        %v6485 = vcombine.high %v6460, %v6476
        %v6487 = vunpack.c.l.s4 1934713408
        %v6488 = vunpack.c.0.s8 %v6487
        %v6489 = vlaneseq
        %v6490 = vshrl.u32 %v6489, 7
        %v6491 = vsub.s32 %v6488, %v6490
        %v6492 = vrot.slane %v6484, %v6491
        %v6494 = vunpack.c.l.s4 1934713408
        %v6495 = vunpack.c.0.s8 %v6494
        %v6496 = vlaneseq
        %v6497 = vshrl.u32 %v6496, 7
        %v6498 = vsub.s32 %v6495, %v6497
        %v6499 = vrot.slane %v6485, %v6498
        %v6500 = vcombine.low %v6467, %v6483
        %v6501 = vcombine.high %v6467, %v6483
        %v6503 = vunpack.c.l.s4 1934713408
        %v6504 = vunpack.c.0.s8 %v6503
        %v6505 = vlaneseq
        %v6506 = vshrl.u32 %v6505, 7
        %v6507 = vsub.s32 %v6504, %v6506
        %v6508 = vrot.slane %v6500, %v6507
        %v6510 = vunpack.c.l.s4 1934713408
        %v6511 = vunpack.c.0.s8 %v6510
        %v6512 = vlaneseq
        %v6513 = vshrl.u32 %v6512, 7
        %v6514 = vsub.s32 %v6511, %v6513
        %v6515 = vrot.slane %v6501, %v6514
        %v6516 = vcombine.high %v6492, 0.0
        %v6517 = vcombine.high %v6499, 0.0
        %v6518 = vcombine.high %v6508, 0.0
        %v6519 = vcombine.high %v6515, 0.0
        %v6520 = vcombine.low %v6431, %v6439
        %v6521 = vcombine.high %v6431, %v6439
        %v6523 = vunpack.c.l.s4 1983009808
        %v6524 = vunpack.c.0.s8 %v6523
        %v6525 = vlaneseq
        %v6526 = vshrl.u32 %v6525, 7
        %v6527 = vsub.s32 %v6524, %v6526
        %v6528 = vrot.slane %v6520, %v6527
        %v6530 = vunpack.c.l.s4 1983009808
        %v6531 = vunpack.c.0.s8 %v6530
        %v6532 = vlaneseq
        %v6533 = vshrl.u32 %v6532, 7
        %v6534 = vsub.s32 %v6531, %v6533
        %v6535 = vrot.slane %v6521, %v6534
        %v6536 = vcombine.low %v6435, %v6443
        %v6537 = vcombine.high %v6435, %v6443
        %v6539 = vunpack.c.l.s4 1983009808
        %v6540 = vunpack.c.0.s8 %v6539
        %v6541 = vlaneseq
        %v6542 = vshrl.u32 %v6541, 7
        %v6543 = vsub.s32 %v6540, %v6542
        %v6544 = vrot.slane %v6536, %v6543
        %v6546 = vunpack.c.l.s4 1983009808
        %v6547 = vunpack.c.0.s8 %v6546
        %v6548 = vlaneseq
        %v6549 = vshrl.u32 %v6548, 7
        %v6550 = vsub.s32 %v6547, %v6549
        %v6551 = vrot.slane %v6537, %v6550
        %v6552 = vcombine.low %v6528, %v6544
        %v6553 = vcombine.high %v6528, %v6544
        %v6555 = vunpack.c.l.s4 1934713408
        %v6556 = vunpack.c.0.s8 %v6555
        %v6557 = vlaneseq
        %v6558 = vshrl.u32 %v6557, 7
        %v6559 = vsub.s32 %v6556, %v6558
        %v6560 = vrot.slane %v6552, %v6559
        %v6562 = vunpack.c.l.s4 1934713408
        %v6563 = vunpack.c.0.s8 %v6562
        %v6564 = vlaneseq
        %v6565 = vshrl.u32 %v6564, 7
        %v6566 = vsub.s32 %v6563, %v6565
        %v6567 = vrot.slane %v6553, %v6566
        %v6568 = vcombine.low %v6535, %v6551
        %v6569 = vcombine.high %v6535, %v6551
        %v6571 = vunpack.c.l.s4 1934713408
        %v6572 = vunpack.c.0.s8 %v6571
        %v6573 = vlaneseq
        %v6574 = vshrl.u32 %v6573, 7
        %v6575 = vsub.s32 %v6572, %v6574
        %v6576 = vrot.slane %v6568, %v6575
        %v6578 = vunpack.c.l.s4 1934713408
        %v6579 = vunpack.c.0.s8 %v6578
        %v6580 = vlaneseq
        %v6581 = vshrl.u32 %v6580, 7
        %v6582 = vsub.s32 %v6579, %v6581
        %v6583 = vrot.slane %v6569, %v6582
        %v6584 = vcombine.high %v6560, 0.0
        %v6585 = vcombine.high %v6567, 0.0
        %v6586 = vcombine.high %v6576, 0.0
        %v6587 = vcombine.high %v6583, 0.0
        %6589 = vrot.lane.b32.xlu0 %v6516, 16
        %v6590 = vpop.permute.xlu0 %6589
        %6593 = vrot.lane.b32.xlu0 %v6499, 32
        %v6594 = vpop.permute.xlu0 %6593
        %6597 = vrot.lane.b32.xlu0 %v6517, 48
        %v6598 = vpop.permute.xlu0 %6597
        %6601 = vrot.lane.b32.xlu0 %v6508, 64
        %v6602 = vpop.permute.xlu0 %6601
        %6605 = vrot.lane.b32.xlu0 %v6518, 80
        %v6606 = vpop.permute.xlu0 %6605
        %6609 = vrot.lane.b32.xlu0 %v6515, 96
        %v6610 = vpop.permute.xlu0 %6609
        %6613 = vrot.lane.b32.xlu0 %v6519, 112
        %v6614 = vpop.permute.xlu0 %6613
        %6617 = vrot.lane.b32.xlu0 %v6584, 16
        %v6618 = vpop.permute.xlu0 %6617
        %6621 = vrot.lane.b32.xlu0 %v6567, 32
        %v6622 = vpop.permute.xlu0 %6621
        %6625 = vrot.lane.b32.xlu0 %v6585, 48
        %v6626 = vpop.permute.xlu0 %6625
        %6629 = vrot.lane.b32.xlu0 %v6576, 64
        %v6630 = vpop.permute.xlu0 %6629
        %6633 = vrot.lane.b32.xlu0 %v6586, 80
        %v6634 = vpop.permute.xlu0 %6633
        %6637 = vrot.lane.b32.xlu0 %v6583, 96
        %v6638 = vpop.permute.xlu0 %6637
        %6641 = vrot.lane.b32.xlu0 %v6587, 112
        %v6642 = vpop.permute.xlu0 %6641
        %v6644 = vsel %vm3059, %v6492, %v6590
        %v6645 = vsel %vm3061, %v6644, %v6594
        %v6646 = vsel %vm3063, %v6645, %v6598
        %v6647 = vsel %vm3065, %v6646, %v6602
        %v6648 = vsel %vm3067, %v6647, %v6606
        %v6649 = vsel %vm3069, %v6648, %v6610
        %v6650 = vsel %vm3071, %v6649, %v6614
        %v6651 = vsel %vm3059, %v6560, %v6618
        %v6652 = vsel %vm3061, %v6651, %v6622
        %v6653 = vsel %vm3063, %v6652, %v6626
        %v6654 = vsel %vm3065, %v6653, %v6630
        %v6655 = vsel %vm3067, %v6654, %v6634
        %v6656 = vsel %vm3069, %v6655, %v6638
        %v6657 = vsel %vm3071, %v6656, %v6642
        %v6659 = vsel %vm3320, %v6411, 0
        %v6662 = vsel %vm3324, %v6650, 0
        %v6665 = vsel %vm3324, %v6657, 0
        %v6667 = vand.u32 %v6665, 4294901760
        %6668 = vmatprep.subr.mxu0 %v6667
        %v6669 = vand.u32 %v6662, 4294901760
        %6670 = vmatpush1.msra.mxu0 %v6669
        %6671 = vmatprep.subr.mxu0 0.0
        %6672 = vmatpush1.msra.mxu0 0.0
        %6673 = vmatprep.subr.mxu0 0.0
        %6674 = vmatpush1.msra.mxu0 0.0
        %6675 = vmatprep.subr.mxu0 0.0
        %6676 = vmatpush1.msra.mxu0 0.0
        %6677 = vmatprep.subr.mxu0 0.0
        %6678 = vmatpush1.msra.mxu0 0.0
        %6679 = vmatprep.subr.mxu0 0.0
        %6680 = vmatpush1.msra.mxu0 0.0
        %6681 = vmatprep.subr.mxu0 0.0
        %6682 = vmatpush1.msra.mxu0 0.0
        %6683 = vmatprep.subr.mxu0 0.0
        %6684 = vmatpush1.msra.mxu0 0.0
        %6685 = vmatprep.subr.mxu0 0.0
        %6686 = vmatpush1.msra.mxu0 0.0
        %6687 = vmatprep.subr.mxu0 0.0
        %6688 = vmatpush1.msra.mxu0 0.0
        %6689 = vmatprep.subr.mxu0 0.0
        %6690 = vmatpush1.msra.mxu0 0.0
        %6691 = vmatprep.subr.mxu0 0.0
        %6692 = vmatpush1.msra.mxu0 0.0
        %6693 = vmatprep.subr.mxu0 0.0
        %6694 = vmatpush1.msra.mxu0 0.0
        %6695 = vmatprep.subr.mxu0 0.0
        %6696 = vmatpush1.msra.mxu0 0.0
        %6697 = vmatprep.subr.mxu0 0.0
        %6698 = vmatpush1.msra.mxu0 0.0
        %6699 = vmatprep.subr.mxu0 0.0
        %6700 = vmatpush1.msra.mxu0 0.0
        %6701 = vmatprep.subr.mxu0 0.0
        %6702 = vmatpush1.msra.mxu0 0.0
        %6703 = vmatprep.subr.mxu0 0.0
        %6704 = vmatpush1.msra.mxu0 0.0
        %6705 = vmatprep.subr.mxu0 0.0
        %6706 = vmatpush1.msra.mxu0 0.0
        %6707 = vmatprep.subr.mxu0 0.0
        %6708 = vmatpush1.msra.mxu0 0.0
        %6709 = vmatprep.subr.mxu0 0.0
        %6710 = vmatpush1.msra.mxu0 0.0
        %6711 = vmatprep.subr.mxu0 0.0
        %6712 = vmatpush1.msra.mxu0 0.0
        %6713 = vmatprep.subr.mxu0 0.0
        %6714 = vmatpush1.msra.mxu0 0.0
        %6715 = vmatprep.subr.mxu0 0.0
        %6716 = vmatpush1.msra.mxu0 0.0
        %6717 = vmatprep.subr.mxu0 0.0
        %6718 = vmatpush1.msra.mxu0 0.0
        %6719 = vmatprep.subr.mxu0 0.0
        %6720 = vmatpush1.msra.mxu0 0.0
        %6721 = vmatprep.subr.mxu0 0.0
        %6722 = vmatpush1.msra.mxu0 0.0
        %6723 = vmatprep.subr.mxu0 0.0
        %6724 = vmatpush1.msra.mxu0 0.0
        %6725 = vmatprep.subr.mxu0 0.0
        %6726 = vmatpush1.msra.mxu0 0.0
        %6727 = vmatprep.subr.mxu0 0.0
        %6728 = vmatpush1.msra.mxu0 0.0
        %6729 = vmatprep.subr.mxu0 0.0
        %6730 = vmatpush1.msra.mxu0 0.0
        %6731 = vmatprep.subr.mxu0 0.0
        %6732 = vmatpush1.msra.mxu0 0.0
        %6733 = vmatprep.mubr.f32.mxu0 0.0
        %v6734 = vand.u32 %v6659, 4294901760
        %v6735 = vsub.f32 %v6659, %v6734
        %v6736 = vand.u32 %v6735, 4294901760
        %v6737 = vsub.f32 %v6735, %v6736
        %v6738 = vand.u32 %v6737, 4294901760
        %6739 = vmatmul.mubr.f32.gmra.mrb[0].mxu0 %v6738
        %v6740 = vpop.f32.mrb[0].mxu0
        %v6741 = vadd.f32 0.0, %v6740
        %v6742 = vpop.f32.mrb[0].mxu0
        %v6743 = vadd.f32 0.0, %v6742
        %6744 = vdwg.mxu0
        %v6745 = vand.u32 %v6665, 4294901760
        %v6746 = vsub.f32 %v6665, %v6745
        %v6747 = vand.u32 %v6746, 4294901760
        %v6748 = vsub.f32 %v6746, %v6747
        %v6749 = vand.u32 %v6748, 4294901760
        %6750 = vmatprep.subr.mxu0 %v6749
        %v6751 = vand.u32 %v6662, 4294901760
        %v6752 = vsub.f32 %v6662, %v6751
        %v6753 = vand.u32 %v6752, 4294901760
        %v6754 = vsub.f32 %v6752, %v6753
        %v6755 = vand.u32 %v6754, 4294901760
        %6756 = vmatpush1.msra.mxu0 %v6755
        %6757 = vmatprep.subr.mxu0 0.0
        %6758 = vmatpush1.msra.mxu0 0.0
        %6759 = vmatprep.subr.mxu0 0.0
        %6760 = vmatpush1.msra.mxu0 0.0
        %6761 = vmatprep.subr.mxu0 0.0
        %6762 = vmatpush1.msra.mxu0 0.0
        %6763 = vmatprep.subr.mxu0 0.0
        %6764 = vmatpush1.msra.mxu0 0.0
        %6765 = vmatprep.subr.mxu0 0.0
        %6766 = vmatpush1.msra.mxu0 0.0
        %6767 = vmatprep.subr.mxu0 0.0
        %6768 = vmatpush1.msra.mxu0 0.0
        %6769 = vmatprep.subr.mxu0 0.0
        %6770 = vmatpush1.msra.mxu0 0.0
        %6771 = vmatprep.subr.mxu0 0.0
        %6772 = vmatpush1.msra.mxu0 0.0
        %6773 = vmatprep.subr.mxu0 0.0
        %6774 = vmatpush1.msra.mxu0 0.0
        %6775 = vmatprep.subr.mxu0 0.0
        %6776 = vmatpush1.msra.mxu0 0.0
        %6777 = vmatprep.subr.mxu0 0.0
        %6778 = vmatpush1.msra.mxu0 0.0
        %6779 = vmatprep.subr.mxu0 0.0
        %6780 = vmatpush1.msra.mxu0 0.0
        %6781 = vmatprep.subr.mxu0 0.0
        %6782 = vmatpush1.msra.mxu0 0.0
        %6783 = vmatprep.subr.mxu0 0.0
        %6784 = vmatpush1.msra.mxu0 0.0
        %6785 = vmatprep.subr.mxu0 0.0
        %6786 = vmatpush1.msra.mxu0 0.0
        %6787 = vmatprep.subr.mxu0 0.0
        %6788 = vmatpush1.msra.mxu0 0.0
        %6789 = vmatprep.subr.mxu0 0.0
        %6790 = vmatpush1.msra.mxu0 0.0
        %6791 = vmatprep.subr.mxu0 0.0
        %6792 = vmatpush1.msra.mxu0 0.0
        %6793 = vmatprep.subr.mxu0 0.0
        %6794 = vmatpush1.msra.mxu0 0.0
        %6795 = vmatprep.subr.mxu0 0.0
        %6796 = vmatpush1.msra.mxu0 0.0
        %6797 = vmatprep.subr.mxu0 0.0
        %6798 = vmatpush1.msra.mxu0 0.0
        %6799 = vmatprep.subr.mxu0 0.0
        %6800 = vmatpush1.msra.mxu0 0.0
        %6801 = vmatprep.subr.mxu0 0.0
        %6802 = vmatpush1.msra.mxu0 0.0
        %6803 = vmatprep.subr.mxu0 0.0
        %6804 = vmatpush1.msra.mxu0 0.0
        %6805 = vmatprep.subr.mxu0 0.0
        %6806 = vmatpush1.msra.mxu0 0.0
        %6807 = vmatprep.subr.mxu0 0.0
        %6808 = vmatpush1.msra.mxu0 0.0
        %6809 = vmatprep.subr.mxu0 0.0
        %6810 = vmatpush1.msra.mxu0 0.0
        %6811 = vmatprep.subr.mxu0 0.0
        %6812 = vmatpush1.msra.mxu0 0.0
        %6813 = vmatprep.subr.mxu0 0.0
        %6814 = vmatpush1.msra.mxu0 0.0
        %6815 = vmatprep.subr.mxu0 0.0
        %6816 = vmatpush1.msra.mxu0 0.0
        %6817 = vmatprep.subr.mxu0 0.0
        %6818 = vmatpush1.msra.mxu0 0.0
        %6819 = vmatprep.mubr.f32.mxu0 0.0
        %v6820 = vand.u32 %v6659, 4294901760
        %6821 = vmatmul.mubr.f32.gmra.mrb[0].mxu0 %v6820
        %v6822 = vpop.f32.mrb[0].mxu0
        %v6823 = vadd.f32 %v6741, %v6822
        %v6824 = vpop.f32.mrb[0].mxu0
        %v6825 = vadd.f32 %v6743, %v6824
        %6826 = vdwg.mxu0
        %v6827 = vand.u32 %v6665, 4294901760
        %v6828 = vsub.f32 %v6665, %v6827
        %6829 = vmatprep.subr.mxu0 %v6828
        %v6830 = vand.u32 %v6662, 4294901760
        %v6831 = vsub.f32 %v6662, %v6830
        %6832 = vmatpush1.msra.mxu0 %v6831
        %6833 = vmatprep.subr.mxu0 0.0
        %6834 = vmatpush1.msra.mxu0 0.0
        %6835 = vmatprep.subr.mxu0 0.0
        %6836 = vmatpush1.msra.mxu0 0.0
        %6837 = vmatprep.subr.mxu0 0.0
        %6838 = vmatpush1.msra.mxu0 0.0
        %6839 = vmatprep.subr.mxu0 0.0
        %6840 = vmatpush1.msra.mxu0 0.0
        %6841 = vmatprep.subr.mxu0 0.0
        %6842 = vmatpush1.msra.mxu0 0.0
        %6843 = vmatprep.subr.mxu0 0.0
        %6844 = vmatpush1.msra.mxu0 0.0
        %6845 = vmatprep.subr.mxu0 0.0
        %6846 = vmatpush1.msra.mxu0 0.0
        %6847 = vmatprep.subr.mxu0 0.0
        %6848 = vmatpush1.msra.mxu0 0.0
        %6849 = vmatprep.subr.mxu0 0.0
        %6850 = vmatpush1.msra.mxu0 0.0
        %6851 = vmatprep.subr.mxu0 0.0
        %6852 = vmatpush1.msra.mxu0 0.0
        %6853 = vmatprep.subr.mxu0 0.0
        %6854 = vmatpush1.msra.mxu0 0.0
        %6855 = vmatprep.subr.mxu0 0.0
        %6856 = vmatpush1.msra.mxu0 0.0
        %6857 = vmatprep.subr.mxu0 0.0
        %6858 = vmatpush1.msra.mxu0 0.0
        %6859 = vmatprep.subr.mxu0 0.0
        %6860 = vmatpush1.msra.mxu0 0.0
        %6861 = vmatprep.subr.mxu0 0.0
        %6862 = vmatpush1.msra.mxu0 0.0
        %6863 = vmatprep.subr.mxu0 0.0
        %6864 = vmatpush1.msra.mxu0 0.0
        %6865 = vmatprep.subr.mxu0 0.0
        %6866 = vmatpush1.msra.mxu0 0.0
        %6867 = vmatprep.subr.mxu0 0.0
        %6868 = vmatpush1.msra.mxu0 0.0
        %6869 = vmatprep.subr.mxu0 0.0
        %6870 = vmatpush1.msra.mxu0 0.0
        %6871 = vmatprep.subr.mxu0 0.0
        %6872 = vmatpush1.msra.mxu0 0.0
        %6873 = vmatprep.subr.mxu0 0.0
        %6874 = vmatpush1.msra.mxu0 0.0
        %6875 = vmatprep.subr.mxu0 0.0
        %6876 = vmatpush1.msra.mxu0 0.0
        %6877 = vmatprep.subr.mxu0 0.0
        %6878 = vmatpush1.msra.mxu0 0.0
        %6879 = vmatprep.subr.mxu0 0.0
        %6880 = vmatpush1.msra.mxu0 0.0
        %6881 = vmatprep.subr.mxu0 0.0
        %6882 = vmatpush1.msra.mxu0 0.0
        %6883 = vmatprep.subr.mxu0 0.0
        %6884 = vmatpush1.msra.mxu0 0.0
        %6885 = vmatprep.subr.mxu0 0.0
        %6886 = vmatpush1.msra.mxu0 0.0
        %6887 = vmatprep.subr.mxu0 0.0
        %6888 = vmatpush1.msra.mxu0 0.0
        %6889 = vmatprep.subr.mxu0 0.0
        %6890 = vmatpush1.msra.mxu0 0.0
        %6891 = vmatprep.subr.mxu0 0.0
        %6892 = vmatpush1.msra.mxu0 0.0
        %6893 = vmatprep.subr.mxu0 0.0
        %6894 = vmatpush1.msra.mxu0 0.0
        %6895 = vmatprep.mubr.f32.mxu0 0.0
        %v6896 = vand.u32 %v6659, 4294901760
        %v6897 = vsub.f32 %v6659, %v6896
        %6898 = vmatmul.mubr.f32.gmra.mrb[0].mxu0 %v6897
        %v6899 = vpop.f32.mrb[0].mxu0
        %v6900 = vadd.f32 %v6823, %v6899
        %v6901 = vpop.f32.mrb[0].mxu0
        %v6902 = vadd.f32 %v6825, %v6901
        %6903 = vdwg.mxu0
        %v6904 = vand.u32 %v6665, 4294901760
        %6905 = vmatprep.subr.mxu0 %v6904
        %v6906 = vand.u32 %v6662, 4294901760
        %6907 = vmatpush1.msra.mxu0 %v6906
        %6908 = vmatprep.subr.mxu0 0.0
        %6909 = vmatpush1.msra.mxu0 0.0
        %6910 = vmatprep.subr.mxu0 0.0
        %6911 = vmatpush1.msra.mxu0 0.0
        %6912 = vmatprep.subr.mxu0 0.0
        %6913 = vmatpush1.msra.mxu0 0.0
        %6914 = vmatprep.subr.mxu0 0.0
        %6915 = vmatpush1.msra.mxu0 0.0
        %6916 = vmatprep.subr.mxu0 0.0
        %6917 = vmatpush1.msra.mxu0 0.0
        %6918 = vmatprep.subr.mxu0 0.0
        %6919 = vmatpush1.msra.mxu0 0.0
        %6920 = vmatprep.subr.mxu0 0.0
        %6921 = vmatpush1.msra.mxu0 0.0
        %6922 = vmatprep.subr.mxu0 0.0
        %6923 = vmatpush1.msra.mxu0 0.0
        %6924 = vmatprep.subr.mxu0 0.0
        %6925 = vmatpush1.msra.mxu0 0.0
        %6926 = vmatprep.subr.mxu0 0.0
        %6927 = vmatpush1.msra.mxu0 0.0
        %6928 = vmatprep.subr.mxu0 0.0
        %6929 = vmatpush1.msra.mxu0 0.0
        %6930 = vmatprep.subr.mxu0 0.0
        %6931 = vmatpush1.msra.mxu0 0.0
        %6932 = vmatprep.subr.mxu0 0.0
        %6933 = vmatpush1.msra.mxu0 0.0
        %6934 = vmatprep.subr.mxu0 0.0
        %6935 = vmatpush1.msra.mxu0 0.0
        %6936 = vmatprep.subr.mxu0 0.0
        %6937 = vmatpush1.msra.mxu0 0.0
        %6938 = vmatprep.subr.mxu0 0.0
        %6939 = vmatpush1.msra.mxu0 0.0
        %6940 = vmatprep.subr.mxu0 0.0
        %6941 = vmatpush1.msra.mxu0 0.0
        %6942 = vmatprep.subr.mxu0 0.0
        %6943 = vmatpush1.msra.mxu0 0.0
        %6944 = vmatprep.subr.mxu0 0.0
        %6945 = vmatpush1.msra.mxu0 0.0
        %6946 = vmatprep.subr.mxu0 0.0
        %6947 = vmatpush1.msra.mxu0 0.0
        %6948 = vmatprep.subr.mxu0 0.0
        %6949 = vmatpush1.msra.mxu0 0.0
        %6950 = vmatprep.subr.mxu0 0.0
        %6951 = vmatpush1.msra.mxu0 0.0
        %6952 = vmatprep.subr.mxu0 0.0
        %6953 = vmatpush1.msra.mxu0 0.0
        %6954 = vmatprep.subr.mxu0 0.0
        %6955 = vmatpush1.msra.mxu0 0.0
        %6956 = vmatprep.subr.mxu0 0.0
        %6957 = vmatpush1.msra.mxu0 0.0
        %6958 = vmatprep.subr.mxu0 0.0
        %6959 = vmatpush1.msra.mxu0 0.0
        %6960 = vmatprep.subr.mxu0 0.0
        %6961 = vmatpush1.msra.mxu0 0.0
        %6962 = vmatprep.subr.mxu0 0.0
        %6963 = vmatpush1.msra.mxu0 0.0
        %6964 = vmatprep.subr.mxu0 0.0
        %6965 = vmatpush1.msra.mxu0 0.0
        %6966 = vmatprep.subr.mxu0 0.0
        %6967 = vmatpush1.msra.mxu0 0.0
        %6968 = vmatprep.subr.mxu0 0.0
        %6969 = vmatpush1.msra.mxu0 0.0
        %6970 = vmatprep.mubr.f32.mxu0 0.0
        %v6971 = vand.u32 %v6659, 4294901760
        %v6972 = vsub.f32 %v6659, %v6971
        %v6973 = vand.u32 %v6972, 4294901760
        %6974 = vmatmul.mubr.f32.gmra.mrb[0].mxu0 %v6973
        %v6975 = vpop.f32.mrb[0].mxu0
        %v6976 = vadd.f32 %v6900, %v6975
        %v6977 = vpop.f32.mrb[0].mxu0
        %v6978 = vadd.f32 %v6902, %v6977
        %6979 = vdwg.mxu0
        %v6980 = vand.u32 %v6665, 4294901760
        %v6981 = vsub.f32 %v6665, %v6980
        %v6982 = vand.u32 %v6981, 4294901760
        %6983 = vmatprep.subr.mxu0 %v6982
        %v6984 = vand.u32 %v6662, 4294901760
        %v6985 = vsub.f32 %v6662, %v6984
        %v6986 = vand.u32 %v6985, 4294901760
        %6987 = vmatpush1.msra.mxu0 %v6986
        %6988 = vmatprep.subr.mxu0 0.0
        %6989 = vmatpush1.msra.mxu0 0.0
        %6990 = vmatprep.subr.mxu0 0.0
        %6991 = vmatpush1.msra.mxu0 0.0
        %6992 = vmatprep.subr.mxu0 0.0
        %6993 = vmatpush1.msra.mxu0 0.0
        %6994 = vmatprep.subr.mxu0 0.0
        %6995 = vmatpush1.msra.mxu0 0.0
        %6996 = vmatprep.subr.mxu0 0.0
        %6997 = vmatpush1.msra.mxu0 0.0
        %6998 = vmatprep.subr.mxu0 0.0
        %6999 = vmatpush1.msra.mxu0 0.0
        %7000 = vmatprep.subr.mxu0 0.0
        %7001 = vmatpush1.msra.mxu0 0.0
        %7002 = vmatprep.subr.mxu0 0.0
        %7003 = vmatpush1.msra.mxu0 0.0
        %7004 = vmatprep.subr.mxu0 0.0
        %7005 = vmatpush1.msra.mxu0 0.0
        %7006 = vmatprep.subr.mxu0 0.0
        %7007 = vmatpush1.msra.mxu0 0.0
        %7008 = vmatprep.subr.mxu0 0.0
        %7009 = vmatpush1.msra.mxu0 0.0
        %7010 = vmatprep.subr.mxu0 0.0
        %7011 = vmatpush1.msra.mxu0 0.0
        %7012 = vmatprep.subr.mxu0 0.0
        %7013 = vmatpush1.msra.mxu0 0.0
        %7014 = vmatprep.subr.mxu0 0.0
        %7015 = vmatpush1.msra.mxu0 0.0
        %7016 = vmatprep.subr.mxu0 0.0
        %7017 = vmatpush1.msra.mxu0 0.0
        %7018 = vmatprep.subr.mxu0 0.0
        %7019 = vmatpush1.msra.mxu0 0.0
        %7020 = vmatprep.subr.mxu0 0.0
        %7021 = vmatpush1.msra.mxu0 0.0
        %7022 = vmatprep.subr.mxu0 0.0
        %7023 = vmatpush1.msra.mxu0 0.0
        %7024 = vmatprep.subr.mxu0 0.0
        %7025 = vmatpush1.msra.mxu0 0.0
        %7026 = vmatprep.subr.mxu0 0.0
        %7027 = vmatpush1.msra.mxu0 0.0
        %7028 = vmatprep.subr.mxu0 0.0
        %7029 = vmatpush1.msra.mxu0 0.0
        %7030 = vmatprep.subr.mxu0 0.0
        %7031 = vmatpush1.msra.mxu0 0.0
        %7032 = vmatprep.subr.mxu0 0.0
        %7033 = vmatpush1.msra.mxu0 0.0
        %7034 = vmatprep.subr.mxu0 0.0
        %7035 = vmatpush1.msra.mxu0 0.0
        %7036 = vmatprep.subr.mxu0 0.0
        %7037 = vmatpush1.msra.mxu0 0.0
        %7038 = vmatprep.subr.mxu0 0.0
        %7039 = vmatpush1.msra.mxu0 0.0
        %7040 = vmatprep.subr.mxu0 0.0
        %7041 = vmatpush1.msra.mxu0 0.0
        %7042 = vmatprep.subr.mxu0 0.0
        %7043 = vmatpush1.msra.mxu0 0.0
        %7044 = vmatprep.subr.mxu0 0.0
        %7045 = vmatpush1.msra.mxu0 0.0
        %7046 = vmatprep.subr.mxu0 0.0
        %7047 = vmatpush1.msra.mxu0 0.0
        %7048 = vmatprep.subr.mxu0 0.0
        %7049 = vmatpush1.msra.mxu0 0.0
        %7050 = vmatprep.mubr.f32.mxu0 0.0
        %v7051 = vand.u32 %v6659, 4294901760
        %7052 = vmatmul.mubr.f32.gmra.mrb[0].mxu0 %v7051
        %v7053 = vpop.f32.mrb[0].mxu0
        %v7054 = vadd.f32 %v6976, %v7053
        %v7055 = vpop.f32.mrb[0].mxu0
        %v7056 = vadd.f32 %v6978, %v7055
        %7057 = vdwg.mxu0
        %v7058 = vand.u32 %v6665, 4294901760
        %7059 = vmatprep.subr.mxu0 %v7058
        %v7060 = vand.u32 %v6662, 4294901760
        %7061 = vmatpush1.msra.mxu0 %v7060
        %7062 = vmatprep.subr.mxu0 0.0
        %7063 = vmatpush1.msra.mxu0 0.0
        %7064 = vmatprep.subr.mxu0 0.0
        %7065 = vmatpush1.msra.mxu0 0.0
        %7066 = vmatprep.subr.mxu0 0.0
        %7067 = vmatpush1.msra.mxu0 0.0
        %7068 = vmatprep.subr.mxu0 0.0
        %7069 = vmatpush1.msra.mxu0 0.0
        %7070 = vmatprep.subr.mxu0 0.0
        %7071 = vmatpush1.msra.mxu0 0.0
        %7072 = vmatprep.subr.mxu0 0.0
        %7073 = vmatpush1.msra.mxu0 0.0
        %7074 = vmatprep.subr.mxu0 0.0
        %7075 = vmatpush1.msra.mxu0 0.0
        %7076 = vmatprep.subr.mxu0 0.0
        %7077 = vmatpush1.msra.mxu0 0.0
        %7078 = vmatprep.subr.mxu0 0.0
        %7079 = vmatpush1.msra.mxu0 0.0
        %7080 = vmatprep.subr.mxu0 0.0
        %7081 = vmatpush1.msra.mxu0 0.0
        %7082 = vmatprep.subr.mxu0 0.0
        %7083 = vmatpush1.msra.mxu0 0.0
        %7084 = vmatprep.subr.mxu0 0.0
        %7085 = vmatpush1.msra.mxu0 0.0
        %7086 = vmatprep.subr.mxu0 0.0
        %7087 = vmatpush1.msra.mxu0 0.0
        %7088 = vmatprep.subr.mxu0 0.0
        %7089 = vmatpush1.msra.mxu0 0.0
        %7090 = vmatprep.subr.mxu0 0.0
        %7091 = vmatpush1.msra.mxu0 0.0
        %7092 = vmatprep.subr.mxu0 0.0
        %7093 = vmatpush1.msra.mxu0 0.0
        %7094 = vmatprep.subr.mxu0 0.0
        %7095 = vmatpush1.msra.mxu0 0.0
        %7096 = vmatprep.subr.mxu0 0.0
        %7097 = vmatpush1.msra.mxu0 0.0
        %7098 = vmatprep.subr.mxu0 0.0
        %7099 = vmatpush1.msra.mxu0 0.0
        %7100 = vmatprep.subr.mxu0 0.0
        %7101 = vmatpush1.msra.mxu0 0.0
        %7102 = vmatprep.subr.mxu0 0.0
        %7103 = vmatpush1.msra.mxu0 0.0
        %7104 = vmatprep.subr.mxu0 0.0
        %7105 = vmatpush1.msra.mxu0 0.0
        %7106 = vmatprep.subr.mxu0 0.0
        %7107 = vmatpush1.msra.mxu0 0.0
        %7108 = vmatprep.subr.mxu0 0.0
        %7109 = vmatpush1.msra.mxu0 0.0
        %7110 = vmatprep.subr.mxu0 0.0
        %7111 = vmatpush1.msra.mxu0 0.0
        %7112 = vmatprep.subr.mxu0 0.0
        %7113 = vmatpush1.msra.mxu0 0.0
        %7114 = vmatprep.subr.mxu0 0.0
        %7115 = vmatpush1.msra.mxu0 0.0
        %7116 = vmatprep.subr.mxu0 0.0
        %7117 = vmatpush1.msra.mxu0 0.0
        %7118 = vmatprep.subr.mxu0 0.0
        %7119 = vmatpush1.msra.mxu0 0.0
        %7120 = vmatprep.subr.mxu0 0.0
        %7121 = vmatpush1.msra.mxu0 0.0
        %7122 = vmatprep.subr.mxu0 0.0
        %7123 = vmatpush1.msra.mxu0 0.0
        %7124 = vmatprep.mubr.f32.mxu0 0.0
        %v7125 = vand.u32 %v6659, 4294901760
        %7126 = vmatmul.mubr.f32.gmra.mrb[0].mxu0 %v7125
        %v7127 = vpop.f32.mrb[0].mxu0
        %v7128 = vadd.f32 %v7054, %v7127
        %v7129 = vpop.f32.mrb[0].mxu0
        %v7130 = vadd.f32 %v7056, %v7129
        %7131 = vdwg.mxu0
        %v7132 = vadd.f32 %v6408, %v7128
        %v7133 = vadd.f32 %v6409, %v7130
        %s7134 = scalar_lea.vmem %s3, 48
        %v7135 = vld [vmem:[%s7134] sm:$0xff]
        %v7136 = vld [vmem:[#allocation2 + $0x2] sm:$0xff]
        %v7137 = vld [vmem:[#allocation2 + $0xa] sm:$0xff]
        %v7138 = vld [vmem:[#allocation2 + $0x1a] sm:$0xff]
        %v7139 = vld [vmem:[#allocation2 + $0x22] sm:$0xff]
        %v7140 = vld [vmem:[#allocation2 + $0x32] sm:$0xff]
        %v7141 = vld [vmem:[#allocation2 + $0x3a] sm:$0xff]
        %v7142 = vld [vmem:[#allocation2 + $0x4a] sm:$0xff]
        %v7143 = vld [vmem:[#allocation2 + $0x52] sm:$0xff]
        %v7144 = vcombine.low %v7136, %v7140
        %v7145 = vcombine.high %v7136, %v7140
        %v7147 = vunpack.c.l.s4 1983009808
        %v7148 = vunpack.c.0.s8 %v7147
        %v7149 = vlaneseq
        %v7150 = vshrl.u32 %v7149, 7
        %v7151 = vsub.s32 %v7148, %v7150
        %v7152 = vrot.slane %v7144, %v7151
        %v7154 = vunpack.c.l.s4 1983009808
        %v7155 = vunpack.c.0.s8 %v7154
        %v7156 = vlaneseq
        %v7157 = vshrl.u32 %v7156, 7
        %v7158 = vsub.s32 %v7155, %v7157
        %v7159 = vrot.slane %v7145, %v7158
        %v7160 = vcombine.low %v7138, %v7142
        %v7161 = vcombine.high %v7138, %v7142
        %v7163 = vunpack.c.l.s4 1983009808
        %v7164 = vunpack.c.0.s8 %v7163
        %v7165 = vlaneseq
        %v7166 = vshrl.u32 %v7165, 7
        %v7167 = vsub.s32 %v7164, %v7166
        %v7168 = vrot.slane %v7160, %v7167
        %v7170 = vunpack.c.l.s4 1983009808
        %v7171 = vunpack.c.0.s8 %v7170
        %v7172 = vlaneseq
        %v7173 = vshrl.u32 %v7172, 7
        %v7174 = vsub.s32 %v7171, %v7173
        %v7175 = vrot.slane %v7161, %v7174
        %v7176 = vcombine.low %v7152, %v7168
        %v7177 = vcombine.high %v7152, %v7168
        %v7179 = vunpack.c.l.s4 1934713408
        %v7180 = vunpack.c.0.s8 %v7179
        %v7181 = vlaneseq
        %v7182 = vshrl.u32 %v7181, 7
        %v7183 = vsub.s32 %v7180, %v7182
        %v7184 = vrot.slane %v7176, %v7183
        %v7186 = vunpack.c.l.s4 1934713408
        %v7187 = vunpack.c.0.s8 %v7186
        %v7188 = vlaneseq
        %v7189 = vshrl.u32 %v7188, 7
        %v7190 = vsub.s32 %v7187, %v7189
        %v7191 = vrot.slane %v7177, %v7190
        %v7192 = vcombine.low %v7159, %v7175
        %v7193 = vcombine.high %v7159, %v7175
        %v7195 = vunpack.c.l.s4 1934713408
        %v7196 = vunpack.c.0.s8 %v7195
        %v7197 = vlaneseq
        %v7198 = vshrl.u32 %v7197, 7
        %v7199 = vsub.s32 %v7196, %v7198
        %v7200 = vrot.slane %v7192, %v7199
        %v7202 = vunpack.c.l.s4 1934713408
        %v7203 = vunpack.c.0.s8 %v7202
        %v7204 = vlaneseq
        %v7205 = vshrl.u32 %v7204, 7
        %v7206 = vsub.s32 %v7203, %v7205
        %v7207 = vrot.slane %v7193, %v7206
        %v7208 = vcombine.high %v7184, 0.0
        %v7209 = vcombine.high %v7191, 0.0
        %v7210 = vcombine.high %v7200, 0.0
        %v7211 = vcombine.high %v7207, 0.0
        %v7212 = vcombine.low %v7137, %v7141
        %v7213 = vcombine.high %v7137, %v7141
        %v7215 = vunpack.c.l.s4 1983009808
        %v7216 = vunpack.c.0.s8 %v7215
        %v7217 = vlaneseq
        %v7218 = vshrl.u32 %v7217, 7
        %v7219 = vsub.s32 %v7216, %v7218
        %v7220 = vrot.slane %v7212, %v7219
        %v7222 = vunpack.c.l.s4 1983009808
        %v7223 = vunpack.c.0.s8 %v7222
        %v7224 = vlaneseq
        %v7225 = vshrl.u32 %v7224, 7
        %v7226 = vsub.s32 %v7223, %v7225
        %v7227 = vrot.slane %v7213, %v7226
        %v7228 = vcombine.low %v7139, %v7143
        %v7229 = vcombine.high %v7139, %v7143
        %v7231 = vunpack.c.l.s4 1983009808
        %v7232 = vunpack.c.0.s8 %v7231
        %v7233 = vlaneseq
        %v7234 = vshrl.u32 %v7233, 7
        %v7235 = vsub.s32 %v7232, %v7234
        %v7236 = vrot.slane %v7228, %v7235
        %v7238 = vunpack.c.l.s4 1983009808
        %v7239 = vunpack.c.0.s8 %v7238
        %v7240 = vlaneseq
        %v7241 = vshrl.u32 %v7240, 7
        %v7242 = vsub.s32 %v7239, %v7241
        %v7243 = vrot.slane %v7229, %v7242
        %v7244 = vcombine.low %v7220, %v7236
        %v7245 = vcombine.high %v7220, %v7236
        %v7247 = vunpack.c.l.s4 1934713408
        %v7248 = vunpack.c.0.s8 %v7247
        %v7249 = vlaneseq
        %v7250 = vshrl.u32 %v7249, 7
        %v7251 = vsub.s32 %v7248, %v7250
        %v7252 = vrot.slane %v7244, %v7251
        %v7254 = vunpack.c.l.s4 1934713408
        %v7255 = vunpack.c.0.s8 %v7254
        %v7256 = vlaneseq
        %v7257 = vshrl.u32 %v7256, 7
        %v7258 = vsub.s32 %v7255, %v7257
        %v7259 = vrot.slane %v7245, %v7258
        %v7260 = vcombine.low %v7227, %v7243
        %v7261 = vcombine.high %v7227, %v7243
        %v7263 = vunpack.c.l.s4 1934713408
        %v7264 = vunpack.c.0.s8 %v7263
        %v7265 = vlaneseq
        %v7266 = vshrl.u32 %v7265, 7
        %v7267 = vsub.s32 %v7264, %v7266
        %v7268 = vrot.slane %v7260, %v7267
        %v7270 = vunpack.c.l.s4 1934713408
        %v7271 = vunpack.c.0.s8 %v7270
        %v7272 = vlaneseq
        %v7273 = vshrl.u32 %v7272, 7
        %v7274 = vsub.s32 %v7271, %v7273
        %v7275 = vrot.slane %v7261, %v7274
        %v7276 = vcombine.high %v7252, 0.0
        %v7277 = vcombine.high %v7259, 0.0
        %v7278 = vcombine.high %v7268, 0.0
        %v7279 = vcombine.high %v7275, 0.0
        %7281 = vrot.lane.b32.xlu0 %v7208, 16
        %v7282 = vpop.permute.xlu0 %7281
        %7285 = vrot.lane.b32.xlu0 %v7191, 32
        %v7286 = vpop.permute.xlu0 %7285
        %7289 = vrot.lane.b32.xlu0 %v7209, 48
        %v7290 = vpop.permute.xlu0 %7289
        %7293 = vrot.lane.b32.xlu0 %v7200, 64
        %v7294 = vpop.permute.xlu0 %7293
        %7297 = vrot.lane.b32.xlu0 %v7210, 80
        %v7298 = vpop.permute.xlu0 %7297
        %7301 = vrot.lane.b32.xlu0 %v7207, 96
        %v7302 = vpop.permute.xlu0 %7301
        %7305 = vrot.lane.b32.xlu0 %v7211, 112
        %v7306 = vpop.permute.xlu0 %7305
        %7309 = vrot.lane.b32.xlu0 %v7276, 16
        %v7310 = vpop.permute.xlu0 %7309
        %7313 = vrot.lane.b32.xlu0 %v7259, 32
        %v7314 = vpop.permute.xlu0 %7313
        %7317 = vrot.lane.b32.xlu0 %v7277, 48
        %v7318 = vpop.permute.xlu0 %7317
        %7321 = vrot.lane.b32.xlu0 %v7268, 64
        %v7322 = vpop.permute.xlu0 %7321
        %7325 = vrot.lane.b32.xlu0 %v7278, 80
        %v7326 = vpop.permute.xlu0 %7325
        %7329 = vrot.lane.b32.xlu0 %v7275, 96
        %v7330 = vpop.permute.xlu0 %7329
        %7333 = vrot.lane.b32.xlu0 %v7279, 112
        %v7334 = vpop.permute.xlu0 %7333
        %v7336 = vsel %vm3059, %v7184, %v7282
        %v7337 = vsel %vm3061, %v7336, %v7286
        %v7338 = vsel %vm3063, %v7337, %v7290
        %v7339 = vsel %vm3065, %v7338, %v7294
        %v7340 = vsel %vm3067, %v7339, %v7298
        %v7341 = vsel %vm3069, %v7340, %v7302
        %v7342 = vsel %vm3071, %v7341, %v7306
        %v7343 = vsel %vm3059, %v7252, %v7310
        %v7344 = vsel %vm3061, %v7343, %v7314
        %v7345 = vsel %vm3063, %v7344, %v7318
        %v7346 = vsel %vm3065, %v7345, %v7322
        %v7347 = vsel %vm3067, %v7346, %v7326
        %v7348 = vsel %vm3069, %v7347, %v7330
        %v7349 = vsel %vm3071, %v7348, %v7334
        %v7351 = vsel %vm3320, %v7135, 0
        %v7354 = vsel %vm3324, %v7342, 0
        %v7357 = vsel %vm3324, %v7349, 0
        %v7359 = vand.u32 %v7357, 4294901760
        %7360 = vmatprep.subr.mxu0 %v7359
        %v7361 = vand.u32 %v7354, 4294901760
        %7362 = vmatpush1.msra.mxu0 %v7361
        %7363 = vmatprep.subr.mxu0 0.0
        %7364 = vmatpush1.msra.mxu0 0.0
        %7365 = vmatprep.subr.mxu0 0.0
        %7366 = vmatpush1.msra.mxu0 0.0
        %7367 = vmatprep.subr.mxu0 0.0
        %7368 = vmatpush1.msra.mxu0 0.0
        %7369 = vmatprep.subr.mxu0 0.0
        %7370 = vmatpush1.msra.mxu0 0.0
        %7371 = vmatprep.subr.mxu0 0.0
        %7372 = vmatpush1.msra.mxu0 0.0
        %7373 = vmatprep.subr.mxu0 0.0
        %7374 = vmatpush1.msra.mxu0 0.0
        %7375 = vmatprep.subr.mxu0 0.0
        %7376 = vmatpush1.msra.mxu0 0.0
        %7377 = vmatprep.subr.mxu0 0.0
        %7378 = vmatpush1.msra.mxu0 0.0
        %7379 = vmatprep.subr.mxu0 0.0
        %7380 = vmatpush1.msra.mxu0 0.0
        %7381 = vmatprep.subr.mxu0 0.0
        %7382 = vmatpush1.msra.mxu0 0.0
        %7383 = vmatprep.subr.mxu0 0.0
        %7384 = vmatpush1.msra.mxu0 0.0
        %7385 = vmatprep.subr.mxu0 0.0
        %7386 = vmatpush1.msra.mxu0 0.0
        %7387 = vmatprep.subr.mxu0 0.0
        %7388 = vmatpush1.msra.mxu0 0.0
        %7389 = vmatprep.subr.mxu0 0.0
        %7390 = vmatpush1.msra.mxu0 0.0
        %7391 = vmatprep.subr.mxu0 0.0
        %7392 = vmatpush1.msra.mxu0 0.0
        %7393 = vmatprep.subr.mxu0 0.0
        %7394 = vmatpush1.msra.mxu0 0.0
        %7395 = vmatprep.subr.mxu0 0.0
        %7396 = vmatpush1.msra.mxu0 0.0
        %7397 = vmatprep.subr.mxu0 0.0
        %7398 = vmatpush1.msra.mxu0 0.0
        %7399 = vmatprep.subr.mxu0 0.0
        %7400 = vmatpush1.msra.mxu0 0.0
        %7401 = vmatprep.subr.mxu0 0.0
        %7402 = vmatpush1.msra.mxu0 0.0
        %7403 = vmatprep.subr.mxu0 0.0
        %7404 = vmatpush1.msra.mxu0 0.0
        %7405 = vmatprep.subr.mxu0 0.0
        %7406 = vmatpush1.msra.mxu0 0.0
        %7407 = vmatprep.subr.mxu0 0.0
        %7408 = vmatpush1.msra.mxu0 0.0
        %7409 = vmatprep.subr.mxu0 0.0
        %7410 = vmatpush1.msra.mxu0 0.0
        %7411 = vmatprep.subr.mxu0 0.0
        %7412 = vmatpush1.msra.mxu0 0.0
        %7413 = vmatprep.subr.mxu0 0.0
        %7414 = vmatpush1.msra.mxu0 0.0
        %7415 = vmatprep.subr.mxu0 0.0
        %7416 = vmatpush1.msra.mxu0 0.0
        %7417 = vmatprep.subr.mxu0 0.0
        %7418 = vmatpush1.msra.mxu0 0.0
        %7419 = vmatprep.subr.mxu0 0.0
        %7420 = vmatpush1.msra.mxu0 0.0
        %7421 = vmatprep.subr.mxu0 0.0
        %7422 = vmatpush1.msra.mxu0 0.0
        %7423 = vmatprep.subr.mxu0 0.0
        %7424 = vmatpush1.msra.mxu0 0.0
        %7425 = vmatprep.mubr.f32.mxu0 0.0
        %v7426 = vand.u32 %v7351, 4294901760
        %v7427 = vsub.f32 %v7351, %v7426
        %v7428 = vand.u32 %v7427, 4294901760
        %v7429 = vsub.f32 %v7427, %v7428
        %v7430 = vand.u32 %v7429, 4294901760
        %7431 = vmatmul.mubr.f32.gmra.mrb[0].mxu0 %v7430
        %v7432 = vpop.f32.mrb[0].mxu0
        %v7433 = vadd.f32 0.0, %v7432
        %v7434 = vpop.f32.mrb[0].mxu0
        %v7435 = vadd.f32 0.0, %v7434
        %7436 = vdwg.mxu0
        %v7437 = vand.u32 %v7357, 4294901760
        %v7438 = vsub.f32 %v7357, %v7437
        %v7439 = vand.u32 %v7438, 4294901760
        %v7440 = vsub.f32 %v7438, %v7439
        %v7441 = vand.u32 %v7440, 4294901760
        %7442 = vmatprep.subr.mxu0 %v7441
        %v7443 = vand.u32 %v7354, 4294901760
        %v7444 = vsub.f32 %v7354, %v7443
        %v7445 = vand.u32 %v7444, 4294901760
        %v7446 = vsub.f32 %v7444, %v7445
        %v7447 = vand.u32 %v7446, 4294901760
        %7448 = vmatpush1.msra.mxu0 %v7447
        %7449 = vmatprep.subr.mxu0 0.0
        %7450 = vmatpush1.msra.mxu0 0.0
        %7451 = vmatprep.subr.mxu0 0.0
        %7452 = vmatpush1.msra.mxu0 0.0
        %7453 = vmatprep.subr.mxu0 0.0
        %7454 = vmatpush1.msra.mxu0 0.0
        %7455 = vmatprep.subr.mxu0 0.0
        %7456 = vmatpush1.msra.mxu0 0.0
        %7457 = vmatprep.subr.mxu0 0.0
        %7458 = vmatpush1.msra.mxu0 0.0
        %7459 = vmatprep.subr.mxu0 0.0
        %7460 = vmatpush1.msra.mxu0 0.0
        %7461 = vmatprep.subr.mxu0 0.0
        %7462 = vmatpush1.msra.mxu0 0.0
        %7463 = vmatprep.subr.mxu0 0.0
        %7464 = vmatpush1.msra.mxu0 0.0
        %7465 = vmatprep.subr.mxu0 0.0
        %7466 = vmatpush1.msra.mxu0 0.0
        %7467 = vmatprep.subr.mxu0 0.0
        %7468 = vmatpush1.msra.mxu0 0.0
        %7469 = vmatprep.subr.mxu0 0.0
        %7470 = vmatpush1.msra.mxu0 0.0
        %7471 = vmatprep.subr.mxu0 0.0
        %7472 = vmatpush1.msra.mxu0 0.0
        %7473 = vmatprep.subr.mxu0 0.0
        %7474 = vmatpush1.msra.mxu0 0.0
        %7475 = vmatprep.subr.mxu0 0.0
        %7476 = vmatpush1.msra.mxu0 0.0
        %7477 = vmatprep.subr.mxu0 0.0
        %7478 = vmatpush1.msra.mxu0 0.0
        %7479 = vmatprep.subr.mxu0 0.0
        %7480 = vmatpush1.msra.mxu0 0.0
        %7481 = vmatprep.subr.mxu0 0.0
        %7482 = vmatpush1.msra.mxu0 0.0
        %7483 = vmatprep.subr.mxu0 0.0
        %7484 = vmatpush1.msra.mxu0 0.0
        %7485 = vmatprep.subr.mxu0 0.0
        %7486 = vmatpush1.msra.mxu0 0.0
        %7487 = vmatprep.subr.mxu0 0.0
        %7488 = vmatpush1.msra.mxu0 0.0
        %7489 = vmatprep.subr.mxu0 0.0
        %7490 = vmatpush1.msra.mxu0 0.0
        %7491 = vmatprep.subr.mxu0 0.0
        %7492 = vmatpush1.msra.mxu0 0.0
        %7493 = vmatprep.subr.mxu0 0.0
        %7494 = vmatpush1.msra.mxu0 0.0
        %7495 = vmatprep.subr.mxu0 0.0
        %7496 = vmatpush1.msra.mxu0 0.0
        %7497 = vmatprep.subr.mxu0 0.0
        %7498 = vmatpush1.msra.mxu0 0.0
        %7499 = vmatprep.subr.mxu0 0.0
        %7500 = vmatpush1.msra.mxu0 0.0
        %7501 = vmatprep.subr.mxu0 0.0
        %7502 = vmatpush1.msra.mxu0 0.0
        %7503 = vmatprep.subr.mxu0 0.0
        %7504 = vmatpush1.msra.mxu0 0.0
        %7505 = vmatprep.subr.mxu0 0.0
        %7506 = vmatpush1.msra.mxu0 0.0
        %7507 = vmatprep.subr.mxu0 0.0
        %7508 = vmatpush1.msra.mxu0 0.0
        %7509 = vmatprep.subr.mxu0 0.0
        %7510 = vmatpush1.msra.mxu0 0.0
        %7511 = vmatprep.mubr.f32.mxu0 0.0
        %v7512 = vand.u32 %v7351, 4294901760
        %7513 = vmatmul.mubr.f32.gmra.mrb[0].mxu0 %v7512
        %v7514 = vpop.f32.mrb[0].mxu0
        %v7515 = vadd.f32 %v7433, %v7514
        %v7516 = vpop.f32.mrb[0].mxu0
        %v7517 = vadd.f32 %v7435, %v7516
        %7518 = vdwg.mxu0
        %v7519 = vand.u32 %v7357, 4294901760
        %v7520 = vsub.f32 %v7357, %v7519
        %7521 = vmatprep.subr.mxu0 %v7520
        %v7522 = vand.u32 %v7354, 4294901760
        %v7523 = vsub.f32 %v7354, %v7522
        %7524 = vmatpush1.msra.mxu0 %v7523
        %7525 = vmatprep.subr.mxu0 0.0
        %7526 = vmatpush1.msra.mxu0 0.0
        %7527 = vmatprep.subr.mxu0 0.0
        %7528 = vmatpush1.msra.mxu0 0.0
        %7529 = vmatprep.subr.mxu0 0.0
        %7530 = vmatpush1.msra.mxu0 0.0
        %7531 = vmatprep.subr.mxu0 0.0
        %7532 = vmatpush1.msra.mxu0 0.0
        %7533 = vmatprep.subr.mxu0 0.0
        %7534 = vmatpush1.msra.mxu0 0.0
        %7535 = vmatprep.subr.mxu0 0.0
        %7536 = vmatpush1.msra.mxu0 0.0
        %7537 = vmatprep.subr.mxu0 0.0
        %7538 = vmatpush1.msra.mxu0 0.0
        %7539 = vmatprep.subr.mxu0 0.0
        %7540 = vmatpush1.msra.mxu0 0.0
        %7541 = vmatprep.subr.mxu0 0.0
        %7542 = vmatpush1.msra.mxu0 0.0
        %7543 = vmatprep.subr.mxu0 0.0
        %7544 = vmatpush1.msra.mxu0 0.0
        %7545 = vmatprep.subr.mxu0 0.0
        %7546 = vmatpush1.msra.mxu0 0.0
        %7547 = vmatprep.subr.mxu0 0.0
        %7548 = vmatpush1.msra.mxu0 0.0
        %7549 = vmatprep.subr.mxu0 0.0
        %7550 = vmatpush1.msra.mxu0 0.0
        %7551 = vmatprep.subr.mxu0 0.0
        %7552 = vmatpush1.msra.mxu0 0.0
        %7553 = vmatprep.subr.mxu0 0.0
        %7554 = vmatpush1.msra.mxu0 0.0
        %7555 = vmatprep.subr.mxu0 0.0
        %7556 = vmatpush1.msra.mxu0 0.0
        %7557 = vmatprep.subr.mxu0 0.0
        %7558 = vmatpush1.msra.mxu0 0.0
        %7559 = vmatprep.subr.mxu0 0.0
        %7560 = vmatpush1.msra.mxu0 0.0
        %7561 = vmatprep.subr.mxu0 0.0
        %7562 = vmatpush1.msra.mxu0 0.0
        %7563 = vmatprep.subr.mxu0 0.0
        %7564 = vmatpush1.msra.mxu0 0.0
        %7565 = vmatprep.subr.mxu0 0.0
        %7566 = vmatpush1.msra.mxu0 0.0
        %7567 = vmatprep.subr.mxu0 0.0
        %7568 = vmatpush1.msra.mxu0 0.0
        %7569 = vmatprep.subr.mxu0 0.0
        %7570 = vmatpush1.msra.mxu0 0.0
        %7571 = vmatprep.subr.mxu0 0.0
        %7572 = vmatpush1.msra.mxu0 0.0
        %7573 = vmatprep.subr.mxu0 0.0
        %7574 = vmatpush1.msra.mxu0 0.0
        %7575 = vmatprep.subr.mxu0 0.0
        %7576 = vmatpush1.msra.mxu0 0.0
        %7577 = vmatprep.subr.mxu0 0.0
        %7578 = vmatpush1.msra.mxu0 0.0
        %7579 = vmatprep.subr.mxu0 0.0
        %7580 = vmatpush1.msra.mxu0 0.0
        %7581 = vmatprep.subr.mxu0 0.0
        %7582 = vmatpush1.msra.mxu0 0.0
        %7583 = vmatprep.subr.mxu0 0.0
        %7584 = vmatpush1.msra.mxu0 0.0
        %7585 = vmatprep.subr.mxu0 0.0
        %7586 = vmatpush1.msra.mxu0 0.0
        %7587 = vmatprep.mubr.f32.mxu0 0.0
        %v7588 = vand.u32 %v7351, 4294901760
        %v7589 = vsub.f32 %v7351, %v7588
        %7590 = vmatmul.mubr.f32.gmra.mrb[0].mxu0 %v7589
        %v7591 = vpop.f32.mrb[0].mxu0
        %v7592 = vadd.f32 %v7515, %v7591
        %v7593 = vpop.f32.mrb[0].mxu0
        %v7594 = vadd.f32 %v7517, %v7593
        %7595 = vdwg.mxu0
        %v7596 = vand.u32 %v7357, 4294901760
        %7597 = vmatprep.subr.mxu0 %v7596
        %v7598 = vand.u32 %v7354, 4294901760
        %7599 = vmatpush1.msra.mxu0 %v7598
        %7600 = vmatprep.subr.mxu0 0.0
        %7601 = vmatpush1.msra.mxu0 0.0
        %7602 = vmatprep.subr.mxu0 0.0
        %7603 = vmatpush1.msra.mxu0 0.0
        %7604 = vmatprep.subr.mxu0 0.0
        %7605 = vmatpush1.msra.mxu0 0.0
        %7606 = vmatprep.subr.mxu0 0.0
        %7607 = vmatpush1.msra.mxu0 0.0
        %7608 = vmatprep.subr.mxu0 0.0
        %7609 = vmatpush1.msra.mxu0 0.0
        %7610 = vmatprep.subr.mxu0 0.0
        %7611 = vmatpush1.msra.mxu0 0.0
        %7612 = vmatprep.subr.mxu0 0.0
        %7613 = vmatpush1.msra.mxu0 0.0
        %7614 = vmatprep.subr.mxu0 0.0
        %7615 = vmatpush1.msra.mxu0 0.0
        %7616 = vmatprep.subr.mxu0 0.0
        %7617 = vmatpush1.msra.mxu0 0.0
        %7618 = vmatprep.subr.mxu0 0.0
        %7619 = vmatpush1.msra.mxu0 0.0
        %7620 = vmatprep.subr.mxu0 0.0
        %7621 = vmatpush1.msra.mxu0 0.0
        %7622 = vmatprep.subr.mxu0 0.0
        %7623 = vmatpush1.msra.mxu0 0.0
        %7624 = vmatprep.subr.mxu0 0.0
        %7625 = vmatpush1.msra.mxu0 0.0
        %7626 = vmatprep.subr.mxu0 0.0
        %7627 = vmatpush1.msra.mxu0 0.0
        %7628 = vmatprep.subr.mxu0 0.0
        %7629 = vmatpush1.msra.mxu0 0.0
        %7630 = vmatprep.subr.mxu0 0.0
        %7631 = vmatpush1.msra.mxu0 0.0
        %7632 = vmatprep.subr.mxu0 0.0
        %7633 = vmatpush1.msra.mxu0 0.0
        %7634 = vmatprep.subr.mxu0 0.0
        %7635 = vmatpush1.msra.mxu0 0.0
        %7636 = vmatprep.subr.mxu0 0.0
        %7637 = vmatpush1.msra.mxu0 0.0
        %7638 = vmatprep.subr.mxu0 0.0
        %7639 = vmatpush1.msra.mxu0 0.0
        %7640 = vmatprep.subr.mxu0 0.0
        %7641 = vmatpush1.msra.mxu0 0.0
        %7642 = vmatprep.subr.mxu0 0.0
        %7643 = vmatpush1.msra.mxu0 0.0
        %7644 = vmatprep.subr.mxu0 0.0
        %7645 = vmatpush1.msra.mxu0 0.0
        %7646 = vmatprep.subr.mxu0 0.0
        %7647 = vmatpush1.msra.mxu0 0.0
        %7648 = vmatprep.subr.mxu0 0.0
        %7649 = vmatpush1.msra.mxu0 0.0
        %7650 = vmatprep.subr.mxu0 0.0
        %7651 = vmatpush1.msra.mxu0 0.0
        %7652 = vmatprep.subr.mxu0 0.0
        %7653 = vmatpush1.msra.mxu0 0.0
        %7654 = vmatprep.subr.mxu0 0.0
        %7655 = vmatpush1.msra.mxu0 0.0
        %7656 = vmatprep.subr.mxu0 0.0
        %7657 = vmatpush1.msra.mxu0 0.0
        %7658 = vmatprep.subr.mxu0 0.0
        %7659 = vmatpush1.msra.mxu0 0.0
        %7660 = vmatprep.subr.mxu0 0.0
        %7661 = vmatpush1.msra.mxu0 0.0
        %7662 = vmatprep.mubr.f32.mxu0 0.0
        %v7663 = vand.u32 %v7351, 4294901760
        %v7664 = vsub.f32 %v7351, %v7663
        %v7665 = vand.u32 %v7664, 4294901760
        %7666 = vmatmul.mubr.f32.gmra.mrb[0].mxu0 %v7665
        %v7667 = vpop.f32.mrb[0].mxu0
        %v7668 = vadd.f32 %v7592, %v7667
        %v7669 = vpop.f32.mrb[0].mxu0
        %v7670 = vadd.f32 %v7594, %v7669
        %7671 = vdwg.mxu0
        %v7672 = vand.u32 %v7357, 4294901760
        %v7673 = vsub.f32 %v7357, %v7672
        %v7674 = vand.u32 %v7673, 4294901760
        %7675 = vmatprep.subr.mxu0 %v7674
        %v7676 = vand.u32 %v7354, 4294901760
        %v7677 = vsub.f32 %v7354, %v7676
        %v7678 = vand.u32 %v7677, 4294901760
        %7679 = vmatpush1.msra.mxu0 %v7678
        %7680 = vmatprep.subr.mxu0 0.0
        %7681 = vmatpush1.msra.mxu0 0.0
        %7682 = vmatprep.subr.mxu0 0.0
        %7683 = vmatpush1.msra.mxu0 0.0
        %7684 = vmatprep.subr.mxu0 0.0
        %7685 = vmatpush1.msra.mxu0 0.0
        %7686 = vmatprep.subr.mxu0 0.0
        %7687 = vmatpush1.msra.mxu0 0.0
        %7688 = vmatprep.subr.mxu0 0.0
        %7689 = vmatpush1.msra.mxu0 0.0
        %7690 = vmatprep.subr.mxu0 0.0
        %7691 = vmatpush1.msra.mxu0 0.0
        %7692 = vmatprep.subr.mxu0 0.0
        %7693 = vmatpush1.msra.mxu0 0.0
        %7694 = vmatprep.subr.mxu0 0.0
        %7695 = vmatpush1.msra.mxu0 0.0
        %7696 = vmatprep.subr.mxu0 0.0
        %7697 = vmatpush1.msra.mxu0 0.0
        %7698 = vmatprep.subr.mxu0 0.0
        %7699 = vmatpush1.msra.mxu0 0.0
        %7700 = vmatprep.subr.mxu0 0.0
        %7701 = vmatpush1.msra.mxu0 0.0
        %7702 = vmatprep.subr.mxu0 0.0
        %7703 = vmatpush1.msra.mxu0 0.0
        %7704 = vmatprep.subr.mxu0 0.0
        %7705 = vmatpush1.msra.mxu0 0.0
        %7706 = vmatprep.subr.mxu0 0.0
        %7707 = vmatpush1.msra.mxu0 0.0
        %7708 = vmatprep.subr.mxu0 0.0
        %7709 = vmatpush1.msra.mxu0 0.0
        %7710 = vmatprep.subr.mxu0 0.0
        %7711 = vmatpush1.msra.mxu0 0.0
        %7712 = vmatprep.subr.mxu0 0.0
        %7713 = vmatpush1.msra.mxu0 0.0
        %7714 = vmatprep.subr.mxu0 0.0
        %7715 = vmatpush1.msra.mxu0 0.0
        %7716 = vmatprep.subr.mxu0 0.0
        %7717 = vmatpush1.msra.mxu0 0.0
        %7718 = vmatprep.subr.mxu0 0.0
        %7719 = vmatpush1.msra.mxu0 0.0
        %7720 = vmatprep.subr.mxu0 0.0
        %7721 = vmatpush1.msra.mxu0 0.0
        %7722 = vmatprep.subr.mxu0 0.0
        %7723 = vmatpush1.msra.mxu0 0.0
        %7724 = vmatprep.subr.mxu0 0.0
        %7725 = vmatpush1.msra.mxu0 0.0
        %7726 = vmatprep.subr.mxu0 0.0
        %7727 = vmatpush1.msra.mxu0 0.0
        %7728 = vmatprep.subr.mxu0 0.0
        %7729 = vmatpush1.msra.mxu0 0.0
        %7730 = vmatprep.subr.mxu0 0.0
        %7731 = vmatpush1.msra.mxu0 0.0
        %7732 = vmatprep.subr.mxu0 0.0
        %7733 = vmatpush1.msra.mxu0 0.0
        %7734 = vmatprep.subr.mxu0 0.0
        %7735 = vmatpush1.msra.mxu0 0.0
        %7736 = vmatprep.subr.mxu0 0.0
        %7737 = vmatpush1.msra.mxu0 0.0
        %7738 = vmatprep.subr.mxu0 0.0
        %7739 = vmatpush1.msra.mxu0 0.0
        %7740 = vmatprep.subr.mxu0 0.0
        %7741 = vmatpush1.msra.mxu0 0.0
        %7742 = vmatprep.mubr.f32.mxu0 0.0
        %v7743 = vand.u32 %v7351, 4294901760
        %7744 = vmatmul.mubr.f32.gmra.mrb[0].mxu0 %v7743
        %v7745 = vpop.f32.mrb[0].mxu0
        %v7746 = vadd.f32 %v7668, %v7745
        %v7747 = vpop.f32.mrb[0].mxu0
        %v7748 = vadd.f32 %v7670, %v7747
        %7749 = vdwg.mxu0
        %v7750 = vand.u32 %v7357, 4294901760
        %7751 = vmatprep.subr.mxu0 %v7750
        %v7752 = vand.u32 %v7354, 4294901760
        %7753 = vmatpush1.msra.mxu0 %v7752
        %7754 = vmatprep.subr.mxu0 0.0
        %7755 = vmatpush1.msra.mxu0 0.0
        %7756 = vmatprep.subr.mxu0 0.0
        %7757 = vmatpush1.msra.mxu0 0.0
        %7758 = vmatprep.subr.mxu0 0.0
        %7759 = vmatpush1.msra.mxu0 0.0
        %7760 = vmatprep.subr.mxu0 0.0
        %7761 = vmatpush1.msra.mxu0 0.0
        %7762 = vmatprep.subr.mxu0 0.0
        %7763 = vmatpush1.msra.mxu0 0.0
        %7764 = vmatprep.subr.mxu0 0.0
        %7765 = vmatpush1.msra.mxu0 0.0
        %7766 = vmatprep.subr.mxu0 0.0
        %7767 = vmatpush1.msra.mxu0 0.0
        %7768 = vmatprep.subr.mxu0 0.0
        %7769 = vmatpush1.msra.mxu0 0.0
        %7770 = vmatprep.subr.mxu0 0.0
        %7771 = vmatpush1.msra.mxu0 0.0
        %7772 = vmatprep.subr.mxu0 0.0
        %7773 = vmatpush1.msra.mxu0 0.0
        %7774 = vmatprep.subr.mxu0 0.0
        %7775 = vmatpush1.msra.mxu0 0.0
        %7776 = vmatprep.subr.mxu0 0.0
        %7777 = vmatpush1.msra.mxu0 0.0
        %7778 = vmatprep.subr.mxu0 0.0
        %7779 = vmatpush1.msra.mxu0 0.0
        %7780 = vmatprep.subr.mxu0 0.0
        %7781 = vmatpush1.msra.mxu0 0.0
        %7782 = vmatprep.subr.mxu0 0.0
        %7783 = vmatpush1.msra.mxu0 0.0
        %7784 = vmatprep.subr.mxu0 0.0
        %7785 = vmatpush1.msra.mxu0 0.0
        %7786 = vmatprep.subr.mxu0 0.0
        %7787 = vmatpush1.msra.mxu0 0.0
        %7788 = vmatprep.subr.mxu0 0.0
        %7789 = vmatpush1.msra.mxu0 0.0
        %7790 = vmatprep.subr.mxu0 0.0
        %7791 = vmatpush1.msra.mxu0 0.0
        %7792 = vmatprep.subr.mxu0 0.0
        %7793 = vmatpush1.msra.mxu0 0.0
        %7794 = vmatprep.subr.mxu0 0.0
        %7795 = vmatpush1.msra.mxu0 0.0
        %7796 = vmatprep.subr.mxu0 0.0
        %7797 = vmatpush1.msra.mxu0 0.0
        %7798 = vmatprep.subr.mxu0 0.0
        %7799 = vmatpush1.msra.mxu0 0.0
        %7800 = vmatprep.subr.mxu0 0.0
        %7801 = vmatpush1.msra.mxu0 0.0
        %7802 = vmatprep.subr.mxu0 0.0
        %7803 = vmatpush1.msra.mxu0 0.0
        %7804 = vmatprep.subr.mxu0 0.0
        %7805 = vmatpush1.msra.mxu0 0.0
        %7806 = vmatprep.subr.mxu0 0.0
        %7807 = vmatpush1.msra.mxu0 0.0
        %7808 = vmatprep.subr.mxu0 0.0
        %7809 = vmatpush1.msra.mxu0 0.0
        %7810 = vmatprep.subr.mxu0 0.0
        %7811 = vmatpush1.msra.mxu0 0.0
        %7812 = vmatprep.subr.mxu0 0.0
        %7813 = vmatpush1.msra.mxu0 0.0
        %7814 = vmatprep.subr.mxu0 0.0
        %7815 = vmatpush1.msra.mxu0 0.0
        %7816 = vmatprep.mubr.f32.mxu0 0.0
        %v7817 = vand.u32 %v7351, 4294901760
        %7818 = vmatmul.mubr.f32.gmra.mrb[0].mxu0 %v7817
        %v7819 = vpop.f32.mrb[0].mxu0
        %v7820 = vadd.f32 %v7746, %v7819
        %v7821 = vpop.f32.mrb[0].mxu0
        %v7822 = vadd.f32 %v7748, %v7821
        %7823 = vdwg.mxu0
        %v7824 = vadd.f32 %v7132, %v7820
        %v7825 = vadd.f32 %v7133, %v7822
        %s7826 = scalar_lea.vmem %s3, 56
        %v7827 = vld [vmem:[%s7826] sm:$0xff]
        %v7828 = vld [vmem:[#allocation2 + $0x2] sm:$0xff]
        %v7829 = vld [vmem:[#allocation2 + $0xa] sm:$0xff]
        %v7830 = vld [vmem:[#allocation2 + $0x1a] sm:$0xff]
        %v7831 = vld [vmem:[#allocation2 + $0x22] sm:$0xff]
        %v7832 = vld [vmem:[#allocation2 + $0x32] sm:$0xff]
        %v7833 = vld [vmem:[#allocation2 + $0x3a] sm:$0xff]
        %v7834 = vld [vmem:[#allocation2 + $0x4a] sm:$0xff]
        %v7835 = vld [vmem:[#allocation2 + $0x52] sm:$0xff]
        %7844 = vrot.lane.b32.xlu0 %v7828, 127
        %v7845 = vpop.permute.xlu0 %7844
        %7846 = vrot.lane.b32.xlu0 %v7829, 127
        %v7847 = vpop.permute.xlu0 %7846
        %7848 = vrot.lane.b32.xlu0 %v7830, 127
        %v7849 = vpop.permute.xlu0 %7848
        %7850 = vrot.lane.b32.xlu0 %v7831, 127
        %v7851 = vpop.permute.xlu0 %7850
        %7852 = vrot.lane.b32.xlu0 %v7832, 127
        %v7853 = vpop.permute.xlu0 %7852
        %7854 = vrot.lane.b32.xlu0 %v7833, 127
        %v7855 = vpop.permute.xlu0 %7854
        %7856 = vrot.lane.b32.xlu0 %v7834, 127
        %v7857 = vpop.permute.xlu0 %7856
        %7858 = vrot.lane.b32.xlu0 %v7835, 127
        %v7859 = vpop.permute.xlu0 %7858
        %v7868 = vcombine.low %v7845, %v7853
        %v7869 = vcombine.high %v7845, %v7853
        %v7871 = vunpack.c.l.s4 1983009808
        %v7872 = vunpack.c.0.s8 %v7871
        %v7873 = vlaneseq
        %v7874 = vshrl.u32 %v7873, 7
        %v7875 = vsub.s32 %v7872, %v7874
        %v7876 = vrot.slane %v7868, %v7875
        %v7878 = vunpack.c.l.s4 1983009808
        %v7879 = vunpack.c.0.s8 %v7878
        %v7880 = vlaneseq
        %v7881 = vshrl.u32 %v7880, 7
        %v7882 = vsub.s32 %v7879, %v7881
        %v7883 = vrot.slane %v7869, %v7882
        %v7884 = vcombine.low %v7849, %v7857
        %v7885 = vcombine.high %v7849, %v7857
        %v7887 = vunpack.c.l.s4 1983009808
        %v7888 = vunpack.c.0.s8 %v7887
        %v7889 = vlaneseq
        %v7890 = vshrl.u32 %v7889, 7
        %v7891 = vsub.s32 %v7888, %v7890
        %v7892 = vrot.slane %v7884, %v7891
        %v7894 = vunpack.c.l.s4 1983009808
        %v7895 = vunpack.c.0.s8 %v7894
        %v7896 = vlaneseq
        %v7897 = vshrl.u32 %v7896, 7
        %v7898 = vsub.s32 %v7895, %v7897
        %v7899 = vrot.slane %v7885, %v7898
        %v7900 = vcombine.low %v7876, %v7892
        %v7901 = vcombine.high %v7876, %v7892
        %v7903 = vunpack.c.l.s4 1934713408
        %v7904 = vunpack.c.0.s8 %v7903
        %v7905 = vlaneseq
        %v7906 = vshrl.u32 %v7905, 7
        %v7907 = vsub.s32 %v7904, %v7906
        %v7908 = vrot.slane %v7900, %v7907
        %v7910 = vunpack.c.l.s4 1934713408
        %v7911 = vunpack.c.0.s8 %v7910
        %v7912 = vlaneseq
        %v7913 = vshrl.u32 %v7912, 7
        %v7914 = vsub.s32 %v7911, %v7913
        %v7915 = vrot.slane %v7901, %v7914
        %v7916 = vcombine.low %v7883, %v7899
        %v7917 = vcombine.high %v7883, %v7899
        %v7919 = vunpack.c.l.s4 1934713408
        %v7920 = vunpack.c.0.s8 %v7919
        %v7921 = vlaneseq
        %v7922 = vshrl.u32 %v7921, 7
        %v7923 = vsub.s32 %v7920, %v7922
        %v7924 = vrot.slane %v7916, %v7923
        %v7926 = vunpack.c.l.s4 1934713408
        %v7927 = vunpack.c.0.s8 %v7926
        %v7928 = vlaneseq
        %v7929 = vshrl.u32 %v7928, 7
        %v7930 = vsub.s32 %v7927, %v7929
        %v7931 = vrot.slane %v7917, %v7930
        %v7932 = vcombine.high %v7908, 0.0
        %v7933 = vcombine.high %v7915, 0.0
        %v7934 = vcombine.high %v7924, 0.0
        %v7935 = vcombine.high %v7931, 0.0
        %v7936 = vcombine.low %v7847, %v7855
        %v7937 = vcombine.high %v7847, %v7855
        %v7939 = vunpack.c.l.s4 1983009808
        %v7940 = vunpack.c.0.s8 %v7939
        %v7941 = vlaneseq
        %v7942 = vshrl.u32 %v7941, 7
        %v7943 = vsub.s32 %v7940, %v7942
        %v7944 = vrot.slane %v7936, %v7943
        %v7946 = vunpack.c.l.s4 1983009808
        %v7947 = vunpack.c.0.s8 %v7946
        %v7948 = vlaneseq
        %v7949 = vshrl.u32 %v7948, 7
        %v7950 = vsub.s32 %v7947, %v7949
        %v7951 = vrot.slane %v7937, %v7950
        %v7952 = vcombine.low %v7851, %v7859
        %v7953 = vcombine.high %v7851, %v7859
        %v7955 = vunpack.c.l.s4 1983009808
        %v7956 = vunpack.c.0.s8 %v7955
        %v7957 = vlaneseq
        %v7958 = vshrl.u32 %v7957, 7
        %v7959 = vsub.s32 %v7956, %v7958
        %v7960 = vrot.slane %v7952, %v7959
        %v7962 = vunpack.c.l.s4 1983009808
        %v7963 = vunpack.c.0.s8 %v7962
        %v7964 = vlaneseq
        %v7965 = vshrl.u32 %v7964, 7
        %v7966 = vsub.s32 %v7963, %v7965
        %v7967 = vrot.slane %v7953, %v7966
        %v7968 = vcombine.low %v7944, %v7960
        %v7969 = vcombine.high %v7944, %v7960
        %v7971 = vunpack.c.l.s4 1934713408
        %v7972 = vunpack.c.0.s8 %v7971
        %v7973 = vlaneseq
        %v7974 = vshrl.u32 %v7973, 7
        %v7975 = vsub.s32 %v7972, %v7974
        %v7976 = vrot.slane %v7968, %v7975
        %v7978 = vunpack.c.l.s4 1934713408
        %v7979 = vunpack.c.0.s8 %v7978
        %v7980 = vlaneseq
        %v7981 = vshrl.u32 %v7980, 7
        %v7982 = vsub.s32 %v7979, %v7981
        %v7983 = vrot.slane %v7969, %v7982
        %v7984 = vcombine.low %v7951, %v7967
        %v7985 = vcombine.high %v7951, %v7967
        %v7987 = vunpack.c.l.s4 1934713408
        %v7988 = vunpack.c.0.s8 %v7987
        %v7989 = vlaneseq
        %v7990 = vshrl.u32 %v7989, 7
        %v7991 = vsub.s32 %v7988, %v7990
        %v7992 = vrot.slane %v7984, %v7991
        %v7994 = vunpack.c.l.s4 1934713408
        %v7995 = vunpack.c.0.s8 %v7994
        %v7996 = vlaneseq
        %v7997 = vshrl.u32 %v7996, 7
        %v7998 = vsub.s32 %v7995, %v7997
        %v7999 = vrot.slane %v7985, %v7998
        %v8000 = vcombine.high %v7976, 0.0
        %v8001 = vcombine.high %v7983, 0.0
        %v8002 = vcombine.high %v7992, 0.0
        %v8003 = vcombine.high %v7999, 0.0
        %8005 = vrot.lane.b32.xlu0 %v7932, 16
        %v8006 = vpop.permute.xlu0 %8005
        %8009 = vrot.lane.b32.xlu0 %v7915, 32
        %v8010 = vpop.permute.xlu0 %8009
        %8013 = vrot.lane.b32.xlu0 %v7933, 48
        %v8014 = vpop.permute.xlu0 %8013
        %8017 = vrot.lane.b32.xlu0 %v7924, 64
        %v8018 = vpop.permute.xlu0 %8017
        %8021 = vrot.lane.b32.xlu0 %v7934, 80
        %v8022 = vpop.permute.xlu0 %8021
        %8025 = vrot.lane.b32.xlu0 %v7931, 96
        %v8026 = vpop.permute.xlu0 %8025
        %8029 = vrot.lane.b32.xlu0 %v7935, 112
        %v8030 = vpop.permute.xlu0 %8029
        %8033 = vrot.lane.b32.xlu0 %v8000, 16
        %v8034 = vpop.permute.xlu0 %8033
        %8037 = vrot.lane.b32.xlu0 %v7983, 32
        %v8038 = vpop.permute.xlu0 %8037
        %8041 = vrot.lane.b32.xlu0 %v8001, 48
        %v8042 = vpop.permute.xlu0 %8041
        %8045 = vrot.lane.b32.xlu0 %v7992, 64
        %v8046 = vpop.permute.xlu0 %8045
        %8049 = vrot.lane.b32.xlu0 %v8002, 80
        %v8050 = vpop.permute.xlu0 %8049
        %8053 = vrot.lane.b32.xlu0 %v7999, 96
        %v8054 = vpop.permute.xlu0 %8053
        %8057 = vrot.lane.b32.xlu0 %v8003, 112
        %v8058 = vpop.permute.xlu0 %8057
        %v8060 = vsel %vm3059, %v7908, %v8006
        %v8061 = vsel %vm3061, %v8060, %v8010
        %v8062 = vsel %vm3063, %v8061, %v8014
        %v8063 = vsel %vm3065, %v8062, %v8018
        %v8064 = vsel %vm3067, %v8063, %v8022
        %v8065 = vsel %vm3069, %v8064, %v8026
        %v8066 = vsel %vm3071, %v8065, %v8030
        %v8067 = vsel %vm3059, %v7976, %v8034
        %v8068 = vsel %vm3061, %v8067, %v8038
        %v8069 = vsel %vm3063, %v8068, %v8042
        %v8070 = vsel %vm3065, %v8069, %v8046
        %v8071 = vsel %vm3067, %v8070, %v8050
        %v8072 = vsel %vm3069, %v8071, %v8054
        %v8073 = vsel %vm3071, %v8072, %v8058
        %v8075 = vsel %vm3320, %v7827, 0
        %v8078 = vsel %vm3324, %v8066, 0
        %v8081 = vsel %vm3324, %v8073, 0
        %v8083 = vand.u32 %v8081, 4294901760
        %8084 = vmatprep.subr.mxu0 %v8083
        %v8085 = vand.u32 %v8078, 4294901760
        %8086 = vmatpush1.msra.mxu0 %v8085
        %8087 = vmatprep.subr.mxu0 0.0
        %8088 = vmatpush1.msra.mxu0 0.0
        %8089 = vmatprep.subr.mxu0 0.0
        %8090 = vmatpush1.msra.mxu0 0.0
        %8091 = vmatprep.subr.mxu0 0.0
        %8092 = vmatpush1.msra.mxu0 0.0
        %8093 = vmatprep.subr.mxu0 0.0
        %8094 = vmatpush1.msra.mxu0 0.0
        %8095 = vmatprep.subr.mxu0 0.0
        %8096 = vmatpush1.msra.mxu0 0.0
        %8097 = vmatprep.subr.mxu0 0.0
        %8098 = vmatpush1.msra.mxu0 0.0
        %8099 = vmatprep.subr.mxu0 0.0
        %8100 = vmatpush1.msra.mxu0 0.0
        %8101 = vmatprep.subr.mxu0 0.0
        %8102 = vmatpush1.msra.mxu0 0.0
        %8103 = vmatprep.subr.mxu0 0.0
        %8104 = vmatpush1.msra.mxu0 0.0
        %8105 = vmatprep.subr.mxu0 0.0
        %8106 = vmatpush1.msra.mxu0 0.0
        %8107 = vmatprep.subr.mxu0 0.0
        %8108 = vmatpush1.msra.mxu0 0.0
        %8109 = vmatprep.subr.mxu0 0.0
        %8110 = vmatpush1.msra.mxu0 0.0
        %8111 = vmatprep.subr.mxu0 0.0
        %8112 = vmatpush1.msra.mxu0 0.0
        %8113 = vmatprep.subr.mxu0 0.0
        %8114 = vmatpush1.msra.mxu0 0.0
        %8115 = vmatprep.subr.mxu0 0.0
        %8116 = vmatpush1.msra.mxu0 0.0
        %8117 = vmatprep.subr.mxu0 0.0
        %8118 = vmatpush1.msra.mxu0 0.0
        %8119 = vmatprep.subr.mxu0 0.0
        %8120 = vmatpush1.msra.mxu0 0.0
        %8121 = vmatprep.subr.mxu0 0.0
        %8122 = vmatpush1.msra.mxu0 0.0
        %8123 = vmatprep.subr.mxu0 0.0
        %8124 = vmatpush1.msra.mxu0 0.0
        %8125 = vmatprep.subr.mxu0 0.0
        %8126 = vmatpush1.msra.mxu0 0.0
        %8127 = vmatprep.subr.mxu0 0.0
        %8128 = vmatpush1.msra.mxu0 0.0
        %8129 = vmatprep.subr.mxu0 0.0
        %8130 = vmatpush1.msra.mxu0 0.0
        %8131 = vmatprep.subr.mxu0 0.0
        %8132 = vmatpush1.msra.mxu0 0.0
        %8133 = vmatprep.subr.mxu0 0.0
        %8134 = vmatpush1.msra.mxu0 0.0
        %8135 = vmatprep.subr.mxu0 0.0
        %8136 = vmatpush1.msra.mxu0 0.0
        %8137 = vmatprep.subr.mxu0 0.0
        %8138 = vmatpush1.msra.mxu0 0.0
        %8139 = vmatprep.subr.mxu0 0.0
        %8140 = vmatpush1.msra.mxu0 0.0
        %8141 = vmatprep.subr.mxu0 0.0
        %8142 = vmatpush1.msra.mxu0 0.0
        %8143 = vmatprep.subr.mxu0 0.0
        %8144 = vmatpush1.msra.mxu0 0.0
        %8145 = vmatprep.subr.mxu0 0.0
        %8146 = vmatpush1.msra.mxu0 0.0
        %8147 = vmatprep.subr.mxu0 0.0
        %8148 = vmatpush1.msra.mxu0 0.0
        %8149 = vmatprep.mubr.f32.mxu0 0.0
        %v8150 = vand.u32 %v8075, 4294901760
        %v8151 = vsub.f32 %v8075, %v8150
        %v8152 = vand.u32 %v8151, 4294901760
        %v8153 = vsub.f32 %v8151, %v8152
        %v8154 = vand.u32 %v8153, 4294901760
        %8155 = vmatmul.mubr.f32.gmra.mrb[0].mxu0 %v8154
        %v8156 = vpop.f32.mrb[0].mxu0
        %v8157 = vadd.f32 0.0, %v8156
        %v8158 = vpop.f32.mrb[0].mxu0
        %v8159 = vadd.f32 0.0, %v8158
        %8160 = vdwg.mxu0
        %v8161 = vand.u32 %v8081, 4294901760
        %v8162 = vsub.f32 %v8081, %v8161
        %v8163 = vand.u32 %v8162, 4294901760
        %v8164 = vsub.f32 %v8162, %v8163
        %v8165 = vand.u32 %v8164, 4294901760
        %8166 = vmatprep.subr.mxu0 %v8165
        %v8167 = vand.u32 %v8078, 4294901760
        %v8168 = vsub.f32 %v8078, %v8167
        %v8169 = vand.u32 %v8168, 4294901760
        %v8170 = vsub.f32 %v8168, %v8169
        %v8171 = vand.u32 %v8170, 4294901760
        %8172 = vmatpush1.msra.mxu0 %v8171
        %8173 = vmatprep.subr.mxu0 0.0
        %8174 = vmatpush1.msra.mxu0 0.0
        %8175 = vmatprep.subr.mxu0 0.0
        %8176 = vmatpush1.msra.mxu0 0.0
        %8177 = vmatprep.subr.mxu0 0.0
        %8178 = vmatpush1.msra.mxu0 0.0
        %8179 = vmatprep.subr.mxu0 0.0
        %8180 = vmatpush1.msra.mxu0 0.0
        %8181 = vmatprep.subr.mxu0 0.0
        %8182 = vmatpush1.msra.mxu0 0.0
        %8183 = vmatprep.subr.mxu0 0.0
        %8184 = vmatpush1.msra.mxu0 0.0
        %8185 = vmatprep.subr.mxu0 0.0
        %8186 = vmatpush1.msra.mxu0 0.0
        %8187 = vmatprep.subr.mxu0 0.0
        %8188 = vmatpush1.msra.mxu0 0.0
        %8189 = vmatprep.subr.mxu0 0.0
        %8190 = vmatpush1.msra.mxu0 0.0
        %8191 = vmatprep.subr.mxu0 0.0
        %8192 = vmatpush1.msra.mxu0 0.0
        %8193 = vmatprep.subr.mxu0 0.0
        %8194 = vmatpush1.msra.mxu0 0.0
        %8195 = vmatprep.subr.mxu0 0.0
        %8196 = vmatpush1.msra.mxu0 0.0
        %8197 = vmatprep.subr.mxu0 0.0
        %8198 = vmatpush1.msra.mxu0 0.0
        %8199 = vmatprep.subr.mxu0 0.0
        %8200 = vmatpush1.msra.mxu0 0.0
        %8201 = vmatprep.subr.mxu0 0.0
        %8202 = vmatpush1.msra.mxu0 0.0
        %8203 = vmatprep.subr.mxu0 0.0
        %8204 = vmatpush1.msra.mxu0 0.0
        %8205 = vmatprep.subr.mxu0 0.0
        %8206 = vmatpush1.msra.mxu0 0.0
        %8207 = vmatprep.subr.mxu0 0.0
        %8208 = vmatpush1.msra.mxu0 0.0
        %8209 = vmatprep.subr.mxu0 0.0
        %8210 = vmatpush1.msra.mxu0 0.0
        %8211 = vmatprep.subr.mxu0 0.0
        %8212 = vmatpush1.msra.mxu0 0.0
        %8213 = vmatprep.subr.mxu0 0.0
        %8214 = vmatpush1.msra.mxu0 0.0
        %8215 = vmatprep.subr.mxu0 0.0
        %8216 = vmatpush1.msra.mxu0 0.0
        %8217 = vmatprep.subr.mxu0 0.0
        %8218 = vmatpush1.msra.mxu0 0.0
        %8219 = vmatprep.subr.mxu0 0.0
        %8220 = vmatpush1.msra.mxu0 0.0
        %8221 = vmatprep.subr.mxu0 0.0
        %8222 = vmatpush1.msra.mxu0 0.0
        %8223 = vmatprep.subr.mxu0 0.0
        %8224 = vmatpush1.msra.mxu0 0.0
        %8225 = vmatprep.subr.mxu0 0.0
        %8226 = vmatpush1.msra.mxu0 0.0
        %8227 = vmatprep.subr.mxu0 0.0
        %8228 = vmatpush1.msra.mxu0 0.0
        %8229 = vmatprep.subr.mxu0 0.0
        %8230 = vmatpush1.msra.mxu0 0.0
        %8231 = vmatprep.subr.mxu0 0.0
        %8232 = vmatpush1.msra.mxu0 0.0
        %8233 = vmatprep.subr.mxu0 0.0
        %8234 = vmatpush1.msra.mxu0 0.0
        %8235 = vmatprep.mubr.f32.mxu0 0.0
        %v8236 = vand.u32 %v8075, 4294901760
        %8237 = vmatmul.mubr.f32.gmra.mrb[0].mxu0 %v8236
        %v8238 = vpop.f32.mrb[0].mxu0
        %v8239 = vadd.f32 %v8157, %v8238
        %v8240 = vpop.f32.mrb[0].mxu0
        %v8241 = vadd.f32 %v8159, %v8240
        %8242 = vdwg.mxu0
        %v8243 = vand.u32 %v8081, 4294901760
        %v8244 = vsub.f32 %v8081, %v8243
        %8245 = vmatprep.subr.mxu0 %v8244
        %v8246 = vand.u32 %v8078, 4294901760
        %v8247 = vsub.f32 %v8078, %v8246
        %8248 = vmatpush1.msra.mxu0 %v8247
        %8249 = vmatprep.subr.mxu0 0.0
        %8250 = vmatpush1.msra.mxu0 0.0
        %8251 = vmatprep.subr.mxu0 0.0
        %8252 = vmatpush1.msra.mxu0 0.0
        %8253 = vmatprep.subr.mxu0 0.0
        %8254 = vmatpush1.msra.mxu0 0.0
        %8255 = vmatprep.subr.mxu0 0.0
        %8256 = vmatpush1.msra.mxu0 0.0
        %8257 = vmatprep.subr.mxu0 0.0
        %8258 = vmatpush1.msra.mxu0 0.0
        %8259 = vmatprep.subr.mxu0 0.0
        %8260 = vmatpush1.msra.mxu0 0.0
        %8261 = vmatprep.subr.mxu0 0.0
        %8262 = vmatpush1.msra.mxu0 0.0
        %8263 = vmatprep.subr.mxu0 0.0
        %8264 = vmatpush1.msra.mxu0 0.0
        %8265 = vmatprep.subr.mxu0 0.0
        %8266 = vmatpush1.msra.mxu0 0.0
        %8267 = vmatprep.subr.mxu0 0.0
        %8268 = vmatpush1.msra.mxu0 0.0
        %8269 = vmatprep.subr.mxu0 0.0
        %8270 = vmatpush1.msra.mxu0 0.0
        %8271 = vmatprep.subr.mxu0 0.0
        %8272 = vmatpush1.msra.mxu0 0.0
        %8273 = vmatprep.subr.mxu0 0.0
        %8274 = vmatpush1.msra.mxu0 0.0
        %8275 = vmatprep.subr.mxu0 0.0
        %8276 = vmatpush1.msra.mxu0 0.0
        %8277 = vmatprep.subr.mxu0 0.0
        %8278 = vmatpush1.msra.mxu0 0.0
        %8279 = vmatprep.subr.mxu0 0.0
        %8280 = vmatpush1.msra.mxu0 0.0
        %8281 = vmatprep.subr.mxu0 0.0
        %8282 = vmatpush1.msra.mxu0 0.0
        %8283 = vmatprep.subr.mxu0 0.0
        %8284 = vmatpush1.msra.mxu0 0.0
        %8285 = vmatprep.subr.mxu0 0.0
        %8286 = vmatpush1.msra.mxu0 0.0
        %8287 = vmatprep.subr.mxu0 0.0
        %8288 = vmatpush1.msra.mxu0 0.0
        %8289 = vmatprep.subr.mxu0 0.0
        %8290 = vmatpush1.msra.mxu0 0.0
        %8291 = vmatprep.subr.mxu0 0.0
        %8292 = vmatpush1.msra.mxu0 0.0
        %8293 = vmatprep.subr.mxu0 0.0
        %8294 = vmatpush1.msra.mxu0 0.0
        %8295 = vmatprep.subr.mxu0 0.0
        %8296 = vmatpush1.msra.mxu0 0.0
        %8297 = vmatprep.subr.mxu0 0.0
        %8298 = vmatpush1.msra.mxu0 0.0
        %8299 = vmatprep.subr.mxu0 0.0
        %8300 = vmatpush1.msra.mxu0 0.0
        %8301 = vmatprep.subr.mxu0 0.0
        %8302 = vmatpush1.msra.mxu0 0.0
        %8303 = vmatprep.subr.mxu0 0.0
        %8304 = vmatpush1.msra.mxu0 0.0
        %8305 = vmatprep.subr.mxu0 0.0
        %8306 = vmatpush1.msra.mxu0 0.0
        %8307 = vmatprep.subr.mxu0 0.0
        %8308 = vmatpush1.msra.mxu0 0.0
        %8309 = vmatprep.subr.mxu0 0.0
        %8310 = vmatpush1.msra.mxu0 0.0
        %8311 = vmatprep.mubr.f32.mxu0 0.0
        %v8312 = vand.u32 %v8075, 4294901760
        %v8313 = vsub.f32 %v8075, %v8312
        %8314 = vmatmul.mubr.f32.gmra.mrb[0].mxu0 %v8313
        %v8315 = vpop.f32.mrb[0].mxu0
        %v8316 = vadd.f32 %v8239, %v8315
        %v8317 = vpop.f32.mrb[0].mxu0
        %v8318 = vadd.f32 %v8241, %v8317
        %8319 = vdwg.mxu0
        %v8320 = vand.u32 %v8081, 4294901760
        %8321 = vmatprep.subr.mxu0 %v8320
        %v8322 = vand.u32 %v8078, 4294901760
        %8323 = vmatpush1.msra.mxu0 %v8322
        %8324 = vmatprep.subr.mxu0 0.0
        %8325 = vmatpush1.msra.mxu0 0.0
        %8326 = vmatprep.subr.mxu0 0.0
        %8327 = vmatpush1.msra.mxu0 0.0
        %8328 = vmatprep.subr.mxu0 0.0
        %8329 = vmatpush1.msra.mxu0 0.0
        %8330 = vmatprep.subr.mxu0 0.0
        %8331 = vmatpush1.msra.mxu0 0.0
        %8332 = vmatprep.subr.mxu0 0.0
        %8333 = vmatpush1.msra.mxu0 0.0
        %8334 = vmatprep.subr.mxu0 0.0
        %8335 = vmatpush1.msra.mxu0 0.0
        %8336 = vmatprep.subr.mxu0 0.0
        %8337 = vmatpush1.msra.mxu0 0.0
        %8338 = vmatprep.subr.mxu0 0.0
        %8339 = vmatpush1.msra.mxu0 0.0
        %8340 = vmatprep.subr.mxu0 0.0
        %8341 = vmatpush1.msra.mxu0 0.0
        %8342 = vmatprep.subr.mxu0 0.0
        %8343 = vmatpush1.msra.mxu0 0.0
        %8344 = vmatprep.subr.mxu0 0.0
        %8345 = vmatpush1.msra.mxu0 0.0
        %8346 = vmatprep.subr.mxu0 0.0
        %8347 = vmatpush1.msra.mxu0 0.0
        %8348 = vmatprep.subr.mxu0 0.0
        %8349 = vmatpush1.msra.mxu0 0.0
        %8350 = vmatprep.subr.mxu0 0.0
        %8351 = vmatpush1.msra.mxu0 0.0
        %8352 = vmatprep.subr.mxu0 0.0
        %8353 = vmatpush1.msra.mxu0 0.0
        %8354 = vmatprep.subr.mxu0 0.0
        %8355 = vmatpush1.msra.mxu0 0.0
        %8356 = vmatprep.subr.mxu0 0.0
        %8357 = vmatpush1.msra.mxu0 0.0
        %8358 = vmatprep.subr.mxu0 0.0
        %8359 = vmatpush1.msra.mxu0 0.0
        %8360 = vmatprep.subr.mxu0 0.0
        %8361 = vmatpush1.msra.mxu0 0.0
        %8362 = vmatprep.subr.mxu0 0.0
        %8363 = vmatpush1.msra.mxu0 0.0
        %8364 = vmatprep.subr.mxu0 0.0
        %8365 = vmatpush1.msra.mxu0 0.0
        %8366 = vmatprep.subr.mxu0 0.0
        %8367 = vmatpush1.msra.mxu0 0.0
        %8368 = vmatprep.subr.mxu0 0.0
        %8369 = vmatpush1.msra.mxu0 0.0
        %8370 = vmatprep.subr.mxu0 0.0
        %8371 = vmatpush1.msra.mxu0 0.0
        %8372 = vmatprep.subr.mxu0 0.0
        %8373 = vmatpush1.msra.mxu0 0.0
        %8374 = vmatprep.subr.mxu0 0.0
        %8375 = vmatpush1.msra.mxu0 0.0
        %8376 = vmatprep.subr.mxu0 0.0
        %8377 = vmatpush1.msra.mxu0 0.0
        %8378 = vmatprep.subr.mxu0 0.0
        %8379 = vmatpush1.msra.mxu0 0.0
        %8380 = vmatprep.subr.mxu0 0.0
        %8381 = vmatpush1.msra.mxu0 0.0
        %8382 = vmatprep.subr.mxu0 0.0
        %8383 = vmatpush1.msra.mxu0 0.0
        %8384 = vmatprep.subr.mxu0 0.0
        %8385 = vmatpush1.msra.mxu0 0.0
        %8386 = vmatprep.mubr.f32.mxu0 0.0
        %v8387 = vand.u32 %v8075, 4294901760
        %v8388 = vsub.f32 %v8075, %v8387
        %v8389 = vand.u32 %v8388, 4294901760
        %8390 = vmatmul.mubr.f32.gmra.mrb[0].mxu0 %v8389
        %v8391 = vpop.f32.mrb[0].mxu0
        %v8392 = vadd.f32 %v8316, %v8391
        %v8393 = vpop.f32.mrb[0].mxu0
        %v8394 = vadd.f32 %v8318, %v8393
        %8395 = vdwg.mxu0
        %v8396 = vand.u32 %v8081, 4294901760
        %v8397 = vsub.f32 %v8081, %v8396
        %v8398 = vand.u32 %v8397, 4294901760
        %8399 = vmatprep.subr.mxu0 %v8398
        %v8400 = vand.u32 %v8078, 4294901760
        %v8401 = vsub.f32 %v8078, %v8400
        %v8402 = vand.u32 %v8401, 4294901760
        %8403 = vmatpush1.msra.mxu0 %v8402
        %8404 = vmatprep.subr.mxu0 0.0
        %8405 = vmatpush1.msra.mxu0 0.0
        %8406 = vmatprep.subr.mxu0 0.0
        %8407 = vmatpush1.msra.mxu0 0.0
        %8408 = vmatprep.subr.mxu0 0.0
        %8409 = vmatpush1.msra.mxu0 0.0
        %8410 = vmatprep.subr.mxu0 0.0
        %8411 = vmatpush1.msra.mxu0 0.0
        %8412 = vmatprep.subr.mxu0 0.0
        %8413 = vmatpush1.msra.mxu0 0.0
        %8414 = vmatprep.subr.mxu0 0.0
        %8415 = vmatpush1.msra.mxu0 0.0
        %8416 = vmatprep.subr.mxu0 0.0
        %8417 = vmatpush1.msra.mxu0 0.0
        %8418 = vmatprep.subr.mxu0 0.0
        %8419 = vmatpush1.msra.mxu0 0.0
        %8420 = vmatprep.subr.mxu0 0.0
        %8421 = vmatpush1.msra.mxu0 0.0
        %8422 = vmatprep.subr.mxu0 0.0
        %8423 = vmatpush1.msra.mxu0 0.0
        %8424 = vmatprep.subr.mxu0 0.0
        %8425 = vmatpush1.msra.mxu0 0.0
        %8426 = vmatprep.subr.mxu0 0.0
        %8427 = vmatpush1.msra.mxu0 0.0
        %8428 = vmatprep.subr.mxu0 0.0
        %8429 = vmatpush1.msra.mxu0 0.0
        %8430 = vmatprep.subr.mxu0 0.0
        %8431 = vmatpush1.msra.mxu0 0.0
        %8432 = vmatprep.subr.mxu0 0.0
        %8433 = vmatpush1.msra.mxu0 0.0
        %8434 = vmatprep.subr.mxu0 0.0
        %8435 = vmatpush1.msra.mxu0 0.0
        %8436 = vmatprep.subr.mxu0 0.0
        %8437 = vmatpush1.msra.mxu0 0.0
        %8438 = vmatprep.subr.mxu0 0.0
        %8439 = vmatpush1.msra.mxu0 0.0
        %8440 = vmatprep.subr.mxu0 0.0
        %8441 = vmatpush1.msra.mxu0 0.0
        %8442 = vmatprep.subr.mxu0 0.0
        %8443 = vmatpush1.msra.mxu0 0.0
        %8444 = vmatprep.subr.mxu0 0.0
        %8445 = vmatpush1.msra.mxu0 0.0
        %8446 = vmatprep.subr.mxu0 0.0
        %8447 = vmatpush1.msra.mxu0 0.0
        %8448 = vmatprep.subr.mxu0 0.0
        %8449 = vmatpush1.msra.mxu0 0.0
        %8450 = vmatprep.subr.mxu0 0.0
        %8451 = vmatpush1.msra.mxu0 0.0
        %8452 = vmatprep.subr.mxu0 0.0
        %8453 = vmatpush1.msra.mxu0 0.0
        %8454 = vmatprep.subr.mxu0 0.0
        %8455 = vmatpush1.msra.mxu0 0.0
        %8456 = vmatprep.subr.mxu0 0.0
        %8457 = vmatpush1.msra.mxu0 0.0
        %8458 = vmatprep.subr.mxu0 0.0
        %8459 = vmatpush1.msra.mxu0 0.0
        %8460 = vmatprep.subr.mxu0 0.0
        %8461 = vmatpush1.msra.mxu0 0.0
        %8462 = vmatprep.subr.mxu0 0.0
        %8463 = vmatpush1.msra.mxu0 0.0
        %8464 = vmatprep.subr.mxu0 0.0
        %8465 = vmatpush1.msra.mxu0 0.0
        %8466 = vmatprep.mubr.f32.mxu0 0.0
        %v8467 = vand.u32 %v8075, 4294901760
        %8468 = vmatmul.mubr.f32.gmra.mrb[0].mxu0 %v8467
        %v8469 = vpop.f32.mrb[0].mxu0
        %v8470 = vadd.f32 %v8392, %v8469
        %v8471 = vpop.f32.mrb[0].mxu0
        %v8472 = vadd.f32 %v8394, %v8471
        %8473 = vdwg.mxu0
        %v8474 = vand.u32 %v8081, 4294901760
        %8475 = vmatprep.subr.mxu0 %v8474
        %v8476 = vand.u32 %v8078, 4294901760
        %8477 = vmatpush1.msra.mxu0 %v8476
        %8478 = vmatprep.subr.mxu0 0.0
        %8479 = vmatpush1.msra.mxu0 0.0
        %8480 = vmatprep.subr.mxu0 0.0
        %8481 = vmatpush1.msra.mxu0 0.0
        %8482 = vmatprep.subr.mxu0 0.0
        %8483 = vmatpush1.msra.mxu0 0.0
        %8484 = vmatprep.subr.mxu0 0.0
        %8485 = vmatpush1.msra.mxu0 0.0
        %8486 = vmatprep.subr.mxu0 0.0
        %8487 = vmatpush1.msra.mxu0 0.0
        %8488 = vmatprep.subr.mxu0 0.0
        %8489 = vmatpush1.msra.mxu0 0.0
        %8490 = vmatprep.subr.mxu0 0.0
        %8491 = vmatpush1.msra.mxu0 0.0
        %8492 = vmatprep.subr.mxu0 0.0
        %8493 = vmatpush1.msra.mxu0 0.0
        %8494 = vmatprep.subr.mxu0 0.0
        %8495 = vmatpush1.msra.mxu0 0.0
        %8496 = vmatprep.subr.mxu0 0.0
        %8497 = vmatpush1.msra.mxu0 0.0
        %8498 = vmatprep.subr.mxu0 0.0
        %8499 = vmatpush1.msra.mxu0 0.0
        %8500 = vmatprep.subr.mxu0 0.0
        %8501 = vmatpush1.msra.mxu0 0.0
        %8502 = vmatprep.subr.mxu0 0.0
        %8503 = vmatpush1.msra.mxu0 0.0
        %8504 = vmatprep.subr.mxu0 0.0
        %8505 = vmatpush1.msra.mxu0 0.0
        %8506 = vmatprep.subr.mxu0 0.0
        %8507 = vmatpush1.msra.mxu0 0.0
        %8508 = vmatprep.subr.mxu0 0.0
        %8509 = vmatpush1.msra.mxu0 0.0
        %8510 = vmatprep.subr.mxu0 0.0
        %8511 = vmatpush1.msra.mxu0 0.0
        %8512 = vmatprep.subr.mxu0 0.0
        %8513 = vmatpush1.msra.mxu0 0.0
        %8514 = vmatprep.subr.mxu0 0.0
        %8515 = vmatpush1.msra.mxu0 0.0
        %8516 = vmatprep.subr.mxu0 0.0
        %8517 = vmatpush1.msra.mxu0 0.0
        %8518 = vmatprep.subr.mxu0 0.0
        %8519 = vmatpush1.msra.mxu0 0.0
        %8520 = vmatprep.subr.mxu0 0.0
        %8521 = vmatpush1.msra.mxu0 0.0
        %8522 = vmatprep.subr.mxu0 0.0
        %8523 = vmatpush1.msra.mxu0 0.0
        %8524 = vmatprep.subr.mxu0 0.0
        %8525 = vmatpush1.msra.mxu0 0.0
        %8526 = vmatprep.subr.mxu0 0.0
        %8527 = vmatpush1.msra.mxu0 0.0
        %8528 = vmatprep.subr.mxu0 0.0
        %8529 = vmatpush1.msra.mxu0 0.0
        %8530 = vmatprep.subr.mxu0 0.0
        %8531 = vmatpush1.msra.mxu0 0.0
        %8532 = vmatprep.subr.mxu0 0.0
        %8533 = vmatpush1.msra.mxu0 0.0
        %8534 = vmatprep.subr.mxu0 0.0
        %8535 = vmatpush1.msra.mxu0 0.0
        %8536 = vmatprep.subr.mxu0 0.0
        %8537 = vmatpush1.msra.mxu0 0.0
        %8538 = vmatprep.subr.mxu0 0.0
        %8539 = vmatpush1.msra.mxu0 0.0
        %8540 = vmatprep.mubr.f32.mxu0 0.0
        %v8541 = vand.u32 %v8075, 4294901760
        %8542 = vmatmul.mubr.f32.gmra.mrb[0].mxu0 %v8541
        %v8543 = vpop.f32.mrb[0].mxu0
        %v8544 = vadd.f32 %v8470, %v8543
        %v8545 = vpop.f32.mrb[0].mxu0
        %v8546 = vadd.f32 %v8472, %v8545
        %8547 = vdwg.mxu0
        %v8548 = vadd.f32 %v7824, %v8544
        %v8549 = vadd.f32 %v7825, %v8546
        %s8550 = scalar_lea.vmem %s3, 64
        %v8551 = vld [vmem:[%s8550] sm:$0xff]
        %v8552 = vld [vmem:[#allocation2 + $0x2] sm:$0xff]
        %v8553 = vld [vmem:[#allocation2 + $0xa] sm:$0xff]
        %v8554 = vld [vmem:[#allocation2 + $0x1a] sm:$0xff]
        %v8555 = vld [vmem:[#allocation2 + $0x22] sm:$0xff]
        %v8556 = vld [vmem:[#allocation2 + $0x32] sm:$0xff]
        %v8557 = vld [vmem:[#allocation2 + $0x3a] sm:$0xff]
        %v8558 = vld [vmem:[#allocation2 + $0x4a] sm:$0xff]
        %v8559 = vld [vmem:[#allocation2 + $0x52] sm:$0xff]
        %8568 = vrot.lane.b32.xlu0 %v8552, 126
        %v8569 = vpop.permute.xlu0 %8568
        %8570 = vrot.lane.b32.xlu0 %v8553, 126
        %v8571 = vpop.permute.xlu0 %8570
        %8572 = vrot.lane.b32.xlu0 %v8554, 126
        %v8573 = vpop.permute.xlu0 %8572
        %8574 = vrot.lane.b32.xlu0 %v8555, 126
        %v8575 = vpop.permute.xlu0 %8574
        %8576 = vrot.lane.b32.xlu0 %v8556, 126
        %v8577 = vpop.permute.xlu0 %8576
        %8578 = vrot.lane.b32.xlu0 %v8557, 126
        %v8579 = vpop.permute.xlu0 %8578
        %8580 = vrot.lane.b32.xlu0 %v8558, 126
        %v8581 = vpop.permute.xlu0 %8580
        %8582 = vrot.lane.b32.xlu0 %v8559, 126
        %v8583 = vpop.permute.xlu0 %8582
        %v8592 = vcombine.low %v8569, %v8577
        %v8593 = vcombine.high %v8569, %v8577
        %v8595 = vunpack.c.l.s4 1983009808
        %v8596 = vunpack.c.0.s8 %v8595
        %v8597 = vlaneseq
        %v8598 = vshrl.u32 %v8597, 7
        %v8599 = vsub.s32 %v8596, %v8598
        %v8600 = vrot.slane %v8592, %v8599
        %v8602 = vunpack.c.l.s4 1983009808
        %v8603 = vunpack.c.0.s8 %v8602
        %v8604 = vlaneseq
        %v8605 = vshrl.u32 %v8604, 7
        %v8606 = vsub.s32 %v8603, %v8605
        %v8607 = vrot.slane %v8593, %v8606
        %v8608 = vcombine.low %v8573, %v8581
        %v8609 = vcombine.high %v8573, %v8581
        %v8611 = vunpack.c.l.s4 1983009808
        %v8612 = vunpack.c.0.s8 %v8611
        %v8613 = vlaneseq
        %v8614 = vshrl.u32 %v8613, 7
        %v8615 = vsub.s32 %v8612, %v8614
        %v8616 = vrot.slane %v8608, %v8615
        %v8618 = vunpack.c.l.s4 1983009808
        %v8619 = vunpack.c.0.s8 %v8618
        %v8620 = vlaneseq
        %v8621 = vshrl.u32 %v8620, 7
        %v8622 = vsub.s32 %v8619, %v8621
        %v8623 = vrot.slane %v8609, %v8622
        %v8624 = vcombine.low %v8600, %v8616
        %v8625 = vcombine.high %v8600, %v8616
        %v8627 = vunpack.c.l.s4 1934713408
        %v8628 = vunpack.c.0.s8 %v8627
        %v8629 = vlaneseq
        %v8630 = vshrl.u32 %v8629, 7
        %v8631 = vsub.s32 %v8628, %v8630
        %v8632 = vrot.slane %v8624, %v8631
        %v8634 = vunpack.c.l.s4 1934713408
        %v8635 = vunpack.c.0.s8 %v8634
        %v8636 = vlaneseq
        %v8637 = vshrl.u32 %v8636, 7
        %v8638 = vsub.s32 %v8635, %v8637
        %v8639 = vrot.slane %v8625, %v8638
        %v8640 = vcombine.low %v8607, %v8623
        %v8641 = vcombine.high %v8607, %v8623
        %v8643 = vunpack.c.l.s4 1934713408
        %v8644 = vunpack.c.0.s8 %v8643
        %v8645 = vlaneseq
        %v8646 = vshrl.u32 %v8645, 7
        %v8647 = vsub.s32 %v8644, %v8646
        %v8648 = vrot.slane %v8640, %v8647
        %v8650 = vunpack.c.l.s4 1934713408
        %v8651 = vunpack.c.0.s8 %v8650
        %v8652 = vlaneseq
        %v8653 = vshrl.u32 %v8652, 7
        %v8654 = vsub.s32 %v8651, %v8653
        %v8655 = vrot.slane %v8641, %v8654
        %v8656 = vcombine.high %v8632, 0.0
        %v8657 = vcombine.high %v8639, 0.0
        %v8658 = vcombine.high %v8648, 0.0
        %v8659 = vcombine.high %v8655, 0.0
        %v8660 = vcombine.low %v8571, %v8579
        %v8661 = vcombine.high %v8571, %v8579
        %v8663 = vunpack.c.l.s4 1983009808
        %v8664 = vunpack.c.0.s8 %v8663
        %v8665 = vlaneseq
        %v8666 = vshrl.u32 %v8665, 7
        %v8667 = vsub.s32 %v8664, %v8666
        %v8668 = vrot.slane %v8660, %v8667
        %v8670 = vunpack.c.l.s4 1983009808
        %v8671 = vunpack.c.0.s8 %v8670
        %v8672 = vlaneseq
        %v8673 = vshrl.u32 %v8672, 7
        %v8674 = vsub.s32 %v8671, %v8673
        %v8675 = vrot.slane %v8661, %v8674
        %v8676 = vcombine.low %v8575, %v8583
        %v8677 = vcombine.high %v8575, %v8583
        %v8679 = vunpack.c.l.s4 1983009808
        %v8680 = vunpack.c.0.s8 %v8679
        %v8681 = vlaneseq
        %v8682 = vshrl.u32 %v8681, 7
        %v8683 = vsub.s32 %v8680, %v8682
        %v8684 = vrot.slane %v8676, %v8683
        %v8686 = vunpack.c.l.s4 1983009808
        %v8687 = vunpack.c.0.s8 %v8686
        %v8688 = vlaneseq
        %v8689 = vshrl.u32 %v8688, 7
        %v8690 = vsub.s32 %v8687, %v8689
        %v8691 = vrot.slane %v8677, %v8690
        %v8692 = vcombine.low %v8668, %v8684
        %v8693 = vcombine.high %v8668, %v8684
        %v8695 = vunpack.c.l.s4 1934713408
        %v8696 = vunpack.c.0.s8 %v8695
        %v8697 = vlaneseq
        %v8698 = vshrl.u32 %v8697, 7
        %v8699 = vsub.s32 %v8696, %v8698
        %v8700 = vrot.slane %v8692, %v8699
        %v8702 = vunpack.c.l.s4 1934713408
        %v8703 = vunpack.c.0.s8 %v8702
        %v8704 = vlaneseq
        %v8705 = vshrl.u32 %v8704, 7
        %v8706 = vsub.s32 %v8703, %v8705
        %v8707 = vrot.slane %v8693, %v8706
        %v8708 = vcombine.low %v8675, %v8691
        %v8709 = vcombine.high %v8675, %v8691
        %v8711 = vunpack.c.l.s4 1934713408
        %v8712 = vunpack.c.0.s8 %v8711
        %v8713 = vlaneseq
        %v8714 = vshrl.u32 %v8713, 7
        %v8715 = vsub.s32 %v8712, %v8714
        %v8716 = vrot.slane %v8708, %v8715
        %v8718 = vunpack.c.l.s4 1934713408
        %v8719 = vunpack.c.0.s8 %v8718
        %v8720 = vlaneseq
        %v8721 = vshrl.u32 %v8720, 7
        %v8722 = vsub.s32 %v8719, %v8721
        %v8723 = vrot.slane %v8709, %v8722
        %v8724 = vcombine.high %v8700, 0.0
        %v8725 = vcombine.high %v8707, 0.0
        %v8726 = vcombine.high %v8716, 0.0
        %v8727 = vcombine.high %v8723, 0.0
        %8729 = vrot.lane.b32.xlu0 %v8656, 16
        %v8730 = vpop.permute.xlu0 %8729
        %8733 = vrot.lane.b32.xlu0 %v8639, 32
        %v8734 = vpop.permute.xlu0 %8733
        %8737 = vrot.lane.b32.xlu0 %v8657, 48
        %v8738 = vpop.permute.xlu0 %8737
        %8741 = vrot.lane.b32.xlu0 %v8648, 64
        %v8742 = vpop.permute.xlu0 %8741
        %8745 = vrot.lane.b32.xlu0 %v8658, 80
        %v8746 = vpop.permute.xlu0 %8745
        %8749 = vrot.lane.b32.xlu0 %v8655, 96
        %v8750 = vpop.permute.xlu0 %8749
        %8753 = vrot.lane.b32.xlu0 %v8659, 112
        %v8754 = vpop.permute.xlu0 %8753
        %8757 = vrot.lane.b32.xlu0 %v8724, 16
        %v8758 = vpop.permute.xlu0 %8757
        %8761 = vrot.lane.b32.xlu0 %v8707, 32
        %v8762 = vpop.permute.xlu0 %8761
        %8765 = vrot.lane.b32.xlu0 %v8725, 48
        %v8766 = vpop.permute.xlu0 %8765
        %8769 = vrot.lane.b32.xlu0 %v8716, 64
        %v8770 = vpop.permute.xlu0 %8769
        %8773 = vrot.lane.b32.xlu0 %v8726, 80
        %v8774 = vpop.permute.xlu0 %8773
        %8777 = vrot.lane.b32.xlu0 %v8723, 96
        %v8778 = vpop.permute.xlu0 %8777
        %8781 = vrot.lane.b32.xlu0 %v8727, 112
        %v8782 = vpop.permute.xlu0 %8781
        %v8784 = vsel %vm3059, %v8632, %v8730
        %v8785 = vsel %vm3061, %v8784, %v8734
        %v8786 = vsel %vm3063, %v8785, %v8738
        %v8787 = vsel %vm3065, %v8786, %v8742
        %v8788 = vsel %vm3067, %v8787, %v8746
        %v8789 = vsel %vm3069, %v8788, %v8750
        %v8790 = vsel %vm3071, %v8789, %v8754
        %v8791 = vsel %vm3059, %v8700, %v8758
        %v8792 = vsel %vm3061, %v8791, %v8762
        %v8793 = vsel %vm3063, %v8792, %v8766
        %v8794 = vsel %vm3065, %v8793, %v8770
        %v8795 = vsel %vm3067, %v8794, %v8774
        %v8796 = vsel %vm3069, %v8795, %v8778
        %v8797 = vsel %vm3071, %v8796, %v8782
        %v8799 = vsel %vm3320, %v8551, 0
        %v8802 = vsel %vm3324, %v8790, 0
        %v8805 = vsel %vm3324, %v8797, 0
        %v8807 = vand.u32 %v8805, 4294901760
        %8808 = vmatprep.subr.mxu0 %v8807
        %v8809 = vand.u32 %v8802, 4294901760
        %8810 = vmatpush1.msra.mxu0 %v8809
        %8811 = vmatprep.subr.mxu0 0.0
        %8812 = vmatpush1.msra.mxu0 0.0
        %8813 = vmatprep.subr.mxu0 0.0
        %8814 = vmatpush1.msra.mxu0 0.0
        %8815 = vmatprep.subr.mxu0 0.0
        %8816 = vmatpush1.msra.mxu0 0.0
        %8817 = vmatprep.subr.mxu0 0.0
        %8818 = vmatpush1.msra.mxu0 0.0
        %8819 = vmatprep.subr.mxu0 0.0
        %8820 = vmatpush1.msra.mxu0 0.0
        %8821 = vmatprep.subr.mxu0 0.0
        %8822 = vmatpush1.msra.mxu0 0.0
        %8823 = vmatprep.subr.mxu0 0.0
        %8824 = vmatpush1.msra.mxu0 0.0
        %8825 = vmatprep.subr.mxu0 0.0
        %8826 = vmatpush1.msra.mxu0 0.0
        %8827 = vmatprep.subr.mxu0 0.0
        %8828 = vmatpush1.msra.mxu0 0.0
        %8829 = vmatprep.subr.mxu0 0.0
        %8830 = vmatpush1.msra.mxu0 0.0
        %8831 = vmatprep.subr.mxu0 0.0
        %8832 = vmatpush1.msra.mxu0 0.0
        %8833 = vmatprep.subr.mxu0 0.0
        %8834 = vmatpush1.msra.mxu0 0.0
        %8835 = vmatprep.subr.mxu0 0.0
        %8836 = vmatpush1.msra.mxu0 0.0
        %8837 = vmatprep.subr.mxu0 0.0
        %8838 = vmatpush1.msra.mxu0 0.0
        %8839 = vmatprep.subr.mxu0 0.0
        %8840 = vmatpush1.msra.mxu0 0.0
        %8841 = vmatprep.subr.mxu0 0.0
        %8842 = vmatpush1.msra.mxu0 0.0
        %8843 = vmatprep.subr.mxu0 0.0
        %8844 = vmatpush1.msra.mxu0 0.0
        %8845 = vmatprep.subr.mxu0 0.0
        %8846 = vmatpush1.msra.mxu0 0.0
        %8847 = vmatprep.subr.mxu0 0.0
        %8848 = vmatpush1.msra.mxu0 0.0
        %8849 = vmatprep.subr.mxu0 0.0
        %8850 = vmatpush1.msra.mxu0 0.0
        %8851 = vmatprep.subr.mxu0 0.0
        %8852 = vmatpush1.msra.mxu0 0.0
        %8853 = vmatprep.subr.mxu0 0.0
        %8854 = vmatpush1.msra.mxu0 0.0
        %8855 = vmatprep.subr.mxu0 0.0
        %8856 = vmatpush1.msra.mxu0 0.0
        %8857 = vmatprep.subr.mxu0 0.0
        %8858 = vmatpush1.msra.mxu0 0.0
        %8859 = vmatprep.subr.mxu0 0.0
        %8860 = vmatpush1.msra.mxu0 0.0
        %8861 = vmatprep.subr.mxu0 0.0
        %8862 = vmatpush1.msra.mxu0 0.0
        %8863 = vmatprep.subr.mxu0 0.0
        %8864 = vmatpush1.msra.mxu0 0.0
        %8865 = vmatprep.subr.mxu0 0.0
        %8866 = vmatpush1.msra.mxu0 0.0
        %8867 = vmatprep.subr.mxu0 0.0
        %8868 = vmatpush1.msra.mxu0 0.0
        %8869 = vmatprep.subr.mxu0 0.0
        %8870 = vmatpush1.msra.mxu0 0.0
        %8871 = vmatprep.subr.mxu0 0.0
        %8872 = vmatpush1.msra.mxu0 0.0
        %8873 = vmatprep.mubr.f32.mxu0 0.0
        %v8874 = vand.u32 %v8799, 4294901760
        %v8875 = vsub.f32 %v8799, %v8874
        %v8876 = vand.u32 %v8875, 4294901760
        %v8877 = vsub.f32 %v8875, %v8876
        %v8878 = vand.u32 %v8877, 4294901760
        %8879 = vmatmul.mubr.f32.gmra.mrb[0].mxu0 %v8878
        %v8880 = vpop.f32.mrb[0].mxu0
        %v8881 = vadd.f32 0.0, %v8880
        %v8882 = vpop.f32.mrb[0].mxu0
        %v8883 = vadd.f32 0.0, %v8882
        %8884 = vdwg.mxu0
        %v8885 = vand.u32 %v8805, 4294901760
        %v8886 = vsub.f32 %v8805, %v8885
        %v8887 = vand.u32 %v8886, 4294901760
        %v8888 = vsub.f32 %v8886, %v8887
        %v8889 = vand.u32 %v8888, 4294901760
        %8890 = vmatprep.subr.mxu0 %v8889
        %v8891 = vand.u32 %v8802, 4294901760
        %v8892 = vsub.f32 %v8802, %v8891
        %v8893 = vand.u32 %v8892, 4294901760
        %v8894 = vsub.f32 %v8892, %v8893
        %v8895 = vand.u32 %v8894, 4294901760
        %8896 = vmatpush1.msra.mxu0 %v8895
        %8897 = vmatprep.subr.mxu0 0.0
        %8898 = vmatpush1.msra.mxu0 0.0
        %8899 = vmatprep.subr.mxu0 0.0
        %8900 = vmatpush1.msra.mxu0 0.0
        %8901 = vmatprep.subr.mxu0 0.0
        %8902 = vmatpush1.msra.mxu0 0.0
        %8903 = vmatprep.subr.mxu0 0.0
        %8904 = vmatpush1.msra.mxu0 0.0
        %8905 = vmatprep.subr.mxu0 0.0
        %8906 = vmatpush1.msra.mxu0 0.0
        %8907 = vmatprep.subr.mxu0 0.0
        %8908 = vmatpush1.msra.mxu0 0.0
        %8909 = vmatprep.subr.mxu0 0.0
        %8910 = vmatpush1.msra.mxu0 0.0
        %8911 = vmatprep.subr.mxu0 0.0
        %8912 = vmatpush1.msra.mxu0 0.0
        %8913 = vmatprep.subr.mxu0 0.0
        %8914 = vmatpush1.msra.mxu0 0.0
        %8915 = vmatprep.subr.mxu0 0.0
        %8916 = vmatpush1.msra.mxu0 0.0
        %8917 = vmatprep.subr.mxu0 0.0
        %8918 = vmatpush1.msra.mxu0 0.0
        %8919 = vmatprep.subr.mxu0 0.0
        %8920 = vmatpush1.msra.mxu0 0.0
        %8921 = vmatprep.subr.mxu0 0.0
        %8922 = vmatpush1.msra.mxu0 0.0
        %8923 = vmatprep.subr.mxu0 0.0
        %8924 = vmatpush1.msra.mxu0 0.0
        %8925 = vmatprep.subr.mxu0 0.0
        %8926 = vmatpush1.msra.mxu0 0.0
        %8927 = vmatprep.subr.mxu0 0.0
        %8928 = vmatpush1.msra.mxu0 0.0
        %8929 = vmatprep.subr.mxu0 0.0
        %8930 = vmatpush1.msra.mxu0 0.0
        %8931 = vmatprep.subr.mxu0 0.0
        %8932 = vmatpush1.msra.mxu0 0.0
        %8933 = vmatprep.subr.mxu0 0.0
        %8934 = vmatpush1.msra.mxu0 0.0
        %8935 = vmatprep.subr.mxu0 0.0
        %8936 = vmatpush1.msra.mxu0 0.0
        %8937 = vmatprep.subr.mxu0 0.0
        %8938 = vmatpush1.msra.mxu0 0.0
        %8939 = vmatprep.subr.mxu0 0.0
        %8940 = vmatpush1.msra.mxu0 0.0
        %8941 = vmatprep.subr.mxu0 0.0
        %8942 = vmatpush1.msra.mxu0 0.0
        %8943 = vmatprep.subr.mxu0 0.0
        %8944 = vmatpush1.msra.mxu0 0.0
        %8945 = vmatprep.subr.mxu0 0.0
        %8946 = vmatpush1.msra.mxu0 0.0
        %8947 = vmatprep.subr.mxu0 0.0
        %8948 = vmatpush1.msra.mxu0 0.0
        %8949 = vmatprep.subr.mxu0 0.0
        %8950 = vmatpush1.msra.mxu0 0.0
        %8951 = vmatprep.subr.mxu0 0.0
        %8952 = vmatpush1.msra.mxu0 0.0
        %8953 = vmatprep.subr.mxu0 0.0
        %8954 = vmatpush1.msra.mxu0 0.0
        %8955 = vmatprep.subr.mxu0 0.0
        %8956 = vmatpush1.msra.mxu0 0.0
        %8957 = vmatprep.subr.mxu0 0.0
        %8958 = vmatpush1.msra.mxu0 0.0
        %8959 = vmatprep.mubr.f32.mxu0 0.0
        %v8960 = vand.u32 %v8799, 4294901760
        %8961 = vmatmul.mubr.f32.gmra.mrb[0].mxu0 %v8960
        %v8962 = vpop.f32.mrb[0].mxu0
        %v8963 = vadd.f32 %v8881, %v8962
        %v8964 = vpop.f32.mrb[0].mxu0
        %v8965 = vadd.f32 %v8883, %v8964
        %8966 = vdwg.mxu0
        %v8967 = vand.u32 %v8805, 4294901760
        %v8968 = vsub.f32 %v8805, %v8967
        %8969 = vmatprep.subr.mxu0 %v8968
        %v8970 = vand.u32 %v8802, 4294901760
        %v8971 = vsub.f32 %v8802, %v8970
        %8972 = vmatpush1.msra.mxu0 %v8971
        %8973 = vmatprep.subr.mxu0 0.0
        %8974 = vmatpush1.msra.mxu0 0.0
        %8975 = vmatprep.subr.mxu0 0.0
        %8976 = vmatpush1.msra.mxu0 0.0
        %8977 = vmatprep.subr.mxu0 0.0
        %8978 = vmatpush1.msra.mxu0 0.0
        %8979 = vmatprep.subr.mxu0 0.0
        %8980 = vmatpush1.msra.mxu0 0.0
        %8981 = vmatprep.subr.mxu0 0.0
        %8982 = vmatpush1.msra.mxu0 0.0
        %8983 = vmatprep.subr.mxu0 0.0
        %8984 = vmatpush1.msra.mxu0 0.0
        %8985 = vmatprep.subr.mxu0 0.0
        %8986 = vmatpush1.msra.mxu0 0.0
        %8987 = vmatprep.subr.mxu0 0.0
        %8988 = vmatpush1.msra.mxu0 0.0
        %8989 = vmatprep.subr.mxu0 0.0
        %8990 = vmatpush1.msra.mxu0 0.0
        %8991 = vmatprep.subr.mxu0 0.0
        %8992 = vmatpush1.msra.mxu0 0.0
        %8993 = vmatprep.subr.mxu0 0.0
        %8994 = vmatpush1.msra.mxu0 0.0
        %8995 = vmatprep.subr.mxu0 0.0
        %8996 = vmatpush1.msra.mxu0 0.0
        %8997 = vmatprep.subr.mxu0 0.0
        %8998 = vmatpush1.msra.mxu0 0.0
        %8999 = vmatprep.subr.mxu0 0.0
        %9000 = vmatpush1.msra.mxu0 0.0
        %9001 = vmatprep.subr.mxu0 0.0
        %9002 = vmatpush1.msra.mxu0 0.0
        %9003 = vmatprep.subr.mxu0 0.0
        %9004 = vmatpush1.msra.mxu0 0.0
        %9005 = vmatprep.subr.mxu0 0.0
        %9006 = vmatpush1.msra.mxu0 0.0
        %9007 = vmatprep.subr.mxu0 0.0
        %9008 = vmatpush1.msra.mxu0 0.0
        %9009 = vmatprep.subr.mxu0 0.0
        %9010 = vmatpush1.msra.mxu0 0.0
        %9011 = vmatprep.subr.mxu0 0.0
        %9012 = vmatpush1.msra.mxu0 0.0
        %9013 = vmatprep.subr.mxu0 0.0
        %9014 = vmatpush1.msra.mxu0 0.0
        %9015 = vmatprep.subr.mxu0 0.0
        %9016 = vmatpush1.msra.mxu0 0.0
        %9017 = vmatprep.subr.mxu0 0.0
        %9018 = vmatpush1.msra.mxu0 0.0
        %9019 = vmatprep.subr.mxu0 0.0
        %9020 = vmatpush1.msra.mxu0 0.0
        %9021 = vmatprep.subr.mxu0 0.0
        %9022 = vmatpush1.msra.mxu0 0.0
        %9023 = vmatprep.subr.mxu0 0.0
        %9024 = vmatpush1.msra.mxu0 0.0
        %9025 = vmatprep.subr.mxu0 0.0
        %9026 = vmatpush1.msra.mxu0 0.0
        %9027 = vmatprep.subr.mxu0 0.0
        %9028 = vmatpush1.msra.mxu0 0.0
        %9029 = vmatprep.subr.mxu0 0.0
        %9030 = vmatpush1.msra.mxu0 0.0
        %9031 = vmatprep.subr.mxu0 0.0
        %9032 = vmatpush1.msra.mxu0 0.0
        %9033 = vmatprep.subr.mxu0 0.0
        %9034 = vmatpush1.msra.mxu0 0.0
        %9035 = vmatprep.mubr.f32.mxu0 0.0
        %v9036 = vand.u32 %v8799, 4294901760
        %v9037 = vsub.f32 %v8799, %v9036
        %9038 = vmatmul.mubr.f32.gmra.mrb[0].mxu0 %v9037
        %v9039 = vpop.f32.mrb[0].mxu0
        %v9040 = vadd.f32 %v8963, %v9039
        %v9041 = vpop.f32.mrb[0].mxu0
        %v9042 = vadd.f32 %v8965, %v9041
        %9043 = vdwg.mxu0
        %v9044 = vand.u32 %v8805, 4294901760
        %9045 = vmatprep.subr.mxu0 %v9044
        %v9046 = vand.u32 %v8802, 4294901760
        %9047 = vmatpush1.msra.mxu0 %v9046
        %9048 = vmatprep.subr.mxu0 0.0
        %9049 = vmatpush1.msra.mxu0 0.0
        %9050 = vmatprep.subr.mxu0 0.0
        %9051 = vmatpush1.msra.mxu0 0.0
        %9052 = vmatprep.subr.mxu0 0.0
        %9053 = vmatpush1.msra.mxu0 0.0
        %9054 = vmatprep.subr.mxu0 0.0
        %9055 = vmatpush1.msra.mxu0 0.0
        %9056 = vmatprep.subr.mxu0 0.0
        %9057 = vmatpush1.msra.mxu0 0.0
        %9058 = vmatprep.subr.mxu0 0.0
        %9059 = vmatpush1.msra.mxu0 0.0
        %9060 = vmatprep.subr.mxu0 0.0
        %9061 = vmatpush1.msra.mxu0 0.0
        %9062 = vmatprep.subr.mxu0 0.0
        %9063 = vmatpush1.msra.mxu0 0.0
        %9064 = vmatprep.subr.mxu0 0.0
        %9065 = vmatpush1.msra.mxu0 0.0
        %9066 = vmatprep.subr.mxu0 0.0
        %9067 = vmatpush1.msra.mxu0 0.0
        %9068 = vmatprep.subr.mxu0 0.0
        %9069 = vmatpush1.msra.mxu0 0.0
        %9070 = vmatprep.subr.mxu0 0.0
        %9071 = vmatpush1.msra.mxu0 0.0
        %9072 = vmatprep.subr.mxu0 0.0
        %9073 = vmatpush1.msra.mxu0 0.0
        %9074 = vmatprep.subr.mxu0 0.0
        %9075 = vmatpush1.msra.mxu0 0.0
        %9076 = vmatprep.subr.mxu0 0.0
        %9077 = vmatpush1.msra.mxu0 0.0
        %9078 = vmatprep.subr.mxu0 0.0
        %9079 = vmatpush1.msra.mxu0 0.0
        %9080 = vmatprep.subr.mxu0 0.0
        %9081 = vmatpush1.msra.mxu0 0.0
        %9082 = vmatprep.subr.mxu0 0.0
        %9083 = vmatpush1.msra.mxu0 0.0
        %9084 = vmatprep.subr.mxu0 0.0
        %9085 = vmatpush1.msra.mxu0 0.0
        %9086 = vmatprep.subr.mxu0 0.0
        %9087 = vmatpush1.msra.mxu0 0.0
        %9088 = vmatprep.subr.mxu0 0.0
        %9089 = vmatpush1.msra.mxu0 0.0
        %9090 = vmatprep.subr.mxu0 0.0
        %9091 = vmatpush1.msra.mxu0 0.0
        %9092 = vmatprep.subr.mxu0 0.0
        %9093 = vmatpush1.msra.mxu0 0.0
        %9094 = vmatprep.subr.mxu0 0.0
        %9095 = vmatpush1.msra.mxu0 0.0
        %9096 = vmatprep.subr.mxu0 0.0
        %9097 = vmatpush1.msra.mxu0 0.0
        %9098 = vmatprep.subr.mxu0 0.0
        %9099 = vmatpush1.msra.mxu0 0.0
        %9100 = vmatprep.subr.mxu0 0.0
        %9101 = vmatpush1.msra.mxu0 0.0
        %9102 = vmatprep.subr.mxu0 0.0
        %9103 = vmatpush1.msra.mxu0 0.0
        %9104 = vmatprep.subr.mxu0 0.0
        %9105 = vmatpush1.msra.mxu0 0.0
        %9106 = vmatprep.subr.mxu0 0.0
        %9107 = vmatpush1.msra.mxu0 0.0
        %9108 = vmatprep.subr.mxu0 0.0
        %9109 = vmatpush1.msra.mxu0 0.0
        %9110 = vmatprep.mubr.f32.mxu0 0.0
        %v9111 = vand.u32 %v8799, 4294901760
        %v9112 = vsub.f32 %v8799, %v9111
        %v9113 = vand.u32 %v9112, 4294901760
        %9114 = vmatmul.mubr.f32.gmra.mrb[0].mxu0 %v9113
        %v9115 = vpop.f32.mrb[0].mxu0
        %v9116 = vadd.f32 %v9040, %v9115
        %v9117 = vpop.f32.mrb[0].mxu0
        %v9118 = vadd.f32 %v9042, %v9117
        %9119 = vdwg.mxu0
        %v9120 = vand.u32 %v8805, 4294901760
        %v9121 = vsub.f32 %v8805, %v9120
        %v9122 = vand.u32 %v9121, 4294901760
        %9123 = vmatprep.subr.mxu0 %v9122
        %v9124 = vand.u32 %v8802, 4294901760
        %v9125 = vsub.f32 %v8802, %v9124
        %v9126 = vand.u32 %v9125, 4294901760
        %9127 = vmatpush1.msra.mxu0 %v9126
        %9128 = vmatprep.subr.mxu0 0.0
        %9129 = vmatpush1.msra.mxu0 0.0
        %9130 = vmatprep.subr.mxu0 0.0
        %9131 = vmatpush1.msra.mxu0 0.0
        %9132 = vmatprep.subr.mxu0 0.0
        %9133 = vmatpush1.msra.mxu0 0.0
        %9134 = vmatprep.subr.mxu0 0.0
        %9135 = vmatpush1.msra.mxu0 0.0
        %9136 = vmatprep.subr.mxu0 0.0
        %9137 = vmatpush1.msra.mxu0 0.0
        %9138 = vmatprep.subr.mxu0 0.0
        %9139 = vmatpush1.msra.mxu0 0.0
        %9140 = vmatprep.subr.mxu0 0.0
        %9141 = vmatpush1.msra.mxu0 0.0
        %9142 = vmatprep.subr.mxu0 0.0
        %9143 = vmatpush1.msra.mxu0 0.0
        %9144 = vmatprep.subr.mxu0 0.0
        %9145 = vmatpush1.msra.mxu0 0.0
        %9146 = vmatprep.subr.mxu0 0.0
        %9147 = vmatpush1.msra.mxu0 0.0
        %9148 = vmatprep.subr.mxu0 0.0
        %9149 = vmatpush1.msra.mxu0 0.0
        %9150 = vmatprep.subr.mxu0 0.0
        %9151 = vmatpush1.msra.mxu0 0.0
        %9152 = vmatprep.subr.mxu0 0.0
        %9153 = vmatpush1.msra.mxu0 0.0
        %9154 = vmatprep.subr.mxu0 0.0
        %9155 = vmatpush1.msra.mxu0 0.0
        %9156 = vmatprep.subr.mxu0 0.0
        %9157 = vmatpush1.msra.mxu0 0.0
        %9158 = vmatprep.subr.mxu0 0.0
        %9159 = vmatpush1.msra.mxu0 0.0
        %9160 = vmatprep.subr.mxu0 0.0
        %9161 = vmatpush1.msra.mxu0 0.0
        %9162 = vmatprep.subr.mxu0 0.0
        %9163 = vmatpush1.msra.mxu0 0.0
        %9164 = vmatprep.subr.mxu0 0.0
        %9165 = vmatpush1.msra.mxu0 0.0
        %9166 = vmatprep.subr.mxu0 0.0
        %9167 = vmatpush1.msra.mxu0 0.0
        %9168 = vmatprep.subr.mxu0 0.0
        %9169 = vmatpush1.msra.mxu0 0.0
        %9170 = vmatprep.subr.mxu0 0.0
        %9171 = vmatpush1.msra.mxu0 0.0
        %9172 = vmatprep.subr.mxu0 0.0
        %9173 = vmatpush1.msra.mxu0 0.0
        %9174 = vmatprep.subr.mxu0 0.0
        %9175 = vmatpush1.msra.mxu0 0.0
        %9176 = vmatprep.subr.mxu0 0.0
        %9177 = vmatpush1.msra.mxu0 0.0
        %9178 = vmatprep.subr.mxu0 0.0
        %9179 = vmatpush1.msra.mxu0 0.0
        %9180 = vmatprep.subr.mxu0 0.0
        %9181 = vmatpush1.msra.mxu0 0.0
        %9182 = vmatprep.subr.mxu0 0.0
        %9183 = vmatpush1.msra.mxu0 0.0
        %9184 = vmatprep.subr.mxu0 0.0
        %9185 = vmatpush1.msra.mxu0 0.0
        %9186 = vmatprep.subr.mxu0 0.0
        %9187 = vmatpush1.msra.mxu0 0.0
        %9188 = vmatprep.subr.mxu0 0.0
        %9189 = vmatpush1.msra.mxu0 0.0
        %9190 = vmatprep.mubr.f32.mxu0 0.0
        %v9191 = vand.u32 %v8799, 4294901760
        %9192 = vmatmul.mubr.f32.gmra.mrb[0].mxu0 %v9191
        %v9193 = vpop.f32.mrb[0].mxu0
        %v9194 = vadd.f32 %v9116, %v9193
        %v9195 = vpop.f32.mrb[0].mxu0
        %v9196 = vadd.f32 %v9118, %v9195
        %9197 = vdwg.mxu0
        %v9198 = vand.u32 %v8805, 4294901760
        %9199 = vmatprep.subr.mxu0 %v9198
        %v9200 = vand.u32 %v8802, 4294901760
        %9201 = vmatpush1.msra.mxu0 %v9200
        %9202 = vmatprep.subr.mxu0 0.0
        %9203 = vmatpush1.msra.mxu0 0.0
        %9204 = vmatprep.subr.mxu0 0.0
        %9205 = vmatpush1.msra.mxu0 0.0
        %9206 = vmatprep.subr.mxu0 0.0
        %9207 = vmatpush1.msra.mxu0 0.0
        %9208 = vmatprep.subr.mxu0 0.0
        %9209 = vmatpush1.msra.mxu0 0.0
        %9210 = vmatprep.subr.mxu0 0.0
        %9211 = vmatpush1.msra.mxu0 0.0
        %9212 = vmatprep.subr.mxu0 0.0
        %9213 = vmatpush1.msra.mxu0 0.0
        %9214 = vmatprep.subr.mxu0 0.0
        %9215 = vmatpush1.msra.mxu0 0.0
        %9216 = vmatprep.subr.mxu0 0.0
        %9217 = vmatpush1.msra.mxu0 0.0
        %9218 = vmatprep.subr.mxu0 0.0
        %9219 = vmatpush1.msra.mxu0 0.0
        %9220 = vmatprep.subr.mxu0 0.0
        %9221 = vmatpush1.msra.mxu0 0.0
        %9222 = vmatprep.subr.mxu0 0.0
        %9223 = vmatpush1.msra.mxu0 0.0
        %9224 = vmatprep.subr.mxu0 0.0
        %9225 = vmatpush1.msra.mxu0 0.0
        %9226 = vmatprep.subr.mxu0 0.0
        %9227 = vmatpush1.msra.mxu0 0.0
        %9228 = vmatprep.subr.mxu0 0.0
        %9229 = vmatpush1.msra.mxu0 0.0
        %9230 = vmatprep.subr.mxu0 0.0
        %9231 = vmatpush1.msra.mxu0 0.0
        %9232 = vmatprep.subr.mxu0 0.0
        %9233 = vmatpush1.msra.mxu0 0.0
        %9234 = vmatprep.subr.mxu0 0.0
        %9235 = vmatpush1.msra.mxu0 0.0
        %9236 = vmatprep.subr.mxu0 0.0
        %9237 = vmatpush1.msra.mxu0 0.0
        %9238 = vmatprep.subr.mxu0 0.0
        %9239 = vmatpush1.msra.mxu0 0.0
        %9240 = vmatprep.subr.mxu0 0.0
        %9241 = vmatpush1.msra.mxu0 0.0
        %9242 = vmatprep.subr.mxu0 0.0
        %9243 = vmatpush1.msra.mxu0 0.0
        %9244 = vmatprep.subr.mxu0 0.0
        %9245 = vmatpush1.msra.mxu0 0.0
        %9246 = vmatprep.subr.mxu0 0.0
        %9247 = vmatpush1.msra.mxu0 0.0
        %9248 = vmatprep.subr.mxu0 0.0
        %9249 = vmatpush1.msra.mxu0 0.0
        %9250 = vmatprep.subr.mxu0 0.0
        %9251 = vmatpush1.msra.mxu0 0.0
        %9252 = vmatprep.subr.mxu0 0.0
        %9253 = vmatpush1.msra.mxu0 0.0
        %9254 = vmatprep.subr.mxu0 0.0
        %9255 = vmatpush1.msra.mxu0 0.0
        %9256 = vmatprep.subr.mxu0 0.0
        %9257 = vmatpush1.msra.mxu0 0.0
        %9258 = vmatprep.subr.mxu0 0.0
        %9259 = vmatpush1.msra.mxu0 0.0
        %9260 = vmatprep.subr.mxu0 0.0
        %9261 = vmatpush1.msra.mxu0 0.0
        %9262 = vmatprep.subr.mxu0 0.0
        %9263 = vmatpush1.msra.mxu0 0.0
        %9264 = vmatprep.mubr.f32.mxu0 0.0
        %v9265 = vand.u32 %v8799, 4294901760
        %9266 = vmatmul.mubr.f32.gmra.mrb[0].mxu0 %v9265
        %v9267 = vpop.f32.mrb[0].mxu0
        %v9268 = vadd.f32 %v9194, %v9267
        %v9269 = vpop.f32.mrb[0].mxu0
        %v9270 = vadd.f32 %v9196, %v9269
        %9271 = vdwg.mxu0
        %v9272 = vadd.f32 %v8548, %v9268
        %v9273 = vadd.f32 %v8549, %v9270
        %v9274 = vld [vmem:[%s4] sm:$0xff]
        %9276 = vset.pattern.permute.xlu0 0
        %9277 = vperm.xlu0 %9276, %v9274
        %v9278 = vpop.permute.xlu0 %9277
        %v9280 = vadd.f32 %v9272, %v9278
        %v9281 = vadd.f32 %v9273, %v9278
        %9282 = vst [vmem:[%s217] sm:$0xff] %v9280
        %9283 = vst [vmem:[%s217 + $0x8] sm:$0xff] %v9281
        %s9284 = sand.u32 %s137, 1
        %s9285 = scalar_lea.sflag [#allocation4], %s9284
        %s9286 = sand.u32 %s137, 1
        %s9287 = smul.addr %s9286, 16
        %s9288 = scalar_lea.vmem [#allocation3], %s9287
        // Predicated region
        $region41: #{tpu_custom_call.1} parent=39 // pred_check
          %p9289 = pneg %p147
        $region42: #{tpu_custom_call.1} parent=39 // pred_check_branch
          %9291 = sbr.rel (%p9289) target = $region44
        $region43: #{tpu_custom_call.1} parent=39 // pred_region
          %s9293 = ssub.s32 256, 256
          %9294 = vsyncadd %s9285, %s9293
          %s9295 = smul.addr %s19, 2
          %s9296 = smul.addr %s9295, 128
          %s9297 = scalar_lea.hbm %s5, %s9296
          %s9299 = sshll.u32 %s9288, 4
          %s9300 = int_to_ptr.vmem [resolvable:$true] %s9299
          %9302 = dma.vmem_to_hbm [thread:$0]  %s9300, 256, %s9297, %s9285
        $region44: #{tpu_custom_call.1} parent=39 // pred_fallthru
          _
      $region40: #{tpu_custom_call.1} parent=5 // pred_fallthru
        _
      %p9303 = scmp.le.s32.totalorder 2, %s14
      // Predicated region
      $region45: #{tpu_custom_call.1} parent=5 // pred_check
        %p9304 = pneg %p9303
      $region46: #{tpu_custom_call.1} parent=5 // pred_check_branch
        %9306 = sbr.rel (%p9304) target = $region48
      $region47: #{tpu_custom_call.1} parent=5 // pred_region
        %s9307 = ssub.s32 %s14, 2
        // Predicated region
        $region49: #{tpu_custom_call.1} parent=47 // pred_check
          %p9308 = pneg %p153
        $region50: #{tpu_custom_call.1} parent=47 // pred_check_branch
          %9310 = sbr.rel (%p9308) target = $region52
        $region51: #{tpu_custom_call.1} parent=47 // pred_region
          %s9311 = sand.u32 %s138, 1
          %s9312 = scalar_lea.sflag [#allocation4], %s9311
          %s9313 = sand.u32 %s138, 1
          %s9314 = smul.addr %s9313, 16
          %s9315 = scalar_lea.vmem [#allocation3], %s9314
          %9316 = dma.done %s9312, 256
        $region52: #{tpu_custom_call.1} parent=47 // pred_fallthru
          _
      $region48: #{tpu_custom_call.1} parent=5 // pred_fallthru
        _
    $region6: #{tpu_custom_call.1} parent=1 // loop_footer
      %s18 = sadd.s32 1, %s14
    $region7: #{tpu_custom_call.1} parent=1 // loop_footer_branch
      %13 = sbr.rel target = $region3
    $region8: #{tpu_custom_call.1} parent=1 // loop_exit
      _
    %9317 = vsyncpa [#allocation4], 1
    %s9318 = scalar_lea.sflag [#allocation4], 1
    %9319 = vsyncpa %s9318, 1

</llo_original>
